<compile_context>
chip_gen: v7x
topology: tpu7x:2x2x1
jax: 0.10.0
libtpu: 0.0.40
codegen_flags: <defaults>
</compile_context>

<pallas_src>
import jax
import jax.numpy as jnp
from jax.experimental import pallas as pl
from jax.experimental.pallas import tpu as pltpu


def _render_trans2_kernel(xh_ref, xe_ref, xo_ref, w1_ref, w3_ref, wd1_ref, p_ref,
                          out_ref, acc_hi, acc_e, acc_o):
    f32 = jnp.float32
    H, W, Ch = out_ref.shape
    Hl = acc_e.shape[0]                      # = 2 * H (x_low spatial height)

    p = p_ref[...].astype(f32)               # (8, Ch) folded BN scale/shift rows

    def brd(i):                              # (1, 1, Ch) broadcastable per-channel constant
        return p[i:i + 1, :][None]

    def cdot(x, w):                          # (h, w, cin) . (cin, cout) on the MXU, f32 acc
        return jax.lax.dot_general(x, w, dimension_numbers=(((2,), (0,)), ((), ())),
                                   preferred_element_type=f32)

    def colsum(x):                           # sum over both spatial axes -> (1, C)
        return jnp.sum(jnp.sum(x.astype(f32), axis=0), axis=0, keepdims=True)

    # ---- global-context branch: g = relu(bn_low(conv1x1(GAP(x_low)))) -------------------
    # interior (unpadded) x_low = odd padded cols 1..2W-1  union  even padded cols 2..2W
    gap = (colsum(xo_ref[1:Hl + 1, 0:W, :]) + colsum(xe_ref[1:Hl + 1, 1:W + 1, :])) \
        * (1.0 / (Hl * 2 * W))                                        # (1, Cl)
    g = jnp.dot(gap, w1_ref[...].astype(f32), preferred_element_type=f32)   # (1, Ch)
    g = jnp.maximum(g * p[0:1, :] + p[1:2, :], 0.0)

    # ---- x_high branch: x_att = bn_high(conv3x3(x_high)) * g ----------------------------
    acc_hi[...] = jnp.zeros_like(acc_hi)
    for dy in range(3):
        for dx in range(3):
            acc_hi[...] += cdot(xh_ref[dy:dy + H, dx:dx + W, :], w3_ref[dy * 3 + dx])
    x_att = (acc_hi[...] * brd(2) + brd(3)) * g[None, :, :]           # (H, W, Ch)

    # ---- d1 branch: maxpool2x2(relu(bn_d1(conv3x3(x_low) + bias))) ----------------------
    # Even / odd output-column phases computed separately -> column pooling is elementwise.
    acc_e[...] = jnp.zeros_like(acc_e)
    acc_o[...] = jnp.zeros_like(acc_o)
    for dy in range(3):
        # even output columns 2j use padded cols 2j, 2j+1, 2j+2
        acc_e[...] += cdot(xe_ref[dy:dy + Hl, 0:W, :], wd1_ref[dy * 3 + 0])
        acc_e[...] += cdot(xo_ref[dy:dy + Hl, 0:W, :], wd1_ref[dy * 3 + 1])
        acc_e[...] += cdot(xe_ref[dy:dy + Hl, 1:W + 1, :], wd1_ref[dy * 3 + 2])
        # odd output columns 2j+1 use padded cols 2j+1, 2j+2, 2j+3
        acc_o[...] += cdot(xo_ref[dy:dy + Hl, 0:W, :], wd1_ref[dy * 3 + 0])
        acc_o[...] += cdot(xe_ref[dy:dy + Hl, 1:W + 1, :], wd1_ref[dy * 3 + 1])
        acc_o[...] += cdot(xo_ref[dy:dy + Hl, 1:W + 1, :], wd1_ref[dy * 3 + 2])

    ye = jnp.maximum(acc_e[...] * brd(4) + brd(5), 0.0)               # (Hl, W, Ch)
    yo = jnp.maximum(acc_o[...] * brd(4) + brd(5), 0.0)
    wpool = jnp.maximum(ye, yo)                                       # pool over column pairs
    hpool = jnp.max(wpool.reshape(H, 2, W, Ch), axis=1)               # pool over row pairs

    # ---- fuse: out = relu(bn_reduction(d1(x_low)) + x_att) ------------------------------
    out = jnp.maximum(hpool * brd(6) + brd(7) + x_att, 0.0)
    out_ref[...] = out.astype(out_ref.dtype)


def render_trans2_forward(x_high, x_low, *, w1x1, bn_low, w3, bn_high, wd1, bd1,
                          bn_d1, bn_red, down=1, eps=1e-5):
    """Pallas implementation of RenderTrans2.forward(x_high, x_low, down=1) (eval-mode BN)."""
    if down != 1:
        # TODO(synk): down=2/3 reuse the same conv+bn+relu+maxpool block at halved resolution.
        raise NotImplementedError("only the default down=1 path is implemented")

    B, Ch, H, W = x_high.shape
    _, Cl, Hl, Wl = x_low.shape
    assert (Hl, Wl) == (2 * H, 2 * W), "x_low must be at 2x the spatial size of x_high"
    assert w1x1.shape == (Ch, Cl, 1, 1) and w3.shape == (Ch, Ch, 3, 3) and wd1.shape == (Ch, Cl, 3, 3)
    f32 = jnp.float32

    # Fold eval-mode BatchNorms (and the d1 conv bias) into per-channel scale / shift.
    def fold(gamma, beta, mean, var):
        s = (gamma / jnp.sqrt(var + eps)).astype(f32)
        return s, (beta - mean * s).astype(f32)

    s_low, b_low = fold(*bn_low)
    s_hi, b_hi = fold(*bn_high)
    s_d1, b_d1bn = fold(*bn_d1)
    b_d1 = s_d1 * bd1.astype(f32) + b_d1bn
    s_red, b_red = fold(*bn_red)
    params8 = jnp.stack([s_low, b_low, s_hi, b_hi, s_d1, b_d1, s_red, b_red], axis=0)  # (8, Ch)

    # Layout glue: NCHW -> channels-last (C on the lane axis), zero padding for the 3x3
    # convs, and an even/odd column split of padded x_low so the in-kernel 2x2 max-pool
    # needs no strided loads or gathers.
    xh_pad = jnp.pad(jnp.transpose(x_high, (0, 2, 3, 1)), ((0, 0), (1, 1), (1, 1), (0, 0)))
    xl_pad = jnp.pad(jnp.transpose(x_low, (0, 2, 3, 1)), ((0, 0), (1, 1), (1, 1), (0, 0)))
    xe = xl_pad[:, :, 0::2, :]            # (B, Hl+2, W+1, Cl): padded cols 0,2,...,2W
    xo = xl_pad[:, :, 1::2, :]            # (B, Hl+2, W+1, Cl): padded cols 1,3,...,2W+1

    w1 = jnp.transpose(w1x1[:, :, 0, 0], (1, 0))                      # (Cl, Ch)
    w3r = jnp.transpose(w3, (2, 3, 1, 0)).reshape(9, Ch, Ch)          # [ky*3+kx, cin, cout]
    wd1r = jnp.transpose(wd1, (2, 3, 1, 0)).reshape(9, Cl, Ch)

    in_specs = [
        pl.BlockSpec((pl.Squeezed(), H + 2, W + 2, Ch), lambda b: (b, 0, 0, 0)),
        pl.BlockSpec((pl.Squeezed(), Hl + 2, W + 1, Cl), lambda b: (b, 0, 0, 0)),
        pl.BlockSpec((pl.Squeezed(), Hl + 2, W + 1, Cl), lambda b: (b, 0, 0, 0)),
        pl.BlockSpec((Cl, Ch), lambda b: (0, 0)),
        pl.BlockSpec((9, Ch, Ch), lambda b: (0, 0, 0)),
        pl.BlockSpec((9, Cl, Ch), lambda b: (0, 0, 0)),
        pl.BlockSpec((8, Ch), lambda b: (0, 0)),
    ]
    out_spec = pl.BlockSpec((pl.Squeezed(), H, W, Ch), lambda b: (b, 0, 0, 0))

    out_nhwc = pl.pallas_call(
        _render_trans2_kernel,
        grid_spec=pltpu.PrefetchScalarGridSpec(
            num_scalar_prefetch=0,
            grid=(B,),
            in_specs=in_specs,
            out_specs=out_spec,
            scratch_shapes=[pltpu.VMEM((H, W, Ch), f32),     # conv3x3(x_high) accumulator
                            pltpu.VMEM((Hl, W, Ch), f32),    # d1 conv, even-column phase
                            pltpu.VMEM((Hl, W, Ch), f32)],   # d1 conv, odd-column phase
        ),
        out_shape=jax.ShapeDtypeStruct((B, H, W, Ch), x_high.dtype),
        compiler_params=pltpu.CompilerParams(dimension_semantics=("parallel",)),
    )(xh_pad, xe, xo, w1, w3r, wd1r, params8)

    return jnp.transpose(out_nhwc, (0, 3, 1, 2))   # back to NCHW to match the PyTorch module


def _reference(x_high, x_low, prm, eps=1e-5):
    """Pure-JAX transcription of the PyTorch forward (eval mode, upsample=False, down=1)."""
    hi = jax.lax.Precision.HIGHEST
    dn = ("NCHW", "OIHW", "NCHW")

    def bn(x, gamma, beta, mean, var):
        s = gamma / jnp.sqrt(var + eps)
        return (x - mean[None, :, None, None]) * s[None, :, None, None] + beta[None, :, None, None]

    gp = jnp.mean(x_low, axis=(2, 3), keepdims=True)
    g1 = jax.lax.conv_general_dilated(gp, prm["w1x1"], (1, 1), "VALID",
                                      dimension_numbers=dn, precision=hi)
    g1 = jax.nn.relu(bn(g1, *prm["bn_low"]))

    m = jax.lax.conv_general_dilated(x_high, prm["w3"], (1, 1), ((1, 1), (1, 1)),
                                     dimension_numbers=dn, precision=hi)
    x_att = bn(m, *prm["bn_high"]) * g1

    t = jax.lax.conv_general_dilated(x_low, prm["wd1"], (1, 1), ((1, 1), (1, 1)),
                                     dimension_numbers=dn, precision=hi)
    t = jax.nn.relu(bn(t + prm["bd1"][None, :, None, None], *prm["bn_d1"]))
    t = jax.lax.reduce_window(t, -jnp.inf, jax.lax.max, (1, 1, 2, 2), (1, 1, 2, 2), "VALID")

    return jax.nn.relu(bn(t, *prm["bn_red"]) + x_att)


if __name__ == "__main__":
    B, Ch, Cl, H, W = 2, 32, 16, 8, 8
    Hl, Wl = 2 * H, 2 * W
    f32 = jnp.float32

    key = jax.random.PRNGKey(0)
    ks = jax.random.split(key, 10)
    x_high = jax.random.normal(ks[0], (B, Ch, H, W), f32)
    x_low = jax.random.normal(ks[1], (B, Cl, Hl, Wl), f32)
    w1x1 = jax.random.normal(ks[2], (Ch, Cl, 1, 1), f32) * 0.1
    w3 = jax.random.normal(ks[3], (Ch, Ch, 3, 3), f32) * 0.05
    wd1 = jax.random.normal(ks[4], (Ch, Cl, 3, 3), f32) * 0.05
    bd1 = jax.random.normal(ks[5], (Ch,), f32) * 0.1

    def bn_params(k):
        k1, k2, k3, k4 = jax.random.split(k, 4)
        return (jax.random.uniform(k1, (Ch,), f32, 0.5, 1.5),
                jax.random.normal(k2, (Ch,), f32) * 0.1,
                jax.random.normal(k3, (Ch,), f32) * 0.1,
                jax.random.uniform(k4, (Ch,), f32, 0.5, 1.5))

    bn_low, bn_high, bn_d1, bn_red = [bn_params(ks[i]) for i in (6, 7, 8, 9)]

    out = render_trans2_forward(x_high, x_low, w1x1=w1x1, bn_low=bn_low, w3=w3,
                                bn_high=bn_high, wd1=wd1, bd1=bd1, bn_d1=bn_d1,
                                bn_red=bn_red, down=1)
    jax.block_until_ready(out)

    ref = _reference(x_high, x_low, dict(w1x1=w1x1, bn_low=bn_low, w3=w3, bn_high=bn_high,
                                         wd1=wd1, bd1=bd1, bn_d1=bn_d1, bn_red=bn_red))
    assert out.shape == (B, Ch, H, W)
    max_err = float(jnp.max(jnp.abs(out - ref)))
    assert jnp.allclose(out, ref, rtol=2e-3, atol=2e-3), f"output mismatch, max abs err {max_err}"
    print("KERNEL_OK")
</pallas_src>

<mosaic_0001>
module attributes {stable_mosaic.version = 11 : i64} {
  func.func @_render_trans2_kernel(%arg0: i32, %arg1: memref<1x10x10x32xf32, #tpu.memory_space<vmem>>, %arg2: memref<1x18x9x16xf32, #tpu.memory_space<vmem>>, %arg3: memref<1x18x9x16xf32, #tpu.memory_space<vmem>>, %arg4: memref<16x32xf32, #tpu.memory_space<vmem>>, %arg5: memref<9x32x32xf32, #tpu.memory_space<vmem>>, %arg6: memref<9x16x32xf32, #tpu.memory_space<vmem>>, %arg7: memref<8x32xf32, #tpu.memory_space<vmem>>, %arg8: memref<1x8x8x32xf32, #tpu.memory_space<vmem>>, %arg9: memref<8x8x32xf32, #tpu.memory_space<vmem>>, %arg10: memref<16x8x32xf32, #tpu.memory_space<vmem>>, %arg11: memref<16x8x32xf32, #tpu.memory_space<vmem>>) attributes {dimension_semantics = [#tpu.dimension_semantics<parallel>], iteration_bounds = array<i64: 2>, scalar_prefetch = 0 : i64, scratch_operands = 3 : i64, tpu.core_type = #tpu.core_type<tc>, window_params = [{transform_indices = @transform_0, window_bounds = array<i64: 1, 10, 10, 32>}, {transform_indices = @transform_1, window_bounds = array<i64: 1, 18, 9, 16>}, {transform_indices = @transform_2, window_bounds = array<i64: 1, 18, 9, 16>}, {pipeline_mode = #tpu.pipeline_mode<synchronous>, transform_indices = @transform_3, window_bounds = array<i64: 16, 32>}, {pipeline_mode = #tpu.pipeline_mode<synchronous>, transform_indices = @transform_4, window_bounds = array<i64: 9, 32, 32>}, {pipeline_mode = #tpu.pipeline_mode<synchronous>, transform_indices = @transform_5, window_bounds = array<i64: 9, 16, 32>}, {pipeline_mode = #tpu.pipeline_mode<synchronous>, transform_indices = @transform_6, window_bounds = array<i64: 8, 32>}, {transform_indices = @transform_7, window_bounds = array<i64: 1, 8, 8, 32>}]} {
    %c0 = arith.constant 0 : index
    %c0_0 = arith.constant 0 : index
    %0 = vector.load %arg7[%c0, %c0_0] : memref<8x32xf32, #tpu.memory_space<vmem>>, vector<8x32xf32>
    %c0_1 = arith.constant 0 : index
    %c1 = arith.constant 1 : index
    %c0_2 = arith.constant 0 : index
    %c0_3 = arith.constant 0 : index
    %1 = vector.load %arg3[%c0_1, %c1, %c0_2, %c0_3] : memref<1x18x9x16xf32, #tpu.memory_space<vmem>>, vector<1x16x8x16xf32>
    %2 = vector.shape_cast %1 : vector<1x16x8x16xf32> to vector<16x8x16xf32>
    %cst = arith.constant dense<0.000000e+00> : vector<8x16xf32>
    %3 = vector.multi_reduction <add>, %2, %cst [0] : vector<16x8x16xf32> to vector<8x16xf32>
    %cst_4 = arith.constant dense<0.000000e+00> : vector<16xf32>
    %4 = vector.multi_reduction <add>, %3, %cst_4 [0] : vector<8x16xf32> to vector<16xf32>
    %5 = vector.shape_cast %4 : vector<16xf32> to vector<1x16xf32>
    %c0_5 = arith.constant 0 : index
    %c1_6 = arith.constant 1 : index
    %c1_7 = arith.constant 1 : index
    %c0_8 = arith.constant 0 : index
    %6 = vector.load %arg2[%c0_5, %c1_6, %c1_7, %c0_8] : memref<1x18x9x16xf32, #tpu.memory_space<vmem>>, vector<1x16x8x16xf32>
    %7 = vector.shape_cast %6 : vector<1x16x8x16xf32> to vector<16x8x16xf32>
    %cst_9 = arith.constant dense<0.000000e+00> : vector<8x16xf32>
    %8 = vector.multi_reduction <add>, %7, %cst_9 [0] : vector<16x8x16xf32> to vector<8x16xf32>
    %cst_10 = arith.constant dense<0.000000e+00> : vector<16xf32>
    %9 = vector.multi_reduction <add>, %8, %cst_10 [0] : vector<8x16xf32> to vector<16xf32>
    %10 = vector.shape_cast %9 : vector<16xf32> to vector<1x16xf32>
    %11 = arith.addf %5, %10 : vector<1x16xf32>
    %cst_11 = arith.constant 3.906250e-03 : f32
    %12 = vector.broadcast %cst_11 : f32 to vector<1x16xf32>
    %13 = arith.mulf %11, %12 : vector<1x16xf32>
    %c0_12 = arith.constant 0 : index
    %c0_13 = arith.constant 0 : index
    %14 = vector.load %arg4[%c0_12, %c0_13] : memref<16x32xf32, #tpu.memory_space<vmem>>, vector<16x32xf32>
    %cst_14 = arith.constant dense<0.000000e+00> : vector<1x32xf32>
    %15 = tpu.matmul %13, %14, %cst_14 {dimension_numbers = #tpu.dot_dimension_numbers<[1], [0], [0], [1], [0, 0, 1, 1], [], []>} : vector<1x16xf32>, vector<16x32xf32>, vector<1x32xf32> -> vector<1x32xf32>
    %16 = vector.extract_strided_slice %0 {offsets = [0, 0], sizes = [1, 32], strides = [1, 1]} : vector<8x32xf32> to vector<1x32xf32>
    %17 = arith.mulf %15, %16 : vector<1x32xf32>
    %18 = vector.extract_strided_slice %0 {offsets = [1, 0], sizes = [1, 32], strides = [1, 1]} : vector<8x32xf32> to vector<1x32xf32>
    %19 = arith.addf %17, %18 : vector<1x32xf32>
    %cst_15 = arith.constant 0.000000e+00 : f32
    %20 = vector.broadcast %cst_15 : f32 to vector<1x32xf32>
    %21 = arith.maximumf %19, %20 : vector<1x32xf32>
    %cst_16 = arith.constant 0.000000e+00 : f32
    %22 = vector.broadcast %cst_16 : f32 to vector<8x8x32xf32>
    %c0_17 = arith.constant 0 : index
    %c0_18 = arith.constant 0 : index
    %c0_19 = arith.constant 0 : index
    %23 = vector.load %arg9[%c0_17, %c0_18, %c0_19] : memref<8x8x32xf32, #tpu.memory_space<vmem>>, vector<8x8x32xf32>
    tpu.vector_store %arg9[%c0_17, %c0_18, %c0_19], %22 {strides = array<i32>} : memref<8x8x32xf32, #tpu.memory_space<vmem>>, vector<8x8x32xf32>,
    %c0_20 = arith.constant 0 : index
    %c0_21 = arith.constant 0 : index
    %c0_22 = arith.constant 0 : index
    %24 = vector.load %arg9[%c0_20, %c0_21, %c0_22] : memref<8x8x32xf32, #tpu.memory_space<vmem>>, vector<8x8x32xf32>
    %c0_23 = arith.constant 0 : index
    %c0_24 = arith.constant 0 : index
    %c0_25 = arith.constant 0 : index
    %c0_26 = arith.constant 0 : index
    %25 = vector.load %arg1[%c0_23, %c0_24, %c0_25, %c0_26] : memref<1x10x10x32xf32, #tpu.memory_space<vmem>>, vector<1x8x8x32xf32>
    %26 = vector.shape_cast %25 : vector<1x8x8x32xf32> to vector<8x8x32xf32>
    %c0_27 = arith.constant 0 : index
    %c0_28 = arith.constant 0 : index
    %c0_29 = arith.constant 0 : index
    %27 = vector.load %arg5[%c0_27, %c0_28, %c0_29] : memref<9x32x32xf32, #tpu.memory_space<vmem>>, vector<1x32x32xf32>
    %28 = vector.shape_cast %27 : vector<1x32x32xf32> to vector<32x32xf32>
    %cst_30 = arith.constant dense<0.000000e+00> : vector<8x8x32xf32>
    %29 = tpu.matmul %26, %28, %cst_30 {dimension_numbers = #tpu.dot_dimension_numbers<[2], [0], [0, 1], [1], [0, 0, 0, 1, 1, 1], [], []>} : vector<8x8x32xf32>, vector<32x32xf32>, vector<8x8x32xf32> -> vector<8x8x32xf32>
    %30 = arith.addf %24, %29 : vector<8x8x32xf32>
    %c0_31 = arith.constant 0 : index
    %c0_32 = arith.constant 0 : index
    %c0_33 = arith.constant 0 : index
    %31 = vector.load %arg9[%c0_31, %c0_32, %c0_33] : memref<8x8x32xf32, #tpu.memory_space<vmem>>, vector<8x8x32xf32>
    tpu.vector_store %arg9[%c0_31, %c0_32, %c0_33], %30 {strides = array<i32>} : memref<8x8x32xf32, #tpu.memory_space<vmem>>, vector<8x8x32xf32>,
    %c0_34 = arith.constant 0 : index
    %c0_35 = arith.constant 0 : index
    %c0_36 = arith.constant 0 : index
    %32 = vector.load %arg9[%c0_34, %c0_35, %c0_36] : memref<8x8x32xf32, #tpu.memory_space<vmem>>, vector<8x8x32xf32>
    %c0_37 = arith.constant 0 : index
    %c0_38 = arith.constant 0 : index
    %c1_39 = arith.constant 1 : index
    %c0_40 = arith.constant 0 : index
    %33 = vector.load %arg1[%c0_37, %c0_38, %c1_39, %c0_40] : memref<1x10x10x32xf32, #tpu.memory_space<vmem>>, vector<1x8x8x32xf32>
    %34 = vector.shape_cast %33 : vector<1x8x8x32xf32> to vector<8x8x32xf32>
    %c1_41 = arith.constant 1 : index
    %c0_42 = arith.constant 0 : index
    %c0_43 = arith.constant 0 : index
    %35 = vector.load %arg5[%c1_41, %c0_42, %c0_43] : memref<9x32x32xf32, #tpu.memory_space<vmem>>, vector<1x32x32xf32>
    %36 = vector.shape_cast %35 : vector<1x32x32xf32> to vector<32x32xf32>
    %cst_44 = arith.constant dense<0.000000e+00> : vector<8x8x32xf32>
    %37 = tpu.matmul %34, %36, %cst_44 {dimension_numbers = #tpu.dot_dimension_numbers<[2], [0], [0, 1], [1], [0, 0, 0, 1, 1, 1], [], []>} : vector<8x8x32xf32>, vector<32x32xf32>, vector<8x8x32xf32> -> vector<8x8x32xf32>
    %38 = arith.addf %32, %37 : vector<8x8x32xf32>
    %c0_45 = arith.constant 0 : index
    %c0_46 = arith.constant 0 : index
    %c0_47 = arith.constant 0 : index
    %39 = vector.load %arg9[%c0_45, %c0_46, %c0_47] : memref<8x8x32xf32, #tpu.memory_space<vmem>>, vector<8x8x32xf32>
    tpu.vector_store %arg9[%c0_45, %c0_46, %c0_47], %38 {strides = array<i32>} : memref<8x8x32xf32, #tpu.memory_space<vmem>>, vector<8x8x32xf32>,
    %c0_48 = arith.constant 0 : index
    %c0_49 = arith.constant 0 : index
    %c0_50 = arith.constant 0 : index
    %40 = vector.load %arg9[%c0_48, %c0_49, %c0_50] : memref<8x8x32xf32, #tpu.memory_space<vmem>>, vector<8x8x32xf32>
    %c0_51 = arith.constant 0 : index
    %c0_52 = arith.constant 0 : index
    %c2 = arith.constant 2 : index
    %c0_53 = arith.constant 0 : index
    %41 = vector.load %arg1[%c0_51, %c0_52, %c2, %c0_53] : memref<1x10x10x32xf32, #tpu.memory_space<vmem>>, vector<1x8x8x32xf32>
    %42 = vector.shape_cast %41 : vector<1x8x8x32xf32> to vector<8x8x32xf32>
    %c2_54 = arith.constant 2 : index
    %c0_55 = arith.constant 0 : index
    %c0_56 = arith.constant 0 : index
    %43 = vector.load %arg5[%c2_54, %c0_55, %c0_56] : memref<9x32x32xf32, #tpu.memory_space<vmem>>, vector<1x32x32xf32>
    %44 = vector.shape_cast %43 : vector<1x32x32xf32> to vector<32x32xf32>
    %cst_57 = arith.constant dense<0.000000e+00> : vector<8x8x32xf32>
    %45 = tpu.matmul %42, %44, %cst_57 {dimension_numbers = #tpu.dot_dimension_numbers<[2], [0], [0, 1], [1], [0, 0, 0, 1, 1, 1], [], []>} : vector<8x8x32xf32>, vector<32x32xf32>, vector<8x8x32xf32> -> vector<8x8x32xf32>
    %46 = arith.addf %40, %45 : vector<8x8x32xf32>
    %c0_58 = arith.constant 0 : index
    %c0_59 = arith.constant 0 : index
    %c0_60 = arith.constant 0 : index
    %47 = vector.load %arg9[%c0_58, %c0_59, %c0_60] : memref<8x8x32xf32, #tpu.memory_space<vmem>>, vector<8x8x32xf32>
    tpu.vector_store %arg9[%c0_58, %c0_59, %c0_60], %46 {strides = array<i32>} : memref<8x8x32xf32, #tpu.memory_space<vmem>>, vector<8x8x32xf32>,
    %c0_61 = arith.constant 0 : index
    %c0_62 = arith.constant 0 : index
    %c0_63 = arith.constant 0 : index
    %48 = vector.load %arg9[%c0_61, %c0_62, %c0_63] : memref<8x8x32xf32, #tpu.memory_space<vmem>>, vector<8x8x32xf32>
    %c0_64 = arith.constant 0 : index
    %c1_65 = arith.constant 1 : index
    %c0_66 = arith.constant 0 : index
    %c0_67 = arith.constant 0 : index
    %49 = vector.load %arg1[%c0_64, %c1_65, %c0_66, %c0_67] : memref<1x10x10x32xf32, #tpu.memory_space<vmem>>, vector<1x8x8x32xf32>
    %50 = vector.shape_cast %49 : vector<1x8x8x32xf32> to vector<8x8x32xf32>
    %c3 = arith.constant 3 : index
    %c0_68 = arith.constant 0 : index
    %c0_69 = arith.constant 0 : index
    %51 = vector.load %arg5[%c3, %c0_68, %c0_69] : memref<9x32x32xf32, #tpu.memory_space<vmem>>, vector<1x32x32xf32>
    %52 = vector.shape_cast %51 : vector<1x32x32xf32> to vector<32x32xf32>
    %cst_70 = arith.constant dense<0.000000e+00> : vector<8x8x32xf32>
    %53 = tpu.matmul %50, %52, %cst_70 {dimension_numbers = #tpu.dot_dimension_numbers<[2], [0], [0, 1], [1], [0, 0, 0, 1, 1, 1], [], []>} : vector<8x8x32xf32>, vector<32x32xf32>, vector<8x8x32xf32> -> vector<8x8x32xf32>
    %54 = arith.addf %48, %53 : vector<8x8x32xf32>
    %c0_71 = arith.constant 0 : index
    %c0_72 = arith.constant 0 : index
    %c0_73 = arith.constant 0 : index
    %55 = vector.load %arg9[%c0_71, %c0_72, %c0_73] : memref<8x8x32xf32, #tpu.memory_space<vmem>>, vector<8x8x32xf32>
    tpu.vector_store %arg9[%c0_71, %c0_72, %c0_73], %54 {strides = array<i32>} : memref<8x8x32xf32, #tpu.memory_space<vmem>>, vector<8x8x32xf32>,
    %c0_74 = arith.constant 0 : index
    %c0_75 = arith.constant 0 : index
    %c0_76 = arith.constant 0 : index
    %56 = vector.load %arg9[%c0_74, %c0_75, %c0_76] : memref<8x8x32xf32, #tpu.memory_space<vmem>>, vector<8x8x32xf32>
    %c0_77 = arith.constant 0 : index
    %c1_78 = arith.constant 1 : index
    %c1_79 = arith.constant 1 : index
    %c0_80 = arith.constant 0 : index
    %57 = vector.load %arg1[%c0_77, %c1_78, %c1_79, %c0_80] : memref<1x10x10x32xf32, #tpu.memory_space<vmem>>, vector<1x8x8x32xf32>
    %58 = vector.shape_cast %57 : vector<1x8x8x32xf32> to vector<8x8x32xf32>
    %c4 = arith.constant 4 : index
    %c0_81 = arith.constant 0 : index
    %c0_82 = arith.constant 0 : index
    %59 = vector.load %arg5[%c4, %c0_81, %c0_82] : memref<9x32x32xf32, #tpu.memory_space<vmem>>, vector<1x32x32xf32>
    %60 = vector.shape_cast %59 : vector<1x32x32xf32> to vector<32x32xf32>
    %cst_83 = arith.constant dense<0.000000e+00> : vector<8x8x32xf32>
    %61 = tpu.matmul %58, %60, %cst_83 {dimension_numbers = #tpu.dot_dimension_numbers<[2], [0], [0, 1], [1], [0, 0, 0, 1, 1, 1], [], []>} : vector<8x8x32xf32>, vector<32x32xf32>, vector<8x8x32xf32> -> vector<8x8x32xf32>
    %62 = arith.addf %56, %61 : vector<8x8x32xf32>
    %c0_84 = arith.constant 0 : index
    %c0_85 = arith.constant 0 : index
    %c0_86 = arith.constant 0 : index
    %63 = vector.load %arg9[%c0_84, %c0_85, %c0_86] : memref<8x8x32xf32, #tpu.memory_space<vmem>>, vector<8x8x32xf32>
    tpu.vector_store %arg9[%c0_84, %c0_85, %c0_86], %62 {strides = array<i32>} : memref<8x8x32xf32, #tpu.memory_space<vmem>>, vector<8x8x32xf32>,
    %c0_87 = arith.constant 0 : index
    %c0_88 = arith.constant 0 : index
    %c0_89 = arith.constant 0 : index
    %64 = vector.load %arg9[%c0_87, %c0_88, %c0_89] : memref<8x8x32xf32, #tpu.memory_space<vmem>>, vector<8x8x32xf32>
    %c0_90 = arith.constant 0 : index
    %c1_91 = arith.constant 1 : index
    %c2_92 = arith.constant 2 : index
    %c0_93 = arith.constant 0 : index
    %65 = vector.load %arg1[%c0_90, %c1_91, %c2_92, %c0_93] : memref<1x10x10x32xf32, #tpu.memory_space<vmem>>, vector<1x8x8x32xf32>
    %66 = vector.shape_cast %65 : vector<1x8x8x32xf32> to vector<8x8x32xf32>
    %c5 = arith.constant 5 : index
    %c0_94 = arith.constant 0 : index
    %c0_95 = arith.constant 0 : index
    %67 = vector.load %arg5[%c5, %c0_94, %c0_95] : memref<9x32x32xf32, #tpu.memory_space<vmem>>, vector<1x32x32xf32>
    %68 = vector.shape_cast %67 : vector<1x32x32xf32> to vector<32x32xf32>
    %cst_96 = arith.constant dense<0.000000e+00> : vector<8x8x32xf32>
    %69 = tpu.matmul %66, %68, %cst_96 {dimension_numbers = #tpu.dot_dimension_numbers<[2], [0], [0, 1], [1], [0, 0, 0, 1, 1, 1], [], []>} : vector<8x8x32xf32>, vector<32x32xf32>, vector<8x8x32xf32> -> vector<8x8x32xf32>
    %70 = arith.addf %64, %69 : vector<8x8x32xf32>
    %c0_97 = arith.constant 0 : index
    %c0_98 = arith.constant 0 : index
    %c0_99 = arith.constant 0 : index
    %71 = vector.load %arg9[%c0_97, %c0_98, %c0_99] : memref<8x8x32xf32, #tpu.memory_space<vmem>>, vector<8x8x32xf32>
    tpu.vector_store %arg9[%c0_97, %c0_98, %c0_99], %70 {strides = array<i32>} : memref<8x8x32xf32, #tpu.memory_space<vmem>>, vector<8x8x32xf32>,
    %c0_100 = arith.constant 0 : index
    %c0_101 = arith.constant 0 : index
    %c0_102 = arith.constant 0 : index
    %72 = vector.load %arg9[%c0_100, %c0_101, %c0_102] : memref<8x8x32xf32, #tpu.memory_space<vmem>>, vector<8x8x32xf32>
    %c0_103 = arith.constant 0 : index
    %c2_104 = arith.constant 2 : index
    %c0_105 = arith.constant 0 : index
    %c0_106 = arith.constant 0 : index
    %73 = vector.load %arg1[%c0_103, %c2_104, %c0_105, %c0_106] : memref<1x10x10x32xf32, #tpu.memory_space<vmem>>, vector<1x8x8x32xf32>
    %74 = vector.shape_cast %73 : vector<1x8x8x32xf32> to vector<8x8x32xf32>
    %c6 = arith.constant 6 : index
    %c0_107 = arith.constant 0 : index
    %c0_108 = arith.constant 0 : index
    %75 = vector.load %arg5[%c6, %c0_107, %c0_108] : memref<9x32x32xf32, #tpu.memory_space<vmem>>, vector<1x32x32xf32>
    %76 = vector.shape_cast %75 : vector<1x32x32xf32> to vector<32x32xf32>
    %cst_109 = arith.constant dense<0.000000e+00> : vector<8x8x32xf32>
    %77 = tpu.matmul %74, %76, %cst_109 {dimension_numbers = #tpu.dot_dimension_numbers<[2], [0], [0, 1], [1], [0, 0, 0, 1, 1, 1], [], []>} : vector<8x8x32xf32>, vector<32x32xf32>, vector<8x8x32xf32> -> vector<8x8x32xf32>
    %78 = arith.addf %72, %77 : vector<8x8x32xf32>
    %c0_110 = arith.constant 0 : index
    %c0_111 = arith.constant 0 : index
    %c0_112 = arith.constant 0 : index
    %79 = vector.load %arg9[%c0_110, %c0_111, %c0_112] : memref<8x8x32xf32, #tpu.memory_space<vmem>>, vector<8x8x32xf32>
    tpu.vector_store %arg9[%c0_110, %c0_111, %c0_112], %78 {strides = array<i32>} : memref<8x8x32xf32, #tpu.memory_space<vmem>>, vector<8x8x32xf32>,
    %c0_113 = arith.constant 0 : index
    %c0_114 = arith.constant 0 : index
    %c0_115 = arith.constant 0 : index
    %80 = vector.load %arg9[%c0_113, %c0_114, %c0_115] : memref<8x8x32xf32, #tpu.memory_space<vmem>>, vector<8x8x32xf32>
    %c0_116 = arith.constant 0 : index
    %c2_117 = arith.constant 2 : index
    %c1_118 = arith.constant 1 : index
    %c0_119 = arith.constant 0 : index
    %81 = vector.load %arg1[%c0_116, %c2_117, %c1_118, %c0_119] : memref<1x10x10x32xf32, #tpu.memory_space<vmem>>, vector<1x8x8x32xf32>
    %82 = vector.shape_cast %81 : vector<1x8x8x32xf32> to vector<8x8x32xf32>
    %c7 = arith.constant 7 : index
    %c0_120 = arith.constant 0 : index
    %c0_121 = arith.constant 0 : index
    %83 = vector.load %arg5[%c7, %c0_120, %c0_121] : memref<9x32x32xf32, #tpu.memory_space<vmem>>, vector<1x32x32xf32>
    %84 = vector.shape_cast %83 : vector<1x32x32xf32> to vector<32x32xf32>
    %cst_122 = arith.constant dense<0.000000e+00> : vector<8x8x32xf32>
    %85 = tpu.matmul %82, %84, %cst_122 {dimension_numbers = #tpu.dot_dimension_numbers<[2], [0], [0, 1], [1], [0, 0, 0, 1, 1, 1], [], []>} : vector<8x8x32xf32>, vector<32x32xf32>, vector<8x8x32xf32> -> vector<8x8x32xf32>
    %86 = arith.addf %80, %85 : vector<8x8x32xf32>
    %c0_123 = arith.constant 0 : index
    %c0_124 = arith.constant 0 : index
    %c0_125 = arith.constant 0 : index
    %87 = vector.load %arg9[%c0_123, %c0_124, %c0_125] : memref<8x8x32xf32, #tpu.memory_space<vmem>>, vector<8x8x32xf32>
    tpu.vector_store %arg9[%c0_123, %c0_124, %c0_125], %86 {strides = array<i32>} : memref<8x8x32xf32, #tpu.memory_space<vmem>>, vector<8x8x32xf32>,
    %c0_126 = arith.constant 0 : index
    %c0_127 = arith.constant 0 : index
    %c0_128 = arith.constant 0 : index
    %88 = vector.load %arg9[%c0_126, %c0_127, %c0_128] : memref<8x8x32xf32, #tpu.memory_space<vmem>>, vector<8x8x32xf32>
    %c0_129 = arith.constant 0 : index
    %c2_130 = arith.constant 2 : index
    %c2_131 = arith.constant 2 : index
    %c0_132 = arith.constant 0 : index
    %89 = vector.load %arg1[%c0_129, %c2_130, %c2_131, %c0_132] : memref<1x10x10x32xf32, #tpu.memory_space<vmem>>, vector<1x8x8x32xf32>
    %90 = vector.shape_cast %89 : vector<1x8x8x32xf32> to vector<8x8x32xf32>
    %c8 = arith.constant 8 : index
    %c0_133 = arith.constant 0 : index
    %c0_134 = arith.constant 0 : index
    %91 = vector.load %arg5[%c8, %c0_133, %c0_134] : memref<9x32x32xf32, #tpu.memory_space<vmem>>, vector<1x32x32xf32>
    %92 = vector.shape_cast %91 : vector<1x32x32xf32> to vector<32x32xf32>
    %cst_135 = arith.constant dense<0.000000e+00> : vector<8x8x32xf32>
    %93 = tpu.matmul %90, %92, %cst_135 {dimension_numbers = #tpu.dot_dimension_numbers<[2], [0], [0, 1], [1], [0, 0, 0, 1, 1, 1], [], []>} : vector<8x8x32xf32>, vector<32x32xf32>, vector<8x8x32xf32> -> vector<8x8x32xf32>
    %94 = arith.addf %88, %93 : vector<8x8x32xf32>
    %c0_136 = arith.constant 0 : index
    %c0_137 = arith.constant 0 : index
    %c0_138 = arith.constant 0 : index
    %95 = vector.load %arg9[%c0_136, %c0_137, %c0_138] : memref<8x8x32xf32, #tpu.memory_space<vmem>>, vector<8x8x32xf32>
    tpu.vector_store %arg9[%c0_136, %c0_137, %c0_138], %94 {strides = array<i32>} : memref<8x8x32xf32, #tpu.memory_space<vmem>>, vector<8x8x32xf32>,
    %c0_139 = arith.constant 0 : index
    %c0_140 = arith.constant 0 : index
    %c0_141 = arith.constant 0 : index
    %96 = vector.load %arg9[%c0_139, %c0_140, %c0_141] : memref<8x8x32xf32, #tpu.memory_space<vmem>>, vector<8x8x32xf32>
    %97 = vector.extract_strided_slice %0 {offsets = [2, 0], sizes = [1, 32], strides = [1, 1]} : vector<8x32xf32> to vector<1x32xf32>
    %98 = vector.shape_cast %97 : vector<1x32xf32> to vector<1x1x32xf32>
    %99 = vector.broadcast %98 : vector<1x1x32xf32> to vector<8x8x32xf32>
    %100 = arith.mulf %96, %99 : vector<8x8x32xf32>
    %101 = vector.extract_strided_slice %0 {offsets = [3, 0], sizes = [1, 32], strides = [1, 1]} : vector<8x32xf32> to vector<1x32xf32>
    %102 = vector.shape_cast %101 : vector<1x32xf32> to vector<1x1x32xf32>
    %103 = vector.broadcast %102 : vector<1x1x32xf32> to vector<8x8x32xf32>
    %104 = arith.addf %100, %103 : vector<8x8x32xf32>
    %105 = vector.shape_cast %21 : vector<1x32xf32> to vector<1x1x32xf32>
    %106 = vector.broadcast %105 : vector<1x1x32xf32> to vector<8x8x32xf32>
    %107 = arith.mulf %104, %106 : vector<8x8x32xf32>
    %cst_142 = arith.constant 0.000000e+00 : f32
    %108 = vector.broadcast %cst_142 : f32 to vector<16x8x32xf32>
    %c0_143 = arith.constant 0 : index
    %c0_144 = arith.constant 0 : index
    %c0_145 = arith.constant 0 : index
    %109 = vector.load %arg10[%c0_143, %c0_144, %c0_145] : memref<16x8x32xf32, #tpu.memory_space<vmem>>, vector<16x8x32xf32>
    tpu.vector_store %arg10[%c0_143, %c0_144, %c0_145], %108 {strides = array<i32>} : memref<16x8x32xf32, #tpu.memory_space<vmem>>, vector<16x8x32xf32>,
    %cst_146 = arith.constant 0.000000e+00 : f32
    %110 = vector.broadcast %cst_146 : f32 to vector<16x8x32xf32>
    %c0_147 = arith.constant 0 : index
    %c0_148 = arith.constant 0 : index
    %c0_149 = arith.constant 0 : index
    %111 = vector.load %arg11[%c0_147, %c0_148, %c0_149] : memref<16x8x32xf32, #tpu.memory_space<vmem>>, vector<16x8x32xf32>
    tpu.vector_store %arg11[%c0_147, %c0_148, %c0_149], %110 {strides = array<i32>} : memref<16x8x32xf32, #tpu.memory_space<vmem>>, vector<16x8x32xf32>,
    %c0_150 = arith.constant 0 : index
    %c0_151 = arith.constant 0 : index
    %c0_152 = arith.constant 0 : index
    %112 = vector.load %arg10[%c0_150, %c0_151, %c0_152] : memref<16x8x32xf32, #tpu.memory_space<vmem>>, vector<16x8x32xf32>
    %c0_153 = arith.constant 0 : index
    %c0_154 = arith.constant 0 : index
    %c0_155 = arith.constant 0 : index
    %c0_156 = arith.constant 0 : index
    %113 = vector.load %arg2[%c0_153, %c0_154, %c0_155, %c0_156] : memref<1x18x9x16xf32, #tpu.memory_space<vmem>>, vector<1x16x8x16xf32>
    %114 = vector.shape_cast %113 : vector<1x16x8x16xf32> to vector<16x8x16xf32>
    %c0_157 = arith.constant 0 : index
    %c0_158 = arith.constant 0 : index
    %c0_159 = arith.constant 0 : index
    %115 = vector.load %arg6[%c0_157, %c0_158, %c0_159] : memref<9x16x32xf32, #tpu.memory_space<vmem>>, vector<1x16x32xf32>
    %116 = vector.shape_cast %115 : vector<1x16x32xf32> to vector<16x32xf32>
    %cst_160 = arith.constant dense<0.000000e+00> : vector<16x8x32xf32>
    %117 = tpu.matmul %114, %116, %cst_160 {dimension_numbers = #tpu.dot_dimension_numbers<[2], [0], [0, 1], [1], [0, 0, 0, 1, 1, 1], [], []>} : vector<16x8x16xf32>, vector<16x32xf32>, vector<16x8x32xf32> -> vector<16x8x32xf32>
    %118 = arith.addf %112, %117 : vector<16x8x32xf32>
    %c0_161 = arith.constant 0 : index
    %c0_162 = arith.constant 0 : index
    %c0_163 = arith.constant 0 : index
    %119 = vector.load %arg10[%c0_161, %c0_162, %c0_163] : memref<16x8x32xf32, #tpu.memory_space<vmem>>, vector<16x8x32xf32>
    tpu.vector_store %arg10[%c0_161, %c0_162, %c0_163], %118 {strides = array<i32>} : memref<16x8x32xf32, #tpu.memory_space<vmem>>, vector<16x8x32xf32>,
    %c0_164 = arith.constant 0 : index
    %c0_165 = arith.constant 0 : index
    %c0_166 = arith.constant 0 : index
    %120 = vector.load %arg10[%c0_164, %c0_165, %c0_166] : memref<16x8x32xf32, #tpu.memory_space<vmem>>, vector<16x8x32xf32>
    %c0_167 = arith.constant 0 : index
    %c0_168 = arith.constant 0 : index
    %c0_169 = arith.constant 0 : index
    %c0_170 = arith.constant 0 : index
    %121 = vector.load %arg3[%c0_167, %c0_168, %c0_169, %c0_170] : memref<1x18x9x16xf32, #tpu.memory_space<vmem>>, vector<1x16x8x16xf32>
    %122 = vector.shape_cast %121 : vector<1x16x8x16xf32> to vector<16x8x16xf32>
    %c1_171 = arith.constant 1 : index
    %c0_172 = arith.constant 0 : index
    %c0_173 = arith.constant 0 : index
    %123 = vector.load %arg6[%c1_171, %c0_172, %c0_173] : memref<9x16x32xf32, #tpu.memory_space<vmem>>, vector<1x16x32xf32>
    %124 = vector.shape_cast %123 : vector<1x16x32xf32> to vector<16x32xf32>
    %cst_174 = arith.constant dense<0.000000e+00> : vector<16x8x32xf32>
    %125 = tpu.matmul %122, %124, %cst_174 {dimension_numbers = #tpu.dot_dimension_numbers<[2], [0], [0, 1], [1], [0, 0, 0, 1, 1, 1], [], []>} : vector<16x8x16xf32>, vector<16x32xf32>, vector<16x8x32xf32> -> vector<16x8x32xf32>
    %126 = arith.addf %120, %125 : vector<16x8x32xf32>
    %c0_175 = arith.constant 0 : index
    %c0_176 = arith.constant 0 : index
    %c0_177 = arith.constant 0 : index
    %127 = vector.load %arg10[%c0_175, %c0_176, %c0_177] : memref<16x8x32xf32, #tpu.memory_space<vmem>>, vector<16x8x32xf32>
    tpu.vector_store %arg10[%c0_175, %c0_176, %c0_177], %126 {strides = array<i32>} : memref<16x8x32xf32, #tpu.memory_space<vmem>>, vector<16x8x32xf32>,
    %c0_178 = arith.constant 0 : index
    %c0_179 = arith.constant 0 : index
    %c0_180 = arith.constant 0 : index
    %128 = vector.load %arg10[%c0_178, %c0_179, %c0_180] : memref<16x8x32xf32, #tpu.memory_space<vmem>>, vector<16x8x32xf32>
    %c0_181 = arith.constant 0 : index
    %c0_182 = arith.constant 0 : index
    %c1_183 = arith.constant 1 : index
    %c0_184 = arith.constant 0 : index
    %129 = vector.load %arg2[%c0_181, %c0_182, %c1_183, %c0_184] : memref<1x18x9x16xf32, #tpu.memory_space<vmem>>, vector<1x16x8x16xf32>
    %130 = vector.shape_cast %129 : vector<1x16x8x16xf32> to vector<16x8x16xf32>
    %c2_185 = arith.constant 2 : index
    %c0_186 = arith.constant 0 : index
    %c0_187 = arith.constant 0 : index
    %131 = vector.load %arg6[%c2_185, %c0_186, %c0_187] : memref<9x16x32xf32, #tpu.memory_space<vmem>>, vector<1x16x32xf32>
    %132 = vector.shape_cast %131 : vector<1x16x32xf32> to vector<16x32xf32>
    %cst_188 = arith.constant dense<0.000000e+00> : vector<16x8x32xf32>
    %133 = tpu.matmul %130, %132, %cst_188 {dimension_numbers = #tpu.dot_dimension_numbers<[2], [0], [0, 1], [1], [0, 0, 0, 1, 1, 1], [], []>} : vector<16x8x16xf32>, vector<16x32xf32>, vector<16x8x32xf32> -> vector<16x8x32xf32>
    %134 = arith.addf %128, %133 : vector<16x8x32xf32>
    %c0_189 = arith.constant 0 : index
    %c0_190 = arith.constant 0 : index
    %c0_191 = arith.constant 0 : index
    %135 = vector.load %arg10[%c0_189, %c0_190, %c0_191] : memref<16x8x32xf32, #tpu.memory_space<vmem>>, vector<16x8x32xf32>
    tpu.vector_store %arg10[%c0_189, %c0_190, %c0_191], %134 {strides = array<i32>} : memref<16x8x32xf32, #tpu.memory_space<vmem>>, vector<16x8x32xf32>,
    %c0_192 = arith.constant 0 : index
    %c0_193 = arith.constant 0 : index
    %c0_194 = arith.constant 0 : index
    %136 = vector.load %arg11[%c0_192, %c0_193, %c0_194] : memref<16x8x32xf32, #tpu.memory_space<vmem>>, vector<16x8x32xf32>
    %c0_195 = arith.constant 0 : index
    %c0_196 = arith.constant 0 : index
    %c0_197 = arith.constant 0 : index
    %c0_198 = arith.constant 0 : index
    %137 = vector.load %arg3[%c0_195, %c0_196, %c0_197, %c0_198] : memref<1x18x9x16xf32, #tpu.memory_space<vmem>>, vector<1x16x8x16xf32>
    %138 = vector.shape_cast %137 : vector<1x16x8x16xf32> to vector<16x8x16xf32>
    %c0_199 = arith.constant 0 : index
    %c0_200 = arith.constant 0 : index
    %c0_201 = arith.constant 0 : index
    %139 = vector.load %arg6[%c0_199, %c0_200, %c0_201] : memref<9x16x32xf32, #tpu.memory_space<vmem>>, vector<1x16x32xf32>
    %140 = vector.shape_cast %139 : vector<1x16x32xf32> to vector<16x32xf32>
    %cst_202 = arith.constant dense<0.000000e+00> : vector<16x8x32xf32>
    %141 = tpu.matmul %138, %140, %cst_202 {dimension_numbers = #tpu.dot_dimension_numbers<[2], [0], [0, 1], [1], [0, 0, 0, 1, 1, 1], [], []>} : vector<16x8x16xf32>, vector<16x32xf32>, vector<16x8x32xf32> -> vector<16x8x32xf32>
    %142 = arith.addf %136, %141 : vector<16x8x32xf32>
    %c0_203 = arith.constant 0 : index
    %c0_204 = arith.constant 0 : index
    %c0_205 = arith.constant 0 : index
    %143 = vector.load %arg11[%c0_203, %c0_204, %c0_205] : memref<16x8x32xf32, #tpu.memory_space<vmem>>, vector<16x8x32xf32>
    tpu.vector_store %arg11[%c0_203, %c0_204, %c0_205], %142 {strides = array<i32>} : memref<16x8x32xf32, #tpu.memory_space<vmem>>, vector<16x8x32xf32>,
    %c0_206 = arith.constant 0 : index
    %c0_207 = arith.constant 0 : index
    %c0_208 = arith.constant 0 : index
    %144 = vector.load %arg11[%c0_206, %c0_207, %c0_208] : memref<16x8x32xf32, #tpu.memory_space<vmem>>, vector<16x8x32xf32>
    %c0_209 = arith.constant 0 : index
    %c0_210 = arith.constant 0 : index
    %c1_211 = arith.constant 1 : index
    %c0_212 = arith.constant 0 : index
    %145 = vector.load %arg2[%c0_209, %c0_210, %c1_211, %c0_212] : memref<1x18x9x16xf32, #tpu.memory_space<vmem>>, vector<1x16x8x16xf32>
    %146 = vector.shape_cast %145 : vector<1x16x8x16xf32> to vector<16x8x16xf32>
    %c1_213 = arith.constant 1 : index
    %c0_214 = arith.constant 0 : index
    %c0_215 = arith.constant 0 : index
    %147 = vector.load %arg6[%c1_213, %c0_214, %c0_215] : memref<9x16x32xf32, #tpu.memory_space<vmem>>, vector<1x16x32xf32>
    %148 = vector.shape_cast %147 : vector<1x16x32xf32> to vector<16x32xf32>
    %cst_216 = arith.constant dense<0.000000e+00> : vector<16x8x32xf32>
    %149 = tpu.matmul %146, %148, %cst_216 {dimension_numbers = #tpu.dot_dimension_numbers<[2], [0], [0, 1], [1], [0, 0, 0, 1, 1, 1], [], []>} : vector<16x8x16xf32>, vector<16x32xf32>, vector<16x8x32xf32> -> vector<16x8x32xf32>
    %150 = arith.addf %144, %149 : vector<16x8x32xf32>
    %c0_217 = arith.constant 0 : index
    %c0_218 = arith.constant 0 : index
    %c0_219 = arith.constant 0 : index
    %151 = vector.load %arg11[%c0_217, %c0_218, %c0_219] : memref<16x8x32xf32, #tpu.memory_space<vmem>>, vector<16x8x32xf32>
    tpu.vector_store %arg11[%c0_217, %c0_218, %c0_219], %150 {strides = array<i32>} : memref<16x8x32xf32, #tpu.memory_space<vmem>>, vector<16x8x32xf32>,
    %c0_220 = arith.constant 0 : index
    %c0_221 = arith.constant 0 : index
    %c0_222 = arith.constant 0 : index
    %152 = vector.load %arg11[%c0_220, %c0_221, %c0_222] : memref<16x8x32xf32, #tpu.memory_space<vmem>>, vector<16x8x32xf32>
    %c0_223 = arith.constant 0 : index
    %c0_224 = arith.constant 0 : index
    %c1_225 = arith.constant 1 : index
    %c0_226 = arith.constant 0 : index
    %153 = vector.load %arg3[%c0_223, %c0_224, %c1_225, %c0_226] : memref<1x18x9x16xf32, #tpu.memory_space<vmem>>, vector<1x16x8x16xf32>
    %154 = vector.shape_cast %153 : vector<1x16x8x16xf32> to vector<16x8x16xf32>
    %c2_227 = arith.constant 2 : index
    %c0_228 = arith.constant 0 : index
    %c0_229 = arith.constant 0 : index
    %155 = vector.load %arg6[%c2_227, %c0_228, %c0_229] : memref<9x16x32xf32, #tpu.memory_space<vmem>>, vector<1x16x32xf32>
    %156 = vector.shape_cast %155 : vector<1x16x32xf32> to vector<16x32xf32>
    %cst_230 = arith.constant dense<0.000000e+00> : vector<16x8x32xf32>
    %157 = tpu.matmul %154, %156, %cst_230 {dimension_numbers = #tpu.dot_dimension_numbers<[2], [0], [0, 1], [1], [0, 0, 0, 1, 1, 1], [], []>} : vector<16x8x16xf32>, vector<16x32xf32>, vector<16x8x32xf32> -> vector<16x8x32xf32>
    %158 = arith.addf %152, %157 : vector<16x8x32xf32>
    %c0_231 = arith.constant 0 : index
    %c0_232 = arith.constant 0 : index
    %c0_233 = arith.constant 0 : index
    %159 = vector.load %arg11[%c0_231, %c0_232, %c0_233] : memref<16x8x32xf32, #tpu.memory_space<vmem>>, vector<16x8x32xf32>
    tpu.vector_store %arg11[%c0_231, %c0_232, %c0_233], %158 {strides = array<i32>} : memref<16x8x32xf32, #tpu.memory_space<vmem>>, vector<16x8x32xf32>,
    %c0_234 = arith.constant 0 : index
    %c0_235 = arith.constant 0 : index
    %c0_236 = arith.constant 0 : index
    %160 = vector.load %arg10[%c0_234, %c0_235, %c0_236] : memref<16x8x32xf32, #tpu.memory_space<vmem>>, vector<16x8x32xf32>
    %c0_237 = arith.constant 0 : index
    %c1_238 = arith.constant 1 : index
    %c0_239 = arith.constant 0 : index
    %c0_240 = arith.constant 0 : index
    %161 = vector.load %arg2[%c0_237, %c1_238, %c0_239, %c0_240] : memref<1x18x9x16xf32, #tpu.memory_space<vmem>>, vector<1x16x8x16xf32>
    %162 = vector.shape_cast %161 : vector<1x16x8x16xf32> to vector<16x8x16xf32>
    %c3_241 = arith.constant 3 : index
    %c0_242 = arith.constant 0 : index
    %c0_243 = arith.constant 0 : index
    %163 = vector.load %arg6[%c3_241, %c0_242, %c0_243] : memref<9x16x32xf32, #tpu.memory_space<vmem>>, vector<1x16x32xf32>
    %164 = vector.shape_cast %163 : vector<1x16x32xf32> to vector<16x32xf32>
    %cst_244 = arith.constant dense<0.000000e+00> : vector<16x8x32xf32>
    %165 = tpu.matmul %162, %164, %cst_244 {dimension_numbers = #tpu.dot_dimension_numbers<[2], [0], [0, 1], [1], [0, 0, 0, 1, 1, 1], [], []>} : vector<16x8x16xf32>, vector<16x32xf32>, vector<16x8x32xf32> -> vector<16x8x32xf32>
    %166 = arith.addf %160, %165 : vector<16x8x32xf32>
    %c0_245 = arith.constant 0 : index
    %c0_246 = arith.constant 0 : index
    %c0_247 = arith.constant 0 : index
    %167 = vector.load %arg10[%c0_245, %c0_246, %c0_247] : memref<16x8x32xf32, #tpu.memory_space<vmem>>, vector<16x8x32xf32>
    tpu.vector_store %arg10[%c0_245, %c0_246, %c0_247], %166 {strides = array<i32>} : memref<16x8x32xf32, #tpu.memory_space<vmem>>, vector<16x8x32xf32>,
    %c0_248 = arith.constant 0 : index
    %c0_249 = arith.constant 0 : index
    %c0_250 = arith.constant 0 : index
    %168 = vector.load %arg10[%c0_248, %c0_249, %c0_250] : memref<16x8x32xf32, #tpu.memory_space<vmem>>, vector<16x8x32xf32>
    %c0_251 = arith.constant 0 : index
    %c1_252 = arith.constant 1 : index
    %c0_253 = arith.constant 0 : index
    %c0_254 = arith.constant 0 : index
    %169 = vector.load %arg3[%c0_251, %c1_252, %c0_253, %c0_254] : memref<1x18x9x16xf32, #tpu.memory_space<vmem>>, vector<1x16x8x16xf32>
    %170 = vector.shape_cast %169 : vector<1x16x8x16xf32> to vector<16x8x16xf32>
    %c4_255 = arith.constant 4 : index
    %c0_256 = arith.constant 0 : index
    %c0_257 = arith.constant 0 : index
    %171 = vector.load %arg6[%c4_255, %c0_256, %c0_257] : memref<9x16x32xf32, #tpu.memory_space<vmem>>, vector<1x16x32xf32>
    %172 = vector.shape_cast %171 : vector<1x16x32xf32> to vector<16x32xf32>
    %cst_258 = arith.constant dense<0.000000e+00> : vector<16x8x32xf32>
    %173 = tpu.matmul %170, %172, %cst_258 {dimension_numbers = #tpu.dot_dimension_numbers<[2], [0], [0, 1], [1], [0, 0, 0, 1, 1, 1], [], []>} : vector<16x8x16xf32>, vector<16x32xf32>, vector<16x8x32xf32> -> vector<16x8x32xf32>
    %174 = arith.addf %168, %173 : vector<16x8x32xf32>
    %c0_259 = arith.constant 0 : index
    %c0_260 = arith.constant 0 : index
    %c0_261 = arith.constant 0 : index
    %175 = vector.load %arg10[%c0_259, %c0_260, %c0_261] : memref<16x8x32xf32, #tpu.memory_space<vmem>>, vector<16x8x32xf32>
    tpu.vector_store %arg10[%c0_259, %c0_260, %c0_261], %174 {strides = array<i32>} : memref<16x8x32xf32, #tpu.memory_space<vmem>>, vector<16x8x32xf32>,
    %c0_262 = arith.constant 0 : index
    %c0_263 = arith.constant 0 : index
    %c0_264 = arith.constant 0 : index
    %176 = vector.load %arg10[%c0_262, %c0_263, %c0_264] : memref<16x8x32xf32, #tpu.memory_space<vmem>>, vector<16x8x32xf32>
    %c0_265 = arith.constant 0 : index
    %c1_266 = arith.constant 1 : index
    %c1_267 = arith.constant 1 : index
    %c0_268 = arith.constant 0 : index
    %177 = vector.load %arg2[%c0_265, %c1_266, %c1_267, %c0_268] : memref<1x18x9x16xf32, #tpu.memory_space<vmem>>, vector<1x16x8x16xf32>
    %178 = vector.shape_cast %177 : vector<1x16x8x16xf32> to vector<16x8x16xf32>
    %c5_269 = arith.constant 5 : index
    %c0_270 = arith.constant 0 : index
    %c0_271 = arith.constant 0 : index
    %179 = vector.load %arg6[%c5_269, %c0_270, %c0_271] : memref<9x16x32xf32, #tpu.memory_space<vmem>>, vector<1x16x32xf32>
    %180 = vector.shape_cast %179 : vector<1x16x32xf32> to vector<16x32xf32>
    %cst_272 = arith.constant dense<0.000000e+00> : vector<16x8x32xf32>
    %181 = tpu.matmul %178, %180, %cst_272 {dimension_numbers = #tpu.dot_dimension_numbers<[2], [0], [0, 1], [1], [0, 0, 0, 1, 1, 1], [], []>} : vector<16x8x16xf32>, vector<16x32xf32>, vector<16x8x32xf32> -> vector<16x8x32xf32>
    %182 = arith.addf %176, %181 : vector<16x8x32xf32>
    %c0_273 = arith.constant 0 : index
    %c0_274 = arith.constant 0 : index
    %c0_275 = arith.constant 0 : index
    %183 = vector.load %arg10[%c0_273, %c0_274, %c0_275] : memref<16x8x32xf32, #tpu.memory_space<vmem>>, vector<16x8x32xf32>
    tpu.vector_store %arg10[%c0_273, %c0_274, %c0_275], %182 {strides = array<i32>} : memref<16x8x32xf32, #tpu.memory_space<vmem>>, vector<16x8x32xf32>,
    %c0_276 = arith.constant 0 : index
    %c0_277 = arith.constant 0 : index
    %c0_278 = arith.constant 0 : index
    %184 = vector.load %arg11[%c0_276, %c0_277, %c0_278] : memref<16x8x32xf32, #tpu.memory_space<vmem>>, vector<16x8x32xf32>
    %c0_279 = arith.constant 0 : index
    %c1_280 = arith.constant 1 : index
    %c0_281 = arith.constant 0 : index
    %c0_282 = arith.constant 0 : index
    %185 = vector.load %arg3[%c0_279, %c1_280, %c0_281, %c0_282] : memref<1x18x9x16xf32, #tpu.memory_space<vmem>>, vector<1x16x8x16xf32>
    %186 = vector.shape_cast %185 : vector<1x16x8x16xf32> to vector<16x8x16xf32>
    %c3_283 = arith.constant 3 : index
    %c0_284 = arith.constant 0 : index
    %c0_285 = arith.constant 0 : index
    %187 = vector.load %arg6[%c3_283, %c0_284, %c0_285] : memref<9x16x32xf32, #tpu.memory_space<vmem>>, vector<1x16x32xf32>
    %188 = vector.shape_cast %187 : vector<1x16x32xf32> to vector<16x32xf32>
    %cst_286 = arith.constant dense<0.000000e+00> : vector<16x8x32xf32>
    %189 = tpu.matmul %186, %188, %cst_286 {dimension_numbers = #tpu.dot_dimension_numbers<[2], [0], [0, 1], [1], [0, 0, 0, 1, 1, 1], [], []>} : vector<16x8x16xf32>, vector<16x32xf32>, vector<16x8x32xf32> -> vector<16x8x32xf32>
    %190 = arith.addf %184, %189 : vector<16x8x32xf32>
    %c0_287 = arith.constant 0 : index
    %c0_288 = arith.constant 0 : index
    %c0_289 = arith.constant 0 : index
    %191 = vector.load %arg11[%c0_287, %c0_288, %c0_289] : memref<16x8x32xf32, #tpu.memory_space<vmem>>, vector<16x8x32xf32>
    tpu.vector_store %arg11[%c0_287, %c0_288, %c0_289], %190 {strides = array<i32>} : memref<16x8x32xf32, #tpu.memory_space<vmem>>, vector<16x8x32xf32>,
    %c0_290 = arith.constant 0 : index
    %c0_291 = arith.constant 0 : index
    %c0_292 = arith.constant 0 : index
    %192 = vector.load %arg11[%c0_290, %c0_291, %c0_292] : memref<16x8x32xf32, #tpu.memory_space<vmem>>, vector<16x8x32xf32>
    %c0_293 = arith.constant 0 : index
    %c1_294 = arith.constant 1 : index
    %c1_295 = arith.constant 1 : index
    %c0_296 = arith.constant 0 : index
    %193 = vector.load %arg2[%c0_293, %c1_294, %c1_295, %c0_296] : memref<1x18x9x16xf32, #tpu.memory_space<vmem>>, vector<1x16x8x16xf32>
    %194 = vector.shape_cast %193 : vector<1x16x8x16xf32> to vector<16x8x16xf32>
    %c4_297 = arith.constant 4 : index
    %c0_298 = arith.constant 0 : index
    %c0_299 = arith.constant 0 : index
    %195 = vector.load %arg6[%c4_297, %c0_298, %c0_299] : memref<9x16x32xf32, #tpu.memory_space<vmem>>, vector<1x16x32xf32>
    %196 = vector.shape_cast %195 : vector<1x16x32xf32> to vector<16x32xf32>
    %cst_300 = arith.constant dense<0.000000e+00> : vector<16x8x32xf32>
    %197 = tpu.matmul %194, %196, %cst_300 {dimension_numbers = #tpu.dot_dimension_numbers<[2], [0], [0, 1], [1], [0, 0, 0, 1, 1, 1], [], []>} : vector<16x8x16xf32>, vector<16x32xf32>, vector<16x8x32xf32> -> vector<16x8x32xf32>
    %198 = arith.addf %192, %197 : vector<16x8x32xf32>
    %c0_301 = arith.constant 0 : index
    %c0_302 = arith.constant 0 : index
    %c0_303 = arith.constant 0 : index
    %199 = vector.load %arg11[%c0_301, %c0_302, %c0_303] : memref<16x8x32xf32, #tpu.memory_space<vmem>>, vector<16x8x32xf32>
    tpu.vector_store %arg11[%c0_301, %c0_302, %c0_303], %198 {strides = array<i32>} : memref<16x8x32xf32, #tpu.memory_space<vmem>>, vector<16x8x32xf32>,
    %c0_304 = arith.constant 0 : index
    %c0_305 = arith.constant 0 : index
    %c0_306 = arith.constant 0 : index
    %200 = vector.load %arg11[%c0_304, %c0_305, %c0_306] : memref<16x8x32xf32, #tpu.memory_space<vmem>>, vector<16x8x32xf32>
    %c0_307 = arith.constant 0 : index
    %c1_308 = arith.constant 1 : index
    %c1_309 = arith.constant 1 : index
    %c0_310 = arith.constant 0 : index
    %201 = vector.load %arg3[%c0_307, %c1_308, %c1_309, %c0_310] : memref<1x18x9x16xf32, #tpu.memory_space<vmem>>, vector<1x16x8x16xf32>
    %202 = vector.shape_cast %201 : vector<1x16x8x16xf32> to vector<16x8x16xf32>
    %c5_311 = arith.constant 5 : index
    %c0_312 = arith.constant 0 : index
    %c0_313 = arith.constant 0 : index
    %203 = vector.load %arg6[%c5_311, %c0_312, %c0_313] : memref<9x16x32xf32, #tpu.memory_space<vmem>>, vector<1x16x32xf32>
    %204 = vector.shape_cast %203 : vector<1x16x32xf32> to vector<16x32xf32>
    %cst_314 = arith.constant dense<0.000000e+00> : vector<16x8x32xf32>
    %205 = tpu.matmul %202, %204, %cst_314 {dimension_numbers = #tpu.dot_dimension_numbers<[2], [0], [0, 1], [1], [0, 0, 0, 1, 1, 1], [], []>} : vector<16x8x16xf32>, vector<16x32xf32>, vector<16x8x32xf32> -> vector<16x8x32xf32>
    %206 = arith.addf %200, %205 : vector<16x8x32xf32>
    %c0_315 = arith.constant 0 : index
    %c0_316 = arith.constant 0 : index
    %c0_317 = arith.constant 0 : index
    %207 = vector.load %arg11[%c0_315, %c0_316, %c0_317] : memref<16x8x32xf32, #tpu.memory_space<vmem>>, vector<16x8x32xf32>
    tpu.vector_store %arg11[%c0_315, %c0_316, %c0_317], %206 {strides = array<i32>} : memref<16x8x32xf32, #tpu.memory_space<vmem>>, vector<16x8x32xf32>,
    %c0_318 = arith.constant 0 : index
    %c0_319 = arith.constant 0 : index
    %c0_320 = arith.constant 0 : index
    %208 = vector.load %arg10[%c0_318, %c0_319, %c0_320] : memref<16x8x32xf32, #tpu.memory_space<vmem>>, vector<16x8x32xf32>
    %c0_321 = arith.constant 0 : index
    %c2_322 = arith.constant 2 : index
    %c0_323 = arith.constant 0 : index
    %c0_324 = arith.constant 0 : index
    %209 = vector.load %arg2[%c0_321, %c2_322, %c0_323, %c0_324] : memref<1x18x9x16xf32, #tpu.memory_space<vmem>>, vector<1x16x8x16xf32>
    %210 = vector.shape_cast %209 : vector<1x16x8x16xf32> to vector<16x8x16xf32>
    %c6_325 = arith.constant 6 : index
    %c0_326 = arith.constant 0 : index
    %c0_327 = arith.constant 0 : index
    %211 = vector.load %arg6[%c6_325, %c0_326, %c0_327] : memref<9x16x32xf32, #tpu.memory_space<vmem>>, vector<1x16x32xf32>
    %212 = vector.shape_cast %211 : vector<1x16x32xf32> to vector<16x32xf32>
    %cst_328 = arith.constant dense<0.000000e+00> : vector<16x8x32xf32>
    %213 = tpu.matmul %210, %212, %cst_328 {dimension_numbers = #tpu.dot_dimension_numbers<[2], [0], [0, 1], [1], [0, 0, 0, 1, 1, 1], [], []>} : vector<16x8x16xf32>, vector<16x32xf32>, vector<16x8x32xf32> -> vector<16x8x32xf32>
    %214 = arith.addf %208, %213 : vector<16x8x32xf32>
    %c0_329 = arith.constant 0 : index
    %c0_330 = arith.constant 0 : index
    %c0_331 = arith.constant 0 : index
    %215 = vector.load %arg10[%c0_329, %c0_330, %c0_331] : memref<16x8x32xf32, #tpu.memory_space<vmem>>, vector<16x8x32xf32>
    tpu.vector_store %arg10[%c0_329, %c0_330, %c0_331], %214 {strides = array<i32>} : memref<16x8x32xf32, #tpu.memory_space<vmem>>, vector<16x8x32xf32>,
    %c0_332 = arith.constant 0 : index
    %c0_333 = arith.constant 0 : index
    %c0_334 = arith.constant 0 : index
    %216 = vector.load %arg10[%c0_332, %c0_333, %c0_334] : memref<16x8x32xf32, #tpu.memory_space<vmem>>, vector<16x8x32xf32>
    %c0_335 = arith.constant 0 : index
    %c2_336 = arith.constant 2 : index
    %c0_337 = arith.constant 0 : index
    %c0_338 = arith.constant 0 : index
    %217 = vector.load %arg3[%c0_335, %c2_336, %c0_337, %c0_338] : memref<1x18x9x16xf32, #tpu.memory_space<vmem>>, vector<1x16x8x16xf32>
    %218 = vector.shape_cast %217 : vector<1x16x8x16xf32> to vector<16x8x16xf32>
    %c7_339 = arith.constant 7 : index
    %c0_340 = arith.constant 0 : index
    %c0_341 = arith.constant 0 : index
    %219 = vector.load %arg6[%c7_339, %c0_340, %c0_341] : memref<9x16x32xf32, #tpu.memory_space<vmem>>, vector<1x16x32xf32>
    %220 = vector.shape_cast %219 : vector<1x16x32xf32> to vector<16x32xf32>
    %cst_342 = arith.constant dense<0.000000e+00> : vector<16x8x32xf32>
    %221 = tpu.matmul %218, %220, %cst_342 {dimension_numbers = #tpu.dot_dimension_numbers<[2], [0], [0, 1], [1], [0, 0, 0, 1, 1, 1], [], []>} : vector<16x8x16xf32>, vector<16x32xf32>, vector<16x8x32xf32> -> vector<16x8x32xf32>
    %222 = arith.addf %216, %221 : vector<16x8x32xf32>
    %c0_343 = arith.constant 0 : index
    %c0_344 = arith.constant 0 : index
    %c0_345 = arith.constant 0 : index
    %223 = vector.load %arg10[%c0_343, %c0_344, %c0_345] : memref<16x8x32xf32, #tpu.memory_space<vmem>>, vector<16x8x32xf32>
    tpu.vector_store %arg10[%c0_343, %c0_344, %c0_345], %222 {strides = array<i32>} : memref<16x8x32xf32, #tpu.memory_space<vmem>>, vector<16x8x32xf32>,
    %c0_346 = arith.constant 0 : index
    %c0_347 = arith.constant 0 : index
    %c0_348 = arith.constant 0 : index
    %224 = vector.load %arg10[%c0_346, %c0_347, %c0_348] : memref<16x8x32xf32, #tpu.memory_space<vmem>>, vector<16x8x32xf32>
    %c0_349 = arith.constant 0 : index
    %c2_350 = arith.constant 2 : index
    %c1_351 = arith.constant 1 : index
    %c0_352 = arith.constant 0 : index
    %225 = vector.load %arg2[%c0_349, %c2_350, %c1_351, %c0_352] : memref<1x18x9x16xf32, #tpu.memory_space<vmem>>, vector<1x16x8x16xf32>
    %226 = vector.shape_cast %225 : vector<1x16x8x16xf32> to vector<16x8x16xf32>
    %c8_353 = arith.constant 8 : index
    %c0_354 = arith.constant 0 : index
    %c0_355 = arith.constant 0 : index
    %227 = vector.load %arg6[%c8_353, %c0_354, %c0_355] : memref<9x16x32xf32, #tpu.memory_space<vmem>>, vector<1x16x32xf32>
    %228 = vector.shape_cast %227 : vector<1x16x32xf32> to vector<16x32xf32>
    %cst_356 = arith.constant dense<0.000000e+00> : vector<16x8x32xf32>
    %229 = tpu.matmul %226, %228, %cst_356 {dimension_numbers = #tpu.dot_dimension_numbers<[2], [0], [0, 1], [1], [0, 0, 0, 1, 1, 1], [], []>} : vector<16x8x16xf32>, vector<16x32xf32>, vector<16x8x32xf32> -> vector<16x8x32xf32>
    %230 = arith.addf %224, %229 : vector<16x8x32xf32>
    %c0_357 = arith.constant 0 : index
    %c0_358 = arith.constant 0 : index
    %c0_359 = arith.constant 0 : index
    %231 = vector.load %arg10[%c0_357, %c0_358, %c0_359] : memref<16x8x32xf32, #tpu.memory_space<vmem>>, vector<16x8x32xf32>
    tpu.vector_store %arg10[%c0_357, %c0_358, %c0_359], %230 {strides = array<i32>} : memref<16x8x32xf32, #tpu.memory_space<vmem>>, vector<16x8x32xf32>,
    %c0_360 = arith.constant 0 : index
    %c0_361 = arith.constant 0 : index
    %c0_362 = arith.constant 0 : index
    %232 = vector.load %arg11[%c0_360, %c0_361, %c0_362] : memref<16x8x32xf32, #tpu.memory_space<vmem>>, vector<16x8x32xf32>
    %c0_363 = arith.constant 0 : index
    %c2_364 = arith.constant 2 : index
    %c0_365 = arith.constant 0 : index
    %c0_366 = arith.constant 0 : index
    %233 = vector.load %arg3[%c0_363, %c2_364, %c0_365, %c0_366] : memref<1x18x9x16xf32, #tpu.memory_space<vmem>>, vector<1x16x8x16xf32>
    %234 = vector.shape_cast %233 : vector<1x16x8x16xf32> to vector<16x8x16xf32>
    %c6_367 = arith.constant 6 : index
    %c0_368 = arith.constant 0 : index
    %c0_369 = arith.constant 0 : index
    %235 = vector.load %arg6[%c6_367, %c0_368, %c0_369] : memref<9x16x32xf32, #tpu.memory_space<vmem>>, vector<1x16x32xf32>
    %236 = vector.shape_cast %235 : vector<1x16x32xf32> to vector<16x32xf32>
    %cst_370 = arith.constant dense<0.000000e+00> : vector<16x8x32xf32>
    %237 = tpu.matmul %234, %236, %cst_370 {dimension_numbers = #tpu.dot_dimension_numbers<[2], [0], [0, 1], [1], [0, 0, 0, 1, 1, 1], [], []>} : vector<16x8x16xf32>, vector<16x32xf32>, vector<16x8x32xf32> -> vector<16x8x32xf32>
    %238 = arith.addf %232, %237 : vector<16x8x32xf32>
    %c0_371 = arith.constant 0 : index
    %c0_372 = arith.constant 0 : index
    %c0_373 = arith.constant 0 : index
    %239 = vector.load %arg11[%c0_371, %c0_372, %c0_373] : memref<16x8x32xf32, #tpu.memory_space<vmem>>, vector<16x8x32xf32>
    tpu.vector_store %arg11[%c0_371, %c0_372, %c0_373], %238 {strides = array<i32>} : memref<16x8x32xf32, #tpu.memory_space<vmem>>, vector<16x8x32xf32>,
    %c0_374 = arith.constant 0 : index
    %c0_375 = arith.constant 0 : index
    %c0_376 = arith.constant 0 : index
    %240 = vector.load %arg11[%c0_374, %c0_375, %c0_376] : memref<16x8x32xf32, #tpu.memory_space<vmem>>, vector<16x8x32xf32>
    %c0_377 = arith.constant 0 : index
    %c2_378 = arith.constant 2 : index
    %c1_379 = arith.constant 1 : index
    %c0_380 = arith.constant 0 : index
    %241 = vector.load %arg2[%c0_377, %c2_378, %c1_379, %c0_380] : memref<1x18x9x16xf32, #tpu.memory_space<vmem>>, vector<1x16x8x16xf32>
    %242 = vector.shape_cast %241 : vector<1x16x8x16xf32> to vector<16x8x16xf32>
    %c7_381 = arith.constant 7 : index
    %c0_382 = arith.constant 0 : index
    %c0_383 = arith.constant 0 : index
    %243 = vector.load %arg6[%c7_381, %c0_382, %c0_383] : memref<9x16x32xf32, #tpu.memory_space<vmem>>, vector<1x16x32xf32>
    %244 = vector.shape_cast %243 : vector<1x16x32xf32> to vector<16x32xf32>
    %cst_384 = arith.constant dense<0.000000e+00> : vector<16x8x32xf32>
    %245 = tpu.matmul %242, %244, %cst_384 {dimension_numbers = #tpu.dot_dimension_numbers<[2], [0], [0, 1], [1], [0, 0, 0, 1, 1, 1], [], []>} : vector<16x8x16xf32>, vector<16x32xf32>, vector<16x8x32xf32> -> vector<16x8x32xf32>
    %246 = arith.addf %240, %245 : vector<16x8x32xf32>
    %c0_385 = arith.constant 0 : index
    %c0_386 = arith.constant 0 : index
    %c0_387 = arith.constant 0 : index
    %247 = vector.load %arg11[%c0_385, %c0_386, %c0_387] : memref<16x8x32xf32, #tpu.memory_space<vmem>>, vector<16x8x32xf32>
    tpu.vector_store %arg11[%c0_385, %c0_386, %c0_387], %246 {strides = array<i32>} : memref<16x8x32xf32, #tpu.memory_space<vmem>>, vector<16x8x32xf32>,
    %c0_388 = arith.constant 0 : index
    %c0_389 = arith.constant 0 : index
    %c0_390 = arith.constant 0 : index
    %248 = vector.load %arg11[%c0_388, %c0_389, %c0_390] : memref<16x8x32xf32, #tpu.memory_space<vmem>>, vector<16x8x32xf32>
    %c0_391 = arith.constant 0 : index
    %c2_392 = arith.constant 2 : index
    %c1_393 = arith.constant 1 : index
    %c0_394 = arith.constant 0 : index
    %249 = vector.load %arg3[%c0_391, %c2_392, %c1_393, %c0_394] : memref<1x18x9x16xf32, #tpu.memory_space<vmem>>, vector<1x16x8x16xf32>
    %250 = vector.shape_cast %249 : vector<1x16x8x16xf32> to vector<16x8x16xf32>
    %c8_395 = arith.constant 8 : index
    %c0_396 = arith.constant 0 : index
    %c0_397 = arith.constant 0 : index
    %251 = vector.load %arg6[%c8_395, %c0_396, %c0_397] : memref<9x16x32xf32, #tpu.memory_space<vmem>>, vector<1x16x32xf32>
    %252 = vector.shape_cast %251 : vector<1x16x32xf32> to vector<16x32xf32>
    %cst_398 = arith.constant dense<0.000000e+00> : vector<16x8x32xf32>
    %253 = tpu.matmul %250, %252, %cst_398 {dimension_numbers = #tpu.dot_dimension_numbers<[2], [0], [0, 1], [1], [0, 0, 0, 1, 1, 1], [], []>} : vector<16x8x16xf32>, vector<16x32xf32>, vector<16x8x32xf32> -> vector<16x8x32xf32>
    %254 = arith.addf %248, %253 : vector<16x8x32xf32>
    %c0_399 = arith.constant 0 : index
    %c0_400 = arith.constant 0 : index
    %c0_401 = arith.constant 0 : index
    %255 = vector.load %arg11[%c0_399, %c0_400, %c0_401] : memref<16x8x32xf32, #tpu.memory_space<vmem>>, vector<16x8x32xf32>
    tpu.vector_store %arg11[%c0_399, %c0_400, %c0_401], %254 {strides = array<i32>} : memref<16x8x32xf32, #tpu.memory_space<vmem>>, vector<16x8x32xf32>,
    %c0_402 = arith.constant 0 : index
    %c0_403 = arith.constant 0 : index
    %c0_404 = arith.constant 0 : index
    %256 = vector.load %arg10[%c0_402, %c0_403, %c0_404] : memref<16x8x32xf32, #tpu.memory_space<vmem>>, vector<16x8x32xf32>
    %257 = vector.extract_strided_slice %0 {offsets = [4, 0], sizes = [1, 32], strides = [1, 1]} : vector<8x32xf32> to vector<1x32xf32>
    %258 = vector.shape_cast %257 : vector<1x32xf32> to vector<1x1x32xf32>
    %259 = vector.broadcast %258 : vector<1x1x32xf32> to vector<16x8x32xf32>
    %260 = arith.mulf %256, %259 : vector<16x8x32xf32>
    %261 = vector.extract_strided_slice %0 {offsets = [5, 0], sizes = [1, 32], strides = [1, 1]} : vector<8x32xf32> to vector<1x32xf32>
    %262 = vector.shape_cast %261 : vector<1x32xf32> to vector<1x1x32xf32>
    %263 = vector.broadcast %262 : vector<1x1x32xf32> to vector<16x8x32xf32>
    %264 = arith.addf %260, %263 : vector<16x8x32xf32>
    %cst_405 = arith.constant 0.000000e+00 : f32
    %265 = vector.broadcast %cst_405 : f32 to vector<16x8x32xf32>
    %266 = arith.maximumf %264, %265 : vector<16x8x32xf32>
    %c0_406 = arith.constant 0 : index
    %c0_407 = arith.constant 0 : index
    %c0_408 = arith.constant 0 : index
    %267 = vector.load %arg11[%c0_406, %c0_407, %c0_408] : memref<16x8x32xf32, #tpu.memory_space<vmem>>, vector<16x8x32xf32>
    %268 = vector.extract_strided_slice %0 {offsets = [4, 0], sizes = [1, 32], strides = [1, 1]} : vector<8x32xf32> to vector<1x32xf32>
    %269 = vector.shape_cast %268 : vector<1x32xf32> to vector<1x1x32xf32>
    %270 = vector.broadcast %269 : vector<1x1x32xf32> to vector<16x8x32xf32>
    %271 = arith.mulf %267, %270 : vector<16x8x32xf32>
    %272 = vector.extract_strided_slice %0 {offsets = [5, 0], sizes = [1, 32], strides = [1, 1]} : vector<8x32xf32> to vector<1x32xf32>
    %273 = vector.shape_cast %272 : vector<1x32xf32> to vector<1x1x32xf32>
    %274 = vector.broadcast %273 : vector<1x1x32xf32> to vector<16x8x32xf32>
    %275 = arith.addf %271, %274 : vector<16x8x32xf32>
    %cst_409 = arith.constant 0.000000e+00 : f32
    %276 = vector.broadcast %cst_409 : f32 to vector<16x8x32xf32>
    %277 = arith.maximumf %275, %276 : vector<16x8x32xf32>
    %278 = arith.maximumf %266, %277 : vector<16x8x32xf32>
    %279 = vector.shape_cast %278 : vector<16x8x32xf32> to vector<8x2x8x32xf32>
    %cst_410 = arith.constant dense<0xFF800000> : vector<8x8x32xf32>
    %280 = vector.multi_reduction <maximumf>, %279, %cst_410 [1] : vector<8x2x8x32xf32> to vector<8x8x32xf32>
    %281 = vector.extract_strided_slice %0 {offsets = [6, 0], sizes = [1, 32], strides = [1, 1]} : vector<8x32xf32> to vector<1x32xf32>
    %282 = vector.shape_cast %281 : vector<1x32xf32> to vector<1x1x32xf32>
    %283 = vector.broadcast %282 : vector<1x1x32xf32> to vector<8x8x32xf32>
    %284 = arith.mulf %280, %283 : vector<8x8x32xf32>
    %285 = vector.extract_strided_slice %0 {offsets = [7, 0], sizes = [1, 32], strides = [1, 1]} : vector<8x32xf32> to vector<1x32xf32>
    %286 = vector.shape_cast %285 : vector<1x32xf32> to vector<1x1x32xf32>
    %287 = vector.broadcast %286 : vector<1x1x32xf32> to vector<8x8x32xf32>
    %288 = arith.addf %284, %287 : vector<8x8x32xf32>
    %289 = arith.addf %288, %107 : vector<8x8x32xf32>
    %cst_411 = arith.constant 0.000000e+00 : f32
    %290 = vector.broadcast %cst_411 : f32 to vector<8x8x32xf32>
    %291 = arith.maximumf %289, %290 : vector<8x8x32xf32>
    %c0_412 = arith.constant 0 : index
    %c0_413 = arith.constant 0 : index
    %c0_414 = arith.constant 0 : index
    %c0_415 = arith.constant 0 : index
    %292 = vector.load %arg8[%c0_412, %c0_413, %c0_414, %c0_415] : memref<1x8x8x32xf32, #tpu.memory_space<vmem>>, vector<1x8x8x32xf32>
    %293 = vector.shape_cast %292 : vector<1x8x8x32xf32> to vector<8x8x32xf32>
    %294 = vector.shape_cast %291 : vector<8x8x32xf32> to vector<1x8x8x32xf32>
    tpu.vector_store %arg8[%c0_412, %c0_413, %c0_414, %c0_415], %294 {strides = array<i32>} : memref<1x8x8x32xf32, #tpu.memory_space<vmem>>, vector<1x8x8x32xf32>,
    return
  }
  func.func @transform_0(%arg0: i32) -> (i32, i32, i32, i32) {
    %c0_i32 = arith.constant 0 : i32
    %c0_i32_0 = arith.constant 0 : i32
    %c0_i32_1 = arith.constant 0 : i32
    %c0_i32_2 = arith.constant 0 : i32
    return %arg0, %c0_i32, %c0_i32_0, %c0_i32_1 : i32, i32, i32, i32
  }
  func.func @transform_1(%arg0: i32) -> (i32, i32, i32, i32) {
    %c0_i32 = arith.constant 0 : i32
    %c0_i32_0 = arith.constant 0 : i32
    %c0_i32_1 = arith.constant 0 : i32
    %c0_i32_2 = arith.constant 0 : i32
    return %arg0, %c0_i32, %c0_i32_0, %c0_i32_1 : i32, i32, i32, i32
  }
  func.func @transform_2(%arg0: i32) -> (i32, i32, i32, i32) {
    %c0_i32 = arith.constant 0 : i32
    %c0_i32_0 = arith.constant 0 : i32
    %c0_i32_1 = arith.constant 0 : i32
    %c0_i32_2 = arith.constant 0 : i32
    return %arg0, %c0_i32, %c0_i32_0, %c0_i32_1 : i32, i32, i32, i32
  }
  func.func @transform_3(%arg0: i32) -> (i32, i32) {
    %c0_i32 = arith.constant 0 : i32
    %c0_i32_0 = arith.constant 0 : i32
    %c0_i32_1 = arith.constant 0 : i32
    return %c0_i32, %c0_i32_0 : i32, i32
  }
  func.func @transform_4(%arg0: i32) -> (i32, i32, i32) {
    %c0_i32 = arith.constant 0 : i32
    %c0_i32_0 = arith.constant 0 : i32
    %c0_i32_1 = arith.constant 0 : i32
    %c0_i32_2 = arith.constant 0 : i32
    return %c0_i32, %c0_i32_0, %c0_i32_1 : i32, i32, i32
  }
  func.func @transform_5(%arg0: i32) -> (i32, i32, i32) {
    %c0_i32 = arith.constant 0 : i32
    %c0_i32_0 = arith.constant 0 : i32
    %c0_i32_1 = arith.constant 0 : i32
    %c0_i32_2 = arith.constant 0 : i32
    return %c0_i32, %c0_i32_0, %c0_i32_1 : i32, i32, i32
  }
  func.func @transform_6(%arg0: i32) -> (i32, i32) {
    %c0_i32 = arith.constant 0 : i32
    %c0_i32_0 = arith.constant 0 : i32
    %c0_i32_1 = arith.constant 0 : i32
    return %c0_i32, %c0_i32_0 : i32, i32
  }
  func.func @transform_7(%arg0: i32) -> (i32, i32, i32, i32) {
    %c0_i32 = arith.constant 0 : i32
    %c0_i32_0 = arith.constant 0 : i32
    %c0_i32_1 = arith.constant 0 : i32
    %c0_i32_2 = arith.constant 0 : i32
    return %arg0, %c0_i32, %c0_i32_0, %c0_i32_1 : i32, i32, i32, i32
  }
}

</mosaic_0001>

<llo_original>
// kernel: tpu_custom_call.1
$region0: #{tpu_custom_call.1}
  #allocation0 [shape = 'u32[]', space=smem, size = 0x4, offset = 0x4, fixed_abs, tag = 'smem constant byte address 0x4 - core index']
  #allocation1 [shape = 'u32[144,128]{1,0:T(1,128)}', space=vmem, size = 0x12000, scoped, tag = 'internal scratch']
  #allocation2 [shape = 'f32[8,8,32]{2,1,0:T(8,128)}', space=vmem, size = 0x8000, scoped, tag = 'scratch operand']
  #allocation3 [shape = 'f32[16,8,32]{2,1,0:T(8,128)}', space=vmem, size = 0x10000, scoped, tag = 'scratch operand']
  #allocation4 [shape = 'f32[16,8,32]{2,1,0:T(8,128)}', space=vmem, size = 0x10000, scoped, tag = 'scratch operand']
  %s0 = inlined_call_operand.vmem [shape: f32[2,10,10,32], index: 0, kind: input, shape index: {}]
  %s1 = inlined_call_operand.vmem [shape: f32[2,18,9,16], index: 1, kind: input, shape index: {}]
  %s2 = inlined_call_operand.vmem [shape: f32[2,18,9,16], index: 2, kind: input, shape index: {}]
  %s3 = inlined_call_operand.vmem [shape: f32[16,32], index: 3, kind: input, shape index: {}]
  %s4 = inlined_call_operand.vmem [shape: f32[9,32,32], index: 4, kind: input, shape index: {}]
  %s5 = inlined_call_operand.vmem [shape: f32[9,16,32], index: 5, kind: input, shape index: {}]
  %s6 = inlined_call_operand.vmem [shape: f32[8,32], index: 6, kind: input, shape index: {}]
  %s7 = inlined_call_operand.hbm [shape: f32[2,8,8,32], index: 7, kind: output, shape index: {}]
  %s8 = sld [smem:[#allocation0]]
  $region61: #{tpu_custom_call.1} parent=0
    _
  %s10 = ssub.s32 1, %s8
  %s11 = scalar_select 0, %s10, %s8
  $region1: #{tpu_custom_call.1} parent=0
    #allocation5 [shape = 'u8[65536]{0}', space=vmem, size = 0x10000, scoped, tag = 'output window, operand 0']
    #allocation6 [shape = 's32[2]{0}', space=sflag, size = 0x8, scoped, tag = 'scoped memory for tpu_custom_call.1']
    %12 = vsyncpa [#allocation6], 0
    %s13 = scalar_lea.sflag [#allocation6], 1
    %14 = vsyncpa %s13, 0
    loop: start=0, step=1, limit=4
    $region2: #{tpu_custom_call.1} parent=1 // loop_pre_header
      _
    $region3: #{tpu_custom_call.1} parent=1 // loop_header
      %s16 = sphi 0, %s20
      %p17 = scmp.ge.s32.totalorder %s16, 4
      %s26 = sphi 0, %s28
      %s29 = sphi 0, %s26
      %s30 = sphi 0, %s29
      %s46 = sphi 0, %s30
      %s52 = sphi 0, %s54
      %s55 = sphi 0, %s52
      %s56 = sphi 0, %s55
      %s72 = sphi 0, %s56
      %s78 = sphi 0, %s80
      %s81 = sphi 0, %s78
      %s82 = sphi 0, %s81
      %s98 = sphi 0, %s82
      %s102 = sphi 0, %s102
      %s104 = sphi 0, %s102
      %s105 = sphi 0, %s104
      %s119 = sphi 0, %s105
      %s123 = sphi 0, %s123
      %s125 = sphi 0, %s123
      %s126 = sphi 0, %s125
      %s140 = sphi 0, %s126
      %s144 = sphi 0, %s144
      %s146 = sphi 0, %s144
      %s147 = sphi 0, %s146
      %s161 = sphi 0, %s147
      %s165 = sphi 0, %s165
      %s167 = sphi 0, %s165
      %s168 = sphi 0, %s167
      %s182 = sphi 0, %s168
      %s188 = sphi 0, %s190
      %s191 = sphi 0, %s188
      %s192 = sphi 0, %s191
      %s208 = sphi 0, %s192
    $region4: #{tpu_custom_call.1} parent=1 // loop_header_branch
      %19 = sbr.rel (%p17) target = $region8
    $region5: #{tpu_custom_call.1} parent=1 // loop_body
      %s21 = ssub.s32 %s16, 1
      %s22 = ssub.s32 %s16, 2
      %s23 = sadd.s32 %s16, 1
      %s24 = ssub.s32 %s16, %s23
      %p25 = scmp.eq.s32.totalorder %s24, 0
      %s27 = sadd.s32 %s26, 1
      %s28 = scalar_select %p25, %s26, %s27
      %p31 = pneg %p25
      %p32 = scmp.eq.s32.totalorder %s16, 1
      %p33 = por %p31, %p32
      %p34 = scmp.ne.s32.totalorder %s26, %s29
      %p35 = scmp.eq.s32.totalorder %s16, 0
      %p36 = por %p34, %p35
      %p37 = scmp.ne.s32.totalorder %s26, %s29
      %p38 = scmp.eq.s32.totalorder %s21, 1
      %p39 = por %p37, %p38
      %p40 = scmp.ne.s32.totalorder %s29, %s30
      %p41 = scmp.eq.s32.totalorder %s21, 0
      %p42 = por %p40, %p41
      %p43 = scmp.ne.s32.totalorder %s29, %s30
      %p44 = scmp.eq.s32.totalorder %s22, 1
      %p45 = por %p43, %p44
      %p47 = scmp.ne.s32.totalorder %s30, %s46
      %p48 = scmp.eq.s32.totalorder %s22, 0
      %p49 = por %p47, %p48
      %s50 = ssub.s32 %s16, %s23
      %p51 = scmp.eq.s32.totalorder %s50, 0
      %s53 = sadd.s32 %s52, 1
      %s54 = scalar_select %p51, %s52, %s53
      %p57 = pneg %p51
      %p58 = scmp.eq.s32.totalorder %s16, 1
      %p59 = por %p57, %p58
      %p60 = scmp.ne.s32.totalorder %s52, %s55
      %p61 = scmp.eq.s32.totalorder %s16, 0
      %p62 = por %p60, %p61
      %p63 = scmp.ne.s32.totalorder %s52, %s55
      %p64 = scmp.eq.s32.totalorder %s21, 1
      %p65 = por %p63, %p64
      %p66 = scmp.ne.s32.totalorder %s55, %s56
      %p67 = scmp.eq.s32.totalorder %s21, 0
      %p68 = por %p66, %p67
      %p69 = scmp.ne.s32.totalorder %s55, %s56
      %p70 = scmp.eq.s32.totalorder %s22, 1
      %p71 = por %p69, %p70
      %p73 = scmp.ne.s32.totalorder %s56, %s72
      %p74 = scmp.eq.s32.totalorder %s22, 0
      %p75 = por %p73, %p74
      %s76 = ssub.s32 %s16, %s23
      %p77 = scmp.eq.s32.totalorder %s76, 0
      %s79 = sadd.s32 %s78, 1
      %s80 = scalar_select %p77, %s78, %s79
      %p83 = pneg %p77
      %p84 = scmp.eq.s32.totalorder %s16, 1
      %p85 = por %p83, %p84
      %p86 = scmp.ne.s32.totalorder %s78, %s81
      %p87 = scmp.eq.s32.totalorder %s16, 0
      %p88 = por %p86, %p87
      %p89 = scmp.ne.s32.totalorder %s78, %s81
      %p90 = scmp.eq.s32.totalorder %s21, 1
      %p91 = por %p89, %p90
      %p92 = scmp.ne.s32.totalorder %s81, %s82
      %p93 = scmp.eq.s32.totalorder %s21, 0
      %p94 = por %p92, %p93
      %p95 = scmp.ne.s32.totalorder %s81, %s82
      %p96 = scmp.eq.s32.totalorder %s22, 1
      %p97 = por %p95, %p96
      %p99 = scmp.ne.s32.totalorder %s82, %s98
      %p100 = scmp.eq.s32.totalorder %s22, 0
      %p101 = por %p99, %p100
      %s103 = sadd.s32 %s102, 1
      %p106 = scmp.eq.s32.totalorder %s16, 1
      %p107 = scmp.ne.s32.totalorder %s102, %s104
      %p108 = scmp.eq.s32.totalorder %s16, 0
      %p109 = por %p107, %p108
      %p110 = scmp.ne.s32.totalorder %s102, %s104
      %p111 = scmp.eq.s32.totalorder %s21, 1
      %p112 = por %p110, %p111
      %p113 = scmp.ne.s32.totalorder %s104, %s105
      %p114 = scmp.eq.s32.totalorder %s21, 0
      %p115 = por %p113, %p114
      %p116 = scmp.ne.s32.totalorder %s104, %s105
      %p117 = scmp.eq.s32.totalorder %s22, 1
      %p118 = por %p116, %p117
      %p120 = scmp.ne.s32.totalorder %s105, %s119
      %p121 = scmp.eq.s32.totalorder %s22, 0
      %p122 = por %p120, %p121
      %s124 = sadd.s32 %s123, 1
      %p127 = scmp.eq.s32.totalorder %s16, 1
      %p128 = scmp.ne.s32.totalorder %s123, %s125
      %p129 = scmp.eq.s32.totalorder %s16, 0
      %p130 = por %p128, %p129
      %p131 = scmp.ne.s32.totalorder %s123, %s125
      %p132 = scmp.eq.s32.totalorder %s21, 1
      %p133 = por %p131, %p132
      %p134 = scmp.ne.s32.totalorder %s125, %s126
      %p135 = scmp.eq.s32.totalorder %s21, 0
      %p136 = por %p134, %p135
      %p137 = scmp.ne.s32.totalorder %s125, %s126
      %p138 = scmp.eq.s32.totalorder %s22, 1
      %p139 = por %p137, %p138
      %p141 = scmp.ne.s32.totalorder %s126, %s140
      %p142 = scmp.eq.s32.totalorder %s22, 0
      %p143 = por %p141, %p142
      %s145 = sadd.s32 %s144, 1
      %p148 = scmp.eq.s32.totalorder %s16, 1
      %p149 = scmp.ne.s32.totalorder %s144, %s146
      %p150 = scmp.eq.s32.totalorder %s16, 0
      %p151 = por %p149, %p150
      %p152 = scmp.ne.s32.totalorder %s144, %s146
      %p153 = scmp.eq.s32.totalorder %s21, 1
      %p154 = por %p152, %p153
      %p155 = scmp.ne.s32.totalorder %s146, %s147
      %p156 = scmp.eq.s32.totalorder %s21, 0
      %p157 = por %p155, %p156
      %p158 = scmp.ne.s32.totalorder %s146, %s147
      %p159 = scmp.eq.s32.totalorder %s22, 1
      %p160 = por %p158, %p159
      %p162 = scmp.ne.s32.totalorder %s147, %s161
      %p163 = scmp.eq.s32.totalorder %s22, 0
      %p164 = por %p162, %p163
      %s166 = sadd.s32 %s165, 1
      %p169 = scmp.eq.s32.totalorder %s16, 1
      %p170 = scmp.ne.s32.totalorder %s165, %s167
      %p171 = scmp.eq.s32.totalorder %s16, 0
      %p172 = por %p170, %p171
      %p173 = scmp.ne.s32.totalorder %s165, %s167
      %p174 = scmp.eq.s32.totalorder %s21, 1
      %p175 = por %p173, %p174
      %p176 = scmp.ne.s32.totalorder %s167, %s168
      %p177 = scmp.eq.s32.totalorder %s21, 0
      %p178 = por %p176, %p177
      %p179 = scmp.ne.s32.totalorder %s167, %s168
      %p180 = scmp.eq.s32.totalorder %s22, 1
      %p181 = por %p179, %p180
      %p183 = scmp.ne.s32.totalorder %s168, %s182
      %p184 = scmp.eq.s32.totalorder %s22, 0
      %p185 = por %p183, %p184
      %s186 = ssub.s32 %s16, %s23
      %p187 = scmp.eq.s32.totalorder %s186, 0
      %s189 = sadd.s32 %s188, 1
      %s190 = scalar_select %p187, %s188, %s189
      %p193 = pneg %p187
      %p194 = scmp.eq.s32.totalorder %s16, 1
      %p195 = por %p193, %p194
      %p196 = scmp.ne.s32.totalorder %s188, %s191
      %p197 = scmp.eq.s32.totalorder %s16, 0
      %p198 = por %p196, %p197
      %p199 = scmp.ne.s32.totalorder %s188, %s191
      %p200 = scmp.eq.s32.totalorder %s21, 1
      %p201 = por %p199, %p200
      %p202 = scmp.ne.s32.totalorder %s191, %s192
      %p203 = scmp.eq.s32.totalorder %s21, 0
      %p204 = por %p202, %p203
      %p205 = scmp.ne.s32.totalorder %s191, %s192
      %p206 = scmp.eq.s32.totalorder %s22, 1
      %p207 = por %p205, %p206
      %p209 = scmp.ne.s32.totalorder %s192, %s208
      %p210 = scmp.eq.s32.totalorder %s22, 0
      %p211 = por %p209, %p210
      %p212 = scmp.le.s32.totalorder 1, %s16
      %p213 = scmp.lt.s32.totalorder %s16, 3
      %p214 = pnand %p212, %p213
      %p215 = pneg %p214
      // Predicated region
      $region9: #{tpu_custom_call.1} parent=5 // pred_check
        _
      $region10: #{tpu_custom_call.1} parent=5 // pred_check_branch
        %217 = sbr.rel (%p214) target = $region12
      $region11: #{tpu_custom_call.1} parent=5 // pred_region
        %s218 = ssub.s32 %s16, 1
        // Predicated region
        $region13: #{tpu_custom_call.1} parent=11 // pred_check
          %p219 = pneg %p115
        $region14: #{tpu_custom_call.1} parent=11 // pred_check_branch
          %221 = sbr.rel (%p219) target = $region16
        $region15: #{tpu_custom_call.1} parent=11 // pred_region
          _
        $region16: #{tpu_custom_call.1} parent=11 // pred_fallthru
          _
        // Predicated region
        $region17: #{tpu_custom_call.1} parent=11 // pred_check
          %p222 = pneg %p136
        $region18: #{tpu_custom_call.1} parent=11 // pred_check_branch
          %224 = sbr.rel (%p222) target = $region20
        $region19: #{tpu_custom_call.1} parent=11 // pred_region
          _
        $region20: #{tpu_custom_call.1} parent=11 // pred_fallthru
          _
        // Predicated region
        $region21: #{tpu_custom_call.1} parent=11 // pred_check
          %p225 = pneg %p157
        $region22: #{tpu_custom_call.1} parent=11 // pred_check_branch
          %227 = sbr.rel (%p225) target = $region24
        $region23: #{tpu_custom_call.1} parent=11 // pred_region
          _
        $region24: #{tpu_custom_call.1} parent=11 // pred_fallthru
          _
        // Predicated region
        $region25: #{tpu_custom_call.1} parent=11 // pred_check
          %p228 = pneg %p178
        $region26: #{tpu_custom_call.1} parent=11 // pred_check_branch
          %230 = sbr.rel (%p228) target = $region28
        $region27: #{tpu_custom_call.1} parent=11 // pred_region
          _
        $region28: #{tpu_custom_call.1} parent=11 // pred_fallthru
          _
      $region12: #{tpu_custom_call.1} parent=5 // pred_fallthru
        _
      %p231 = scmp.lt.s32.totalorder %s16, 2
      // Predicated region
      $region29: #{tpu_custom_call.1} parent=5 // pred_check
        %p232 = pneg %p231
      $region30: #{tpu_custom_call.1} parent=5 // pred_check_branch
        %234 = sbr.rel (%p232) target = $region32
      $region31: #{tpu_custom_call.1} parent=5 // pred_region
        // Predicated region
        $region33: #{tpu_custom_call.1} parent=31 // pred_check
          %p235 = pneg %p36
        $region34: #{tpu_custom_call.1} parent=31 // pred_check_branch
          %237 = sbr.rel (%p235) target = $region36
        $region35: #{tpu_custom_call.1} parent=31 // pred_region
          %p238 = scmp.lt.s32.totalorder %s16, 1
          %s239 = scalar_select %p238, %s16, 1
          %s240 = smul.addr %s239, 20
          %s241 = smul.addr %s240, 8
          %s242 = scalar_lea.vmem %s0, %s241
        $region36: #{tpu_custom_call.1} parent=31 // pred_fallthru
          _
        // Predicated region
        $region37: #{tpu_custom_call.1} parent=31 // pred_check
          %p243 = pneg %p62
        $region38: #{tpu_custom_call.1} parent=31 // pred_check_branch
          %245 = sbr.rel (%p243) target = $region40
        $region39: #{tpu_custom_call.1} parent=31 // pred_region
          %p246 = scmp.lt.s32.totalorder %s16, 1
          %s247 = scalar_select %p246, %s16, 1
          %s248 = smul.addr %s247, 36
          %s249 = smul.addr %s248, 8
          %s250 = scalar_lea.vmem %s1, %s249
        $region40: #{tpu_custom_call.1} parent=31 // pred_fallthru
          _
        // Predicated region
        $region41: #{tpu_custom_call.1} parent=31 // pred_check
          %p251 = pneg %p88
        $region42: #{tpu_custom_call.1} parent=31 // pred_check_branch
          %253 = sbr.rel (%p251) target = $region44
        $region43: #{tpu_custom_call.1} parent=31 // pred_region
          %p254 = scmp.lt.s32.totalorder %s16, 1
          %s255 = scalar_select %p254, %s16, 1
          %s256 = smul.addr %s255, 36
          %s257 = smul.addr %s256, 8
          %s258 = scalar_lea.vmem %s2, %s257
        $region44: #{tpu_custom_call.1} parent=31 // pred_fallthru
          _
      $region32: #{tpu_custom_call.1} parent=5 // pred_fallthru
        _
      %p259 = scmp.le.s32.totalorder 1, %s16
      %p260 = scmp.lt.s32.totalorder %s16, 3
      %p261 = pnand %p259, %p260
      %p262 = pneg %p261
      // Predicated region
      $region45: #{tpu_custom_call.1} parent=5 // pred_check
        _
      $region46: #{tpu_custom_call.1} parent=5 // pred_check_branch
        %264 = sbr.rel (%p261) target = $region48
      $region47: #{tpu_custom_call.1} parent=5 // pred_region
        %s265 = ssub.s32 %s16, 1
        %p266 = scmp.lt.s32.totalorder %s21, 1
        %s267 = scalar_select %p266, %s21, 1
        %s268 = smul.addr %s267, 20
        %s269 = smul.addr %s268, 8
        %s270 = scalar_lea.vmem %s0, %s269
        %p271 = pneg %p42
        %p272 = pneg %p39
        %p273 = scmp.lt.s32.totalorder %s21, 1
        %s274 = scalar_select %p273, %s21, 1
        %s275 = smul.addr %s274, 36
        %s276 = smul.addr %s275, 8
        %s277 = scalar_lea.vmem %s1, %s276
        %p278 = pneg %p68
        %p279 = pneg %p65
        %p280 = scmp.lt.s32.totalorder %s21, 1
        %s281 = scalar_select %p280, %s21, 1
        %s282 = smul.addr %s281, 36
        %s283 = smul.addr %s282, 8
        %s284 = scalar_lea.vmem %s2, %s283
        %p285 = pneg %p94
        %p286 = pneg %p91
        %p287 = pneg %p115
        %p288 = pneg %p112
        %p289 = pneg %p136
        %p290 = pneg %p133
        %p291 = pneg %p157
        %p292 = pneg %p154
        %p293 = pneg %p178
        %p294 = pneg %p175
        %p295 = pneg %p204
        %p296 = pneg %p201
        %s297 = sand.u32 %s191, 1
        %s298 = scalar_lea.sflag [#allocation6], %s297
        %s299 = sand.u32 %s191, 1
        %s300 = smul.addr %s299, 64
        %s301 = scalar_lea.vmem [#allocation5], %s300
        %p302 = scmp.lt.s32.totalorder %s21, 1
        %s303 = scalar_select %p302, %s21, 1
        %s304 = smul.addr %s303, 20
        %s305 = smul.addr %s304, 8
        %s306 = scalar_lea.vmem %s0, %s305
        %p307 = scmp.lt.s32.totalorder %s21, 1
        %s308 = scalar_select %p307, %s21, 1
        %s309 = smul.addr %s308, 36
        %s310 = smul.addr %s309, 8
        %s311 = scalar_lea.vmem %s1, %s310
        %p312 = scmp.lt.s32.totalorder %s21, 1
        %s313 = scalar_select %p312, %s21, 1
        %s314 = smul.addr %s313, 36
        %s315 = smul.addr %s314, 8
        %s316 = scalar_lea.vmem %s2, %s315
        %v317 = vld [vmem:[%s6] sm:$0xff]
        %s318 = scalar_lea.vmem %s316, 16
        %v319 = vld [vmem:[%s318] sm:$0xff]
        %v320 = vld [vmem:[%s318 + $0x10] sm:$0xff]
        %v321 = vld [vmem:[%s318 + $0x20] sm:$0xff]
        %v322 = vld [vmem:[%s318 + $0x30] sm:$0xff]
        %v323 = vld [vmem:[%s318 + $0x40] sm:$0xff]
        %v324 = vld [vmem:[%s318 + $0x50] sm:$0xff]
        %v325 = vld [vmem:[%s318 + $0x60] sm:$0xff]
        %v326 = vld [vmem:[%s318 + $0x70] sm:$0xff]
        %v327 = vld [vmem:[%s318 + $0x80] sm:$0xff]
        %v328 = vld [vmem:[%s318 + $0x90] sm:$0xff]
        %v329 = vld [vmem:[%s318 + $0xa0] sm:$0xff]
        %v330 = vld [vmem:[%s318 + $0xb0] sm:$0xff]
        %v331 = vld [vmem:[%s318 + $0xc0] sm:$0xff]
        %v332 = vld [vmem:[%s318 + $0xd0] sm:$0xff]
        %v333 = vld [vmem:[%s318 + $0xe0] sm:$0xff]
        %v334 = vld [vmem:[%s318 + $0xf0] sm:$0xff]
        %vm335 = vcmask 130048
        %v336 = vsel %vm335, %v319, 0.0
        %v337 = vsel %vm335, %v320, 0.0
        %v338 = vadd.f32 %v336, %v337
        %v339 = vsel %vm335, %v321, 0.0
        %v340 = vadd.f32 %v338, %v339
        %v341 = vsel %vm335, %v322, 0.0
        %v342 = vadd.f32 %v340, %v341
        %v343 = vsel %vm335, %v323, 0.0
        %v344 = vadd.f32 %v342, %v343
        %v345 = vsel %vm335, %v324, 0.0
        %v346 = vadd.f32 %v344, %v345
        %v347 = vsel %vm335, %v325, 0.0
        %v348 = vadd.f32 %v346, %v347
        %v349 = vsel %vm335, %v326, 0.0
        %v350 = vadd.f32 %v348, %v349
        %v351 = vsel %vm335, %v327, 0.0
        %v352 = vadd.f32 %v350, %v351
        %v353 = vsel %vm335, %v328, 0.0
        %v354 = vadd.f32 %v352, %v353
        %v355 = vsel %vm335, %v329, 0.0
        %v356 = vadd.f32 %v354, %v355
        %v357 = vsel %vm335, %v330, 0.0
        %v358 = vadd.f32 %v356, %v357
        %v359 = vsel %vm335, %v331, 0.0
        %v360 = vadd.f32 %v358, %v359
        %v361 = vsel %vm335, %v332, 0.0
        %v362 = vadd.f32 %v360, %v361
        %v363 = vsel %vm335, %v333, 0.0
        %v364 = vadd.f32 %v362, %v363
        %v365 = vsel %vm335, %v334, 0.0
        %v366 = vadd.f32 %v364, %v365
        %v367 = vsel %vm335, %v366, 0.0
        %v368 = vrot.slane %v367, 4
        %v369 = vadd.f32 %v367, %v368
        %v370 = vrot.slane %v369, 2
        %v371 = vadd.f32 %v369, %v370
        %v372 = vrot.slane %v371, 1
        %v373 = vadd.f32 %v371, %v372
        %s374 = scalar_lea.vmem %s311, 16
        %v375 = vld [vmem:[%s374 + $0x1] sm:$0xff]
        %v376 = vld [vmem:[%s374 + $0x11] sm:$0xff]
        %v377 = vld [vmem:[%s374 + $0x21] sm:$0xff]
        %v378 = vld [vmem:[%s374 + $0x31] sm:$0xff]
        %v379 = vld [vmem:[%s374 + $0x41] sm:$0xff]
        %v380 = vld [vmem:[%s374 + $0x51] sm:$0xff]
        %v381 = vld [vmem:[%s374 + $0x61] sm:$0xff]
        %v382 = vld [vmem:[%s374 + $0x71] sm:$0xff]
        %v383 = vld [vmem:[%s374 + $0x81] sm:$0xff]
        %v384 = vld [vmem:[%s374 + $0x91] sm:$0xff]
        %v385 = vld [vmem:[%s374 + $0xa1] sm:$0xff]
        %v386 = vld [vmem:[%s374 + $0xb1] sm:$0xff]
        %v387 = vld [vmem:[%s374 + $0xc1] sm:$0xff]
        %v388 = vld [vmem:[%s374 + $0xd1] sm:$0xff]
        %v389 = vld [vmem:[%s374 + $0xe1] sm:$0xff]
        %v390 = vld [vmem:[%s374 + $0xf1] sm:$0xff]
        %v391 = vsel %vm335, %v375, 0.0
        %v392 = vsel %vm335, %v376, 0.0
        %v393 = vadd.f32 %v391, %v392
        %v394 = vsel %vm335, %v377, 0.0
        %v395 = vadd.f32 %v393, %v394
        %v396 = vsel %vm335, %v378, 0.0
        %v397 = vadd.f32 %v395, %v396
        %v398 = vsel %vm335, %v379, 0.0
        %v399 = vadd.f32 %v397, %v398
        %v400 = vsel %vm335, %v380, 0.0
        %v401 = vadd.f32 %v399, %v400
        %v402 = vsel %vm335, %v381, 0.0
        %v403 = vadd.f32 %v401, %v402
        %v404 = vsel %vm335, %v382, 0.0
        %v405 = vadd.f32 %v403, %v404
        %v406 = vsel %vm335, %v383, 0.0
        %v407 = vadd.f32 %v405, %v406
        %v408 = vsel %vm335, %v384, 0.0
        %v409 = vadd.f32 %v407, %v408
        %v410 = vsel %vm335, %v385, 0.0
        %v411 = vadd.f32 %v409, %v410
        %v412 = vsel %vm335, %v386, 0.0
        %v413 = vadd.f32 %v411, %v412
        %v414 = vsel %vm335, %v387, 0.0
        %v415 = vadd.f32 %v413, %v414
        %v416 = vsel %vm335, %v388, 0.0
        %v417 = vadd.f32 %v415, %v416
        %v418 = vsel %vm335, %v389, 0.0
        %v419 = vadd.f32 %v417, %v418
        %v420 = vsel %vm335, %v390, 0.0
        %v421 = vadd.f32 %v419, %v420
        %v422 = vsel %vm335, %v421, 0.0
        %v423 = vrot.slane %v422, 4
        %v424 = vadd.f32 %v422, %v423
        %v425 = vrot.slane %v424, 2
        %v426 = vadd.f32 %v424, %v425
        %v427 = vrot.slane %v426, 1
        %v428 = vadd.f32 %v426, %v427
        %v429 = vadd.f32 %v373, %v428
        %v430 = vmul.f32 %v429, 0.00390625
        %v431 = vld [vmem:[%s3] sm:$0xff]
        %v432 = vld [vmem:[%s3 + $0x8] sm:$0xff]
        %v434 = vsel %vm335, %v430, 0
        %436 = vmatprep.subr.mxu0 0.0
        %437 = vmatpush1.msra.mxu0 %v431
        %438 = vmatprep.subr.mxu0 0.0
        %439 = vmatpush1.msra.mxu0 %v432
        %440 = vmatprep.subr.mxu0 0.0
        %441 = vmatpush1.msra.mxu0 0.0
        %442 = vmatprep.subr.mxu0 0.0
        %443 = vmatpush1.msra.mxu0 0.0
        %444 = vmatprep.subr.mxu0 0.0
        %445 = vmatpush1.msra.mxu0 0.0
        %446 = vmatprep.subr.mxu0 0.0
        %447 = vmatpush1.msra.mxu0 0.0
        %448 = vmatprep.subr.mxu0 0.0
        %449 = vmatpush1.msra.mxu0 0.0
        %450 = vmatprep.subr.mxu0 0.0
        %451 = vmatpush1.msra.mxu0 0.0
        %452 = vmatprep.subr.mxu0 0.0
        %453 = vmatpush1.msra.mxu0 0.0
        %454 = vmatprep.subr.mxu0 0.0
        %455 = vmatpush1.msra.mxu0 0.0
        %456 = vmatprep.subr.mxu0 0.0
        %457 = vmatpush1.msra.mxu0 0.0
        %458 = vmatprep.subr.mxu0 0.0
        %459 = vmatpush1.msra.mxu0 0.0
        %460 = vmatprep.subr.mxu0 0.0
        %461 = vmatpush1.msra.mxu0 0.0
        %462 = vmatprep.subr.mxu0 0.0
        %463 = vmatpush1.msra.mxu0 0.0
        %464 = vmatprep.subr.mxu0 0.0
        %465 = vmatpush1.msra.mxu0 0.0
        %466 = vmatprep.subr.mxu0 0.0
        %467 = vmatpush1.msra.mxu0 0.0
        %468 = vmatprep.subr.mxu0 0.0
        %469 = vmatpush1.msra.mxu0 0.0
        %470 = vmatprep.subr.mxu0 0.0
        %471 = vmatpush1.msra.mxu0 0.0
        %472 = vmatprep.subr.mxu0 0.0
        %473 = vmatpush1.msra.mxu0 0.0
        %474 = vmatprep.subr.mxu0 0.0
        %475 = vmatpush1.msra.mxu0 0.0
        %476 = vmatprep.subr.mxu0 0.0
        %477 = vmatpush1.msra.mxu0 0.0
        %478 = vmatprep.subr.mxu0 0.0
        %479 = vmatpush1.msra.mxu0 0.0
        %480 = vmatprep.subr.mxu0 0.0
        %481 = vmatpush1.msra.mxu0 0.0
        %482 = vmatprep.subr.mxu0 0.0
        %483 = vmatpush1.msra.mxu0 0.0
        %484 = vmatprep.subr.mxu0 0.0
        %485 = vmatpush1.msra.mxu0 0.0
        %486 = vmatprep.subr.mxu0 0.0
        %487 = vmatpush1.msra.mxu0 0.0
        %488 = vmatprep.subr.mxu0 0.0
        %489 = vmatpush1.msra.mxu0 0.0
        %490 = vmatprep.subr.mxu0 0.0
        %491 = vmatpush1.msra.mxu0 0.0
        %492 = vmatprep.subr.mxu0 0.0
        %493 = vmatpush1.msra.mxu0 0.0
        %494 = vmatprep.subr.mxu0 0.0
        %495 = vmatpush1.msra.mxu0 0.0
        %496 = vmatprep.subr.mxu0 0.0
        %497 = vmatpush1.msra.mxu0 0.0
        %498 = vmatprep.subr.mxu0 0.0
        %499 = vmatpush1.msra.mxu0 0.0
        %500 = vmatprep.mubr.f32.mxu0 0.0
        %501 = vmatmul.mubr.f32.gmra.mrb[0].mxu0 %v434
        %v502 = vpop.f32.mrb[0].mxu0
        %v503 = vadd.f32 0.0, %v502
        %v504 = vpop.f32.mrb[0].mxu0
        %505 = vdwg.mxu0
        %v506 = vmul.f32 %v503, %v317
        %v508 = vrot.slane %v317, 1
        %v510 = vadd.f32 %v506, %v508
        %v511 = vmax.f32 %v510, 0.0
        %vm512 = vcmask 261120
        %513 = vst.msk [vmem:[#allocation2] sm:$0xff] %vm512, 0.0
        %514 = vst.msk [vmem:[#allocation2 + $0x8] sm:$0xff] %vm512, 0.0
        %515 = vst.msk [vmem:[#allocation2 + $0x10] sm:$0xff] %vm512, 0.0
        %516 = vst.msk [vmem:[#allocation2 + $0x18] sm:$0xff] %vm512, 0.0
        %517 = vst.msk [vmem:[#allocation2 + $0x20] sm:$0xff] %vm512, 0.0
        %518 = vst.msk [vmem:[#allocation2 + $0x28] sm:$0xff] %vm512, 0.0
        %519 = vst.msk [vmem:[#allocation2 + $0x30] sm:$0xff] %vm512, 0.0
        %520 = vst.msk [vmem:[#allocation2 + $0x38] sm:$0xff] %vm512, 0.0
        %v521 = vld [vmem:[#allocation2] sm:$0xff]
        %v522 = vld [vmem:[#allocation2 + $0x8] sm:$0xff]
        %v523 = vld [vmem:[#allocation2 + $0x10] sm:$0xff]
        %v524 = vld [vmem:[#allocation2 + $0x18] sm:$0xff]
        %v525 = vld [vmem:[#allocation2 + $0x20] sm:$0xff]
        %v526 = vld [vmem:[#allocation2 + $0x28] sm:$0xff]
        %v527 = vld [vmem:[#allocation2 + $0x30] sm:$0xff]
        %v528 = vld [vmem:[#allocation2 + $0x38] sm:$0xff]
        %v529 = vld [vmem:[%s306] sm:$0xff]
        %v530 = vld [vmem:[%s306 + $0x10] sm:$0xff]
        %v531 = vld [vmem:[%s306 + $0x20] sm:$0xff]
        %v532 = vld [vmem:[%s306 + $0x30] sm:$0xff]
        %v533 = vld [vmem:[%s306 + $0x40] sm:$0xff]
        %v534 = vld [vmem:[%s306 + $0x50] sm:$0xff]
        %v535 = vld [vmem:[%s306 + $0x60] sm:$0xff]
        %v536 = vld [vmem:[%s306 + $0x70] sm:$0xff]
        %v537 = vld [vmem:[%s4] sm:$0xff]
        %v538 = vld [vmem:[%s4 + $0x8] sm:$0xff]
        %v539 = vld [vmem:[%s4 + $0x10] sm:$0xff]
        %v540 = vld [vmem:[%s4 + $0x18] sm:$0xff]
        %v542 = vsel %vm512, %v529, 0
        %v545 = vsel %vm512, %v530, 0
        %v548 = vsel %vm512, %v531, 0
        %v551 = vsel %vm512, %v532, 0
        %v554 = vsel %vm512, %v533, 0
        %v557 = vsel %vm512, %v534, 0
        %v560 = vsel %vm512, %v535, 0
        %v563 = vsel %vm512, %v536, 0
        %565 = vmatprep.subr.mxu0 0.0
        %566 = vmatpush1.msra.mxu0 %v537
        %567 = vmatprep.subr.mxu0 0.0
        %568 = vmatpush1.msra.mxu0 %v538
        %569 = vmatprep.subr.mxu0 0.0
        %570 = vmatpush1.msra.mxu0 %v539
        %571 = vmatprep.subr.mxu0 0.0
        %572 = vmatpush1.msra.mxu0 %v540
        %573 = vmatprep.subr.mxu0 0.0
        %574 = vmatpush1.msra.mxu0 0.0
        %575 = vmatprep.subr.mxu0 0.0
        %576 = vmatpush1.msra.mxu0 0.0
        %577 = vmatprep.subr.mxu0 0.0
        %578 = vmatpush1.msra.mxu0 0.0
        %579 = vmatprep.subr.mxu0 0.0
        %580 = vmatpush1.msra.mxu0 0.0
        %581 = vmatprep.subr.mxu0 0.0
        %582 = vmatpush1.msra.mxu0 0.0
        %583 = vmatprep.subr.mxu0 0.0
        %584 = vmatpush1.msra.mxu0 0.0
        %585 = vmatprep.subr.mxu0 0.0
        %586 = vmatpush1.msra.mxu0 0.0
        %587 = vmatprep.subr.mxu0 0.0
        %588 = vmatpush1.msra.mxu0 0.0
        %589 = vmatprep.subr.mxu0 0.0
        %590 = vmatpush1.msra.mxu0 0.0
        %591 = vmatprep.subr.mxu0 0.0
        %592 = vmatpush1.msra.mxu0 0.0
        %593 = vmatprep.subr.mxu0 0.0
        %594 = vmatpush1.msra.mxu0 0.0
        %595 = vmatprep.subr.mxu0 0.0
        %596 = vmatpush1.msra.mxu0 0.0
        %597 = vmatprep.subr.mxu0 0.0
        %598 = vmatpush1.msra.mxu0 0.0
        %599 = vmatprep.subr.mxu0 0.0
        %600 = vmatpush1.msra.mxu0 0.0
        %601 = vmatprep.subr.mxu0 0.0
        %602 = vmatpush1.msra.mxu0 0.0
        %603 = vmatprep.subr.mxu0 0.0
        %604 = vmatpush1.msra.mxu0 0.0
        %605 = vmatprep.subr.mxu0 0.0
        %606 = vmatpush1.msra.mxu0 0.0
        %607 = vmatprep.subr.mxu0 0.0
        %608 = vmatpush1.msra.mxu0 0.0
        %609 = vmatprep.subr.mxu0 0.0
        %610 = vmatpush1.msra.mxu0 0.0
        %611 = vmatprep.subr.mxu0 0.0
        %612 = vmatpush1.msra.mxu0 0.0
        %613 = vmatprep.subr.mxu0 0.0
        %614 = vmatpush1.msra.mxu0 0.0
        %615 = vmatprep.subr.mxu0 0.0
        %616 = vmatpush1.msra.mxu0 0.0
        %617 = vmatprep.subr.mxu0 0.0
        %618 = vmatpush1.msra.mxu0 0.0
        %619 = vmatprep.subr.mxu0 0.0
        %620 = vmatpush1.msra.mxu0 0.0
        %621 = vmatprep.subr.mxu0 0.0
        %622 = vmatpush1.msra.mxu0 0.0
        %623 = vmatprep.subr.mxu0 0.0
        %624 = vmatpush1.msra.mxu0 0.0
        %625 = vmatprep.subr.mxu0 0.0
        %626 = vmatpush1.msra.mxu0 0.0
        %627 = vmatprep.subr.mxu0 0.0
        %628 = vmatpush1.msra.mxu0 0.0
        %629 = vmatprep.mubr.f32.mxu0 0.0
        %630 = vmatmul.mubr.f32.gmra.mrb[0].mxu0 %v542
        %v631 = vpop.f32.mrb[0].mxu0
        %v632 = vadd.f32 0.0, %v631
        %v633 = vpop.f32.mrb[0].mxu0
        %634 = vmatprep.mubr.f32.mxu0 0.0
        %635 = vmatmul.mubr.f32.gmra.mrb[0].mxu0 %v545
        %v636 = vpop.f32.mrb[0].mxu0
        %v637 = vadd.f32 0.0, %v636
        %v638 = vpop.f32.mrb[0].mxu0
        %639 = vmatprep.mubr.f32.mxu0 0.0
        %640 = vmatmul.mubr.f32.gmra.mrb[0].mxu0 %v548
        %v641 = vpop.f32.mrb[0].mxu0
        %v642 = vadd.f32 0.0, %v641
        %v643 = vpop.f32.mrb[0].mxu0
        %644 = vmatprep.mubr.f32.mxu0 0.0
        %645 = vmatmul.mubr.f32.gmra.mrb[0].mxu0 %v551
        %v646 = vpop.f32.mrb[0].mxu0
        %v647 = vadd.f32 0.0, %v646
        %v648 = vpop.f32.mrb[0].mxu0
        %649 = vmatprep.mubr.f32.mxu0 0.0
        %650 = vmatmul.mubr.f32.gmra.mrb[0].mxu0 %v554
        %v651 = vpop.f32.mrb[0].mxu0
        %v652 = vadd.f32 0.0, %v651
        %v653 = vpop.f32.mrb[0].mxu0
        %654 = vmatprep.mubr.f32.mxu0 0.0
        %655 = vmatmul.mubr.f32.gmra.mrb[0].mxu0 %v557
        %v656 = vpop.f32.mrb[0].mxu0
        %v657 = vadd.f32 0.0, %v656
        %v658 = vpop.f32.mrb[0].mxu0
        %659 = vmatprep.mubr.f32.mxu0 0.0
        %660 = vmatmul.mubr.f32.gmra.mrb[0].mxu0 %v560
        %v661 = vpop.f32.mrb[0].mxu0
        %v662 = vadd.f32 0.0, %v661
        %v663 = vpop.f32.mrb[0].mxu0
        %664 = vmatprep.mubr.f32.mxu0 0.0
        %665 = vmatmul.mubr.f32.gmra.mrb[0].mxu0 %v563
        %v666 = vpop.f32.mrb[0].mxu0
        %v667 = vadd.f32 0.0, %v666
        %v668 = vpop.f32.mrb[0].mxu0
        %669 = vdwg.mxu0
        %v670 = vadd.f32 %v521, %v632
        %v671 = vadd.f32 %v522, %v637
        %v672 = vadd.f32 %v523, %v642
        %v673 = vadd.f32 %v524, %v647
        %v674 = vadd.f32 %v525, %v652
        %v675 = vadd.f32 %v526, %v657
        %v676 = vadd.f32 %v527, %v662
        %v677 = vadd.f32 %v528, %v667
        %678 = vst.msk [vmem:[#allocation2] sm:$0xff] %vm512, %v670
        %679 = vst.msk [vmem:[#allocation2 + $0x8] sm:$0xff] %vm512, %v671
        %680 = vst.msk [vmem:[#allocation2 + $0x10] sm:$0xff] %vm512, %v672
        %681 = vst.msk [vmem:[#allocation2 + $0x18] sm:$0xff] %vm512, %v673
        %682 = vst.msk [vmem:[#allocation2 + $0x20] sm:$0xff] %vm512, %v674
        %683 = vst.msk [vmem:[#allocation2 + $0x28] sm:$0xff] %vm512, %v675
        %684 = vst.msk [vmem:[#allocation2 + $0x30] sm:$0xff] %vm512, %v676
        %685 = vst.msk [vmem:[#allocation2 + $0x38] sm:$0xff] %vm512, %v677
        %v686 = vld [vmem:[#allocation2] sm:$0xff]
        %v687 = vld [vmem:[#allocation2 + $0x8] sm:$0xff]
        %v688 = vld [vmem:[#allocation2 + $0x10] sm:$0xff]
        %v689 = vld [vmem:[#allocation2 + $0x18] sm:$0xff]
        %v690 = vld [vmem:[#allocation2 + $0x20] sm:$0xff]
        %v691 = vld [vmem:[#allocation2 + $0x28] sm:$0xff]
        %v692 = vld [vmem:[#allocation2 + $0x30] sm:$0xff]
        %v693 = vld [vmem:[#allocation2 + $0x38] sm:$0xff]
        %v694 = vld [vmem:[%s306 + $0x1] sm:$0xff]
        %v695 = vld [vmem:[%s306 + $0x11] sm:$0xff]
        %v696 = vld [vmem:[%s306 + $0x21] sm:$0xff]
        %v697 = vld [vmem:[%s306 + $0x31] sm:$0xff]
        %v698 = vld [vmem:[%s306 + $0x41] sm:$0xff]
        %v699 = vld [vmem:[%s306 + $0x51] sm:$0xff]
        %v700 = vld [vmem:[%s306 + $0x61] sm:$0xff]
        %v701 = vld [vmem:[%s306 + $0x71] sm:$0xff]
        %s702 = scalar_lea.vmem %s4, 32
        %v703 = vld [vmem:[%s702] sm:$0xff]
        %v704 = vld [vmem:[%s702 + $0x8] sm:$0xff]
        %v705 = vld [vmem:[%s702 + $0x10] sm:$0xff]
        %v706 = vld [vmem:[%s702 + $0x18] sm:$0xff]
        %v708 = vsel %vm512, %v694, 0
        %v711 = vsel %vm512, %v695, 0
        %v714 = vsel %vm512, %v696, 0
        %v717 = vsel %vm512, %v697, 0
        %v720 = vsel %vm512, %v698, 0
        %v723 = vsel %vm512, %v699, 0
        %v726 = vsel %vm512, %v700, 0
        %v729 = vsel %vm512, %v701, 0
        %731 = vmatprep.subr.mxu0 0.0
        %732 = vmatpush1.msra.mxu0 %v703
        %733 = vmatprep.subr.mxu0 0.0
        %734 = vmatpush1.msra.mxu0 %v704
        %735 = vmatprep.subr.mxu0 0.0
        %736 = vmatpush1.msra.mxu0 %v705
        %737 = vmatprep.subr.mxu0 0.0
        %738 = vmatpush1.msra.mxu0 %v706
        %739 = vmatprep.subr.mxu0 0.0
        %740 = vmatpush1.msra.mxu0 0.0
        %741 = vmatprep.subr.mxu0 0.0
        %742 = vmatpush1.msra.mxu0 0.0
        %743 = vmatprep.subr.mxu0 0.0
        %744 = vmatpush1.msra.mxu0 0.0
        %745 = vmatprep.subr.mxu0 0.0
        %746 = vmatpush1.msra.mxu0 0.0
        %747 = vmatprep.subr.mxu0 0.0
        %748 = vmatpush1.msra.mxu0 0.0
        %749 = vmatprep.subr.mxu0 0.0
        %750 = vmatpush1.msra.mxu0 0.0
        %751 = vmatprep.subr.mxu0 0.0
        %752 = vmatpush1.msra.mxu0 0.0
        %753 = vmatprep.subr.mxu0 0.0
        %754 = vmatpush1.msra.mxu0 0.0
        %755 = vmatprep.subr.mxu0 0.0
        %756 = vmatpush1.msra.mxu0 0.0
        %757 = vmatprep.subr.mxu0 0.0
        %758 = vmatpush1.msra.mxu0 0.0
        %759 = vmatprep.subr.mxu0 0.0
        %760 = vmatpush1.msra.mxu0 0.0
        %761 = vmatprep.subr.mxu0 0.0
        %762 = vmatpush1.msra.mxu0 0.0
        %763 = vmatprep.subr.mxu0 0.0
        %764 = vmatpush1.msra.mxu0 0.0
        %765 = vmatprep.subr.mxu0 0.0
        %766 = vmatpush1.msra.mxu0 0.0
        %767 = vmatprep.subr.mxu0 0.0
        %768 = vmatpush1.msra.mxu0 0.0
        %769 = vmatprep.subr.mxu0 0.0
        %770 = vmatpush1.msra.mxu0 0.0
        %771 = vmatprep.subr.mxu0 0.0
        %772 = vmatpush1.msra.mxu0 0.0
        %773 = vmatprep.subr.mxu0 0.0
        %774 = vmatpush1.msra.mxu0 0.0
        %775 = vmatprep.subr.mxu0 0.0
        %776 = vmatpush1.msra.mxu0 0.0
        %777 = vmatprep.subr.mxu0 0.0
        %778 = vmatpush1.msra.mxu0 0.0
        %779 = vmatprep.subr.mxu0 0.0
        %780 = vmatpush1.msra.mxu0 0.0
        %781 = vmatprep.subr.mxu0 0.0
        %782 = vmatpush1.msra.mxu0 0.0
        %783 = vmatprep.subr.mxu0 0.0
        %784 = vmatpush1.msra.mxu0 0.0
        %785 = vmatprep.subr.mxu0 0.0
        %786 = vmatpush1.msra.mxu0 0.0
        %787 = vmatprep.subr.mxu0 0.0
        %788 = vmatpush1.msra.mxu0 0.0
        %789 = vmatprep.subr.mxu0 0.0
        %790 = vmatpush1.msra.mxu0 0.0
        %791 = vmatprep.subr.mxu0 0.0
        %792 = vmatpush1.msra.mxu0 0.0
        %793 = vmatprep.subr.mxu0 0.0
        %794 = vmatpush1.msra.mxu0 0.0
        %795 = vmatprep.mubr.f32.mxu0 0.0
        %796 = vmatmul.mubr.f32.gmra.mrb[0].mxu0 %v708
        %v797 = vpop.f32.mrb[0].mxu0
        %v798 = vadd.f32 0.0, %v797
        %v799 = vpop.f32.mrb[0].mxu0
        %800 = vmatprep.mubr.f32.mxu0 0.0
        %801 = vmatmul.mubr.f32.gmra.mrb[0].mxu0 %v711
        %v802 = vpop.f32.mrb[0].mxu0
        %v803 = vadd.f32 0.0, %v802
        %v804 = vpop.f32.mrb[0].mxu0
        %805 = vmatprep.mubr.f32.mxu0 0.0
        %806 = vmatmul.mubr.f32.gmra.mrb[0].mxu0 %v714
        %v807 = vpop.f32.mrb[0].mxu0
        %v808 = vadd.f32 0.0, %v807
        %v809 = vpop.f32.mrb[0].mxu0
        %810 = vmatprep.mubr.f32.mxu0 0.0
        %811 = vmatmul.mubr.f32.gmra.mrb[0].mxu0 %v717
        %v812 = vpop.f32.mrb[0].mxu0
        %v813 = vadd.f32 0.0, %v812
        %v814 = vpop.f32.mrb[0].mxu0
        %815 = vmatprep.mubr.f32.mxu0 0.0
        %816 = vmatmul.mubr.f32.gmra.mrb[0].mxu0 %v720
        %v817 = vpop.f32.mrb[0].mxu0
        %v818 = vadd.f32 0.0, %v817
        %v819 = vpop.f32.mrb[0].mxu0
        %820 = vmatprep.mubr.f32.mxu0 0.0
        %821 = vmatmul.mubr.f32.gmra.mrb[0].mxu0 %v723
        %v822 = vpop.f32.mrb[0].mxu0
        %v823 = vadd.f32 0.0, %v822
        %v824 = vpop.f32.mrb[0].mxu0
        %825 = vmatprep.mubr.f32.mxu0 0.0
        %826 = vmatmul.mubr.f32.gmra.mrb[0].mxu0 %v726
        %v827 = vpop.f32.mrb[0].mxu0
        %v828 = vadd.f32 0.0, %v827
        %v829 = vpop.f32.mrb[0].mxu0
        %830 = vmatprep.mubr.f32.mxu0 0.0
        %831 = vmatmul.mubr.f32.gmra.mrb[0].mxu0 %v729
        %v832 = vpop.f32.mrb[0].mxu0
        %v833 = vadd.f32 0.0, %v832
        %v834 = vpop.f32.mrb[0].mxu0
        %835 = vdwg.mxu0
        %v836 = vadd.f32 %v686, %v798
        %v837 = vadd.f32 %v687, %v803
        %v838 = vadd.f32 %v688, %v808
        %v839 = vadd.f32 %v689, %v813
        %v840 = vadd.f32 %v690, %v818
        %v841 = vadd.f32 %v691, %v823
        %v842 = vadd.f32 %v692, %v828
        %v843 = vadd.f32 %v693, %v833
        %844 = vst.msk [vmem:[#allocation2] sm:$0xff] %vm512, %v836
        %845 = vst.msk [vmem:[#allocation2 + $0x8] sm:$0xff] %vm512, %v837
        %846 = vst.msk [vmem:[#allocation2 + $0x10] sm:$0xff] %vm512, %v838
        %847 = vst.msk [vmem:[#allocation2 + $0x18] sm:$0xff] %vm512, %v839
        %848 = vst.msk [vmem:[#allocation2 + $0x20] sm:$0xff] %vm512, %v840
        %849 = vst.msk [vmem:[#allocation2 + $0x28] sm:$0xff] %vm512, %v841
        %850 = vst.msk [vmem:[#allocation2 + $0x30] sm:$0xff] %vm512, %v842
        %851 = vst.msk [vmem:[#allocation2 + $0x38] sm:$0xff] %vm512, %v843
        %v852 = vld [vmem:[#allocation2] sm:$0xff]
        %v853 = vld [vmem:[#allocation2 + $0x8] sm:$0xff]
        %v854 = vld [vmem:[#allocation2 + $0x10] sm:$0xff]
        %v855 = vld [vmem:[#allocation2 + $0x18] sm:$0xff]
        %v856 = vld [vmem:[#allocation2 + $0x20] sm:$0xff]
        %v857 = vld [vmem:[#allocation2 + $0x28] sm:$0xff]
        %v858 = vld [vmem:[#allocation2 + $0x30] sm:$0xff]
        %v859 = vld [vmem:[#allocation2 + $0x38] sm:$0xff]
        %v860 = vld [vmem:[%s306 + $0x2] sm:$0xff]
        %v861 = vld [vmem:[%s306 + $0x12] sm:$0xff]
        %v862 = vld [vmem:[%s306 + $0x22] sm:$0xff]
        %v863 = vld [vmem:[%s306 + $0x32] sm:$0xff]
        %v864 = vld [vmem:[%s306 + $0x42] sm:$0xff]
        %v865 = vld [vmem:[%s306 + $0x52] sm:$0xff]
        %v866 = vld [vmem:[%s306 + $0x62] sm:$0xff]
        %v867 = vld [vmem:[%s306 + $0x72] sm:$0xff]
        %s868 = scalar_lea.vmem %s4, 64
        %v869 = vld [vmem:[%s868] sm:$0xff]
        %v870 = vld [vmem:[%s868 + $0x8] sm:$0xff]
        %v871 = vld [vmem:[%s868 + $0x10] sm:$0xff]
        %v872 = vld [vmem:[%s868 + $0x18] sm:$0xff]
        %v874 = vsel %vm512, %v860, 0
        %v877 = vsel %vm512, %v861, 0
        %v880 = vsel %vm512, %v862, 0
        %v883 = vsel %vm512, %v863, 0
        %v886 = vsel %vm512, %v864, 0
        %v889 = vsel %vm512, %v865, 0
        %v892 = vsel %vm512, %v866, 0
        %v895 = vsel %vm512, %v867, 0
        %897 = vmatprep.subr.mxu0 0.0
        %898 = vmatpush1.msra.mxu0 %v869
        %899 = vmatprep.subr.mxu0 0.0
        %900 = vmatpush1.msra.mxu0 %v870
        %901 = vmatprep.subr.mxu0 0.0
        %902 = vmatpush1.msra.mxu0 %v871
        %903 = vmatprep.subr.mxu0 0.0
        %904 = vmatpush1.msra.mxu0 %v872
        %905 = vmatprep.subr.mxu0 0.0
        %906 = vmatpush1.msra.mxu0 0.0
        %907 = vmatprep.subr.mxu0 0.0
        %908 = vmatpush1.msra.mxu0 0.0
        %909 = vmatprep.subr.mxu0 0.0
        %910 = vmatpush1.msra.mxu0 0.0
        %911 = vmatprep.subr.mxu0 0.0
        %912 = vmatpush1.msra.mxu0 0.0
        %913 = vmatprep.subr.mxu0 0.0
        %914 = vmatpush1.msra.mxu0 0.0
        %915 = vmatprep.subr.mxu0 0.0
        %916 = vmatpush1.msra.mxu0 0.0
        %917 = vmatprep.subr.mxu0 0.0
        %918 = vmatpush1.msra.mxu0 0.0
        %919 = vmatprep.subr.mxu0 0.0
        %920 = vmatpush1.msra.mxu0 0.0
        %921 = vmatprep.subr.mxu0 0.0
        %922 = vmatpush1.msra.mxu0 0.0
        %923 = vmatprep.subr.mxu0 0.0
        %924 = vmatpush1.msra.mxu0 0.0
        %925 = vmatprep.subr.mxu0 0.0
        %926 = vmatpush1.msra.mxu0 0.0
        %927 = vmatprep.subr.mxu0 0.0
        %928 = vmatpush1.msra.mxu0 0.0
        %929 = vmatprep.subr.mxu0 0.0
        %930 = vmatpush1.msra.mxu0 0.0
        %931 = vmatprep.subr.mxu0 0.0
        %932 = vmatpush1.msra.mxu0 0.0
        %933 = vmatprep.subr.mxu0 0.0
        %934 = vmatpush1.msra.mxu0 0.0
        %935 = vmatprep.subr.mxu0 0.0
        %936 = vmatpush1.msra.mxu0 0.0
        %937 = vmatprep.subr.mxu0 0.0
        %938 = vmatpush1.msra.mxu0 0.0
        %939 = vmatprep.subr.mxu0 0.0
        %940 = vmatpush1.msra.mxu0 0.0
        %941 = vmatprep.subr.mxu0 0.0
        %942 = vmatpush1.msra.mxu0 0.0
        %943 = vmatprep.subr.mxu0 0.0
        %944 = vmatpush1.msra.mxu0 0.0
        %945 = vmatprep.subr.mxu0 0.0
        %946 = vmatpush1.msra.mxu0 0.0
        %947 = vmatprep.subr.mxu0 0.0
        %948 = vmatpush1.msra.mxu0 0.0
        %949 = vmatprep.subr.mxu0 0.0
        %950 = vmatpush1.msra.mxu0 0.0
        %951 = vmatprep.subr.mxu0 0.0
        %952 = vmatpush1.msra.mxu0 0.0
        %953 = vmatprep.subr.mxu0 0.0
        %954 = vmatpush1.msra.mxu0 0.0
        %955 = vmatprep.subr.mxu0 0.0
        %956 = vmatpush1.msra.mxu0 0.0
        %957 = vmatprep.subr.mxu0 0.0
        %958 = vmatpush1.msra.mxu0 0.0
        %959 = vmatprep.subr.mxu0 0.0
        %960 = vmatpush1.msra.mxu0 0.0
        %961 = vmatprep.mubr.f32.mxu0 0.0
        %962 = vmatmul.mubr.f32.gmra.mrb[0].mxu0 %v874
        %v963 = vpop.f32.mrb[0].mxu0
        %v964 = vadd.f32 0.0, %v963
        %v965 = vpop.f32.mrb[0].mxu0
        %966 = vmatprep.mubr.f32.mxu0 0.0
        %967 = vmatmul.mubr.f32.gmra.mrb[0].mxu0 %v877
        %v968 = vpop.f32.mrb[0].mxu0
        %v969 = vadd.f32 0.0, %v968
        %v970 = vpop.f32.mrb[0].mxu0
        %971 = vmatprep.mubr.f32.mxu0 0.0
        %972 = vmatmul.mubr.f32.gmra.mrb[0].mxu0 %v880
        %v973 = vpop.f32.mrb[0].mxu0
        %v974 = vadd.f32 0.0, %v973
        %v975 = vpop.f32.mrb[0].mxu0
        %976 = vmatprep.mubr.f32.mxu0 0.0
        %977 = vmatmul.mubr.f32.gmra.mrb[0].mxu0 %v883
        %v978 = vpop.f32.mrb[0].mxu0
        %v979 = vadd.f32 0.0, %v978
        %v980 = vpop.f32.mrb[0].mxu0
        %981 = vmatprep.mubr.f32.mxu0 0.0
        %982 = vmatmul.mubr.f32.gmra.mrb[0].mxu0 %v886
        %v983 = vpop.f32.mrb[0].mxu0
        %v984 = vadd.f32 0.0, %v983
        %v985 = vpop.f32.mrb[0].mxu0
        %986 = vmatprep.mubr.f32.mxu0 0.0
        %987 = vmatmul.mubr.f32.gmra.mrb[0].mxu0 %v889
        %v988 = vpop.f32.mrb[0].mxu0
        %v989 = vadd.f32 0.0, %v988
        %v990 = vpop.f32.mrb[0].mxu0
        %991 = vmatprep.mubr.f32.mxu0 0.0
        %992 = vmatmul.mubr.f32.gmra.mrb[0].mxu0 %v892
        %v993 = vpop.f32.mrb[0].mxu0
        %v994 = vadd.f32 0.0, %v993
        %v995 = vpop.f32.mrb[0].mxu0
        %996 = vmatprep.mubr.f32.mxu0 0.0
        %997 = vmatmul.mubr.f32.gmra.mrb[0].mxu0 %v895
        %v998 = vpop.f32.mrb[0].mxu0
        %v999 = vadd.f32 0.0, %v998
        %v1000 = vpop.f32.mrb[0].mxu0
        %1001 = vdwg.mxu0
        %v1002 = vadd.f32 %v852, %v964
        %v1003 = vadd.f32 %v853, %v969
        %v1004 = vadd.f32 %v854, %v974
        %v1005 = vadd.f32 %v855, %v979
        %v1006 = vadd.f32 %v856, %v984
        %v1007 = vadd.f32 %v857, %v989
        %v1008 = vadd.f32 %v858, %v994
        %v1009 = vadd.f32 %v859, %v999
        %1010 = vst.msk [vmem:[#allocation2] sm:$0xff] %vm512, %v1002
        %1011 = vst.msk [vmem:[#allocation2 + $0x8] sm:$0xff] %vm512, %v1003
        %1012 = vst.msk [vmem:[#allocation2 + $0x10] sm:$0xff] %vm512, %v1004
        %1013 = vst.msk [vmem:[#allocation2 + $0x18] sm:$0xff] %vm512, %v1005
        %1014 = vst.msk [vmem:[#allocation2 + $0x20] sm:$0xff] %vm512, %v1006
        %1015 = vst.msk [vmem:[#allocation2 + $0x28] sm:$0xff] %vm512, %v1007
        %1016 = vst.msk [vmem:[#allocation2 + $0x30] sm:$0xff] %vm512, %v1008
        %1017 = vst.msk [vmem:[#allocation2 + $0x38] sm:$0xff] %vm512, %v1009
        %v1018 = vld [vmem:[#allocation2] sm:$0xff]
        %v1019 = vld [vmem:[#allocation2 + $0x8] sm:$0xff]
        %v1020 = vld [vmem:[#allocation2 + $0x10] sm:$0xff]
        %v1021 = vld [vmem:[#allocation2 + $0x18] sm:$0xff]
        %v1022 = vld [vmem:[#allocation2 + $0x20] sm:$0xff]
        %v1023 = vld [vmem:[#allocation2 + $0x28] sm:$0xff]
        %v1024 = vld [vmem:[#allocation2 + $0x30] sm:$0xff]
        %v1025 = vld [vmem:[#allocation2 + $0x38] sm:$0xff]
        %s1026 = scalar_lea.vmem %s306, 16
        %v1027 = vld [vmem:[%s1026] sm:$0xff]
        %v1028 = vld [vmem:[%s1026 + $0x10] sm:$0xff]
        %v1029 = vld [vmem:[%s1026 + $0x20] sm:$0xff]
        %v1030 = vld [vmem:[%s1026 + $0x30] sm:$0xff]
        %v1031 = vld [vmem:[%s1026 + $0x40] sm:$0xff]
        %v1032 = vld [vmem:[%s1026 + $0x50] sm:$0xff]
        %v1033 = vld [vmem:[%s1026 + $0x60] sm:$0xff]
        %v1034 = vld [vmem:[%s1026 + $0x70] sm:$0xff]
        %s1035 = scalar_lea.vmem %s4, 96
        %v1036 = vld [vmem:[%s1035] sm:$0xff]
        %v1037 = vld [vmem:[%s1035 + $0x8] sm:$0xff]
        %v1038 = vld [vmem:[%s1035 + $0x10] sm:$0xff]
        %v1039 = vld [vmem:[%s1035 + $0x18] sm:$0xff]
        %v1041 = vsel %vm512, %v1027, 0
        %v1044 = vsel %vm512, %v1028, 0
        %v1047 = vsel %vm512, %v1029, 0
        %v1050 = vsel %vm512, %v1030, 0
        %v1053 = vsel %vm512, %v1031, 0
        %v1056 = vsel %vm512, %v1032, 0
        %v1059 = vsel %vm512, %v1033, 0
        %v1062 = vsel %vm512, %v1034, 0
        %1064 = vmatprep.subr.mxu0 0.0
        %1065 = vmatpush1.msra.mxu0 %v1036
        %1066 = vmatprep.subr.mxu0 0.0
        %1067 = vmatpush1.msra.mxu0 %v1037
        %1068 = vmatprep.subr.mxu0 0.0
        %1069 = vmatpush1.msra.mxu0 %v1038
        %1070 = vmatprep.subr.mxu0 0.0
        %1071 = vmatpush1.msra.mxu0 %v1039
        %1072 = vmatprep.subr.mxu0 0.0
        %1073 = vmatpush1.msra.mxu0 0.0
        %1074 = vmatprep.subr.mxu0 0.0
        %1075 = vmatpush1.msra.mxu0 0.0
        %1076 = vmatprep.subr.mxu0 0.0
        %1077 = vmatpush1.msra.mxu0 0.0
        %1078 = vmatprep.subr.mxu0 0.0
        %1079 = vmatpush1.msra.mxu0 0.0
        %1080 = vmatprep.subr.mxu0 0.0
        %1081 = vmatpush1.msra.mxu0 0.0
        %1082 = vmatprep.subr.mxu0 0.0
        %1083 = vmatpush1.msra.mxu0 0.0
        %1084 = vmatprep.subr.mxu0 0.0
        %1085 = vmatpush1.msra.mxu0 0.0
        %1086 = vmatprep.subr.mxu0 0.0
        %1087 = vmatpush1.msra.mxu0 0.0
        %1088 = vmatprep.subr.mxu0 0.0
        %1089 = vmatpush1.msra.mxu0 0.0
        %1090 = vmatprep.subr.mxu0 0.0
        %1091 = vmatpush1.msra.mxu0 0.0
        %1092 = vmatprep.subr.mxu0 0.0
        %1093 = vmatpush1.msra.mxu0 0.0
        %1094 = vmatprep.subr.mxu0 0.0
        %1095 = vmatpush1.msra.mxu0 0.0
        %1096 = vmatprep.subr.mxu0 0.0
        %1097 = vmatpush1.msra.mxu0 0.0
        %1098 = vmatprep.subr.mxu0 0.0
        %1099 = vmatpush1.msra.mxu0 0.0
        %1100 = vmatprep.subr.mxu0 0.0
        %1101 = vmatpush1.msra.mxu0 0.0
        %1102 = vmatprep.subr.mxu0 0.0
        %1103 = vmatpush1.msra.mxu0 0.0
        %1104 = vmatprep.subr.mxu0 0.0
        %1105 = vmatpush1.msra.mxu0 0.0
        %1106 = vmatprep.subr.mxu0 0.0
        %1107 = vmatpush1.msra.mxu0 0.0
        %1108 = vmatprep.subr.mxu0 0.0
        %1109 = vmatpush1.msra.mxu0 0.0
        %1110 = vmatprep.subr.mxu0 0.0
        %1111 = vmatpush1.msra.mxu0 0.0
        %1112 = vmatprep.subr.mxu0 0.0
        %1113 = vmatpush1.msra.mxu0 0.0
        %1114 = vmatprep.subr.mxu0 0.0
        %1115 = vmatpush1.msra.mxu0 0.0
        %1116 = vmatprep.subr.mxu0 0.0
        %1117 = vmatpush1.msra.mxu0 0.0
        %1118 = vmatprep.subr.mxu0 0.0
        %1119 = vmatpush1.msra.mxu0 0.0
        %1120 = vmatprep.subr.mxu0 0.0
        %1121 = vmatpush1.msra.mxu0 0.0
        %1122 = vmatprep.subr.mxu0 0.0
        %1123 = vmatpush1.msra.mxu0 0.0
        %1124 = vmatprep.subr.mxu0 0.0
        %1125 = vmatpush1.msra.mxu0 0.0
        %1126 = vmatprep.subr.mxu0 0.0
        %1127 = vmatpush1.msra.mxu0 0.0
        %1128 = vmatprep.mubr.f32.mxu0 0.0
        %1129 = vmatmul.mubr.f32.gmra.mrb[0].mxu0 %v1041
        %v1130 = vpop.f32.mrb[0].mxu0
        %v1131 = vadd.f32 0.0, %v1130
        %v1132 = vpop.f32.mrb[0].mxu0
        %1133 = vmatprep.mubr.f32.mxu0 0.0
        %1134 = vmatmul.mubr.f32.gmra.mrb[0].mxu0 %v1044
        %v1135 = vpop.f32.mrb[0].mxu0
        %v1136 = vadd.f32 0.0, %v1135
        %v1137 = vpop.f32.mrb[0].mxu0
        %1138 = vmatprep.mubr.f32.mxu0 0.0
        %1139 = vmatmul.mubr.f32.gmra.mrb[0].mxu0 %v1047
        %v1140 = vpop.f32.mrb[0].mxu0
        %v1141 = vadd.f32 0.0, %v1140
        %v1142 = vpop.f32.mrb[0].mxu0
        %1143 = vmatprep.mubr.f32.mxu0 0.0
        %1144 = vmatmul.mubr.f32.gmra.mrb[0].mxu0 %v1050
        %v1145 = vpop.f32.mrb[0].mxu0
        %v1146 = vadd.f32 0.0, %v1145
        %v1147 = vpop.f32.mrb[0].mxu0
        %1148 = vmatprep.mubr.f32.mxu0 0.0
        %1149 = vmatmul.mubr.f32.gmra.mrb[0].mxu0 %v1053
        %v1150 = vpop.f32.mrb[0].mxu0
        %v1151 = vadd.f32 0.0, %v1150
        %v1152 = vpop.f32.mrb[0].mxu0
        %1153 = vmatprep.mubr.f32.mxu0 0.0
        %1154 = vmatmul.mubr.f32.gmra.mrb[0].mxu0 %v1056
        %v1155 = vpop.f32.mrb[0].mxu0
        %v1156 = vadd.f32 0.0, %v1155
        %v1157 = vpop.f32.mrb[0].mxu0
        %1158 = vmatprep.mubr.f32.mxu0 0.0
        %1159 = vmatmul.mubr.f32.gmra.mrb[0].mxu0 %v1059
        %v1160 = vpop.f32.mrb[0].mxu0
        %v1161 = vadd.f32 0.0, %v1160
        %v1162 = vpop.f32.mrb[0].mxu0
        %1163 = vmatprep.mubr.f32.mxu0 0.0
        %1164 = vmatmul.mubr.f32.gmra.mrb[0].mxu0 %v1062
        %v1165 = vpop.f32.mrb[0].mxu0
        %v1166 = vadd.f32 0.0, %v1165
        %v1167 = vpop.f32.mrb[0].mxu0
        %1168 = vdwg.mxu0
        %v1169 = vadd.f32 %v1018, %v1131
        %v1170 = vadd.f32 %v1019, %v1136
        %v1171 = vadd.f32 %v1020, %v1141
        %v1172 = vadd.f32 %v1021, %v1146
        %v1173 = vadd.f32 %v1022, %v1151
        %v1174 = vadd.f32 %v1023, %v1156
        %v1175 = vadd.f32 %v1024, %v1161
        %v1176 = vadd.f32 %v1025, %v1166
        %1177 = vst.msk [vmem:[#allocation2] sm:$0xff] %vm512, %v1169
        %1178 = vst.msk [vmem:[#allocation2 + $0x8] sm:$0xff] %vm512, %v1170
        %1179 = vst.msk [vmem:[#allocation2 + $0x10] sm:$0xff] %vm512, %v1171
        %1180 = vst.msk [vmem:[#allocation2 + $0x18] sm:$0xff] %vm512, %v1172
        %1181 = vst.msk [vmem:[#allocation2 + $0x20] sm:$0xff] %vm512, %v1173
        %1182 = vst.msk [vmem:[#allocation2 + $0x28] sm:$0xff] %vm512, %v1174
        %1183 = vst.msk [vmem:[#allocation2 + $0x30] sm:$0xff] %vm512, %v1175
        %1184 = vst.msk [vmem:[#allocation2 + $0x38] sm:$0xff] %vm512, %v1176
        %v1185 = vld [vmem:[#allocation2] sm:$0xff]
        %v1186 = vld [vmem:[#allocation2 + $0x8] sm:$0xff]
        %v1187 = vld [vmem:[#allocation2 + $0x10] sm:$0xff]
        %v1188 = vld [vmem:[#allocation2 + $0x18] sm:$0xff]
        %v1189 = vld [vmem:[#allocation2 + $0x20] sm:$0xff]
        %v1190 = vld [vmem:[#allocation2 + $0x28] sm:$0xff]
        %v1191 = vld [vmem:[#allocation2 + $0x30] sm:$0xff]
        %v1192 = vld [vmem:[#allocation2 + $0x38] sm:$0xff]
        %v1193 = vld [vmem:[%s1026 + $0x1] sm:$0xff]
        %v1194 = vld [vmem:[%s1026 + $0x11] sm:$0xff]
        %v1195 = vld [vmem:[%s1026 + $0x21] sm:$0xff]
        %v1196 = vld [vmem:[%s1026 + $0x31] sm:$0xff]
        %v1197 = vld [vmem:[%s1026 + $0x41] sm:$0xff]
        %v1198 = vld [vmem:[%s1026 + $0x51] sm:$0xff]
        %v1199 = vld [vmem:[%s1026 + $0x61] sm:$0xff]
        %v1200 = vld [vmem:[%s1026 + $0x71] sm:$0xff]
        %s1201 = scalar_lea.vmem %s4, 128
        %v1202 = vld [vmem:[%s1201] sm:$0xff]
        %v1203 = vld [vmem:[%s1201 + $0x8] sm:$0xff]
        %v1204 = vld [vmem:[%s1201 + $0x10] sm:$0xff]
        %v1205 = vld [vmem:[%s1201 + $0x18] sm:$0xff]
        %v1207 = vsel %vm512, %v1193, 0
        %v1210 = vsel %vm512, %v1194, 0
        %v1213 = vsel %vm512, %v1195, 0
        %v1216 = vsel %vm512, %v1196, 0
        %v1219 = vsel %vm512, %v1197, 0
        %v1222 = vsel %vm512, %v1198, 0
        %v1225 = vsel %vm512, %v1199, 0
        %v1228 = vsel %vm512, %v1200, 0
        %1230 = vmatprep.subr.mxu0 0.0
        %1231 = vmatpush1.msra.mxu0 %v1202
        %1232 = vmatprep.subr.mxu0 0.0
        %1233 = vmatpush1.msra.mxu0 %v1203
        %1234 = vmatprep.subr.mxu0 0.0
        %1235 = vmatpush1.msra.mxu0 %v1204
        %1236 = vmatprep.subr.mxu0 0.0
        %1237 = vmatpush1.msra.mxu0 %v1205
        %1238 = vmatprep.subr.mxu0 0.0
        %1239 = vmatpush1.msra.mxu0 0.0
        %1240 = vmatprep.subr.mxu0 0.0
        %1241 = vmatpush1.msra.mxu0 0.0
        %1242 = vmatprep.subr.mxu0 0.0
        %1243 = vmatpush1.msra.mxu0 0.0
        %1244 = vmatprep.subr.mxu0 0.0
        %1245 = vmatpush1.msra.mxu0 0.0
        %1246 = vmatprep.subr.mxu0 0.0
        %1247 = vmatpush1.msra.mxu0 0.0
        %1248 = vmatprep.subr.mxu0 0.0
        %1249 = vmatpush1.msra.mxu0 0.0
        %1250 = vmatprep.subr.mxu0 0.0
        %1251 = vmatpush1.msra.mxu0 0.0
        %1252 = vmatprep.subr.mxu0 0.0
        %1253 = vmatpush1.msra.mxu0 0.0
        %1254 = vmatprep.subr.mxu0 0.0
        %1255 = vmatpush1.msra.mxu0 0.0
        %1256 = vmatprep.subr.mxu0 0.0
        %1257 = vmatpush1.msra.mxu0 0.0
        %1258 = vmatprep.subr.mxu0 0.0
        %1259 = vmatpush1.msra.mxu0 0.0
        %1260 = vmatprep.subr.mxu0 0.0
        %1261 = vmatpush1.msra.mxu0 0.0
        %1262 = vmatprep.subr.mxu0 0.0
        %1263 = vmatpush1.msra.mxu0 0.0
        %1264 = vmatprep.subr.mxu0 0.0
        %1265 = vmatpush1.msra.mxu0 0.0
        %1266 = vmatprep.subr.mxu0 0.0
        %1267 = vmatpush1.msra.mxu0 0.0
        %1268 = vmatprep.subr.mxu0 0.0
        %1269 = vmatpush1.msra.mxu0 0.0
        %1270 = vmatprep.subr.mxu0 0.0
        %1271 = vmatpush1.msra.mxu0 0.0
        %1272 = vmatprep.subr.mxu0 0.0
        %1273 = vmatpush1.msra.mxu0 0.0
        %1274 = vmatprep.subr.mxu0 0.0
        %1275 = vmatpush1.msra.mxu0 0.0
        %1276 = vmatprep.subr.mxu0 0.0
        %1277 = vmatpush1.msra.mxu0 0.0
        %1278 = vmatprep.subr.mxu0 0.0
        %1279 = vmatpush1.msra.mxu0 0.0
        %1280 = vmatprep.subr.mxu0 0.0
        %1281 = vmatpush1.msra.mxu0 0.0
        %1282 = vmatprep.subr.mxu0 0.0
        %1283 = vmatpush1.msra.mxu0 0.0
        %1284 = vmatprep.subr.mxu0 0.0
        %1285 = vmatpush1.msra.mxu0 0.0
        %1286 = vmatprep.subr.mxu0 0.0
        %1287 = vmatpush1.msra.mxu0 0.0
        %1288 = vmatprep.subr.mxu0 0.0
        %1289 = vmatpush1.msra.mxu0 0.0
        %1290 = vmatprep.subr.mxu0 0.0
        %1291 = vmatpush1.msra.mxu0 0.0
        %1292 = vmatprep.subr.mxu0 0.0
        %1293 = vmatpush1.msra.mxu0 0.0
        %1294 = vmatprep.mubr.f32.mxu0 0.0
        %1295 = vmatmul.mubr.f32.gmra.mrb[0].mxu0 %v1207
        %v1296 = vpop.f32.mrb[0].mxu0
        %v1297 = vadd.f32 0.0, %v1296
        %v1298 = vpop.f32.mrb[0].mxu0
        %1299 = vmatprep.mubr.f32.mxu0 0.0
        %1300 = vmatmul.mubr.f32.gmra.mrb[0].mxu0 %v1210
        %v1301 = vpop.f32.mrb[0].mxu0
        %v1302 = vadd.f32 0.0, %v1301
        %v1303 = vpop.f32.mrb[0].mxu0
        %1304 = vmatprep.mubr.f32.mxu0 0.0
        %1305 = vmatmul.mubr.f32.gmra.mrb[0].mxu0 %v1213
        %v1306 = vpop.f32.mrb[0].mxu0
        %v1307 = vadd.f32 0.0, %v1306
        %v1308 = vpop.f32.mrb[0].mxu0
        %1309 = vmatprep.mubr.f32.mxu0 0.0
        %1310 = vmatmul.mubr.f32.gmra.mrb[0].mxu0 %v1216
        %v1311 = vpop.f32.mrb[0].mxu0
        %v1312 = vadd.f32 0.0, %v1311
        %v1313 = vpop.f32.mrb[0].mxu0
        %1314 = vmatprep.mubr.f32.mxu0 0.0
        %1315 = vmatmul.mubr.f32.gmra.mrb[0].mxu0 %v1219
        %v1316 = vpop.f32.mrb[0].mxu0
        %v1317 = vadd.f32 0.0, %v1316
        %v1318 = vpop.f32.mrb[0].mxu0
        %1319 = vmatprep.mubr.f32.mxu0 0.0
        %1320 = vmatmul.mubr.f32.gmra.mrb[0].mxu0 %v1222
        %v1321 = vpop.f32.mrb[0].mxu0
        %v1322 = vadd.f32 0.0, %v1321
        %v1323 = vpop.f32.mrb[0].mxu0
        %1324 = vmatprep.mubr.f32.mxu0 0.0
        %1325 = vmatmul.mubr.f32.gmra.mrb[0].mxu0 %v1225
        %v1326 = vpop.f32.mrb[0].mxu0
        %v1327 = vadd.f32 0.0, %v1326
        %v1328 = vpop.f32.mrb[0].mxu0
        %1329 = vmatprep.mubr.f32.mxu0 0.0
        %1330 = vmatmul.mubr.f32.gmra.mrb[0].mxu0 %v1228
        %v1331 = vpop.f32.mrb[0].mxu0
        %v1332 = vadd.f32 0.0, %v1331
        %v1333 = vpop.f32.mrb[0].mxu0
        %1334 = vdwg.mxu0
        %v1335 = vadd.f32 %v1185, %v1297
        %v1336 = vadd.f32 %v1186, %v1302
        %v1337 = vadd.f32 %v1187, %v1307
        %v1338 = vadd.f32 %v1188, %v1312
        %v1339 = vadd.f32 %v1189, %v1317
        %v1340 = vadd.f32 %v1190, %v1322
        %v1341 = vadd.f32 %v1191, %v1327
        %v1342 = vadd.f32 %v1192, %v1332
        %1343 = vst.msk [vmem:[#allocation2] sm:$0xff] %vm512, %v1335
        %1344 = vst.msk [vmem:[#allocation2 + $0x8] sm:$0xff] %vm512, %v1336
        %1345 = vst.msk [vmem:[#allocation2 + $0x10] sm:$0xff] %vm512, %v1337
        %1346 = vst.msk [vmem:[#allocation2 + $0x18] sm:$0xff] %vm512, %v1338
        %1347 = vst.msk [vmem:[#allocation2 + $0x20] sm:$0xff] %vm512, %v1339
        %1348 = vst.msk [vmem:[#allocation2 + $0x28] sm:$0xff] %vm512, %v1340
        %1349 = vst.msk [vmem:[#allocation2 + $0x30] sm:$0xff] %vm512, %v1341
        %1350 = vst.msk [vmem:[#allocation2 + $0x38] sm:$0xff] %vm512, %v1342
        %v1351 = vld [vmem:[#allocation2] sm:$0xff]
        %v1352 = vld [vmem:[#allocation2 + $0x8] sm:$0xff]
        %v1353 = vld [vmem:[#allocation2 + $0x10] sm:$0xff]
        %v1354 = vld [vmem:[#allocation2 + $0x18] sm:$0xff]
        %v1355 = vld [vmem:[#allocation2 + $0x20] sm:$0xff]
        %v1356 = vld [vmem:[#allocation2 + $0x28] sm:$0xff]
        %v1357 = vld [vmem:[#allocation2 + $0x30] sm:$0xff]
        %v1358 = vld [vmem:[#allocation2 + $0x38] sm:$0xff]
        %v1359 = vld [vmem:[%s1026 + $0x2] sm:$0xff]
        %v1360 = vld [vmem:[%s1026 + $0x12] sm:$0xff]
        %v1361 = vld [vmem:[%s1026 + $0x22] sm:$0xff]
        %v1362 = vld [vmem:[%s1026 + $0x32] sm:$0xff]
        %v1363 = vld [vmem:[%s1026 + $0x42] sm:$0xff]
        %v1364 = vld [vmem:[%s1026 + $0x52] sm:$0xff]
        %v1365 = vld [vmem:[%s1026 + $0x62] sm:$0xff]
        %v1366 = vld [vmem:[%s1026 + $0x72] sm:$0xff]
        %s1367 = scalar_lea.vmem %s4, 160
        %v1368 = vld [vmem:[%s1367] sm:$0xff]
        %v1369 = vld [vmem:[%s1367 + $0x8] sm:$0xff]
        %v1370 = vld [vmem:[%s1367 + $0x10] sm:$0xff]
        %v1371 = vld [vmem:[%s1367 + $0x18] sm:$0xff]
        %v1373 = vsel %vm512, %v1359, 0
        %v1376 = vsel %vm512, %v1360, 0
        %v1379 = vsel %vm512, %v1361, 0
        %v1382 = vsel %vm512, %v1362, 0
        %v1385 = vsel %vm512, %v1363, 0
        %v1388 = vsel %vm512, %v1364, 0
        %v1391 = vsel %vm512, %v1365, 0
        %v1394 = vsel %vm512, %v1366, 0
        %1396 = vmatprep.subr.mxu0 0.0
        %1397 = vmatpush1.msra.mxu0 %v1368
        %1398 = vmatprep.subr.mxu0 0.0
        %1399 = vmatpush1.msra.mxu0 %v1369
        %1400 = vmatprep.subr.mxu0 0.0
        %1401 = vmatpush1.msra.mxu0 %v1370
        %1402 = vmatprep.subr.mxu0 0.0
        %1403 = vmatpush1.msra.mxu0 %v1371
        %1404 = vmatprep.subr.mxu0 0.0
        %1405 = vmatpush1.msra.mxu0 0.0
        %1406 = vmatprep.subr.mxu0 0.0
        %1407 = vmatpush1.msra.mxu0 0.0
        %1408 = vmatprep.subr.mxu0 0.0
        %1409 = vmatpush1.msra.mxu0 0.0
        %1410 = vmatprep.subr.mxu0 0.0
        %1411 = vmatpush1.msra.mxu0 0.0
        %1412 = vmatprep.subr.mxu0 0.0
        %1413 = vmatpush1.msra.mxu0 0.0
        %1414 = vmatprep.subr.mxu0 0.0
        %1415 = vmatpush1.msra.mxu0 0.0
        %1416 = vmatprep.subr.mxu0 0.0
        %1417 = vmatpush1.msra.mxu0 0.0
        %1418 = vmatprep.subr.mxu0 0.0
        %1419 = vmatpush1.msra.mxu0 0.0
        %1420 = vmatprep.subr.mxu0 0.0
        %1421 = vmatpush1.msra.mxu0 0.0
        %1422 = vmatprep.subr.mxu0 0.0
        %1423 = vmatpush1.msra.mxu0 0.0
        %1424 = vmatprep.subr.mxu0 0.0
        %1425 = vmatpush1.msra.mxu0 0.0
        %1426 = vmatprep.subr.mxu0 0.0
        %1427 = vmatpush1.msra.mxu0 0.0
        %1428 = vmatprep.subr.mxu0 0.0
        %1429 = vmatpush1.msra.mxu0 0.0
        %1430 = vmatprep.subr.mxu0 0.0
        %1431 = vmatpush1.msra.mxu0 0.0
        %1432 = vmatprep.subr.mxu0 0.0
        %1433 = vmatpush1.msra.mxu0 0.0
        %1434 = vmatprep.subr.mxu0 0.0
        %1435 = vmatpush1.msra.mxu0 0.0
        %1436 = vmatprep.subr.mxu0 0.0
        %1437 = vmatpush1.msra.mxu0 0.0
        %1438 = vmatprep.subr.mxu0 0.0
        %1439 = vmatpush1.msra.mxu0 0.0
        %1440 = vmatprep.subr.mxu0 0.0
        %1441 = vmatpush1.msra.mxu0 0.0
        %1442 = vmatprep.subr.mxu0 0.0
        %1443 = vmatpush1.msra.mxu0 0.0
        %1444 = vmatprep.subr.mxu0 0.0
        %1445 = vmatpush1.msra.mxu0 0.0
        %1446 = vmatprep.subr.mxu0 0.0
        %1447 = vmatpush1.msra.mxu0 0.0
        %1448 = vmatprep.subr.mxu0 0.0
        %1449 = vmatpush1.msra.mxu0 0.0
        %1450 = vmatprep.subr.mxu0 0.0
        %1451 = vmatpush1.msra.mxu0 0.0
        %1452 = vmatprep.subr.mxu0 0.0
        %1453 = vmatpush1.msra.mxu0 0.0
        %1454 = vmatprep.subr.mxu0 0.0
        %1455 = vmatpush1.msra.mxu0 0.0
        %1456 = vmatprep.subr.mxu0 0.0
        %1457 = vmatpush1.msra.mxu0 0.0
        %1458 = vmatprep.subr.mxu0 0.0
        %1459 = vmatpush1.msra.mxu0 0.0
        %1460 = vmatprep.mubr.f32.mxu0 0.0
        %1461 = vmatmul.mubr.f32.gmra.mrb[0].mxu0 %v1373
        %v1462 = vpop.f32.mrb[0].mxu0
        %v1463 = vadd.f32 0.0, %v1462
        %v1464 = vpop.f32.mrb[0].mxu0
        %1465 = vmatprep.mubr.f32.mxu0 0.0
        %1466 = vmatmul.mubr.f32.gmra.mrb[0].mxu0 %v1376
        %v1467 = vpop.f32.mrb[0].mxu0
        %v1468 = vadd.f32 0.0, %v1467
        %v1469 = vpop.f32.mrb[0].mxu0
        %1470 = vmatprep.mubr.f32.mxu0 0.0
        %1471 = vmatmul.mubr.f32.gmra.mrb[0].mxu0 %v1379
        %v1472 = vpop.f32.mrb[0].mxu0
        %v1473 = vadd.f32 0.0, %v1472
        %v1474 = vpop.f32.mrb[0].mxu0
        %1475 = vmatprep.mubr.f32.mxu0 0.0
        %1476 = vmatmul.mubr.f32.gmra.mrb[0].mxu0 %v1382
        %v1477 = vpop.f32.mrb[0].mxu0
        %v1478 = vadd.f32 0.0, %v1477
        %v1479 = vpop.f32.mrb[0].mxu0
        %1480 = vmatprep.mubr.f32.mxu0 0.0
        %1481 = vmatmul.mubr.f32.gmra.mrb[0].mxu0 %v1385
        %v1482 = vpop.f32.mrb[0].mxu0
        %v1483 = vadd.f32 0.0, %v1482
        %v1484 = vpop.f32.mrb[0].mxu0
        %1485 = vmatprep.mubr.f32.mxu0 0.0
        %1486 = vmatmul.mubr.f32.gmra.mrb[0].mxu0 %v1388
        %v1487 = vpop.f32.mrb[0].mxu0
        %v1488 = vadd.f32 0.0, %v1487
        %v1489 = vpop.f32.mrb[0].mxu0
        %1490 = vmatprep.mubr.f32.mxu0 0.0
        %1491 = vmatmul.mubr.f32.gmra.mrb[0].mxu0 %v1391
        %v1492 = vpop.f32.mrb[0].mxu0
        %v1493 = vadd.f32 0.0, %v1492
        %v1494 = vpop.f32.mrb[0].mxu0
        %1495 = vmatprep.mubr.f32.mxu0 0.0
        %1496 = vmatmul.mubr.f32.gmra.mrb[0].mxu0 %v1394
        %v1497 = vpop.f32.mrb[0].mxu0
        %v1498 = vadd.f32 0.0, %v1497
        %v1499 = vpop.f32.mrb[0].mxu0
        %1500 = vdwg.mxu0
        %v1501 = vadd.f32 %v1351, %v1463
        %v1502 = vadd.f32 %v1352, %v1468
        %v1503 = vadd.f32 %v1353, %v1473
        %v1504 = vadd.f32 %v1354, %v1478
        %v1505 = vadd.f32 %v1355, %v1483
        %v1506 = vadd.f32 %v1356, %v1488
        %v1507 = vadd.f32 %v1357, %v1493
        %v1508 = vadd.f32 %v1358, %v1498
        %1509 = vst.msk [vmem:[#allocation2] sm:$0xff] %vm512, %v1501
        %1510 = vst.msk [vmem:[#allocation2 + $0x8] sm:$0xff] %vm512, %v1502
        %1511 = vst.msk [vmem:[#allocation2 + $0x10] sm:$0xff] %vm512, %v1503
        %1512 = vst.msk [vmem:[#allocation2 + $0x18] sm:$0xff] %vm512, %v1504
        %1513 = vst.msk [vmem:[#allocation2 + $0x20] sm:$0xff] %vm512, %v1505
        %1514 = vst.msk [vmem:[#allocation2 + $0x28] sm:$0xff] %vm512, %v1506
        %1515 = vst.msk [vmem:[#allocation2 + $0x30] sm:$0xff] %vm512, %v1507
        %1516 = vst.msk [vmem:[#allocation2 + $0x38] sm:$0xff] %vm512, %v1508
        %v1517 = vld [vmem:[#allocation2] sm:$0xff]
        %v1518 = vld [vmem:[#allocation2 + $0x8] sm:$0xff]
        %v1519 = vld [vmem:[#allocation2 + $0x10] sm:$0xff]
        %v1520 = vld [vmem:[#allocation2 + $0x18] sm:$0xff]
        %v1521 = vld [vmem:[#allocation2 + $0x20] sm:$0xff]
        %v1522 = vld [vmem:[#allocation2 + $0x28] sm:$0xff]
        %v1523 = vld [vmem:[#allocation2 + $0x30] sm:$0xff]
        %v1524 = vld [vmem:[#allocation2 + $0x38] sm:$0xff]
        %s1525 = scalar_lea.vmem %s306, 32
        %v1526 = vld [vmem:[%s1525] sm:$0xff]
        %v1527 = vld [vmem:[%s1525 + $0x10] sm:$0xff]
        %v1528 = vld [vmem:[%s1525 + $0x20] sm:$0xff]
        %v1529 = vld [vmem:[%s1525 + $0x30] sm:$0xff]
        %v1530 = vld [vmem:[%s1525 + $0x40] sm:$0xff]
        %v1531 = vld [vmem:[%s1525 + $0x50] sm:$0xff]
        %v1532 = vld [vmem:[%s1525 + $0x60] sm:$0xff]
        %v1533 = vld [vmem:[%s1525 + $0x70] sm:$0xff]
        %s1534 = scalar_lea.vmem %s4, 192
        %v1535 = vld [vmem:[%s1534] sm:$0xff]
        %v1536 = vld [vmem:[%s1534 + $0x8] sm:$0xff]
        %v1537 = vld [vmem:[%s1534 + $0x10] sm:$0xff]
        %v1538 = vld [vmem:[%s1534 + $0x18] sm:$0xff]
        %v1540 = vsel %vm512, %v1526, 0
        %v1543 = vsel %vm512, %v1527, 0
        %v1546 = vsel %vm512, %v1528, 0
        %v1549 = vsel %vm512, %v1529, 0
        %v1552 = vsel %vm512, %v1530, 0
        %v1555 = vsel %vm512, %v1531, 0
        %v1558 = vsel %vm512, %v1532, 0
        %v1561 = vsel %vm512, %v1533, 0
        %1563 = vmatprep.subr.mxu0 0.0
        %1564 = vmatpush1.msra.mxu0 %v1535
        %1565 = vmatprep.subr.mxu0 0.0
        %1566 = vmatpush1.msra.mxu0 %v1536
        %1567 = vmatprep.subr.mxu0 0.0
        %1568 = vmatpush1.msra.mxu0 %v1537
        %1569 = vmatprep.subr.mxu0 0.0
        %1570 = vmatpush1.msra.mxu0 %v1538
        %1571 = vmatprep.subr.mxu0 0.0
        %1572 = vmatpush1.msra.mxu0 0.0
        %1573 = vmatprep.subr.mxu0 0.0
        %1574 = vmatpush1.msra.mxu0 0.0
        %1575 = vmatprep.subr.mxu0 0.0
        %1576 = vmatpush1.msra.mxu0 0.0
        %1577 = vmatprep.subr.mxu0 0.0
        %1578 = vmatpush1.msra.mxu0 0.0
        %1579 = vmatprep.subr.mxu0 0.0
        %1580 = vmatpush1.msra.mxu0 0.0
        %1581 = vmatprep.subr.mxu0 0.0
        %1582 = vmatpush1.msra.mxu0 0.0
        %1583 = vmatprep.subr.mxu0 0.0
        %1584 = vmatpush1.msra.mxu0 0.0
        %1585 = vmatprep.subr.mxu0 0.0
        %1586 = vmatpush1.msra.mxu0 0.0
        %1587 = vmatprep.subr.mxu0 0.0
        %1588 = vmatpush1.msra.mxu0 0.0
        %1589 = vmatprep.subr.mxu0 0.0
        %1590 = vmatpush1.msra.mxu0 0.0
        %1591 = vmatprep.subr.mxu0 0.0
        %1592 = vmatpush1.msra.mxu0 0.0
        %1593 = vmatprep.subr.mxu0 0.0
        %1594 = vmatpush1.msra.mxu0 0.0
        %1595 = vmatprep.subr.mxu0 0.0
        %1596 = vmatpush1.msra.mxu0 0.0
        %1597 = vmatprep.subr.mxu0 0.0
        %1598 = vmatpush1.msra.mxu0 0.0
        %1599 = vmatprep.subr.mxu0 0.0
        %1600 = vmatpush1.msra.mxu0 0.0
        %1601 = vmatprep.subr.mxu0 0.0
        %1602 = vmatpush1.msra.mxu0 0.0
        %1603 = vmatprep.subr.mxu0 0.0
        %1604 = vmatpush1.msra.mxu0 0.0
        %1605 = vmatprep.subr.mxu0 0.0
        %1606 = vmatpush1.msra.mxu0 0.0
        %1607 = vmatprep.subr.mxu0 0.0
        %1608 = vmatpush1.msra.mxu0 0.0
        %1609 = vmatprep.subr.mxu0 0.0
        %1610 = vmatpush1.msra.mxu0 0.0
        %1611 = vmatprep.subr.mxu0 0.0
        %1612 = vmatpush1.msra.mxu0 0.0
        %1613 = vmatprep.subr.mxu0 0.0
        %1614 = vmatpush1.msra.mxu0 0.0
        %1615 = vmatprep.subr.mxu0 0.0
        %1616 = vmatpush1.msra.mxu0 0.0
        %1617 = vmatprep.subr.mxu0 0.0
        %1618 = vmatpush1.msra.mxu0 0.0
        %1619 = vmatprep.subr.mxu0 0.0
        %1620 = vmatpush1.msra.mxu0 0.0
        %1621 = vmatprep.subr.mxu0 0.0
        %1622 = vmatpush1.msra.mxu0 0.0
        %1623 = vmatprep.subr.mxu0 0.0
        %1624 = vmatpush1.msra.mxu0 0.0
        %1625 = vmatprep.subr.mxu0 0.0
        %1626 = vmatpush1.msra.mxu0 0.0
        %1627 = vmatprep.mubr.f32.mxu0 0.0
        %1628 = vmatmul.mubr.f32.gmra.mrb[0].mxu0 %v1540
        %v1629 = vpop.f32.mrb[0].mxu0
        %v1630 = vadd.f32 0.0, %v1629
        %v1631 = vpop.f32.mrb[0].mxu0
        %1632 = vmatprep.mubr.f32.mxu0 0.0
        %1633 = vmatmul.mubr.f32.gmra.mrb[0].mxu0 %v1543
        %v1634 = vpop.f32.mrb[0].mxu0
        %v1635 = vadd.f32 0.0, %v1634
        %v1636 = vpop.f32.mrb[0].mxu0
        %1637 = vmatprep.mubr.f32.mxu0 0.0
        %1638 = vmatmul.mubr.f32.gmra.mrb[0].mxu0 %v1546
        %v1639 = vpop.f32.mrb[0].mxu0
        %v1640 = vadd.f32 0.0, %v1639
        %v1641 = vpop.f32.mrb[0].mxu0
        %1642 = vmatprep.mubr.f32.mxu0 0.0
        %1643 = vmatmul.mubr.f32.gmra.mrb[0].mxu0 %v1549
        %v1644 = vpop.f32.mrb[0].mxu0
        %v1645 = vadd.f32 0.0, %v1644
        %v1646 = vpop.f32.mrb[0].mxu0
        %1647 = vmatprep.mubr.f32.mxu0 0.0
        %1648 = vmatmul.mubr.f32.gmra.mrb[0].mxu0 %v1552
        %v1649 = vpop.f32.mrb[0].mxu0
        %v1650 = vadd.f32 0.0, %v1649
        %v1651 = vpop.f32.mrb[0].mxu0
        %1652 = vmatprep.mubr.f32.mxu0 0.0
        %1653 = vmatmul.mubr.f32.gmra.mrb[0].mxu0 %v1555
        %v1654 = vpop.f32.mrb[0].mxu0
        %v1655 = vadd.f32 0.0, %v1654
        %v1656 = vpop.f32.mrb[0].mxu0
        %1657 = vmatprep.mubr.f32.mxu0 0.0
        %1658 = vmatmul.mubr.f32.gmra.mrb[0].mxu0 %v1558
        %v1659 = vpop.f32.mrb[0].mxu0
        %v1660 = vadd.f32 0.0, %v1659
        %v1661 = vpop.f32.mrb[0].mxu0
        %1662 = vmatprep.mubr.f32.mxu0 0.0
        %1663 = vmatmul.mubr.f32.gmra.mrb[0].mxu0 %v1561
        %v1664 = vpop.f32.mrb[0].mxu0
        %v1665 = vadd.f32 0.0, %v1664
        %v1666 = vpop.f32.mrb[0].mxu0
        %1667 = vdwg.mxu0
        %v1668 = vadd.f32 %v1517, %v1630
        %v1669 = vadd.f32 %v1518, %v1635
        %v1670 = vadd.f32 %v1519, %v1640
        %v1671 = vadd.f32 %v1520, %v1645
        %v1672 = vadd.f32 %v1521, %v1650
        %v1673 = vadd.f32 %v1522, %v1655
        %v1674 = vadd.f32 %v1523, %v1660
        %v1675 = vadd.f32 %v1524, %v1665
        %1676 = vst.msk [vmem:[#allocation2] sm:$0xff] %vm512, %v1668
        %1677 = vst.msk [vmem:[#allocation2 + $0x8] sm:$0xff] %vm512, %v1669
        %1678 = vst.msk [vmem:[#allocation2 + $0x10] sm:$0xff] %vm512, %v1670
        %1679 = vst.msk [vmem:[#allocation2 + $0x18] sm:$0xff] %vm512, %v1671
        %1680 = vst.msk [vmem:[#allocation2 + $0x20] sm:$0xff] %vm512, %v1672
        %1681 = vst.msk [vmem:[#allocation2 + $0x28] sm:$0xff] %vm512, %v1673
        %1682 = vst.msk [vmem:[#allocation2 + $0x30] sm:$0xff] %vm512, %v1674
        %1683 = vst.msk [vmem:[#allocation2 + $0x38] sm:$0xff] %vm512, %v1675
        %v1684 = vld [vmem:[#allocation2] sm:$0xff]
        %v1685 = vld [vmem:[#allocation2 + $0x8] sm:$0xff]
        %v1686 = vld [vmem:[#allocation2 + $0x10] sm:$0xff]
        %v1687 = vld [vmem:[#allocation2 + $0x18] sm:$0xff]
        %v1688 = vld [vmem:[#allocation2 + $0x20] sm:$0xff]
        %v1689 = vld [vmem:[#allocation2 + $0x28] sm:$0xff]
        %v1690 = vld [vmem:[#allocation2 + $0x30] sm:$0xff]
        %v1691 = vld [vmem:[#allocation2 + $0x38] sm:$0xff]
        %v1692 = vld [vmem:[%s1525 + $0x1] sm:$0xff]
        %v1693 = vld [vmem:[%s1525 + $0x11] sm:$0xff]
        %v1694 = vld [vmem:[%s1525 + $0x21] sm:$0xff]
        %v1695 = vld [vmem:[%s1525 + $0x31] sm:$0xff]
        %v1696 = vld [vmem:[%s1525 + $0x41] sm:$0xff]
        %v1697 = vld [vmem:[%s1525 + $0x51] sm:$0xff]
        %v1698 = vld [vmem:[%s1525 + $0x61] sm:$0xff]
        %v1699 = vld [vmem:[%s1525 + $0x71] sm:$0xff]
        %s1700 = scalar_lea.vmem %s4, 224
        %v1701 = vld [vmem:[%s1700] sm:$0xff]
        %v1702 = vld [vmem:[%s1700 + $0x8] sm:$0xff]
        %v1703 = vld [vmem:[%s1700 + $0x10] sm:$0xff]
        %v1704 = vld [vmem:[%s1700 + $0x18] sm:$0xff]
        %v1706 = vsel %vm512, %v1692, 0
        %v1709 = vsel %vm512, %v1693, 0
        %v1712 = vsel %vm512, %v1694, 0
        %v1715 = vsel %vm512, %v1695, 0
        %v1718 = vsel %vm512, %v1696, 0
        %v1721 = vsel %vm512, %v1697, 0
        %v1724 = vsel %vm512, %v1698, 0
        %v1727 = vsel %vm512, %v1699, 0
        %1729 = vmatprep.subr.mxu0 0.0
        %1730 = vmatpush1.msra.mxu0 %v1701
        %1731 = vmatprep.subr.mxu0 0.0
        %1732 = vmatpush1.msra.mxu0 %v1702
        %1733 = vmatprep.subr.mxu0 0.0
        %1734 = vmatpush1.msra.mxu0 %v1703
        %1735 = vmatprep.subr.mxu0 0.0
        %1736 = vmatpush1.msra.mxu0 %v1704
        %1737 = vmatprep.subr.mxu0 0.0
        %1738 = vmatpush1.msra.mxu0 0.0
        %1739 = vmatprep.subr.mxu0 0.0
        %1740 = vmatpush1.msra.mxu0 0.0
        %1741 = vmatprep.subr.mxu0 0.0
        %1742 = vmatpush1.msra.mxu0 0.0
        %1743 = vmatprep.subr.mxu0 0.0
        %1744 = vmatpush1.msra.mxu0 0.0
        %1745 = vmatprep.subr.mxu0 0.0
        %1746 = vmatpush1.msra.mxu0 0.0
        %1747 = vmatprep.subr.mxu0 0.0
        %1748 = vmatpush1.msra.mxu0 0.0
        %1749 = vmatprep.subr.mxu0 0.0
        %1750 = vmatpush1.msra.mxu0 0.0
        %1751 = vmatprep.subr.mxu0 0.0
        %1752 = vmatpush1.msra.mxu0 0.0
        %1753 = vmatprep.subr.mxu0 0.0
        %1754 = vmatpush1.msra.mxu0 0.0
        %1755 = vmatprep.subr.mxu0 0.0
        %1756 = vmatpush1.msra.mxu0 0.0
        %1757 = vmatprep.subr.mxu0 0.0
        %1758 = vmatpush1.msra.mxu0 0.0
        %1759 = vmatprep.subr.mxu0 0.0
        %1760 = vmatpush1.msra.mxu0 0.0
        %1761 = vmatprep.subr.mxu0 0.0
        %1762 = vmatpush1.msra.mxu0 0.0
        %1763 = vmatprep.subr.mxu0 0.0
        %1764 = vmatpush1.msra.mxu0 0.0
        %1765 = vmatprep.subr.mxu0 0.0
        %1766 = vmatpush1.msra.mxu0 0.0
        %1767 = vmatprep.subr.mxu0 0.0
        %1768 = vmatpush1.msra.mxu0 0.0
        %1769 = vmatprep.subr.mxu0 0.0
        %1770 = vmatpush1.msra.mxu0 0.0
        %1771 = vmatprep.subr.mxu0 0.0
        %1772 = vmatpush1.msra.mxu0 0.0
        %1773 = vmatprep.subr.mxu0 0.0
        %1774 = vmatpush1.msra.mxu0 0.0
        %1775 = vmatprep.subr.mxu0 0.0
        %1776 = vmatpush1.msra.mxu0 0.0
        %1777 = vmatprep.subr.mxu0 0.0
        %1778 = vmatpush1.msra.mxu0 0.0
        %1779 = vmatprep.subr.mxu0 0.0
        %1780 = vmatpush1.msra.mxu0 0.0
        %1781 = vmatprep.subr.mxu0 0.0
        %1782 = vmatpush1.msra.mxu0 0.0
        %1783 = vmatprep.subr.mxu0 0.0
        %1784 = vmatpush1.msra.mxu0 0.0
        %1785 = vmatprep.subr.mxu0 0.0
        %1786 = vmatpush1.msra.mxu0 0.0
        %1787 = vmatprep.subr.mxu0 0.0
        %1788 = vmatpush1.msra.mxu0 0.0
        %1789 = vmatprep.subr.mxu0 0.0
        %1790 = vmatpush1.msra.mxu0 0.0
        %1791 = vmatprep.subr.mxu0 0.0
        %1792 = vmatpush1.msra.mxu0 0.0
        %1793 = vmatprep.mubr.f32.mxu0 0.0
        %1794 = vmatmul.mubr.f32.gmra.mrb[0].mxu0 %v1706
        %v1795 = vpop.f32.mrb[0].mxu0
        %v1796 = vadd.f32 0.0, %v1795
        %v1797 = vpop.f32.mrb[0].mxu0
        %1798 = vmatprep.mubr.f32.mxu0 0.0
        %1799 = vmatmul.mubr.f32.gmra.mrb[0].mxu0 %v1709
        %v1800 = vpop.f32.mrb[0].mxu0
        %v1801 = vadd.f32 0.0, %v1800
        %v1802 = vpop.f32.mrb[0].mxu0
        %1803 = vmatprep.mubr.f32.mxu0 0.0
        %1804 = vmatmul.mubr.f32.gmra.mrb[0].mxu0 %v1712
        %v1805 = vpop.f32.mrb[0].mxu0
        %v1806 = vadd.f32 0.0, %v1805
        %v1807 = vpop.f32.mrb[0].mxu0
        %1808 = vmatprep.mubr.f32.mxu0 0.0
        %1809 = vmatmul.mubr.f32.gmra.mrb[0].mxu0 %v1715
        %v1810 = vpop.f32.mrb[0].mxu0
        %v1811 = vadd.f32 0.0, %v1810
        %v1812 = vpop.f32.mrb[0].mxu0
        %1813 = vmatprep.mubr.f32.mxu0 0.0
        %1814 = vmatmul.mubr.f32.gmra.mrb[0].mxu0 %v1718
        %v1815 = vpop.f32.mrb[0].mxu0
        %v1816 = vadd.f32 0.0, %v1815
        %v1817 = vpop.f32.mrb[0].mxu0
        %1818 = vmatprep.mubr.f32.mxu0 0.0
        %1819 = vmatmul.mubr.f32.gmra.mrb[0].mxu0 %v1721
        %v1820 = vpop.f32.mrb[0].mxu0
        %v1821 = vadd.f32 0.0, %v1820
        %v1822 = vpop.f32.mrb[0].mxu0
        %1823 = vmatprep.mubr.f32.mxu0 0.0
        %1824 = vmatmul.mubr.f32.gmra.mrb[0].mxu0 %v1724
        %v1825 = vpop.f32.mrb[0].mxu0
        %v1826 = vadd.f32 0.0, %v1825
        %v1827 = vpop.f32.mrb[0].mxu0
        %1828 = vmatprep.mubr.f32.mxu0 0.0
        %1829 = vmatmul.mubr.f32.gmra.mrb[0].mxu0 %v1727
        %v1830 = vpop.f32.mrb[0].mxu0
        %v1831 = vadd.f32 0.0, %v1830
        %v1832 = vpop.f32.mrb[0].mxu0
        %1833 = vdwg.mxu0
        %v1834 = vadd.f32 %v1684, %v1796
        %v1835 = vadd.f32 %v1685, %v1801
        %v1836 = vadd.f32 %v1686, %v1806
        %v1837 = vadd.f32 %v1687, %v1811
        %v1838 = vadd.f32 %v1688, %v1816
        %v1839 = vadd.f32 %v1689, %v1821
        %v1840 = vadd.f32 %v1690, %v1826
        %v1841 = vadd.f32 %v1691, %v1831
        %1842 = vst.msk [vmem:[#allocation2] sm:$0xff] %vm512, %v1834
        %1843 = vst.msk [vmem:[#allocation2 + $0x8] sm:$0xff] %vm512, %v1835
        %1844 = vst.msk [vmem:[#allocation2 + $0x10] sm:$0xff] %vm512, %v1836
        %1845 = vst.msk [vmem:[#allocation2 + $0x18] sm:$0xff] %vm512, %v1837
        %1846 = vst.msk [vmem:[#allocation2 + $0x20] sm:$0xff] %vm512, %v1838
        %1847 = vst.msk [vmem:[#allocation2 + $0x28] sm:$0xff] %vm512, %v1839
        %1848 = vst.msk [vmem:[#allocation2 + $0x30] sm:$0xff] %vm512, %v1840
        %1849 = vst.msk [vmem:[#allocation2 + $0x38] sm:$0xff] %vm512, %v1841
        %v1850 = vld [vmem:[#allocation2] sm:$0xff]
        %v1851 = vld [vmem:[#allocation2 + $0x8] sm:$0xff]
        %v1852 = vld [vmem:[#allocation2 + $0x10] sm:$0xff]
        %v1853 = vld [vmem:[#allocation2 + $0x18] sm:$0xff]
        %v1854 = vld [vmem:[#allocation2 + $0x20] sm:$0xff]
        %v1855 = vld [vmem:[#allocation2 + $0x28] sm:$0xff]
        %v1856 = vld [vmem:[#allocation2 + $0x30] sm:$0xff]
        %v1857 = vld [vmem:[#allocation2 + $0x38] sm:$0xff]
        %v1858 = vld [vmem:[%s1525 + $0x2] sm:$0xff]
        %v1859 = vld [vmem:[%s1525 + $0x12] sm:$0xff]
        %v1860 = vld [vmem:[%s1525 + $0x22] sm:$0xff]
        %v1861 = vld [vmem:[%s1525 + $0x32] sm:$0xff]
        %v1862 = vld [vmem:[%s1525 + $0x42] sm:$0xff]
        %v1863 = vld [vmem:[%s1525 + $0x52] sm:$0xff]
        %v1864 = vld [vmem:[%s1525 + $0x62] sm:$0xff]
        %v1865 = vld [vmem:[%s1525 + $0x72] sm:$0xff]
        %s1866 = scalar_lea.vmem %s4, 256
        %v1867 = vld [vmem:[%s1866] sm:$0xff]
        %v1868 = vld [vmem:[%s1866 + $0x8] sm:$0xff]
        %v1869 = vld [vmem:[%s1866 + $0x10] sm:$0xff]
        %v1870 = vld [vmem:[%s1866 + $0x18] sm:$0xff]
        %v1872 = vsel %vm512, %v1858, 0
        %v1875 = vsel %vm512, %v1859, 0
        %v1878 = vsel %vm512, %v1860, 0
        %v1881 = vsel %vm512, %v1861, 0
        %v1884 = vsel %vm512, %v1862, 0
        %v1887 = vsel %vm512, %v1863, 0
        %v1890 = vsel %vm512, %v1864, 0
        %v1893 = vsel %vm512, %v1865, 0
        %1895 = vmatprep.subr.mxu0 0.0
        %1896 = vmatpush1.msra.mxu0 %v1867
        %1897 = vmatprep.subr.mxu0 0.0
        %1898 = vmatpush1.msra.mxu0 %v1868
        %1899 = vmatprep.subr.mxu0 0.0
        %1900 = vmatpush1.msra.mxu0 %v1869
        %1901 = vmatprep.subr.mxu0 0.0
        %1902 = vmatpush1.msra.mxu0 %v1870
        %1903 = vmatprep.subr.mxu0 0.0
        %1904 = vmatpush1.msra.mxu0 0.0
        %1905 = vmatprep.subr.mxu0 0.0
        %1906 = vmatpush1.msra.mxu0 0.0
        %1907 = vmatprep.subr.mxu0 0.0
        %1908 = vmatpush1.msra.mxu0 0.0
        %1909 = vmatprep.subr.mxu0 0.0
        %1910 = vmatpush1.msra.mxu0 0.0
        %1911 = vmatprep.subr.mxu0 0.0
        %1912 = vmatpush1.msra.mxu0 0.0
        %1913 = vmatprep.subr.mxu0 0.0
        %1914 = vmatpush1.msra.mxu0 0.0
        %1915 = vmatprep.subr.mxu0 0.0
        %1916 = vmatpush1.msra.mxu0 0.0
        %1917 = vmatprep.subr.mxu0 0.0
        %1918 = vmatpush1.msra.mxu0 0.0
        %1919 = vmatprep.subr.mxu0 0.0
        %1920 = vmatpush1.msra.mxu0 0.0
        %1921 = vmatprep.subr.mxu0 0.0
        %1922 = vmatpush1.msra.mxu0 0.0
        %1923 = vmatprep.subr.mxu0 0.0
        %1924 = vmatpush1.msra.mxu0 0.0
        %1925 = vmatprep.subr.mxu0 0.0
        %1926 = vmatpush1.msra.mxu0 0.0
        %1927 = vmatprep.subr.mxu0 0.0
        %1928 = vmatpush1.msra.mxu0 0.0
        %1929 = vmatprep.subr.mxu0 0.0
        %1930 = vmatpush1.msra.mxu0 0.0
        %1931 = vmatprep.subr.mxu0 0.0
        %1932 = vmatpush1.msra.mxu0 0.0
        %1933 = vmatprep.subr.mxu0 0.0
        %1934 = vmatpush1.msra.mxu0 0.0
        %1935 = vmatprep.subr.mxu0 0.0
        %1936 = vmatpush1.msra.mxu0 0.0
        %1937 = vmatprep.subr.mxu0 0.0
        %1938 = vmatpush1.msra.mxu0 0.0
        %1939 = vmatprep.subr.mxu0 0.0
        %1940 = vmatpush1.msra.mxu0 0.0
        %1941 = vmatprep.subr.mxu0 0.0
        %1942 = vmatpush1.msra.mxu0 0.0
        %1943 = vmatprep.subr.mxu0 0.0
        %1944 = vmatpush1.msra.mxu0 0.0
        %1945 = vmatprep.subr.mxu0 0.0
        %1946 = vmatpush1.msra.mxu0 0.0
        %1947 = vmatprep.subr.mxu0 0.0
        %1948 = vmatpush1.msra.mxu0 0.0
        %1949 = vmatprep.subr.mxu0 0.0
        %1950 = vmatpush1.msra.mxu0 0.0
        %1951 = vmatprep.subr.mxu0 0.0
        %1952 = vmatpush1.msra.mxu0 0.0
        %1953 = vmatprep.subr.mxu0 0.0
        %1954 = vmatpush1.msra.mxu0 0.0
        %1955 = vmatprep.subr.mxu0 0.0
        %1956 = vmatpush1.msra.mxu0 0.0
        %1957 = vmatprep.subr.mxu0 0.0
        %1958 = vmatpush1.msra.mxu0 0.0
        %1959 = vmatprep.mubr.f32.mxu0 0.0
        %1960 = vmatmul.mubr.f32.gmra.mrb[0].mxu0 %v1872
        %v1961 = vpop.f32.mrb[0].mxu0
        %v1962 = vadd.f32 0.0, %v1961
        %v1963 = vpop.f32.mrb[0].mxu0
        %1964 = vmatprep.mubr.f32.mxu0 0.0
        %1965 = vmatmul.mubr.f32.gmra.mrb[0].mxu0 %v1875
        %v1966 = vpop.f32.mrb[0].mxu0
        %v1967 = vadd.f32 0.0, %v1966
        %v1968 = vpop.f32.mrb[0].mxu0
        %1969 = vmatprep.mubr.f32.mxu0 0.0
        %1970 = vmatmul.mubr.f32.gmra.mrb[0].mxu0 %v1878
        %v1971 = vpop.f32.mrb[0].mxu0
        %v1972 = vadd.f32 0.0, %v1971
        %v1973 = vpop.f32.mrb[0].mxu0
        %1974 = vmatprep.mubr.f32.mxu0 0.0
        %1975 = vmatmul.mubr.f32.gmra.mrb[0].mxu0 %v1881
        %v1976 = vpop.f32.mrb[0].mxu0
        %v1977 = vadd.f32 0.0, %v1976
        %v1978 = vpop.f32.mrb[0].mxu0
        %1979 = vmatprep.mubr.f32.mxu0 0.0
        %1980 = vmatmul.mubr.f32.gmra.mrb[0].mxu0 %v1884
        %v1981 = vpop.f32.mrb[0].mxu0
        %v1982 = vadd.f32 0.0, %v1981
        %v1983 = vpop.f32.mrb[0].mxu0
        %1984 = vmatprep.mubr.f32.mxu0 0.0
        %1985 = vmatmul.mubr.f32.gmra.mrb[0].mxu0 %v1887
        %v1986 = vpop.f32.mrb[0].mxu0
        %v1987 = vadd.f32 0.0, %v1986
        %v1988 = vpop.f32.mrb[0].mxu0
        %1989 = vmatprep.mubr.f32.mxu0 0.0
        %1990 = vmatmul.mubr.f32.gmra.mrb[0].mxu0 %v1890
        %v1991 = vpop.f32.mrb[0].mxu0
        %v1992 = vadd.f32 0.0, %v1991
        %v1993 = vpop.f32.mrb[0].mxu0
        %1994 = vmatprep.mubr.f32.mxu0 0.0
        %1995 = vmatmul.mubr.f32.gmra.mrb[0].mxu0 %v1893
        %v1996 = vpop.f32.mrb[0].mxu0
        %v1997 = vadd.f32 0.0, %v1996
        %v1998 = vpop.f32.mrb[0].mxu0
        %1999 = vdwg.mxu0
        %v2000 = vadd.f32 %v1850, %v1962
        %v2001 = vadd.f32 %v1851, %v1967
        %v2002 = vadd.f32 %v1852, %v1972
        %v2003 = vadd.f32 %v1853, %v1977
        %v2004 = vadd.f32 %v1854, %v1982
        %v2005 = vadd.f32 %v1855, %v1987
        %v2006 = vadd.f32 %v1856, %v1992
        %v2007 = vadd.f32 %v1857, %v1997
        %2008 = vst.msk [vmem:[#allocation2] sm:$0xff] %vm512, %v2000
        %2009 = vst.msk [vmem:[#allocation2 + $0x8] sm:$0xff] %vm512, %v2001
        %2010 = vst.msk [vmem:[#allocation2 + $0x10] sm:$0xff] %vm512, %v2002
        %2011 = vst.msk [vmem:[#allocation2 + $0x18] sm:$0xff] %vm512, %v2003
        %2012 = vst.msk [vmem:[#allocation2 + $0x20] sm:$0xff] %vm512, %v2004
        %2013 = vst.msk [vmem:[#allocation2 + $0x28] sm:$0xff] %vm512, %v2005
        %2014 = vst.msk [vmem:[#allocation2 + $0x30] sm:$0xff] %vm512, %v2006
        %2015 = vst.msk [vmem:[#allocation2 + $0x38] sm:$0xff] %vm512, %v2007
        %v2016 = vld [vmem:[#allocation2] sm:$0xff]
        %v2017 = vld [vmem:[#allocation2 + $0x8] sm:$0xff]
        %v2018 = vld [vmem:[#allocation2 + $0x10] sm:$0xff]
        %v2019 = vld [vmem:[#allocation2 + $0x18] sm:$0xff]
        %v2020 = vld [vmem:[#allocation2 + $0x20] sm:$0xff]
        %v2021 = vld [vmem:[#allocation2 + $0x28] sm:$0xff]
        %v2022 = vld [vmem:[#allocation2 + $0x30] sm:$0xff]
        %v2023 = vld [vmem:[#allocation2 + $0x38] sm:$0xff]
        %v2024 = vlaneseq
        %v2025 = vshrl.u32 %v2024, 7
        %v2026 = vsub.s32 2, %v2025
        %v2027 = vrot.slane %v317, %v2026
        %v2028 = vmul.f32 %v2016, %v2027
        %v2029 = vmul.f32 %v2017, %v2027
        %v2030 = vmul.f32 %v2018, %v2027
        %v2031 = vmul.f32 %v2019, %v2027
        %v2032 = vmul.f32 %v2020, %v2027
        %v2033 = vmul.f32 %v2021, %v2027
        %v2034 = vmul.f32 %v2022, %v2027
        %v2035 = vmul.f32 %v2023, %v2027
        %v2036 = vlaneseq
        %v2037 = vshrl.u32 %v2036, 7
        %v2038 = vsub.s32 3, %v2037
        %v2039 = vrot.slane %v317, %v2038
        %v2040 = vadd.f32 %v2028, %v2039
        %v2041 = vadd.f32 %v2029, %v2039
        %v2042 = vadd.f32 %v2030, %v2039
        %v2043 = vadd.f32 %v2031, %v2039
        %v2044 = vadd.f32 %v2032, %v2039
        %v2045 = vadd.f32 %v2033, %v2039
        %v2046 = vadd.f32 %v2034, %v2039
        %v2047 = vadd.f32 %v2035, %v2039
        %v2048 = vlaneseq
        %v2049 = vshrl.u32 %v2048, 7
        %v2050 = vsub.s32 0, %v2049
        %v2051 = vrot.slane %v511, %v2050
        %v2052 = vmul.f32 %v2040, %v2051
        %v2053 = vmul.f32 %v2041, %v2051
        %v2054 = vmul.f32 %v2042, %v2051
        %v2055 = vmul.f32 %v2043, %v2051
        %v2056 = vmul.f32 %v2044, %v2051
        %v2057 = vmul.f32 %v2045, %v2051
        %v2058 = vmul.f32 %v2046, %v2051
        %v2059 = vmul.f32 %v2047, %v2051
        %2060 = vst.msk [vmem:[#allocation3] sm:$0xff] %vm512, 0.0
        %2061 = vst.msk [vmem:[#allocation3 + $0x8] sm:$0xff] %vm512, 0.0
        %2062 = vst.msk [vmem:[#allocation3 + $0x10] sm:$0xff] %vm512, 0.0
        %2063 = vst.msk [vmem:[#allocation3 + $0x18] sm:$0xff] %vm512, 0.0
        %2064 = vst.msk [vmem:[#allocation3 + $0x20] sm:$0xff] %vm512, 0.0
        %2065 = vst.msk [vmem:[#allocation3 + $0x28] sm:$0xff] %vm512, 0.0
        %2066 = vst.msk [vmem:[#allocation3 + $0x30] sm:$0xff] %vm512, 0.0
        %2067 = vst.msk [vmem:[#allocation3 + $0x38] sm:$0xff] %vm512, 0.0
        %2068 = vst.msk [vmem:[#allocation3 + $0x40] sm:$0xff] %vm512, 0.0
        %2069 = vst.msk [vmem:[#allocation3 + $0x48] sm:$0xff] %vm512, 0.0
        %2070 = vst.msk [vmem:[#allocation3 + $0x50] sm:$0xff] %vm512, 0.0
        %2071 = vst.msk [vmem:[#allocation3 + $0x58] sm:$0xff] %vm512, 0.0
        %2072 = vst.msk [vmem:[#allocation3 + $0x60] sm:$0xff] %vm512, 0.0
        %2073 = vst.msk [vmem:[#allocation3 + $0x68] sm:$0xff] %vm512, 0.0
        %2074 = vst.msk [vmem:[#allocation3 + $0x70] sm:$0xff] %vm512, 0.0
        %2075 = vst.msk [vmem:[#allocation3 + $0x78] sm:$0xff] %vm512, 0.0
        %2076 = vst.msk [vmem:[#allocation4] sm:$0xff] %vm512, 0.0
        %2077 = vst.msk [vmem:[#allocation4 + $0x8] sm:$0xff] %vm512, 0.0
        %2078 = vst.msk [vmem:[#allocation4 + $0x10] sm:$0xff] %vm512, 0.0
        %2079 = vst.msk [vmem:[#allocation4 + $0x18] sm:$0xff] %vm512, 0.0
        %2080 = vst.msk [vmem:[#allocation4 + $0x20] sm:$0xff] %vm512, 0.0
        %2081 = vst.msk [vmem:[#allocation4 + $0x28] sm:$0xff] %vm512, 0.0
        %2082 = vst.msk [vmem:[#allocation4 + $0x30] sm:$0xff] %vm512, 0.0
        %2083 = vst.msk [vmem:[#allocation4 + $0x38] sm:$0xff] %vm512, 0.0
        %2084 = vst.msk [vmem:[#allocation4 + $0x40] sm:$0xff] %vm512, 0.0
        %2085 = vst.msk [vmem:[#allocation4 + $0x48] sm:$0xff] %vm512, 0.0
        %2086 = vst.msk [vmem:[#allocation4 + $0x50] sm:$0xff] %vm512, 0.0
        %2087 = vst.msk [vmem:[#allocation4 + $0x58] sm:$0xff] %vm512, 0.0
        %2088 = vst.msk [vmem:[#allocation4 + $0x60] sm:$0xff] %vm512, 0.0
        %2089 = vst.msk [vmem:[#allocation4 + $0x68] sm:$0xff] %vm512, 0.0
        %2090 = vst.msk [vmem:[#allocation4 + $0x70] sm:$0xff] %vm512, 0.0
        %2091 = vst.msk [vmem:[#allocation4 + $0x78] sm:$0xff] %vm512, 0.0
        %v2092 = vld [vmem:[#allocation3] sm:$0xff]
        %v2093 = vld [vmem:[#allocation3 + $0x8] sm:$0xff]
        %v2094 = vld [vmem:[#allocation3 + $0x10] sm:$0xff]
        %v2095 = vld [vmem:[#allocation3 + $0x18] sm:$0xff]
        %v2096 = vld [vmem:[#allocation3 + $0x20] sm:$0xff]
        %v2097 = vld [vmem:[#allocation3 + $0x28] sm:$0xff]
        %v2098 = vld [vmem:[#allocation3 + $0x30] sm:$0xff]
        %v2099 = vld [vmem:[#allocation3 + $0x38] sm:$0xff]
        %v2100 = vld [vmem:[#allocation3 + $0x40] sm:$0xff]
        %v2101 = vld [vmem:[#allocation3 + $0x48] sm:$0xff]
        %v2102 = vld [vmem:[#allocation3 + $0x50] sm:$0xff]
        %v2103 = vld [vmem:[#allocation3 + $0x58] sm:$0xff]
        %v2104 = vld [vmem:[#allocation3 + $0x60] sm:$0xff]
        %v2105 = vld [vmem:[#allocation3 + $0x68] sm:$0xff]
        %v2106 = vld [vmem:[#allocation3 + $0x70] sm:$0xff]
        %v2107 = vld [vmem:[#allocation3 + $0x78] sm:$0xff]
        %v2108 = vld [vmem:[%s311] sm:$0xff]
        %v2109 = vld [vmem:[%s311 + $0x10] sm:$0xff]
        %v2110 = vld [vmem:[%s311 + $0x20] sm:$0xff]
        %v2111 = vld [vmem:[%s311 + $0x30] sm:$0xff]
        %v2112 = vld [vmem:[%s311 + $0x40] sm:$0xff]
        %v2113 = vld [vmem:[%s311 + $0x50] sm:$0xff]
        %v2114 = vld [vmem:[%s311 + $0x60] sm:$0xff]
        %v2115 = vld [vmem:[%s311 + $0x70] sm:$0xff]
        %v2116 = vld [vmem:[%s311 + $0x80] sm:$0xff]
        %v2117 = vld [vmem:[%s311 + $0x90] sm:$0xff]
        %v2118 = vld [vmem:[%s311 + $0xa0] sm:$0xff]
        %v2119 = vld [vmem:[%s311 + $0xb0] sm:$0xff]
        %v2120 = vld [vmem:[%s311 + $0xc0] sm:$0xff]
        %v2121 = vld [vmem:[%s311 + $0xd0] sm:$0xff]
        %v2122 = vld [vmem:[%s311 + $0xe0] sm:$0xff]
        %v2123 = vld [vmem:[%s311 + $0xf0] sm:$0xff]
        %v2124 = vld [vmem:[%s5] sm:$0xff]
        %v2125 = vld [vmem:[%s5 + $0x8] sm:$0xff]
        %v2127 = vsel %vm335, %v2108, 0
        %v2130 = vsel %vm335, %v2109, 0
        %v2133 = vsel %vm335, %v2110, 0
        %v2136 = vsel %vm335, %v2111, 0
        %v2139 = vsel %vm335, %v2112, 0
        %v2142 = vsel %vm335, %v2113, 0
        %v2145 = vsel %vm335, %v2114, 0
        %v2148 = vsel %vm335, %v2115, 0
        %v2151 = vsel %vm335, %v2116, 0
        %v2154 = vsel %vm335, %v2117, 0
        %v2157 = vsel %vm335, %v2118, 0
        %v2160 = vsel %vm335, %v2119, 0
        %v2163 = vsel %vm335, %v2120, 0
        %v2166 = vsel %vm335, %v2121, 0
        %v2169 = vsel %vm335, %v2122, 0
        %v2172 = vsel %vm335, %v2123, 0
        %2174 = vmatprep.subr.mxu0 0.0
        %2175 = vmatpush1.msra.mxu0 %v2124
        %2176 = vmatprep.subr.mxu0 0.0
        %2177 = vmatpush1.msra.mxu0 %v2125
        %2178 = vmatprep.subr.mxu0 0.0
        %2179 = vmatpush1.msra.mxu0 0.0
        %2180 = vmatprep.subr.mxu0 0.0
        %2181 = vmatpush1.msra.mxu0 0.0
        %2182 = vmatprep.subr.mxu0 0.0
        %2183 = vmatpush1.msra.mxu0 0.0
        %2184 = vmatprep.subr.mxu0 0.0
        %2185 = vmatpush1.msra.mxu0 0.0
        %2186 = vmatprep.subr.mxu0 0.0
        %2187 = vmatpush1.msra.mxu0 0.0
        %2188 = vmatprep.subr.mxu0 0.0
        %2189 = vmatpush1.msra.mxu0 0.0
        %2190 = vmatprep.subr.mxu0 0.0
        %2191 = vmatpush1.msra.mxu0 0.0
        %2192 = vmatprep.subr.mxu0 0.0
        %2193 = vmatpush1.msra.mxu0 0.0
        %2194 = vmatprep.subr.mxu0 0.0
        %2195 = vmatpush1.msra.mxu0 0.0
        %2196 = vmatprep.subr.mxu0 0.0
        %2197 = vmatpush1.msra.mxu0 0.0
        %2198 = vmatprep.subr.mxu0 0.0
        %2199 = vmatpush1.msra.mxu0 0.0
        %2200 = vmatprep.subr.mxu0 0.0
        %2201 = vmatpush1.msra.mxu0 0.0
        %2202 = vmatprep.subr.mxu0 0.0
        %2203 = vmatpush1.msra.mxu0 0.0
        %2204 = vmatprep.subr.mxu0 0.0
        %2205 = vmatpush1.msra.mxu0 0.0
        %2206 = vmatprep.subr.mxu0 0.0
        %2207 = vmatpush1.msra.mxu0 0.0
        %2208 = vmatprep.subr.mxu0 0.0
        %2209 = vmatpush1.msra.mxu0 0.0
        %2210 = vmatprep.subr.mxu0 0.0
        %2211 = vmatpush1.msra.mxu0 0.0
        %2212 = vmatprep.subr.mxu0 0.0
        %2213 = vmatpush1.msra.mxu0 0.0
        %2214 = vmatprep.subr.mxu0 0.0
        %2215 = vmatpush1.msra.mxu0 0.0
        %2216 = vmatprep.subr.mxu0 0.0
        %2217 = vmatpush1.msra.mxu0 0.0
        %2218 = vmatprep.subr.mxu0 0.0
        %2219 = vmatpush1.msra.mxu0 0.0
        %2220 = vmatprep.subr.mxu0 0.0
        %2221 = vmatpush1.msra.mxu0 0.0
        %2222 = vmatprep.subr.mxu0 0.0
        %2223 = vmatpush1.msra.mxu0 0.0
        %2224 = vmatprep.subr.mxu0 0.0
        %2225 = vmatpush1.msra.mxu0 0.0
        %2226 = vmatprep.subr.mxu0 0.0
        %2227 = vmatpush1.msra.mxu0 0.0
        %2228 = vmatprep.subr.mxu0 0.0
        %2229 = vmatpush1.msra.mxu0 0.0
        %2230 = vmatprep.subr.mxu0 0.0
        %2231 = vmatpush1.msra.mxu0 0.0
        %2232 = vmatprep.subr.mxu0 0.0
        %2233 = vmatpush1.msra.mxu0 0.0
        %2234 = vmatprep.subr.mxu0 0.0
        %2235 = vmatpush1.msra.mxu0 0.0
        %2236 = vmatprep.subr.mxu0 0.0
        %2237 = vmatpush1.msra.mxu0 0.0
        %2238 = vmatprep.mubr.f32.mxu0 0.0
        %2239 = vmatmul.mubr.f32.gmra.mrb[0].mxu0 %v2127
        %v2240 = vpop.f32.mrb[0].mxu0
        %v2241 = vadd.f32 0.0, %v2240
        %v2242 = vpop.f32.mrb[0].mxu0
        %2243 = vmatprep.mubr.f32.mxu0 0.0
        %2244 = vmatmul.mubr.f32.gmra.mrb[0].mxu0 %v2130
        %v2245 = vpop.f32.mrb[0].mxu0
        %v2246 = vadd.f32 0.0, %v2245
        %v2247 = vpop.f32.mrb[0].mxu0
        %2248 = vmatprep.mubr.f32.mxu0 0.0
        %2249 = vmatmul.mubr.f32.gmra.mrb[0].mxu0 %v2133
        %v2250 = vpop.f32.mrb[0].mxu0
        %v2251 = vadd.f32 0.0, %v2250
        %v2252 = vpop.f32.mrb[0].mxu0
        %2253 = vmatprep.mubr.f32.mxu0 0.0
        %2254 = vmatmul.mubr.f32.gmra.mrb[0].mxu0 %v2136
        %v2255 = vpop.f32.mrb[0].mxu0
        %v2256 = vadd.f32 0.0, %v2255
        %v2257 = vpop.f32.mrb[0].mxu0
        %2258 = vmatprep.mubr.f32.mxu0 0.0
        %2259 = vmatmul.mubr.f32.gmra.mrb[0].mxu0 %v2139
        %v2260 = vpop.f32.mrb[0].mxu0
        %v2261 = vadd.f32 0.0, %v2260
        %v2262 = vpop.f32.mrb[0].mxu0
        %2263 = vmatprep.mubr.f32.mxu0 0.0
        %2264 = vmatmul.mubr.f32.gmra.mrb[0].mxu0 %v2142
        %v2265 = vpop.f32.mrb[0].mxu0
        %v2266 = vadd.f32 0.0, %v2265
        %v2267 = vpop.f32.mrb[0].mxu0
        %2268 = vmatprep.mubr.f32.mxu0 0.0
        %2269 = vmatmul.mubr.f32.gmra.mrb[0].mxu0 %v2145
        %v2270 = vpop.f32.mrb[0].mxu0
        %v2271 = vadd.f32 0.0, %v2270
        %v2272 = vpop.f32.mrb[0].mxu0
        %2273 = vmatprep.mubr.f32.mxu0 0.0
        %2274 = vmatmul.mubr.f32.gmra.mrb[0].mxu0 %v2148
        %v2275 = vpop.f32.mrb[0].mxu0
        %v2276 = vadd.f32 0.0, %v2275
        %v2277 = vpop.f32.mrb[0].mxu0
        %2278 = vmatprep.mubr.f32.mxu0 0.0
        %2279 = vmatmul.mubr.f32.gmra.mrb[0].mxu0 %v2151
        %v2280 = vpop.f32.mrb[0].mxu0
        %v2281 = vadd.f32 0.0, %v2280
        %v2282 = vpop.f32.mrb[0].mxu0
        %2283 = vmatprep.mubr.f32.mxu0 0.0
        %2284 = vmatmul.mubr.f32.gmra.mrb[0].mxu0 %v2154
        %v2285 = vpop.f32.mrb[0].mxu0
        %v2286 = vadd.f32 0.0, %v2285
        %v2287 = vpop.f32.mrb[0].mxu0
        %2288 = vmatprep.mubr.f32.mxu0 0.0
        %2289 = vmatmul.mubr.f32.gmra.mrb[0].mxu0 %v2157
        %v2290 = vpop.f32.mrb[0].mxu0
        %v2291 = vadd.f32 0.0, %v2290
        %v2292 = vpop.f32.mrb[0].mxu0
        %2293 = vmatprep.mubr.f32.mxu0 0.0
        %2294 = vmatmul.mubr.f32.gmra.mrb[0].mxu0 %v2160
        %v2295 = vpop.f32.mrb[0].mxu0
        %v2296 = vadd.f32 0.0, %v2295
        %v2297 = vpop.f32.mrb[0].mxu0
        %2298 = vmatprep.mubr.f32.mxu0 0.0
        %2299 = vmatmul.mubr.f32.gmra.mrb[0].mxu0 %v2163
        %v2300 = vpop.f32.mrb[0].mxu0
        %v2301 = vadd.f32 0.0, %v2300
        %v2302 = vpop.f32.mrb[0].mxu0
        %2303 = vmatprep.mubr.f32.mxu0 0.0
        %2304 = vmatmul.mubr.f32.gmra.mrb[0].mxu0 %v2166
        %v2305 = vpop.f32.mrb[0].mxu0
        %v2306 = vadd.f32 0.0, %v2305
        %v2307 = vpop.f32.mrb[0].mxu0
        %2308 = vmatprep.mubr.f32.mxu0 0.0
        %2309 = vmatmul.mubr.f32.gmra.mrb[0].mxu0 %v2169
        %v2310 = vpop.f32.mrb[0].mxu0
        %v2311 = vadd.f32 0.0, %v2310
        %v2312 = vpop.f32.mrb[0].mxu0
        %2313 = vmatprep.mubr.f32.mxu0 0.0
        %2314 = vmatmul.mubr.f32.gmra.mrb[0].mxu0 %v2172
        %v2315 = vpop.f32.mrb[0].mxu0
        %v2316 = vadd.f32 0.0, %v2315
        %v2317 = vpop.f32.mrb[0].mxu0
        %2318 = vdwg.mxu0
        %v2319 = vadd.f32 %v2092, %v2241
        %v2320 = vadd.f32 %v2093, %v2246
        %v2321 = vadd.f32 %v2094, %v2251
        %v2322 = vadd.f32 %v2095, %v2256
        %v2323 = vadd.f32 %v2096, %v2261
        %v2324 = vadd.f32 %v2097, %v2266
        %v2325 = vadd.f32 %v2098, %v2271
        %v2326 = vadd.f32 %v2099, %v2276
        %v2327 = vadd.f32 %v2100, %v2281
        %v2328 = vadd.f32 %v2101, %v2286
        %v2329 = vadd.f32 %v2102, %v2291
        %v2330 = vadd.f32 %v2103, %v2296
        %v2331 = vadd.f32 %v2104, %v2301
        %v2332 = vadd.f32 %v2105, %v2306
        %v2333 = vadd.f32 %v2106, %v2311
        %v2334 = vadd.f32 %v2107, %v2316
        %2335 = vst.msk [vmem:[#allocation3] sm:$0xff] %vm512, %v2319
        %2336 = vst.msk [vmem:[#allocation3 + $0x8] sm:$0xff] %vm512, %v2320
        %2337 = vst.msk [vmem:[#allocation3 + $0x10] sm:$0xff] %vm512, %v2321
        %2338 = vst.msk [vmem:[#allocation3 + $0x18] sm:$0xff] %vm512, %v2322
        %2339 = vst.msk [vmem:[#allocation3 + $0x20] sm:$0xff] %vm512, %v2323
        %2340 = vst.msk [vmem:[#allocation3 + $0x28] sm:$0xff] %vm512, %v2324
        %2341 = vst.msk [vmem:[#allocation3 + $0x30] sm:$0xff] %vm512, %v2325
        %2342 = vst.msk [vmem:[#allocation3 + $0x38] sm:$0xff] %vm512, %v2326
        %2343 = vst.msk [vmem:[#allocation3 + $0x40] sm:$0xff] %vm512, %v2327
        %2344 = vst.msk [vmem:[#allocation3 + $0x48] sm:$0xff] %vm512, %v2328
        %2345 = vst.msk [vmem:[#allocation3 + $0x50] sm:$0xff] %vm512, %v2329
        %2346 = vst.msk [vmem:[#allocation3 + $0x58] sm:$0xff] %vm512, %v2330
        %2347 = vst.msk [vmem:[#allocation3 + $0x60] sm:$0xff] %vm512, %v2331
        %2348 = vst.msk [vmem:[#allocation3 + $0x68] sm:$0xff] %vm512, %v2332
        %2349 = vst.msk [vmem:[#allocation3 + $0x70] sm:$0xff] %vm512, %v2333
        %2350 = vst.msk [vmem:[#allocation3 + $0x78] sm:$0xff] %vm512, %v2334
        %v2351 = vld [vmem:[#allocation3] sm:$0xff]
        %v2352 = vld [vmem:[#allocation3 + $0x8] sm:$0xff]
        %v2353 = vld [vmem:[#allocation3 + $0x10] sm:$0xff]
        %v2354 = vld [vmem:[#allocation3 + $0x18] sm:$0xff]
        %v2355 = vld [vmem:[#allocation3 + $0x20] sm:$0xff]
        %v2356 = vld [vmem:[#allocation3 + $0x28] sm:$0xff]
        %v2357 = vld [vmem:[#allocation3 + $0x30] sm:$0xff]
        %v2358 = vld [vmem:[#allocation3 + $0x38] sm:$0xff]
        %v2359 = vld [vmem:[#allocation3 + $0x40] sm:$0xff]
        %v2360 = vld [vmem:[#allocation3 + $0x48] sm:$0xff]
        %v2361 = vld [vmem:[#allocation3 + $0x50] sm:$0xff]
        %v2362 = vld [vmem:[#allocation3 + $0x58] sm:$0xff]
        %v2363 = vld [vmem:[#allocation3 + $0x60] sm:$0xff]
        %v2364 = vld [vmem:[#allocation3 + $0x68] sm:$0xff]
        %v2365 = vld [vmem:[#allocation3 + $0x70] sm:$0xff]
        %v2366 = vld [vmem:[#allocation3 + $0x78] sm:$0xff]
        %v2367 = vld [vmem:[%s316] sm:$0xff]
        %v2368 = vld [vmem:[%s316 + $0x10] sm:$0xff]
        %v2369 = vld [vmem:[%s316 + $0x20] sm:$0xff]
        %v2370 = vld [vmem:[%s316 + $0x30] sm:$0xff]
        %v2371 = vld [vmem:[%s316 + $0x40] sm:$0xff]
        %v2372 = vld [vmem:[%s316 + $0x50] sm:$0xff]
        %v2373 = vld [vmem:[%s316 + $0x60] sm:$0xff]
        %v2374 = vld [vmem:[%s316 + $0x70] sm:$0xff]
        %v2375 = vld [vmem:[%s316 + $0x80] sm:$0xff]
        %v2376 = vld [vmem:[%s316 + $0x90] sm:$0xff]
        %v2377 = vld [vmem:[%s316 + $0xa0] sm:$0xff]
        %v2378 = vld [vmem:[%s316 + $0xb0] sm:$0xff]
        %v2379 = vld [vmem:[%s316 + $0xc0] sm:$0xff]
        %v2380 = vld [vmem:[%s316 + $0xd0] sm:$0xff]
        %v2381 = vld [vmem:[%s316 + $0xe0] sm:$0xff]
        %v2382 = vld [vmem:[%s316 + $0xf0] sm:$0xff]
        %s2383 = scalar_lea.vmem %s5, 16
        %v2384 = vld [vmem:[%s2383] sm:$0xff]
        %v2385 = vld [vmem:[%s2383 + $0x8] sm:$0xff]
        %v2387 = vsel %vm335, %v2367, 0
        %v2390 = vsel %vm335, %v2368, 0
        %v2393 = vsel %vm335, %v2369, 0
        %v2396 = vsel %vm335, %v2370, 0
        %v2399 = vsel %vm335, %v2371, 0
        %v2402 = vsel %vm335, %v2372, 0
        %v2405 = vsel %vm335, %v2373, 0
        %v2408 = vsel %vm335, %v2374, 0
        %v2411 = vsel %vm335, %v2375, 0
        %v2414 = vsel %vm335, %v2376, 0
        %v2417 = vsel %vm335, %v2377, 0
        %v2420 = vsel %vm335, %v2378, 0
        %v2423 = vsel %vm335, %v2379, 0
        %v2426 = vsel %vm335, %v2380, 0
        %v2429 = vsel %vm335, %v2381, 0
        %v2432 = vsel %vm335, %v2382, 0
        %2434 = vmatprep.subr.mxu0 0.0
        %2435 = vmatpush1.msra.mxu0 %v2384
        %2436 = vmatprep.subr.mxu0 0.0
        %2437 = vmatpush1.msra.mxu0 %v2385
        %2438 = vmatprep.subr.mxu0 0.0
        %2439 = vmatpush1.msra.mxu0 0.0
        %2440 = vmatprep.subr.mxu0 0.0
        %2441 = vmatpush1.msra.mxu0 0.0
        %2442 = vmatprep.subr.mxu0 0.0
        %2443 = vmatpush1.msra.mxu0 0.0
        %2444 = vmatprep.subr.mxu0 0.0
        %2445 = vmatpush1.msra.mxu0 0.0
        %2446 = vmatprep.subr.mxu0 0.0
        %2447 = vmatpush1.msra.mxu0 0.0
        %2448 = vmatprep.subr.mxu0 0.0
        %2449 = vmatpush1.msra.mxu0 0.0
        %2450 = vmatprep.subr.mxu0 0.0
        %2451 = vmatpush1.msra.mxu0 0.0
        %2452 = vmatprep.subr.mxu0 0.0
        %2453 = vmatpush1.msra.mxu0 0.0
        %2454 = vmatprep.subr.mxu0 0.0
        %2455 = vmatpush1.msra.mxu0 0.0
        %2456 = vmatprep.subr.mxu0 0.0
        %2457 = vmatpush1.msra.mxu0 0.0
        %2458 = vmatprep.subr.mxu0 0.0
        %2459 = vmatpush1.msra.mxu0 0.0
        %2460 = vmatprep.subr.mxu0 0.0
        %2461 = vmatpush1.msra.mxu0 0.0
        %2462 = vmatprep.subr.mxu0 0.0
        %2463 = vmatpush1.msra.mxu0 0.0
        %2464 = vmatprep.subr.mxu0 0.0
        %2465 = vmatpush1.msra.mxu0 0.0
        %2466 = vmatprep.subr.mxu0 0.0
        %2467 = vmatpush1.msra.mxu0 0.0
        %2468 = vmatprep.subr.mxu0 0.0
        %2469 = vmatpush1.msra.mxu0 0.0
        %2470 = vmatprep.subr.mxu0 0.0
        %2471 = vmatpush1.msra.mxu0 0.0
        %2472 = vmatprep.subr.mxu0 0.0
        %2473 = vmatpush1.msra.mxu0 0.0
        %2474 = vmatprep.subr.mxu0 0.0
        %2475 = vmatpush1.msra.mxu0 0.0
        %2476 = vmatprep.subr.mxu0 0.0
        %2477 = vmatpush1.msra.mxu0 0.0
        %2478 = vmatprep.subr.mxu0 0.0
        %2479 = vmatpush1.msra.mxu0 0.0
        %2480 = vmatprep.subr.mxu0 0.0
        %2481 = vmatpush1.msra.mxu0 0.0
        %2482 = vmatprep.subr.mxu0 0.0
        %2483 = vmatpush1.msra.mxu0 0.0
        %2484 = vmatprep.subr.mxu0 0.0
        %2485 = vmatpush1.msra.mxu0 0.0
        %2486 = vmatprep.subr.mxu0 0.0
        %2487 = vmatpush1.msra.mxu0 0.0
        %2488 = vmatprep.subr.mxu0 0.0
        %2489 = vmatpush1.msra.mxu0 0.0
        %2490 = vmatprep.subr.mxu0 0.0
        %2491 = vmatpush1.msra.mxu0 0.0
        %2492 = vmatprep.subr.mxu0 0.0
        %2493 = vmatpush1.msra.mxu0 0.0
        %2494 = vmatprep.subr.mxu0 0.0
        %2495 = vmatpush1.msra.mxu0 0.0
        %2496 = vmatprep.subr.mxu0 0.0
        %2497 = vmatpush1.msra.mxu0 0.0
        %2498 = vmatprep.mubr.f32.mxu0 0.0
        %2499 = vmatmul.mubr.f32.gmra.mrb[0].mxu0 %v2387
        %v2500 = vpop.f32.mrb[0].mxu0
        %v2501 = vadd.f32 0.0, %v2500
        %v2502 = vpop.f32.mrb[0].mxu0
        %2503 = vmatprep.mubr.f32.mxu0 0.0
        %2504 = vmatmul.mubr.f32.gmra.mrb[0].mxu0 %v2390
        %v2505 = vpop.f32.mrb[0].mxu0
        %v2506 = vadd.f32 0.0, %v2505
        %v2507 = vpop.f32.mrb[0].mxu0
        %2508 = vmatprep.mubr.f32.mxu0 0.0
        %2509 = vmatmul.mubr.f32.gmra.mrb[0].mxu0 %v2393
        %v2510 = vpop.f32.mrb[0].mxu0
        %v2511 = vadd.f32 0.0, %v2510
        %v2512 = vpop.f32.mrb[0].mxu0
        %2513 = vmatprep.mubr.f32.mxu0 0.0
        %2514 = vmatmul.mubr.f32.gmra.mrb[0].mxu0 %v2396
        %v2515 = vpop.f32.mrb[0].mxu0
        %v2516 = vadd.f32 0.0, %v2515
        %v2517 = vpop.f32.mrb[0].mxu0
        %2518 = vmatprep.mubr.f32.mxu0 0.0
        %2519 = vmatmul.mubr.f32.gmra.mrb[0].mxu0 %v2399
        %v2520 = vpop.f32.mrb[0].mxu0
        %v2521 = vadd.f32 0.0, %v2520
        %v2522 = vpop.f32.mrb[0].mxu0
        %2523 = vmatprep.mubr.f32.mxu0 0.0
        %2524 = vmatmul.mubr.f32.gmra.mrb[0].mxu0 %v2402
        %v2525 = vpop.f32.mrb[0].mxu0
        %v2526 = vadd.f32 0.0, %v2525
        %v2527 = vpop.f32.mrb[0].mxu0
        %2528 = vmatprep.mubr.f32.mxu0 0.0
        %2529 = vmatmul.mubr.f32.gmra.mrb[0].mxu0 %v2405
        %v2530 = vpop.f32.mrb[0].mxu0
        %v2531 = vadd.f32 0.0, %v2530
        %v2532 = vpop.f32.mrb[0].mxu0
        %2533 = vmatprep.mubr.f32.mxu0 0.0
        %2534 = vmatmul.mubr.f32.gmra.mrb[0].mxu0 %v2408
        %v2535 = vpop.f32.mrb[0].mxu0
        %v2536 = vadd.f32 0.0, %v2535
        %v2537 = vpop.f32.mrb[0].mxu0
        %2538 = vmatprep.mubr.f32.mxu0 0.0
        %2539 = vmatmul.mubr.f32.gmra.mrb[0].mxu0 %v2411
        %v2540 = vpop.f32.mrb[0].mxu0
        %v2541 = vadd.f32 0.0, %v2540
        %v2542 = vpop.f32.mrb[0].mxu0
        %2543 = vmatprep.mubr.f32.mxu0 0.0
        %2544 = vmatmul.mubr.f32.gmra.mrb[0].mxu0 %v2414
        %v2545 = vpop.f32.mrb[0].mxu0
        %v2546 = vadd.f32 0.0, %v2545
        %v2547 = vpop.f32.mrb[0].mxu0
        %2548 = vmatprep.mubr.f32.mxu0 0.0
        %2549 = vmatmul.mubr.f32.gmra.mrb[0].mxu0 %v2417
        %v2550 = vpop.f32.mrb[0].mxu0
        %v2551 = vadd.f32 0.0, %v2550
        %v2552 = vpop.f32.mrb[0].mxu0
        %2553 = vmatprep.mubr.f32.mxu0 0.0
        %2554 = vmatmul.mubr.f32.gmra.mrb[0].mxu0 %v2420
        %v2555 = vpop.f32.mrb[0].mxu0
        %v2556 = vadd.f32 0.0, %v2555
        %v2557 = vpop.f32.mrb[0].mxu0
        %2558 = vmatprep.mubr.f32.mxu0 0.0
        %2559 = vmatmul.mubr.f32.gmra.mrb[0].mxu0 %v2423
        %v2560 = vpop.f32.mrb[0].mxu0
        %v2561 = vadd.f32 0.0, %v2560
        %v2562 = vpop.f32.mrb[0].mxu0
        %2563 = vmatprep.mubr.f32.mxu0 0.0
        %2564 = vmatmul.mubr.f32.gmra.mrb[0].mxu0 %v2426
        %v2565 = vpop.f32.mrb[0].mxu0
        %v2566 = vadd.f32 0.0, %v2565
        %v2567 = vpop.f32.mrb[0].mxu0
        %2568 = vmatprep.mubr.f32.mxu0 0.0
        %2569 = vmatmul.mubr.f32.gmra.mrb[0].mxu0 %v2429
        %v2570 = vpop.f32.mrb[0].mxu0
        %v2571 = vadd.f32 0.0, %v2570
        %v2572 = vpop.f32.mrb[0].mxu0
        %2573 = vmatprep.mubr.f32.mxu0 0.0
        %2574 = vmatmul.mubr.f32.gmra.mrb[0].mxu0 %v2432
        %v2575 = vpop.f32.mrb[0].mxu0
        %v2576 = vadd.f32 0.0, %v2575
        %v2577 = vpop.f32.mrb[0].mxu0
        %2578 = vdwg.mxu0
        %v2579 = vadd.f32 %v2351, %v2501
        %v2580 = vadd.f32 %v2352, %v2506
        %v2581 = vadd.f32 %v2353, %v2511
        %v2582 = vadd.f32 %v2354, %v2516
        %v2583 = vadd.f32 %v2355, %v2521
        %v2584 = vadd.f32 %v2356, %v2526
        %v2585 = vadd.f32 %v2357, %v2531
        %v2586 = vadd.f32 %v2358, %v2536
        %v2587 = vadd.f32 %v2359, %v2541
        %v2588 = vadd.f32 %v2360, %v2546
        %v2589 = vadd.f32 %v2361, %v2551
        %v2590 = vadd.f32 %v2362, %v2556
        %v2591 = vadd.f32 %v2363, %v2561
        %v2592 = vadd.f32 %v2364, %v2566
        %v2593 = vadd.f32 %v2365, %v2571
        %v2594 = vadd.f32 %v2366, %v2576
        %2595 = vst.msk [vmem:[#allocation3] sm:$0xff] %vm512, %v2579
        %2596 = vst.msk [vmem:[#allocation3 + $0x8] sm:$0xff] %vm512, %v2580
        %2597 = vst.msk [vmem:[#allocation3 + $0x10] sm:$0xff] %vm512, %v2581
        %2598 = vst.msk [vmem:[#allocation3 + $0x18] sm:$0xff] %vm512, %v2582
        %2599 = vst.msk [vmem:[#allocation3 + $0x20] sm:$0xff] %vm512, %v2583
        %2600 = vst.msk [vmem:[#allocation3 + $0x28] sm:$0xff] %vm512, %v2584
        %2601 = vst.msk [vmem:[#allocation3 + $0x30] sm:$0xff] %vm512, %v2585
        %2602 = vst.msk [vmem:[#allocation3 + $0x38] sm:$0xff] %vm512, %v2586
        %2603 = vst.msk [vmem:[#allocation3 + $0x40] sm:$0xff] %vm512, %v2587
        %2604 = vst.msk [vmem:[#allocation3 + $0x48] sm:$0xff] %vm512, %v2588
        %2605 = vst.msk [vmem:[#allocation3 + $0x50] sm:$0xff] %vm512, %v2589
        %2606 = vst.msk [vmem:[#allocation3 + $0x58] sm:$0xff] %vm512, %v2590
        %2607 = vst.msk [vmem:[#allocation3 + $0x60] sm:$0xff] %vm512, %v2591
        %2608 = vst.msk [vmem:[#allocation3 + $0x68] sm:$0xff] %vm512, %v2592
        %2609 = vst.msk [vmem:[#allocation3 + $0x70] sm:$0xff] %vm512, %v2593
        %2610 = vst.msk [vmem:[#allocation3 + $0x78] sm:$0xff] %vm512, %v2594
        %v2611 = vld [vmem:[#allocation3] sm:$0xff]
        %v2612 = vld [vmem:[#allocation3 + $0x8] sm:$0xff]
        %v2613 = vld [vmem:[#allocation3 + $0x10] sm:$0xff]
        %v2614 = vld [vmem:[#allocation3 + $0x18] sm:$0xff]
        %v2615 = vld [vmem:[#allocation3 + $0x20] sm:$0xff]
        %v2616 = vld [vmem:[#allocation3 + $0x28] sm:$0xff]
        %v2617 = vld [vmem:[#allocation3 + $0x30] sm:$0xff]
        %v2618 = vld [vmem:[#allocation3 + $0x38] sm:$0xff]
        %v2619 = vld [vmem:[#allocation3 + $0x40] sm:$0xff]
        %v2620 = vld [vmem:[#allocation3 + $0x48] sm:$0xff]
        %v2621 = vld [vmem:[#allocation3 + $0x50] sm:$0xff]
        %v2622 = vld [vmem:[#allocation3 + $0x58] sm:$0xff]
        %v2623 = vld [vmem:[#allocation3 + $0x60] sm:$0xff]
        %v2624 = vld [vmem:[#allocation3 + $0x68] sm:$0xff]
        %v2625 = vld [vmem:[#allocation3 + $0x70] sm:$0xff]
        %v2626 = vld [vmem:[#allocation3 + $0x78] sm:$0xff]
        %v2627 = vld [vmem:[%s311 + $0x1] sm:$0xff]
        %v2628 = vld [vmem:[%s311 + $0x11] sm:$0xff]
        %v2629 = vld [vmem:[%s311 + $0x21] sm:$0xff]
        %v2630 = vld [vmem:[%s311 + $0x31] sm:$0xff]
        %v2631 = vld [vmem:[%s311 + $0x41] sm:$0xff]
        %v2632 = vld [vmem:[%s311 + $0x51] sm:$0xff]
        %v2633 = vld [vmem:[%s311 + $0x61] sm:$0xff]
        %v2634 = vld [vmem:[%s311 + $0x71] sm:$0xff]
        %v2635 = vld [vmem:[%s311 + $0x81] sm:$0xff]
        %v2636 = vld [vmem:[%s311 + $0x91] sm:$0xff]
        %v2637 = vld [vmem:[%s311 + $0xa1] sm:$0xff]
        %v2638 = vld [vmem:[%s311 + $0xb1] sm:$0xff]
        %v2639 = vld [vmem:[%s311 + $0xc1] sm:$0xff]
        %v2640 = vld [vmem:[%s311 + $0xd1] sm:$0xff]
        %v2641 = vld [vmem:[%s311 + $0xe1] sm:$0xff]
        %v2642 = vld [vmem:[%s311 + $0xf1] sm:$0xff]
        %s2643 = scalar_lea.vmem %s5, 32
        %v2644 = vld [vmem:[%s2643] sm:$0xff]
        %v2645 = vld [vmem:[%s2643 + $0x8] sm:$0xff]
        %v2647 = vsel %vm335, %v2627, 0
        %v2650 = vsel %vm335, %v2628, 0
        %v2653 = vsel %vm335, %v2629, 0
        %v2656 = vsel %vm335, %v2630, 0
        %v2659 = vsel %vm335, %v2631, 0
        %v2662 = vsel %vm335, %v2632, 0
        %v2665 = vsel %vm335, %v2633, 0
        %v2668 = vsel %vm335, %v2634, 0
        %v2671 = vsel %vm335, %v2635, 0
        %v2674 = vsel %vm335, %v2636, 0
        %v2677 = vsel %vm335, %v2637, 0
        %v2680 = vsel %vm335, %v2638, 0
        %v2683 = vsel %vm335, %v2639, 0
        %v2686 = vsel %vm335, %v2640, 0
        %v2689 = vsel %vm335, %v2641, 0
        %v2692 = vsel %vm335, %v2642, 0
        %2694 = vmatprep.subr.mxu0 0.0
        %2695 = vmatpush1.msra.mxu0 %v2644
        %2696 = vmatprep.subr.mxu0 0.0
        %2697 = vmatpush1.msra.mxu0 %v2645
        %2698 = vmatprep.subr.mxu0 0.0
        %2699 = vmatpush1.msra.mxu0 0.0
        %2700 = vmatprep.subr.mxu0 0.0
        %2701 = vmatpush1.msra.mxu0 0.0
        %2702 = vmatprep.subr.mxu0 0.0
        %2703 = vmatpush1.msra.mxu0 0.0
        %2704 = vmatprep.subr.mxu0 0.0
        %2705 = vmatpush1.msra.mxu0 0.0
        %2706 = vmatprep.subr.mxu0 0.0
        %2707 = vmatpush1.msra.mxu0 0.0
        %2708 = vmatprep.subr.mxu0 0.0
        %2709 = vmatpush1.msra.mxu0 0.0
        %2710 = vmatprep.subr.mxu0 0.0
        %2711 = vmatpush1.msra.mxu0 0.0
        %2712 = vmatprep.subr.mxu0 0.0
        %2713 = vmatpush1.msra.mxu0 0.0
        %2714 = vmatprep.subr.mxu0 0.0
        %2715 = vmatpush1.msra.mxu0 0.0
        %2716 = vmatprep.subr.mxu0 0.0
        %2717 = vmatpush1.msra.mxu0 0.0
        %2718 = vmatprep.subr.mxu0 0.0
        %2719 = vmatpush1.msra.mxu0 0.0
        %2720 = vmatprep.subr.mxu0 0.0
        %2721 = vmatpush1.msra.mxu0 0.0
        %2722 = vmatprep.subr.mxu0 0.0
        %2723 = vmatpush1.msra.mxu0 0.0
        %2724 = vmatprep.subr.mxu0 0.0
        %2725 = vmatpush1.msra.mxu0 0.0
        %2726 = vmatprep.subr.mxu0 0.0
        %2727 = vmatpush1.msra.mxu0 0.0
        %2728 = vmatprep.subr.mxu0 0.0
        %2729 = vmatpush1.msra.mxu0 0.0
        %2730 = vmatprep.subr.mxu0 0.0
        %2731 = vmatpush1.msra.mxu0 0.0
        %2732 = vmatprep.subr.mxu0 0.0
        %2733 = vmatpush1.msra.mxu0 0.0
        %2734 = vmatprep.subr.mxu0 0.0
        %2735 = vmatpush1.msra.mxu0 0.0
        %2736 = vmatprep.subr.mxu0 0.0
        %2737 = vmatpush1.msra.mxu0 0.0
        %2738 = vmatprep.subr.mxu0 0.0
        %2739 = vmatpush1.msra.mxu0 0.0
        %2740 = vmatprep.subr.mxu0 0.0
        %2741 = vmatpush1.msra.mxu0 0.0
        %2742 = vmatprep.subr.mxu0 0.0
        %2743 = vmatpush1.msra.mxu0 0.0
        %2744 = vmatprep.subr.mxu0 0.0
        %2745 = vmatpush1.msra.mxu0 0.0
        %2746 = vmatprep.subr.mxu0 0.0
        %2747 = vmatpush1.msra.mxu0 0.0
        %2748 = vmatprep.subr.mxu0 0.0
        %2749 = vmatpush1.msra.mxu0 0.0
        %2750 = vmatprep.subr.mxu0 0.0
        %2751 = vmatpush1.msra.mxu0 0.0
        %2752 = vmatprep.subr.mxu0 0.0
        %2753 = vmatpush1.msra.mxu0 0.0
        %2754 = vmatprep.subr.mxu0 0.0
        %2755 = vmatpush1.msra.mxu0 0.0
        %2756 = vmatprep.subr.mxu0 0.0
        %2757 = vmatpush1.msra.mxu0 0.0
        %2758 = vmatprep.mubr.f32.mxu0 0.0
        %2759 = vmatmul.mubr.f32.gmra.mrb[0].mxu0 %v2647
        %v2760 = vpop.f32.mrb[0].mxu0
        %v2761 = vadd.f32 0.0, %v2760
        %v2762 = vpop.f32.mrb[0].mxu0
        %2763 = vmatprep.mubr.f32.mxu0 0.0
        %2764 = vmatmul.mubr.f32.gmra.mrb[0].mxu0 %v2650
        %v2765 = vpop.f32.mrb[0].mxu0
        %v2766 = vadd.f32 0.0, %v2765
        %v2767 = vpop.f32.mrb[0].mxu0
        %2768 = vmatprep.mubr.f32.mxu0 0.0
        %2769 = vmatmul.mubr.f32.gmra.mrb[0].mxu0 %v2653
        %v2770 = vpop.f32.mrb[0].mxu0
        %v2771 = vadd.f32 0.0, %v2770
        %v2772 = vpop.f32.mrb[0].mxu0
        %2773 = vmatprep.mubr.f32.mxu0 0.0
        %2774 = vmatmul.mubr.f32.gmra.mrb[0].mxu0 %v2656
        %v2775 = vpop.f32.mrb[0].mxu0
        %v2776 = vadd.f32 0.0, %v2775
        %v2777 = vpop.f32.mrb[0].mxu0
        %2778 = vmatprep.mubr.f32.mxu0 0.0
        %2779 = vmatmul.mubr.f32.gmra.mrb[0].mxu0 %v2659
        %v2780 = vpop.f32.mrb[0].mxu0
        %v2781 = vadd.f32 0.0, %v2780
        %v2782 = vpop.f32.mrb[0].mxu0
        %2783 = vmatprep.mubr.f32.mxu0 0.0
        %2784 = vmatmul.mubr.f32.gmra.mrb[0].mxu0 %v2662
        %v2785 = vpop.f32.mrb[0].mxu0
        %v2786 = vadd.f32 0.0, %v2785
        %v2787 = vpop.f32.mrb[0].mxu0
        %2788 = vmatprep.mubr.f32.mxu0 0.0
        %2789 = vmatmul.mubr.f32.gmra.mrb[0].mxu0 %v2665
        %v2790 = vpop.f32.mrb[0].mxu0
        %v2791 = vadd.f32 0.0, %v2790
        %v2792 = vpop.f32.mrb[0].mxu0
        %2793 = vmatprep.mubr.f32.mxu0 0.0
        %2794 = vmatmul.mubr.f32.gmra.mrb[0].mxu0 %v2668
        %v2795 = vpop.f32.mrb[0].mxu0
        %v2796 = vadd.f32 0.0, %v2795
        %v2797 = vpop.f32.mrb[0].mxu0
        %2798 = vmatprep.mubr.f32.mxu0 0.0
        %2799 = vmatmul.mubr.f32.gmra.mrb[0].mxu0 %v2671
        %v2800 = vpop.f32.mrb[0].mxu0
        %v2801 = vadd.f32 0.0, %v2800
        %v2802 = vpop.f32.mrb[0].mxu0
        %2803 = vmatprep.mubr.f32.mxu0 0.0
        %2804 = vmatmul.mubr.f32.gmra.mrb[0].mxu0 %v2674
        %v2805 = vpop.f32.mrb[0].mxu0
        %v2806 = vadd.f32 0.0, %v2805
        %v2807 = vpop.f32.mrb[0].mxu0
        %2808 = vmatprep.mubr.f32.mxu0 0.0
        %2809 = vmatmul.mubr.f32.gmra.mrb[0].mxu0 %v2677
        %v2810 = vpop.f32.mrb[0].mxu0
        %v2811 = vadd.f32 0.0, %v2810
        %v2812 = vpop.f32.mrb[0].mxu0
        %2813 = vmatprep.mubr.f32.mxu0 0.0
        %2814 = vmatmul.mubr.f32.gmra.mrb[0].mxu0 %v2680
        %v2815 = vpop.f32.mrb[0].mxu0
        %v2816 = vadd.f32 0.0, %v2815
        %v2817 = vpop.f32.mrb[0].mxu0
        %2818 = vmatprep.mubr.f32.mxu0 0.0
        %2819 = vmatmul.mubr.f32.gmra.mrb[0].mxu0 %v2683
        %v2820 = vpop.f32.mrb[0].mxu0
        %v2821 = vadd.f32 0.0, %v2820
        %v2822 = vpop.f32.mrb[0].mxu0
        %2823 = vmatprep.mubr.f32.mxu0 0.0
        %2824 = vmatmul.mubr.f32.gmra.mrb[0].mxu0 %v2686
        %v2825 = vpop.f32.mrb[0].mxu0
        %v2826 = vadd.f32 0.0, %v2825
        %v2827 = vpop.f32.mrb[0].mxu0
        %2828 = vmatprep.mubr.f32.mxu0 0.0
        %2829 = vmatmul.mubr.f32.gmra.mrb[0].mxu0 %v2689
        %v2830 = vpop.f32.mrb[0].mxu0
        %v2831 = vadd.f32 0.0, %v2830
        %v2832 = vpop.f32.mrb[0].mxu0
        %2833 = vmatprep.mubr.f32.mxu0 0.0
        %2834 = vmatmul.mubr.f32.gmra.mrb[0].mxu0 %v2692
        %v2835 = vpop.f32.mrb[0].mxu0
        %v2836 = vadd.f32 0.0, %v2835
        %v2837 = vpop.f32.mrb[0].mxu0
        %2838 = vdwg.mxu0
        %v2839 = vadd.f32 %v2611, %v2761
        %v2840 = vadd.f32 %v2612, %v2766
        %v2841 = vadd.f32 %v2613, %v2771
        %v2842 = vadd.f32 %v2614, %v2776
        %v2843 = vadd.f32 %v2615, %v2781
        %v2844 = vadd.f32 %v2616, %v2786
        %v2845 = vadd.f32 %v2617, %v2791
        %v2846 = vadd.f32 %v2618, %v2796
        %v2847 = vadd.f32 %v2619, %v2801
        %v2848 = vadd.f32 %v2620, %v2806
        %v2849 = vadd.f32 %v2621, %v2811
        %v2850 = vadd.f32 %v2622, %v2816
        %v2851 = vadd.f32 %v2623, %v2821
        %v2852 = vadd.f32 %v2624, %v2826
        %v2853 = vadd.f32 %v2625, %v2831
        %v2854 = vadd.f32 %v2626, %v2836
        %2855 = vst.msk [vmem:[#allocation3] sm:$0xff] %vm512, %v2839
        %2856 = vst.msk [vmem:[#allocation3 + $0x8] sm:$0xff] %vm512, %v2840
        %2857 = vst.msk [vmem:[#allocation3 + $0x10] sm:$0xff] %vm512, %v2841
        %2858 = vst.msk [vmem:[#allocation3 + $0x18] sm:$0xff] %vm512, %v2842
        %2859 = vst.msk [vmem:[#allocation3 + $0x20] sm:$0xff] %vm512, %v2843
        %2860 = vst.msk [vmem:[#allocation3 + $0x28] sm:$0xff] %vm512, %v2844
        %2861 = vst.msk [vmem:[#allocation3 + $0x30] sm:$0xff] %vm512, %v2845
        %2862 = vst.msk [vmem:[#allocation3 + $0x38] sm:$0xff] %vm512, %v2846
        %2863 = vst.msk [vmem:[#allocation3 + $0x40] sm:$0xff] %vm512, %v2847
        %2864 = vst.msk [vmem:[#allocation3 + $0x48] sm:$0xff] %vm512, %v2848
        %2865 = vst.msk [vmem:[#allocation3 + $0x50] sm:$0xff] %vm512, %v2849
        %2866 = vst.msk [vmem:[#allocation3 + $0x58] sm:$0xff] %vm512, %v2850
        %2867 = vst.msk [vmem:[#allocation3 + $0x60] sm:$0xff] %vm512, %v2851
        %2868 = vst.msk [vmem:[#allocation3 + $0x68] sm:$0xff] %vm512, %v2852
        %2869 = vst.msk [vmem:[#allocation3 + $0x70] sm:$0xff] %vm512, %v2853
        %2870 = vst.msk [vmem:[#allocation3 + $0x78] sm:$0xff] %vm512, %v2854
        %v2871 = vld [vmem:[#allocation4] sm:$0xff]
        %v2872 = vld [vmem:[#allocation4 + $0x8] sm:$0xff]
        %v2873 = vld [vmem:[#allocation4 + $0x10] sm:$0xff]
        %v2874 = vld [vmem:[#allocation4 + $0x18] sm:$0xff]
        %v2875 = vld [vmem:[#allocation4 + $0x20] sm:$0xff]
        %v2876 = vld [vmem:[#allocation4 + $0x28] sm:$0xff]
        %v2877 = vld [vmem:[#allocation4 + $0x30] sm:$0xff]
        %v2878 = vld [vmem:[#allocation4 + $0x38] sm:$0xff]
        %v2879 = vld [vmem:[#allocation4 + $0x40] sm:$0xff]
        %v2880 = vld [vmem:[#allocation4 + $0x48] sm:$0xff]
        %v2881 = vld [vmem:[#allocation4 + $0x50] sm:$0xff]
        %v2882 = vld [vmem:[#allocation4 + $0x58] sm:$0xff]
        %v2883 = vld [vmem:[#allocation4 + $0x60] sm:$0xff]
        %v2884 = vld [vmem:[#allocation4 + $0x68] sm:$0xff]
        %v2885 = vld [vmem:[#allocation4 + $0x70] sm:$0xff]
        %v2886 = vld [vmem:[#allocation4 + $0x78] sm:$0xff]
        %v2887 = vld [vmem:[%s316] sm:$0xff]
        %v2888 = vld [vmem:[%s316 + $0x10] sm:$0xff]
        %v2889 = vld [vmem:[%s316 + $0x20] sm:$0xff]
        %v2890 = vld [vmem:[%s316 + $0x30] sm:$0xff]
        %v2891 = vld [vmem:[%s316 + $0x40] sm:$0xff]
        %v2892 = vld [vmem:[%s316 + $0x50] sm:$0xff]
        %v2893 = vld [vmem:[%s316 + $0x60] sm:$0xff]
        %v2894 = vld [vmem:[%s316 + $0x70] sm:$0xff]
        %v2895 = vld [vmem:[%s316 + $0x80] sm:$0xff]
        %v2896 = vld [vmem:[%s316 + $0x90] sm:$0xff]
        %v2897 = vld [vmem:[%s316 + $0xa0] sm:$0xff]
        %v2898 = vld [vmem:[%s316 + $0xb0] sm:$0xff]
        %v2899 = vld [vmem:[%s316 + $0xc0] sm:$0xff]
        %v2900 = vld [vmem:[%s316 + $0xd0] sm:$0xff]
        %v2901 = vld [vmem:[%s316 + $0xe0] sm:$0xff]
        %v2902 = vld [vmem:[%s316 + $0xf0] sm:$0xff]
        %v2903 = vld [vmem:[%s5] sm:$0xff]
        %v2904 = vld [vmem:[%s5 + $0x8] sm:$0xff]
        %v2906 = vsel %vm335, %v2887, 0
        %v2909 = vsel %vm335, %v2888, 0
        %v2912 = vsel %vm335, %v2889, 0
        %v2915 = vsel %vm335, %v2890, 0
        %v2918 = vsel %vm335, %v2891, 0
        %v2921 = vsel %vm335, %v2892, 0
        %v2924 = vsel %vm335, %v2893, 0
        %v2927 = vsel %vm335, %v2894, 0
        %v2930 = vsel %vm335, %v2895, 0
        %v2933 = vsel %vm335, %v2896, 0
        %v2936 = vsel %vm335, %v2897, 0
        %v2939 = vsel %vm335, %v2898, 0
        %v2942 = vsel %vm335, %v2899, 0
        %v2945 = vsel %vm335, %v2900, 0
        %v2948 = vsel %vm335, %v2901, 0
        %v2951 = vsel %vm335, %v2902, 0
        %2953 = vmatprep.subr.mxu0 0.0
        %2954 = vmatpush1.msra.mxu0 %v2903
        %2955 = vmatprep.subr.mxu0 0.0
        %2956 = vmatpush1.msra.mxu0 %v2904
        %2957 = vmatprep.subr.mxu0 0.0
        %2958 = vmatpush1.msra.mxu0 0.0
        %2959 = vmatprep.subr.mxu0 0.0
        %2960 = vmatpush1.msra.mxu0 0.0
        %2961 = vmatprep.subr.mxu0 0.0
        %2962 = vmatpush1.msra.mxu0 0.0
        %2963 = vmatprep.subr.mxu0 0.0
        %2964 = vmatpush1.msra.mxu0 0.0
        %2965 = vmatprep.subr.mxu0 0.0
        %2966 = vmatpush1.msra.mxu0 0.0
        %2967 = vmatprep.subr.mxu0 0.0
        %2968 = vmatpush1.msra.mxu0 0.0
        %2969 = vmatprep.subr.mxu0 0.0
        %2970 = vmatpush1.msra.mxu0 0.0
        %2971 = vmatprep.subr.mxu0 0.0
        %2972 = vmatpush1.msra.mxu0 0.0
        %2973 = vmatprep.subr.mxu0 0.0
        %2974 = vmatpush1.msra.mxu0 0.0
        %2975 = vmatprep.subr.mxu0 0.0
        %2976 = vmatpush1.msra.mxu0 0.0
        %2977 = vmatprep.subr.mxu0 0.0
        %2978 = vmatpush1.msra.mxu0 0.0
        %2979 = vmatprep.subr.mxu0 0.0
        %2980 = vmatpush1.msra.mxu0 0.0
        %2981 = vmatprep.subr.mxu0 0.0
        %2982 = vmatpush1.msra.mxu0 0.0
        %2983 = vmatprep.subr.mxu0 0.0
        %2984 = vmatpush1.msra.mxu0 0.0
        %2985 = vmatprep.subr.mxu0 0.0
        %2986 = vmatpush1.msra.mxu0 0.0
        %2987 = vmatprep.subr.mxu0 0.0
        %2988 = vmatpush1.msra.mxu0 0.0
        %2989 = vmatprep.subr.mxu0 0.0
        %2990 = vmatpush1.msra.mxu0 0.0
        %2991 = vmatprep.subr.mxu0 0.0
        %2992 = vmatpush1.msra.mxu0 0.0
        %2993 = vmatprep.subr.mxu0 0.0
        %2994 = vmatpush1.msra.mxu0 0.0
        %2995 = vmatprep.subr.mxu0 0.0
        %2996 = vmatpush1.msra.mxu0 0.0
        %2997 = vmatprep.subr.mxu0 0.0
        %2998 = vmatpush1.msra.mxu0 0.0
        %2999 = vmatprep.subr.mxu0 0.0
        %3000 = vmatpush1.msra.mxu0 0.0
        %3001 = vmatprep.subr.mxu0 0.0
        %3002 = vmatpush1.msra.mxu0 0.0
        %3003 = vmatprep.subr.mxu0 0.0
        %3004 = vmatpush1.msra.mxu0 0.0
        %3005 = vmatprep.subr.mxu0 0.0
        %3006 = vmatpush1.msra.mxu0 0.0
        %3007 = vmatprep.subr.mxu0 0.0
        %3008 = vmatpush1.msra.mxu0 0.0
        %3009 = vmatprep.subr.mxu0 0.0
        %3010 = vmatpush1.msra.mxu0 0.0
        %3011 = vmatprep.subr.mxu0 0.0
        %3012 = vmatpush1.msra.mxu0 0.0
        %3013 = vmatprep.subr.mxu0 0.0
        %3014 = vmatpush1.msra.mxu0 0.0
        %3015 = vmatprep.subr.mxu0 0.0
        %3016 = vmatpush1.msra.mxu0 0.0
        %3017 = vmatprep.mubr.f32.mxu0 0.0
        %3018 = vmatmul.mubr.f32.gmra.mrb[0].mxu0 %v2906
        %v3019 = vpop.f32.mrb[0].mxu0
        %v3020 = vadd.f32 0.0, %v3019
        %v3021 = vpop.f32.mrb[0].mxu0
        %3022 = vmatprep.mubr.f32.mxu0 0.0
        %3023 = vmatmul.mubr.f32.gmra.mrb[0].mxu0 %v2909
        %v3024 = vpop.f32.mrb[0].mxu0
        %v3025 = vadd.f32 0.0, %v3024
        %v3026 = vpop.f32.mrb[0].mxu0
        %3027 = vmatprep.mubr.f32.mxu0 0.0
        %3028 = vmatmul.mubr.f32.gmra.mrb[0].mxu0 %v2912
        %v3029 = vpop.f32.mrb[0].mxu0
        %v3030 = vadd.f32 0.0, %v3029
        %v3031 = vpop.f32.mrb[0].mxu0
        %3032 = vmatprep.mubr.f32.mxu0 0.0
        %3033 = vmatmul.mubr.f32.gmra.mrb[0].mxu0 %v2915
        %v3034 = vpop.f32.mrb[0].mxu0
        %v3035 = vadd.f32 0.0, %v3034
        %v3036 = vpop.f32.mrb[0].mxu0
        %3037 = vmatprep.mubr.f32.mxu0 0.0
        %3038 = vmatmul.mubr.f32.gmra.mrb[0].mxu0 %v2918
        %v3039 = vpop.f32.mrb[0].mxu0
        %v3040 = vadd.f32 0.0, %v3039
        %v3041 = vpop.f32.mrb[0].mxu0
        %3042 = vmatprep.mubr.f32.mxu0 0.0
        %3043 = vmatmul.mubr.f32.gmra.mrb[0].mxu0 %v2921
        %v3044 = vpop.f32.mrb[0].mxu0
        %v3045 = vadd.f32 0.0, %v3044
        %v3046 = vpop.f32.mrb[0].mxu0
        %3047 = vmatprep.mubr.f32.mxu0 0.0
        %3048 = vmatmul.mubr.f32.gmra.mrb[0].mxu0 %v2924
        %v3049 = vpop.f32.mrb[0].mxu0
        %v3050 = vadd.f32 0.0, %v3049
        %v3051 = vpop.f32.mrb[0].mxu0
        %3052 = vmatprep.mubr.f32.mxu0 0.0
        %3053 = vmatmul.mubr.f32.gmra.mrb[0].mxu0 %v2927
        %v3054 = vpop.f32.mrb[0].mxu0
        %v3055 = vadd.f32 0.0, %v3054
        %v3056 = vpop.f32.mrb[0].mxu0
        %3057 = vmatprep.mubr.f32.mxu0 0.0
        %3058 = vmatmul.mubr.f32.gmra.mrb[0].mxu0 %v2930
        %v3059 = vpop.f32.mrb[0].mxu0
        %v3060 = vadd.f32 0.0, %v3059
        %v3061 = vpop.f32.mrb[0].mxu0
        %3062 = vmatprep.mubr.f32.mxu0 0.0
        %3063 = vmatmul.mubr.f32.gmra.mrb[0].mxu0 %v2933
        %v3064 = vpop.f32.mrb[0].mxu0
        %v3065 = vadd.f32 0.0, %v3064
        %v3066 = vpop.f32.mrb[0].mxu0
        %3067 = vmatprep.mubr.f32.mxu0 0.0
        %3068 = vmatmul.mubr.f32.gmra.mrb[0].mxu0 %v2936
        %v3069 = vpop.f32.mrb[0].mxu0
        %v3070 = vadd.f32 0.0, %v3069
        %v3071 = vpop.f32.mrb[0].mxu0
        %3072 = vmatprep.mubr.f32.mxu0 0.0
        %3073 = vmatmul.mubr.f32.gmra.mrb[0].mxu0 %v2939
        %v3074 = vpop.f32.mrb[0].mxu0
        %v3075 = vadd.f32 0.0, %v3074
        %v3076 = vpop.f32.mrb[0].mxu0
        %3077 = vmatprep.mubr.f32.mxu0 0.0
        %3078 = vmatmul.mubr.f32.gmra.mrb[0].mxu0 %v2942
        %v3079 = vpop.f32.mrb[0].mxu0
        %v3080 = vadd.f32 0.0, %v3079
        %v3081 = vpop.f32.mrb[0].mxu0
        %3082 = vmatprep.mubr.f32.mxu0 0.0
        %3083 = vmatmul.mubr.f32.gmra.mrb[0].mxu0 %v2945
        %v3084 = vpop.f32.mrb[0].mxu0
        %v3085 = vadd.f32 0.0, %v3084
        %v3086 = vpop.f32.mrb[0].mxu0
        %3087 = vmatprep.mubr.f32.mxu0 0.0
        %3088 = vmatmul.mubr.f32.gmra.mrb[0].mxu0 %v2948
        %v3089 = vpop.f32.mrb[0].mxu0
        %v3090 = vadd.f32 0.0, %v3089
        %v3091 = vpop.f32.mrb[0].mxu0
        %3092 = vmatprep.mubr.f32.mxu0 0.0
        %3093 = vmatmul.mubr.f32.gmra.mrb[0].mxu0 %v2951
        %v3094 = vpop.f32.mrb[0].mxu0
        %v3095 = vadd.f32 0.0, %v3094
        %v3096 = vpop.f32.mrb[0].mxu0
        %3097 = vdwg.mxu0
        %v3098 = vadd.f32 %v2871, %v3020
        %v3099 = vadd.f32 %v2872, %v3025
        %v3100 = vadd.f32 %v2873, %v3030
        %v3101 = vadd.f32 %v2874, %v3035
        %v3102 = vadd.f32 %v2875, %v3040
        %v3103 = vadd.f32 %v2876, %v3045
        %v3104 = vadd.f32 %v2877, %v3050
        %v3105 = vadd.f32 %v2878, %v3055
        %v3106 = vadd.f32 %v2879, %v3060
        %v3107 = vadd.f32 %v2880, %v3065
        %v3108 = vadd.f32 %v2881, %v3070
        %v3109 = vadd.f32 %v2882, %v3075
        %v3110 = vadd.f32 %v2883, %v3080
        %v3111 = vadd.f32 %v2884, %v3085
        %v3112 = vadd.f32 %v2885, %v3090
        %v3113 = vadd.f32 %v2886, %v3095
        %3114 = vst.msk [vmem:[#allocation4] sm:$0xff] %vm512, %v3098
        %3115 = vst.msk [vmem:[#allocation4 + $0x8] sm:$0xff] %vm512, %v3099
        %3116 = vst.msk [vmem:[#allocation4 + $0x10] sm:$0xff] %vm512, %v3100
        %3117 = vst.msk [vmem:[#allocation4 + $0x18] sm:$0xff] %vm512, %v3101
        %3118 = vst.msk [vmem:[#allocation4 + $0x20] sm:$0xff] %vm512, %v3102
        %3119 = vst.msk [vmem:[#allocation4 + $0x28] sm:$0xff] %vm512, %v3103
        %3120 = vst.msk [vmem:[#allocation4 + $0x30] sm:$0xff] %vm512, %v3104
        %3121 = vst.msk [vmem:[#allocation4 + $0x38] sm:$0xff] %vm512, %v3105
        %3122 = vst.msk [vmem:[#allocation4 + $0x40] sm:$0xff] %vm512, %v3106
        %3123 = vst.msk [vmem:[#allocation4 + $0x48] sm:$0xff] %vm512, %v3107
        %3124 = vst.msk [vmem:[#allocation4 + $0x50] sm:$0xff] %vm512, %v3108
        %3125 = vst.msk [vmem:[#allocation4 + $0x58] sm:$0xff] %vm512, %v3109
        %3126 = vst.msk [vmem:[#allocation4 + $0x60] sm:$0xff] %vm512, %v3110
        %3127 = vst.msk [vmem:[#allocation4 + $0x68] sm:$0xff] %vm512, %v3111
        %3128 = vst.msk [vmem:[#allocation4 + $0x70] sm:$0xff] %vm512, %v3112
        %3129 = vst.msk [vmem:[#allocation4 + $0x78] sm:$0xff] %vm512, %v3113
        %v3130 = vld [vmem:[#allocation4] sm:$0xff]
        %v3131 = vld [vmem:[#allocation4 + $0x8] sm:$0xff]
        %v3132 = vld [vmem:[#allocation4 + $0x10] sm:$0xff]
        %v3133 = vld [vmem:[#allocation4 + $0x18] sm:$0xff]
        %v3134 = vld [vmem:[#allocation4 + $0x20] sm:$0xff]
        %v3135 = vld [vmem:[#allocation4 + $0x28] sm:$0xff]
        %v3136 = vld [vmem:[#allocation4 + $0x30] sm:$0xff]
        %v3137 = vld [vmem:[#allocation4 + $0x38] sm:$0xff]
        %v3138 = vld [vmem:[#allocation4 + $0x40] sm:$0xff]
        %v3139 = vld [vmem:[#allocation4 + $0x48] sm:$0xff]
        %v3140 = vld [vmem:[#allocation4 + $0x50] sm:$0xff]
        %v3141 = vld [vmem:[#allocation4 + $0x58] sm:$0xff]
        %v3142 = vld [vmem:[#allocation4 + $0x60] sm:$0xff]
        %v3143 = vld [vmem:[#allocation4 + $0x68] sm:$0xff]
        %v3144 = vld [vmem:[#allocation4 + $0x70] sm:$0xff]
        %v3145 = vld [vmem:[#allocation4 + $0x78] sm:$0xff]
        %v3146 = vld [vmem:[%s311 + $0x1] sm:$0xff]
        %v3147 = vld [vmem:[%s311 + $0x11] sm:$0xff]
        %v3148 = vld [vmem:[%s311 + $0x21] sm:$0xff]
        %v3149 = vld [vmem:[%s311 + $0x31] sm:$0xff]
        %v3150 = vld [vmem:[%s311 + $0x41] sm:$0xff]
        %v3151 = vld [vmem:[%s311 + $0x51] sm:$0xff]
        %v3152 = vld [vmem:[%s311 + $0x61] sm:$0xff]
        %v3153 = vld [vmem:[%s311 + $0x71] sm:$0xff]
        %v3154 = vld [vmem:[%s311 + $0x81] sm:$0xff]
        %v3155 = vld [vmem:[%s311 + $0x91] sm:$0xff]
        %v3156 = vld [vmem:[%s311 + $0xa1] sm:$0xff]
        %v3157 = vld [vmem:[%s311 + $0xb1] sm:$0xff]
        %v3158 = vld [vmem:[%s311 + $0xc1] sm:$0xff]
        %v3159 = vld [vmem:[%s311 + $0xd1] sm:$0xff]
        %v3160 = vld [vmem:[%s311 + $0xe1] sm:$0xff]
        %v3161 = vld [vmem:[%s311 + $0xf1] sm:$0xff]
        %v3162 = vld [vmem:[%s2383] sm:$0xff]
        %v3163 = vld [vmem:[%s2383 + $0x8] sm:$0xff]
        %v3165 = vsel %vm335, %v3146, 0
        %v3168 = vsel %vm335, %v3147, 0
        %v3171 = vsel %vm335, %v3148, 0
        %v3174 = vsel %vm335, %v3149, 0
        %v3177 = vsel %vm335, %v3150, 0
        %v3180 = vsel %vm335, %v3151, 0
        %v3183 = vsel %vm335, %v3152, 0
        %v3186 = vsel %vm335, %v3153, 0
        %v3189 = vsel %vm335, %v3154, 0
        %v3192 = vsel %vm335, %v3155, 0
        %v3195 = vsel %vm335, %v3156, 0
        %v3198 = vsel %vm335, %v3157, 0
        %v3201 = vsel %vm335, %v3158, 0
        %v3204 = vsel %vm335, %v3159, 0
        %v3207 = vsel %vm335, %v3160, 0
        %v3210 = vsel %vm335, %v3161, 0
        %3212 = vmatprep.subr.mxu0 0.0
        %3213 = vmatpush1.msra.mxu0 %v3162
        %3214 = vmatprep.subr.mxu0 0.0
        %3215 = vmatpush1.msra.mxu0 %v3163
        %3216 = vmatprep.subr.mxu0 0.0
        %3217 = vmatpush1.msra.mxu0 0.0
        %3218 = vmatprep.subr.mxu0 0.0
        %3219 = vmatpush1.msra.mxu0 0.0
        %3220 = vmatprep.subr.mxu0 0.0
        %3221 = vmatpush1.msra.mxu0 0.0
        %3222 = vmatprep.subr.mxu0 0.0
        %3223 = vmatpush1.msra.mxu0 0.0
        %3224 = vmatprep.subr.mxu0 0.0
        %3225 = vmatpush1.msra.mxu0 0.0
        %3226 = vmatprep.subr.mxu0 0.0
        %3227 = vmatpush1.msra.mxu0 0.0
        %3228 = vmatprep.subr.mxu0 0.0
        %3229 = vmatpush1.msra.mxu0 0.0
        %3230 = vmatprep.subr.mxu0 0.0
        %3231 = vmatpush1.msra.mxu0 0.0
        %3232 = vmatprep.subr.mxu0 0.0
        %3233 = vmatpush1.msra.mxu0 0.0
        %3234 = vmatprep.subr.mxu0 0.0
        %3235 = vmatpush1.msra.mxu0 0.0
        %3236 = vmatprep.subr.mxu0 0.0
        %3237 = vmatpush1.msra.mxu0 0.0
        %3238 = vmatprep.subr.mxu0 0.0
        %3239 = vmatpush1.msra.mxu0 0.0
        %3240 = vmatprep.subr.mxu0 0.0
        %3241 = vmatpush1.msra.mxu0 0.0
        %3242 = vmatprep.subr.mxu0 0.0
        %3243 = vmatpush1.msra.mxu0 0.0
        %3244 = vmatprep.subr.mxu0 0.0
        %3245 = vmatpush1.msra.mxu0 0.0
        %3246 = vmatprep.subr.mxu0 0.0
        %3247 = vmatpush1.msra.mxu0 0.0
        %3248 = vmatprep.subr.mxu0 0.0
        %3249 = vmatpush1.msra.mxu0 0.0
        %3250 = vmatprep.subr.mxu0 0.0
        %3251 = vmatpush1.msra.mxu0 0.0
        %3252 = vmatprep.subr.mxu0 0.0
        %3253 = vmatpush1.msra.mxu0 0.0
        %3254 = vmatprep.subr.mxu0 0.0
        %3255 = vmatpush1.msra.mxu0 0.0
        %3256 = vmatprep.subr.mxu0 0.0
        %3257 = vmatpush1.msra.mxu0 0.0
        %3258 = vmatprep.subr.mxu0 0.0
        %3259 = vmatpush1.msra.mxu0 0.0
        %3260 = vmatprep.subr.mxu0 0.0
        %3261 = vmatpush1.msra.mxu0 0.0
        %3262 = vmatprep.subr.mxu0 0.0
        %3263 = vmatpush1.msra.mxu0 0.0
        %3264 = vmatprep.subr.mxu0 0.0
        %3265 = vmatpush1.msra.mxu0 0.0
        %3266 = vmatprep.subr.mxu0 0.0
        %3267 = vmatpush1.msra.mxu0 0.0
        %3268 = vmatprep.subr.mxu0 0.0
        %3269 = vmatpush1.msra.mxu0 0.0
        %3270 = vmatprep.subr.mxu0 0.0
        %3271 = vmatpush1.msra.mxu0 0.0
        %3272 = vmatprep.subr.mxu0 0.0
        %3273 = vmatpush1.msra.mxu0 0.0
        %3274 = vmatprep.subr.mxu0 0.0
        %3275 = vmatpush1.msra.mxu0 0.0
        %3276 = vmatprep.mubr.f32.mxu0 0.0
        %3277 = vmatmul.mubr.f32.gmra.mrb[0].mxu0 %v3165
        %v3278 = vpop.f32.mrb[0].mxu0
        %v3279 = vadd.f32 0.0, %v3278
        %v3280 = vpop.f32.mrb[0].mxu0
        %3281 = vmatprep.mubr.f32.mxu0 0.0
        %3282 = vmatmul.mubr.f32.gmra.mrb[0].mxu0 %v3168
        %v3283 = vpop.f32.mrb[0].mxu0
        %v3284 = vadd.f32 0.0, %v3283
        %v3285 = vpop.f32.mrb[0].mxu0
        %3286 = vmatprep.mubr.f32.mxu0 0.0
        %3287 = vmatmul.mubr.f32.gmra.mrb[0].mxu0 %v3171
        %v3288 = vpop.f32.mrb[0].mxu0
        %v3289 = vadd.f32 0.0, %v3288
        %v3290 = vpop.f32.mrb[0].mxu0
        %3291 = vmatprep.mubr.f32.mxu0 0.0
        %3292 = vmatmul.mubr.f32.gmra.mrb[0].mxu0 %v3174
        %v3293 = vpop.f32.mrb[0].mxu0
        %v3294 = vadd.f32 0.0, %v3293
        %v3295 = vpop.f32.mrb[0].mxu0
        %3296 = vmatprep.mubr.f32.mxu0 0.0
        %3297 = vmatmul.mubr.f32.gmra.mrb[0].mxu0 %v3177
        %v3298 = vpop.f32.mrb[0].mxu0
        %v3299 = vadd.f32 0.0, %v3298
        %v3300 = vpop.f32.mrb[0].mxu0
        %3301 = vmatprep.mubr.f32.mxu0 0.0
        %3302 = vmatmul.mubr.f32.gmra.mrb[0].mxu0 %v3180
        %v3303 = vpop.f32.mrb[0].mxu0
        %v3304 = vadd.f32 0.0, %v3303
        %v3305 = vpop.f32.mrb[0].mxu0
        %3306 = vmatprep.mubr.f32.mxu0 0.0
        %3307 = vmatmul.mubr.f32.gmra.mrb[0].mxu0 %v3183
        %v3308 = vpop.f32.mrb[0].mxu0
        %v3309 = vadd.f32 0.0, %v3308
        %v3310 = vpop.f32.mrb[0].mxu0
        %3311 = vmatprep.mubr.f32.mxu0 0.0
        %3312 = vmatmul.mubr.f32.gmra.mrb[0].mxu0 %v3186
        %v3313 = vpop.f32.mrb[0].mxu0
        %v3314 = vadd.f32 0.0, %v3313
        %v3315 = vpop.f32.mrb[0].mxu0
        %3316 = vmatprep.mubr.f32.mxu0 0.0
        %3317 = vmatmul.mubr.f32.gmra.mrb[0].mxu0 %v3189
        %v3318 = vpop.f32.mrb[0].mxu0
        %v3319 = vadd.f32 0.0, %v3318
        %v3320 = vpop.f32.mrb[0].mxu0
        %3321 = vmatprep.mubr.f32.mxu0 0.0
        %3322 = vmatmul.mubr.f32.gmra.mrb[0].mxu0 %v3192
        %v3323 = vpop.f32.mrb[0].mxu0
        %v3324 = vadd.f32 0.0, %v3323
        %v3325 = vpop.f32.mrb[0].mxu0
        %3326 = vmatprep.mubr.f32.mxu0 0.0
        %3327 = vmatmul.mubr.f32.gmra.mrb[0].mxu0 %v3195
        %v3328 = vpop.f32.mrb[0].mxu0
        %v3329 = vadd.f32 0.0, %v3328
        %v3330 = vpop.f32.mrb[0].mxu0
        %3331 = vmatprep.mubr.f32.mxu0 0.0
        %3332 = vmatmul.mubr.f32.gmra.mrb[0].mxu0 %v3198
        %v3333 = vpop.f32.mrb[0].mxu0
        %v3334 = vadd.f32 0.0, %v3333
        %v3335 = vpop.f32.mrb[0].mxu0
        %3336 = vmatprep.mubr.f32.mxu0 0.0
        %3337 = vmatmul.mubr.f32.gmra.mrb[0].mxu0 %v3201
        %v3338 = vpop.f32.mrb[0].mxu0
        %v3339 = vadd.f32 0.0, %v3338
        %v3340 = vpop.f32.mrb[0].mxu0
        %3341 = vmatprep.mubr.f32.mxu0 0.0
        %3342 = vmatmul.mubr.f32.gmra.mrb[0].mxu0 %v3204
        %v3343 = vpop.f32.mrb[0].mxu0
        %v3344 = vadd.f32 0.0, %v3343
        %v3345 = vpop.f32.mrb[0].mxu0
        %3346 = vmatprep.mubr.f32.mxu0 0.0
        %3347 = vmatmul.mubr.f32.gmra.mrb[0].mxu0 %v3207
        %v3348 = vpop.f32.mrb[0].mxu0
        %v3349 = vadd.f32 0.0, %v3348
        %v3350 = vpop.f32.mrb[0].mxu0
        %3351 = vmatprep.mubr.f32.mxu0 0.0
        %3352 = vmatmul.mubr.f32.gmra.mrb[0].mxu0 %v3210
        %v3353 = vpop.f32.mrb[0].mxu0
        %v3354 = vadd.f32 0.0, %v3353
        %v3355 = vpop.f32.mrb[0].mxu0
        %3356 = vdwg.mxu0
        %v3357 = vadd.f32 %v3130, %v3279
        %v3358 = vadd.f32 %v3131, %v3284
        %v3359 = vadd.f32 %v3132, %v3289
        %v3360 = vadd.f32 %v3133, %v3294
        %v3361 = vadd.f32 %v3134, %v3299
        %v3362 = vadd.f32 %v3135, %v3304
        %v3363 = vadd.f32 %v3136, %v3309
        %v3364 = vadd.f32 %v3137, %v3314
        %v3365 = vadd.f32 %v3138, %v3319
        %v3366 = vadd.f32 %v3139, %v3324
        %v3367 = vadd.f32 %v3140, %v3329
        %v3368 = vadd.f32 %v3141, %v3334
        %v3369 = vadd.f32 %v3142, %v3339
        %v3370 = vadd.f32 %v3143, %v3344
        %v3371 = vadd.f32 %v3144, %v3349
        %v3372 = vadd.f32 %v3145, %v3354
        %3373 = vst.msk [vmem:[#allocation4] sm:$0xff] %vm512, %v3357
        %3374 = vst.msk [vmem:[#allocation4 + $0x8] sm:$0xff] %vm512, %v3358
        %3375 = vst.msk [vmem:[#allocation4 + $0x10] sm:$0xff] %vm512, %v3359
        %3376 = vst.msk [vmem:[#allocation4 + $0x18] sm:$0xff] %vm512, %v3360
        %3377 = vst.msk [vmem:[#allocation4 + $0x20] sm:$0xff] %vm512, %v3361
        %3378 = vst.msk [vmem:[#allocation4 + $0x28] sm:$0xff] %vm512, %v3362
        %3379 = vst.msk [vmem:[#allocation4 + $0x30] sm:$0xff] %vm512, %v3363
        %3380 = vst.msk [vmem:[#allocation4 + $0x38] sm:$0xff] %vm512, %v3364
        %3381 = vst.msk [vmem:[#allocation4 + $0x40] sm:$0xff] %vm512, %v3365
        %3382 = vst.msk [vmem:[#allocation4 + $0x48] sm:$0xff] %vm512, %v3366
        %3383 = vst.msk [vmem:[#allocation4 + $0x50] sm:$0xff] %vm512, %v3367
        %3384 = vst.msk [vmem:[#allocation4 + $0x58] sm:$0xff] %vm512, %v3368
        %3385 = vst.msk [vmem:[#allocation4 + $0x60] sm:$0xff] %vm512, %v3369
        %3386 = vst.msk [vmem:[#allocation4 + $0x68] sm:$0xff] %vm512, %v3370
        %3387 = vst.msk [vmem:[#allocation4 + $0x70] sm:$0xff] %vm512, %v3371
        %3388 = vst.msk [vmem:[#allocation4 + $0x78] sm:$0xff] %vm512, %v3372
        %v3389 = vld [vmem:[#allocation4] sm:$0xff]
        %v3390 = vld [vmem:[#allocation4 + $0x8] sm:$0xff]
        %v3391 = vld [vmem:[#allocation4 + $0x10] sm:$0xff]
        %v3392 = vld [vmem:[#allocation4 + $0x18] sm:$0xff]
        %v3393 = vld [vmem:[#allocation4 + $0x20] sm:$0xff]
        %v3394 = vld [vmem:[#allocation4 + $0x28] sm:$0xff]
        %v3395 = vld [vmem:[#allocation4 + $0x30] sm:$0xff]
        %v3396 = vld [vmem:[#allocation4 + $0x38] sm:$0xff]
        %v3397 = vld [vmem:[#allocation4 + $0x40] sm:$0xff]
        %v3398 = vld [vmem:[#allocation4 + $0x48] sm:$0xff]
        %v3399 = vld [vmem:[#allocation4 + $0x50] sm:$0xff]
        %v3400 = vld [vmem:[#allocation4 + $0x58] sm:$0xff]
        %v3401 = vld [vmem:[#allocation4 + $0x60] sm:$0xff]
        %v3402 = vld [vmem:[#allocation4 + $0x68] sm:$0xff]
        %v3403 = vld [vmem:[#allocation4 + $0x70] sm:$0xff]
        %v3404 = vld [vmem:[#allocation4 + $0x78] sm:$0xff]
        %v3405 = vld [vmem:[%s316 + $0x1] sm:$0xff]
        %v3406 = vld [vmem:[%s316 + $0x11] sm:$0xff]
        %v3407 = vld [vmem:[%s316 + $0x21] sm:$0xff]
        %v3408 = vld [vmem:[%s316 + $0x31] sm:$0xff]
        %v3409 = vld [vmem:[%s316 + $0x41] sm:$0xff]
        %v3410 = vld [vmem:[%s316 + $0x51] sm:$0xff]
        %v3411 = vld [vmem:[%s316 + $0x61] sm:$0xff]
        %v3412 = vld [vmem:[%s316 + $0x71] sm:$0xff]
        %v3413 = vld [vmem:[%s316 + $0x81] sm:$0xff]
        %v3414 = vld [vmem:[%s316 + $0x91] sm:$0xff]
        %v3415 = vld [vmem:[%s316 + $0xa1] sm:$0xff]
        %v3416 = vld [vmem:[%s316 + $0xb1] sm:$0xff]
        %v3417 = vld [vmem:[%s316 + $0xc1] sm:$0xff]
        %v3418 = vld [vmem:[%s316 + $0xd1] sm:$0xff]
        %v3419 = vld [vmem:[%s316 + $0xe1] sm:$0xff]
        %v3420 = vld [vmem:[%s316 + $0xf1] sm:$0xff]
        %v3421 = vld [vmem:[%s2643] sm:$0xff]
        %v3422 = vld [vmem:[%s2643 + $0x8] sm:$0xff]
        %v3424 = vsel %vm335, %v3405, 0
        %v3427 = vsel %vm335, %v3406, 0
        %v3430 = vsel %vm335, %v3407, 0
        %v3433 = vsel %vm335, %v3408, 0
        %v3436 = vsel %vm335, %v3409, 0
        %v3439 = vsel %vm335, %v3410, 0
        %v3442 = vsel %vm335, %v3411, 0
        %v3445 = vsel %vm335, %v3412, 0
        %v3448 = vsel %vm335, %v3413, 0
        %v3451 = vsel %vm335, %v3414, 0
        %v3454 = vsel %vm335, %v3415, 0
        %v3457 = vsel %vm335, %v3416, 0
        %v3460 = vsel %vm335, %v3417, 0
        %v3463 = vsel %vm335, %v3418, 0
        %v3466 = vsel %vm335, %v3419, 0
        %v3469 = vsel %vm335, %v3420, 0
        %3471 = vmatprep.subr.mxu0 0.0
        %3472 = vmatpush1.msra.mxu0 %v3421
        %3473 = vmatprep.subr.mxu0 0.0
        %3474 = vmatpush1.msra.mxu0 %v3422
        %3475 = vmatprep.subr.mxu0 0.0
        %3476 = vmatpush1.msra.mxu0 0.0
        %3477 = vmatprep.subr.mxu0 0.0
        %3478 = vmatpush1.msra.mxu0 0.0
        %3479 = vmatprep.subr.mxu0 0.0
        %3480 = vmatpush1.msra.mxu0 0.0
        %3481 = vmatprep.subr.mxu0 0.0
        %3482 = vmatpush1.msra.mxu0 0.0
        %3483 = vmatprep.subr.mxu0 0.0
        %3484 = vmatpush1.msra.mxu0 0.0
        %3485 = vmatprep.subr.mxu0 0.0
        %3486 = vmatpush1.msra.mxu0 0.0
        %3487 = vmatprep.subr.mxu0 0.0
        %3488 = vmatpush1.msra.mxu0 0.0
        %3489 = vmatprep.subr.mxu0 0.0
        %3490 = vmatpush1.msra.mxu0 0.0
        %3491 = vmatprep.subr.mxu0 0.0
        %3492 = vmatpush1.msra.mxu0 0.0
        %3493 = vmatprep.subr.mxu0 0.0
        %3494 = vmatpush1.msra.mxu0 0.0
        %3495 = vmatprep.subr.mxu0 0.0
        %3496 = vmatpush1.msra.mxu0 0.0
        %3497 = vmatprep.subr.mxu0 0.0
        %3498 = vmatpush1.msra.mxu0 0.0
        %3499 = vmatprep.subr.mxu0 0.0
        %3500 = vmatpush1.msra.mxu0 0.0
        %3501 = vmatprep.subr.mxu0 0.0
        %3502 = vmatpush1.msra.mxu0 0.0
        %3503 = vmatprep.subr.mxu0 0.0
        %3504 = vmatpush1.msra.mxu0 0.0
        %3505 = vmatprep.subr.mxu0 0.0
        %3506 = vmatpush1.msra.mxu0 0.0
        %3507 = vmatprep.subr.mxu0 0.0
        %3508 = vmatpush1.msra.mxu0 0.0
        %3509 = vmatprep.subr.mxu0 0.0
        %3510 = vmatpush1.msra.mxu0 0.0
        %3511 = vmatprep.subr.mxu0 0.0
        %3512 = vmatpush1.msra.mxu0 0.0
        %3513 = vmatprep.subr.mxu0 0.0
        %3514 = vmatpush1.msra.mxu0 0.0
        %3515 = vmatprep.subr.mxu0 0.0
        %3516 = vmatpush1.msra.mxu0 0.0
        %3517 = vmatprep.subr.mxu0 0.0
        %3518 = vmatpush1.msra.mxu0 0.0
        %3519 = vmatprep.subr.mxu0 0.0
        %3520 = vmatpush1.msra.mxu0 0.0
        %3521 = vmatprep.subr.mxu0 0.0
        %3522 = vmatpush1.msra.mxu0 0.0
        %3523 = vmatprep.subr.mxu0 0.0
        %3524 = vmatpush1.msra.mxu0 0.0
        %3525 = vmatprep.subr.mxu0 0.0
        %3526 = vmatpush1.msra.mxu0 0.0
        %3527 = vmatprep.subr.mxu0 0.0
        %3528 = vmatpush1.msra.mxu0 0.0
        %3529 = vmatprep.subr.mxu0 0.0
        %3530 = vmatpush1.msra.mxu0 0.0
        %3531 = vmatprep.subr.mxu0 0.0
        %3532 = vmatpush1.msra.mxu0 0.0
        %3533 = vmatprep.subr.mxu0 0.0
        %3534 = vmatpush1.msra.mxu0 0.0
        %3535 = vmatprep.mubr.f32.mxu0 0.0
        %3536 = vmatmul.mubr.f32.gmra.mrb[0].mxu0 %v3424
        %v3537 = vpop.f32.mrb[0].mxu0
        %v3538 = vadd.f32 0.0, %v3537
        %v3539 = vpop.f32.mrb[0].mxu0
        %3540 = vmatprep.mubr.f32.mxu0 0.0
        %3541 = vmatmul.mubr.f32.gmra.mrb[0].mxu0 %v3427
        %v3542 = vpop.f32.mrb[0].mxu0
        %v3543 = vadd.f32 0.0, %v3542
        %v3544 = vpop.f32.mrb[0].mxu0
        %3545 = vmatprep.mubr.f32.mxu0 0.0
        %3546 = vmatmul.mubr.f32.gmra.mrb[0].mxu0 %v3430
        %v3547 = vpop.f32.mrb[0].mxu0
        %v3548 = vadd.f32 0.0, %v3547
        %v3549 = vpop.f32.mrb[0].mxu0
        %3550 = vmatprep.mubr.f32.mxu0 0.0
        %3551 = vmatmul.mubr.f32.gmra.mrb[0].mxu0 %v3433
        %v3552 = vpop.f32.mrb[0].mxu0
        %v3553 = vadd.f32 0.0, %v3552
        %v3554 = vpop.f32.mrb[0].mxu0
        %3555 = vmatprep.mubr.f32.mxu0 0.0
        %3556 = vmatmul.mubr.f32.gmra.mrb[0].mxu0 %v3436
        %v3557 = vpop.f32.mrb[0].mxu0
        %v3558 = vadd.f32 0.0, %v3557
        %v3559 = vpop.f32.mrb[0].mxu0
        %3560 = vmatprep.mubr.f32.mxu0 0.0
        %3561 = vmatmul.mubr.f32.gmra.mrb[0].mxu0 %v3439
        %v3562 = vpop.f32.mrb[0].mxu0
        %v3563 = vadd.f32 0.0, %v3562
        %v3564 = vpop.f32.mrb[0].mxu0
        %3565 = vmatprep.mubr.f32.mxu0 0.0
        %3566 = vmatmul.mubr.f32.gmra.mrb[0].mxu0 %v3442
        %v3567 = vpop.f32.mrb[0].mxu0
        %v3568 = vadd.f32 0.0, %v3567
        %v3569 = vpop.f32.mrb[0].mxu0
        %3570 = vmatprep.mubr.f32.mxu0 0.0
        %3571 = vmatmul.mubr.f32.gmra.mrb[0].mxu0 %v3445
        %v3572 = vpop.f32.mrb[0].mxu0
        %v3573 = vadd.f32 0.0, %v3572
        %v3574 = vpop.f32.mrb[0].mxu0
        %3575 = vmatprep.mubr.f32.mxu0 0.0
        %3576 = vmatmul.mubr.f32.gmra.mrb[0].mxu0 %v3448
        %v3577 = vpop.f32.mrb[0].mxu0
        %v3578 = vadd.f32 0.0, %v3577
        %v3579 = vpop.f32.mrb[0].mxu0
        %3580 = vmatprep.mubr.f32.mxu0 0.0
        %3581 = vmatmul.mubr.f32.gmra.mrb[0].mxu0 %v3451
        %v3582 = vpop.f32.mrb[0].mxu0
        %v3583 = vadd.f32 0.0, %v3582
        %v3584 = vpop.f32.mrb[0].mxu0
        %3585 = vmatprep.mubr.f32.mxu0 0.0
        %3586 = vmatmul.mubr.f32.gmra.mrb[0].mxu0 %v3454
        %v3587 = vpop.f32.mrb[0].mxu0
        %v3588 = vadd.f32 0.0, %v3587
        %v3589 = vpop.f32.mrb[0].mxu0
        %3590 = vmatprep.mubr.f32.mxu0 0.0
        %3591 = vmatmul.mubr.f32.gmra.mrb[0].mxu0 %v3457
        %v3592 = vpop.f32.mrb[0].mxu0
        %v3593 = vadd.f32 0.0, %v3592
        %v3594 = vpop.f32.mrb[0].mxu0
        %3595 = vmatprep.mubr.f32.mxu0 0.0
        %3596 = vmatmul.mubr.f32.gmra.mrb[0].mxu0 %v3460
        %v3597 = vpop.f32.mrb[0].mxu0
        %v3598 = vadd.f32 0.0, %v3597
        %v3599 = vpop.f32.mrb[0].mxu0
        %3600 = vmatprep.mubr.f32.mxu0 0.0
        %3601 = vmatmul.mubr.f32.gmra.mrb[0].mxu0 %v3463
        %v3602 = vpop.f32.mrb[0].mxu0
        %v3603 = vadd.f32 0.0, %v3602
        %v3604 = vpop.f32.mrb[0].mxu0
        %3605 = vmatprep.mubr.f32.mxu0 0.0
        %3606 = vmatmul.mubr.f32.gmra.mrb[0].mxu0 %v3466
        %v3607 = vpop.f32.mrb[0].mxu0
        %v3608 = vadd.f32 0.0, %v3607
        %v3609 = vpop.f32.mrb[0].mxu0
        %3610 = vmatprep.mubr.f32.mxu0 0.0
        %3611 = vmatmul.mubr.f32.gmra.mrb[0].mxu0 %v3469
        %v3612 = vpop.f32.mrb[0].mxu0
        %v3613 = vadd.f32 0.0, %v3612
        %v3614 = vpop.f32.mrb[0].mxu0
        %3615 = vdwg.mxu0
        %v3616 = vadd.f32 %v3389, %v3538
        %v3617 = vadd.f32 %v3390, %v3543
        %v3618 = vadd.f32 %v3391, %v3548
        %v3619 = vadd.f32 %v3392, %v3553
        %v3620 = vadd.f32 %v3393, %v3558
        %v3621 = vadd.f32 %v3394, %v3563
        %v3622 = vadd.f32 %v3395, %v3568
        %v3623 = vadd.f32 %v3396, %v3573
        %v3624 = vadd.f32 %v3397, %v3578
        %v3625 = vadd.f32 %v3398, %v3583
        %v3626 = vadd.f32 %v3399, %v3588
        %v3627 = vadd.f32 %v3400, %v3593
        %v3628 = vadd.f32 %v3401, %v3598
        %v3629 = vadd.f32 %v3402, %v3603
        %v3630 = vadd.f32 %v3403, %v3608
        %v3631 = vadd.f32 %v3404, %v3613
        %3632 = vst.msk [vmem:[#allocation4] sm:$0xff] %vm512, %v3616
        %3633 = vst.msk [vmem:[#allocation4 + $0x8] sm:$0xff] %vm512, %v3617
        %3634 = vst.msk [vmem:[#allocation4 + $0x10] sm:$0xff] %vm512, %v3618
        %3635 = vst.msk [vmem:[#allocation4 + $0x18] sm:$0xff] %vm512, %v3619
        %3636 = vst.msk [vmem:[#allocation4 + $0x20] sm:$0xff] %vm512, %v3620
        %3637 = vst.msk [vmem:[#allocation4 + $0x28] sm:$0xff] %vm512, %v3621
        %3638 = vst.msk [vmem:[#allocation4 + $0x30] sm:$0xff] %vm512, %v3622
        %3639 = vst.msk [vmem:[#allocation4 + $0x38] sm:$0xff] %vm512, %v3623
        %3640 = vst.msk [vmem:[#allocation4 + $0x40] sm:$0xff] %vm512, %v3624
        %3641 = vst.msk [vmem:[#allocation4 + $0x48] sm:$0xff] %vm512, %v3625
        %3642 = vst.msk [vmem:[#allocation4 + $0x50] sm:$0xff] %vm512, %v3626
        %3643 = vst.msk [vmem:[#allocation4 + $0x58] sm:$0xff] %vm512, %v3627
        %3644 = vst.msk [vmem:[#allocation4 + $0x60] sm:$0xff] %vm512, %v3628
        %3645 = vst.msk [vmem:[#allocation4 + $0x68] sm:$0xff] %vm512, %v3629
        %3646 = vst.msk [vmem:[#allocation4 + $0x70] sm:$0xff] %vm512, %v3630
        %3647 = vst.msk [vmem:[#allocation4 + $0x78] sm:$0xff] %vm512, %v3631
        %v3648 = vld [vmem:[#allocation3] sm:$0xff]
        %v3649 = vld [vmem:[#allocation3 + $0x8] sm:$0xff]
        %v3650 = vld [vmem:[#allocation3 + $0x10] sm:$0xff]
        %v3651 = vld [vmem:[#allocation3 + $0x18] sm:$0xff]
        %v3652 = vld [vmem:[#allocation3 + $0x20] sm:$0xff]
        %v3653 = vld [vmem:[#allocation3 + $0x28] sm:$0xff]
        %v3654 = vld [vmem:[#allocation3 + $0x30] sm:$0xff]
        %v3655 = vld [vmem:[#allocation3 + $0x38] sm:$0xff]
        %v3656 = vld [vmem:[#allocation3 + $0x40] sm:$0xff]
        %v3657 = vld [vmem:[#allocation3 + $0x48] sm:$0xff]
        %v3658 = vld [vmem:[#allocation3 + $0x50] sm:$0xff]
        %v3659 = vld [vmem:[#allocation3 + $0x58] sm:$0xff]
        %v3660 = vld [vmem:[#allocation3 + $0x60] sm:$0xff]
        %v3661 = vld [vmem:[#allocation3 + $0x68] sm:$0xff]
        %v3662 = vld [vmem:[#allocation3 + $0x70] sm:$0xff]
        %v3663 = vld [vmem:[#allocation3 + $0x78] sm:$0xff]
        %v3664 = vld [vmem:[%s374] sm:$0xff]
        %v3665 = vld [vmem:[%s374 + $0x10] sm:$0xff]
        %v3666 = vld [vmem:[%s374 + $0x20] sm:$0xff]
        %v3667 = vld [vmem:[%s374 + $0x30] sm:$0xff]
        %v3668 = vld [vmem:[%s374 + $0x40] sm:$0xff]
        %v3669 = vld [vmem:[%s374 + $0x50] sm:$0xff]
        %v3670 = vld [vmem:[%s374 + $0x60] sm:$0xff]
        %v3671 = vld [vmem:[%s374 + $0x70] sm:$0xff]
        %v3672 = vld [vmem:[%s374 + $0x80] sm:$0xff]
        %v3673 = vld [vmem:[%s374 + $0x90] sm:$0xff]
        %v3674 = vld [vmem:[%s374 + $0xa0] sm:$0xff]
        %v3675 = vld [vmem:[%s374 + $0xb0] sm:$0xff]
        %v3676 = vld [vmem:[%s374 + $0xc0] sm:$0xff]
        %v3677 = vld [vmem:[%s374 + $0xd0] sm:$0xff]
        %v3678 = vld [vmem:[%s374 + $0xe0] sm:$0xff]
        %v3679 = vld [vmem:[%s374 + $0xf0] sm:$0xff]
        %s3680 = scalar_lea.vmem %s5, 48
        %v3681 = vld [vmem:[%s3680] sm:$0xff]
        %v3682 = vld [vmem:[%s3680 + $0x8] sm:$0xff]
        %v3684 = vsel %vm335, %v3664, 0
        %v3687 = vsel %vm335, %v3665, 0
        %v3690 = vsel %vm335, %v3666, 0
        %v3693 = vsel %vm335, %v3667, 0
        %v3696 = vsel %vm335, %v3668, 0
        %v3699 = vsel %vm335, %v3669, 0
        %v3702 = vsel %vm335, %v3670, 0
        %v3705 = vsel %vm335, %v3671, 0
        %v3708 = vsel %vm335, %v3672, 0
        %v3711 = vsel %vm335, %v3673, 0
        %v3714 = vsel %vm335, %v3674, 0
        %v3717 = vsel %vm335, %v3675, 0
        %v3720 = vsel %vm335, %v3676, 0
        %v3723 = vsel %vm335, %v3677, 0
        %v3726 = vsel %vm335, %v3678, 0
        %v3729 = vsel %vm335, %v3679, 0
        %3731 = vmatprep.subr.mxu0 0.0
        %3732 = vmatpush1.msra.mxu0 %v3681
        %3733 = vmatprep.subr.mxu0 0.0
        %3734 = vmatpush1.msra.mxu0 %v3682
        %3735 = vmatprep.subr.mxu0 0.0
        %3736 = vmatpush1.msra.mxu0 0.0
        %3737 = vmatprep.subr.mxu0 0.0
        %3738 = vmatpush1.msra.mxu0 0.0
        %3739 = vmatprep.subr.mxu0 0.0
        %3740 = vmatpush1.msra.mxu0 0.0
        %3741 = vmatprep.subr.mxu0 0.0
        %3742 = vmatpush1.msra.mxu0 0.0
        %3743 = vmatprep.subr.mxu0 0.0
        %3744 = vmatpush1.msra.mxu0 0.0
        %3745 = vmatprep.subr.mxu0 0.0
        %3746 = vmatpush1.msra.mxu0 0.0
        %3747 = vmatprep.subr.mxu0 0.0
        %3748 = vmatpush1.msra.mxu0 0.0
        %3749 = vmatprep.subr.mxu0 0.0
        %3750 = vmatpush1.msra.mxu0 0.0
        %3751 = vmatprep.subr.mxu0 0.0
        %3752 = vmatpush1.msra.mxu0 0.0
        %3753 = vmatprep.subr.mxu0 0.0
        %3754 = vmatpush1.msra.mxu0 0.0
        %3755 = vmatprep.subr.mxu0 0.0
        %3756 = vmatpush1.msra.mxu0 0.0
        %3757 = vmatprep.subr.mxu0 0.0
        %3758 = vmatpush1.msra.mxu0 0.0
        %3759 = vmatprep.subr.mxu0 0.0
        %3760 = vmatpush1.msra.mxu0 0.0
        %3761 = vmatprep.subr.mxu0 0.0
        %3762 = vmatpush1.msra.mxu0 0.0
        %3763 = vmatprep.subr.mxu0 0.0
        %3764 = vmatpush1.msra.mxu0 0.0
        %3765 = vmatprep.subr.mxu0 0.0
        %3766 = vmatpush1.msra.mxu0 0.0
        %3767 = vmatprep.subr.mxu0 0.0
        %3768 = vmatpush1.msra.mxu0 0.0
        %3769 = vmatprep.subr.mxu0 0.0
        %3770 = vmatpush1.msra.mxu0 0.0
        %3771 = vmatprep.subr.mxu0 0.0
        %3772 = vmatpush1.msra.mxu0 0.0
        %3773 = vmatprep.subr.mxu0 0.0
        %3774 = vmatpush1.msra.mxu0 0.0
        %3775 = vmatprep.subr.mxu0 0.0
        %3776 = vmatpush1.msra.mxu0 0.0
        %3777 = vmatprep.subr.mxu0 0.0
        %3778 = vmatpush1.msra.mxu0 0.0
        %3779 = vmatprep.subr.mxu0 0.0
        %3780 = vmatpush1.msra.mxu0 0.0
        %3781 = vmatprep.subr.mxu0 0.0
        %3782 = vmatpush1.msra.mxu0 0.0
        %3783 = vmatprep.subr.mxu0 0.0
        %3784 = vmatpush1.msra.mxu0 0.0
        %3785 = vmatprep.subr.mxu0 0.0
        %3786 = vmatpush1.msra.mxu0 0.0
        %3787 = vmatprep.subr.mxu0 0.0
        %3788 = vmatpush1.msra.mxu0 0.0
        %3789 = vmatprep.subr.mxu0 0.0
        %3790 = vmatpush1.msra.mxu0 0.0
        %3791 = vmatprep.subr.mxu0 0.0
        %3792 = vmatpush1.msra.mxu0 0.0
        %3793 = vmatprep.subr.mxu0 0.0
        %3794 = vmatpush1.msra.mxu0 0.0
        %3795 = vmatprep.mubr.f32.mxu0 0.0
        %3796 = vmatmul.mubr.f32.gmra.mrb[0].mxu0 %v3684
        %v3797 = vpop.f32.mrb[0].mxu0
        %v3798 = vadd.f32 0.0, %v3797
        %v3799 = vpop.f32.mrb[0].mxu0
        %3800 = vmatprep.mubr.f32.mxu0 0.0
        %3801 = vmatmul.mubr.f32.gmra.mrb[0].mxu0 %v3687
        %v3802 = vpop.f32.mrb[0].mxu0
        %v3803 = vadd.f32 0.0, %v3802
        %v3804 = vpop.f32.mrb[0].mxu0
        %3805 = vmatprep.mubr.f32.mxu0 0.0
        %3806 = vmatmul.mubr.f32.gmra.mrb[0].mxu0 %v3690
        %v3807 = vpop.f32.mrb[0].mxu0
        %v3808 = vadd.f32 0.0, %v3807
        %v3809 = vpop.f32.mrb[0].mxu0
        %3810 = vmatprep.mubr.f32.mxu0 0.0
        %3811 = vmatmul.mubr.f32.gmra.mrb[0].mxu0 %v3693
        %v3812 = vpop.f32.mrb[0].mxu0
        %v3813 = vadd.f32 0.0, %v3812
        %v3814 = vpop.f32.mrb[0].mxu0
        %3815 = vmatprep.mubr.f32.mxu0 0.0
        %3816 = vmatmul.mubr.f32.gmra.mrb[0].mxu0 %v3696
        %v3817 = vpop.f32.mrb[0].mxu0
        %v3818 = vadd.f32 0.0, %v3817
        %v3819 = vpop.f32.mrb[0].mxu0
        %3820 = vmatprep.mubr.f32.mxu0 0.0
        %3821 = vmatmul.mubr.f32.gmra.mrb[0].mxu0 %v3699
        %v3822 = vpop.f32.mrb[0].mxu0
        %v3823 = vadd.f32 0.0, %v3822
        %v3824 = vpop.f32.mrb[0].mxu0
        %3825 = vmatprep.mubr.f32.mxu0 0.0
        %3826 = vmatmul.mubr.f32.gmra.mrb[0].mxu0 %v3702
        %v3827 = vpop.f32.mrb[0].mxu0
        %v3828 = vadd.f32 0.0, %v3827
        %v3829 = vpop.f32.mrb[0].mxu0
        %3830 = vmatprep.mubr.f32.mxu0 0.0
        %3831 = vmatmul.mubr.f32.gmra.mrb[0].mxu0 %v3705
        %v3832 = vpop.f32.mrb[0].mxu0
        %v3833 = vadd.f32 0.0, %v3832
        %v3834 = vpop.f32.mrb[0].mxu0
        %3835 = vmatprep.mubr.f32.mxu0 0.0
        %3836 = vmatmul.mubr.f32.gmra.mrb[0].mxu0 %v3708
        %v3837 = vpop.f32.mrb[0].mxu0
        %v3838 = vadd.f32 0.0, %v3837
        %v3839 = vpop.f32.mrb[0].mxu0
        %3840 = vmatprep.mubr.f32.mxu0 0.0
        %3841 = vmatmul.mubr.f32.gmra.mrb[0].mxu0 %v3711
        %v3842 = vpop.f32.mrb[0].mxu0
        %v3843 = vadd.f32 0.0, %v3842
        %v3844 = vpop.f32.mrb[0].mxu0
        %3845 = vmatprep.mubr.f32.mxu0 0.0
        %3846 = vmatmul.mubr.f32.gmra.mrb[0].mxu0 %v3714
        %v3847 = vpop.f32.mrb[0].mxu0
        %v3848 = vadd.f32 0.0, %v3847
        %v3849 = vpop.f32.mrb[0].mxu0
        %3850 = vmatprep.mubr.f32.mxu0 0.0
        %3851 = vmatmul.mubr.f32.gmra.mrb[0].mxu0 %v3717
        %v3852 = vpop.f32.mrb[0].mxu0
        %v3853 = vadd.f32 0.0, %v3852
        %v3854 = vpop.f32.mrb[0].mxu0
        %3855 = vmatprep.mubr.f32.mxu0 0.0
        %3856 = vmatmul.mubr.f32.gmra.mrb[0].mxu0 %v3720
        %v3857 = vpop.f32.mrb[0].mxu0
        %v3858 = vadd.f32 0.0, %v3857
        %v3859 = vpop.f32.mrb[0].mxu0
        %3860 = vmatprep.mubr.f32.mxu0 0.0
        %3861 = vmatmul.mubr.f32.gmra.mrb[0].mxu0 %v3723
        %v3862 = vpop.f32.mrb[0].mxu0
        %v3863 = vadd.f32 0.0, %v3862
        %v3864 = vpop.f32.mrb[0].mxu0
        %3865 = vmatprep.mubr.f32.mxu0 0.0
        %3866 = vmatmul.mubr.f32.gmra.mrb[0].mxu0 %v3726
        %v3867 = vpop.f32.mrb[0].mxu0
        %v3868 = vadd.f32 0.0, %v3867
        %v3869 = vpop.f32.mrb[0].mxu0
        %3870 = vmatprep.mubr.f32.mxu0 0.0
        %3871 = vmatmul.mubr.f32.gmra.mrb[0].mxu0 %v3729
        %v3872 = vpop.f32.mrb[0].mxu0
        %v3873 = vadd.f32 0.0, %v3872
        %v3874 = vpop.f32.mrb[0].mxu0
        %3875 = vdwg.mxu0
        %v3876 = vadd.f32 %v3648, %v3798
        %v3877 = vadd.f32 %v3649, %v3803
        %v3878 = vadd.f32 %v3650, %v3808
        %v3879 = vadd.f32 %v3651, %v3813
        %v3880 = vadd.f32 %v3652, %v3818
        %v3881 = vadd.f32 %v3653, %v3823
        %v3882 = vadd.f32 %v3654, %v3828
        %v3883 = vadd.f32 %v3655, %v3833
        %v3884 = vadd.f32 %v3656, %v3838
        %v3885 = vadd.f32 %v3657, %v3843
        %v3886 = vadd.f32 %v3658, %v3848
        %v3887 = vadd.f32 %v3659, %v3853
        %v3888 = vadd.f32 %v3660, %v3858
        %v3889 = vadd.f32 %v3661, %v3863
        %v3890 = vadd.f32 %v3662, %v3868
        %v3891 = vadd.f32 %v3663, %v3873
        %3892 = vst.msk [vmem:[#allocation3] sm:$0xff] %vm512, %v3876
        %3893 = vst.msk [vmem:[#allocation3 + $0x8] sm:$0xff] %vm512, %v3877
        %3894 = vst.msk [vmem:[#allocation3 + $0x10] sm:$0xff] %vm512, %v3878
        %3895 = vst.msk [vmem:[#allocation3 + $0x18] sm:$0xff] %vm512, %v3879
        %3896 = vst.msk [vmem:[#allocation3 + $0x20] sm:$0xff] %vm512, %v3880
        %3897 = vst.msk [vmem:[#allocation3 + $0x28] sm:$0xff] %vm512, %v3881
        %3898 = vst.msk [vmem:[#allocation3 + $0x30] sm:$0xff] %vm512, %v3882
        %3899 = vst.msk [vmem:[#allocation3 + $0x38] sm:$0xff] %vm512, %v3883
        %3900 = vst.msk [vmem:[#allocation3 + $0x40] sm:$0xff] %vm512, %v3884
        %3901 = vst.msk [vmem:[#allocation3 + $0x48] sm:$0xff] %vm512, %v3885
        %3902 = vst.msk [vmem:[#allocation3 + $0x50] sm:$0xff] %vm512, %v3886
        %3903 = vst.msk [vmem:[#allocation3 + $0x58] sm:$0xff] %vm512, %v3887
        %3904 = vst.msk [vmem:[#allocation3 + $0x60] sm:$0xff] %vm512, %v3888
        %3905 = vst.msk [vmem:[#allocation3 + $0x68] sm:$0xff] %vm512, %v3889
        %3906 = vst.msk [vmem:[#allocation3 + $0x70] sm:$0xff] %vm512, %v3890
        %3907 = vst.msk [vmem:[#allocation3 + $0x78] sm:$0xff] %vm512, %v3891
        %v3908 = vld [vmem:[#allocation3] sm:$0xff]
        %v3909 = vld [vmem:[#allocation3 + $0x8] sm:$0xff]
        %v3910 = vld [vmem:[#allocation3 + $0x10] sm:$0xff]
        %v3911 = vld [vmem:[#allocation3 + $0x18] sm:$0xff]
        %v3912 = vld [vmem:[#allocation3 + $0x20] sm:$0xff]
        %v3913 = vld [vmem:[#allocation3 + $0x28] sm:$0xff]
        %v3914 = vld [vmem:[#allocation3 + $0x30] sm:$0xff]
        %v3915 = vld [vmem:[#allocation3 + $0x38] sm:$0xff]
        %v3916 = vld [vmem:[#allocation3 + $0x40] sm:$0xff]
        %v3917 = vld [vmem:[#allocation3 + $0x48] sm:$0xff]
        %v3918 = vld [vmem:[#allocation3 + $0x50] sm:$0xff]
        %v3919 = vld [vmem:[#allocation3 + $0x58] sm:$0xff]
        %v3920 = vld [vmem:[#allocation3 + $0x60] sm:$0xff]
        %v3921 = vld [vmem:[#allocation3 + $0x68] sm:$0xff]
        %v3922 = vld [vmem:[#allocation3 + $0x70] sm:$0xff]
        %v3923 = vld [vmem:[#allocation3 + $0x78] sm:$0xff]
        %v3924 = vld [vmem:[%s318] sm:$0xff]
        %v3925 = vld [vmem:[%s318 + $0x10] sm:$0xff]
        %v3926 = vld [vmem:[%s318 + $0x20] sm:$0xff]
        %v3927 = vld [vmem:[%s318 + $0x30] sm:$0xff]
        %v3928 = vld [vmem:[%s318 + $0x40] sm:$0xff]
        %v3929 = vld [vmem:[%s318 + $0x50] sm:$0xff]
        %v3930 = vld [vmem:[%s318 + $0x60] sm:$0xff]
        %v3931 = vld [vmem:[%s318 + $0x70] sm:$0xff]
        %v3932 = vld [vmem:[%s318 + $0x80] sm:$0xff]
        %v3933 = vld [vmem:[%s318 + $0x90] sm:$0xff]
        %v3934 = vld [vmem:[%s318 + $0xa0] sm:$0xff]
        %v3935 = vld [vmem:[%s318 + $0xb0] sm:$0xff]
        %v3936 = vld [vmem:[%s318 + $0xc0] sm:$0xff]
        %v3937 = vld [vmem:[%s318 + $0xd0] sm:$0xff]
        %v3938 = vld [vmem:[%s318 + $0xe0] sm:$0xff]
        %v3939 = vld [vmem:[%s318 + $0xf0] sm:$0xff]
        %s3940 = scalar_lea.vmem %s5, 64
        %v3941 = vld [vmem:[%s3940] sm:$0xff]
        %v3942 = vld [vmem:[%s3940 + $0x8] sm:$0xff]
        %v3944 = vsel %vm335, %v3924, 0
        %v3947 = vsel %vm335, %v3925, 0
        %v3950 = vsel %vm335, %v3926, 0
        %v3953 = vsel %vm335, %v3927, 0
        %v3956 = vsel %vm335, %v3928, 0
        %v3959 = vsel %vm335, %v3929, 0
        %v3962 = vsel %vm335, %v3930, 0
        %v3965 = vsel %vm335, %v3931, 0
        %v3968 = vsel %vm335, %v3932, 0
        %v3971 = vsel %vm335, %v3933, 0
        %v3974 = vsel %vm335, %v3934, 0
        %v3977 = vsel %vm335, %v3935, 0
        %v3980 = vsel %vm335, %v3936, 0
        %v3983 = vsel %vm335, %v3937, 0
        %v3986 = vsel %vm335, %v3938, 0
        %v3989 = vsel %vm335, %v3939, 0
        %3991 = vmatprep.subr.mxu0 0.0
        %3992 = vmatpush1.msra.mxu0 %v3941
        %3993 = vmatprep.subr.mxu0 0.0
        %3994 = vmatpush1.msra.mxu0 %v3942
        %3995 = vmatprep.subr.mxu0 0.0
        %3996 = vmatpush1.msra.mxu0 0.0
        %3997 = vmatprep.subr.mxu0 0.0
        %3998 = vmatpush1.msra.mxu0 0.0
        %3999 = vmatprep.subr.mxu0 0.0
        %4000 = vmatpush1.msra.mxu0 0.0
        %4001 = vmatprep.subr.mxu0 0.0
        %4002 = vmatpush1.msra.mxu0 0.0
        %4003 = vmatprep.subr.mxu0 0.0
        %4004 = vmatpush1.msra.mxu0 0.0
        %4005 = vmatprep.subr.mxu0 0.0
        %4006 = vmatpush1.msra.mxu0 0.0
        %4007 = vmatprep.subr.mxu0 0.0
        %4008 = vmatpush1.msra.mxu0 0.0
        %4009 = vmatprep.subr.mxu0 0.0
        %4010 = vmatpush1.msra.mxu0 0.0
        %4011 = vmatprep.subr.mxu0 0.0
        %4012 = vmatpush1.msra.mxu0 0.0
        %4013 = vmatprep.subr.mxu0 0.0
        %4014 = vmatpush1.msra.mxu0 0.0
        %4015 = vmatprep.subr.mxu0 0.0
        %4016 = vmatpush1.msra.mxu0 0.0
        %4017 = vmatprep.subr.mxu0 0.0
        %4018 = vmatpush1.msra.mxu0 0.0
        %4019 = vmatprep.subr.mxu0 0.0
        %4020 = vmatpush1.msra.mxu0 0.0
        %4021 = vmatprep.subr.mxu0 0.0
        %4022 = vmatpush1.msra.mxu0 0.0
        %4023 = vmatprep.subr.mxu0 0.0
        %4024 = vmatpush1.msra.mxu0 0.0
        %4025 = vmatprep.subr.mxu0 0.0
        %4026 = vmatpush1.msra.mxu0 0.0
        %4027 = vmatprep.subr.mxu0 0.0
        %4028 = vmatpush1.msra.mxu0 0.0
        %4029 = vmatprep.subr.mxu0 0.0
        %4030 = vmatpush1.msra.mxu0 0.0
        %4031 = vmatprep.subr.mxu0 0.0
        %4032 = vmatpush1.msra.mxu0 0.0
        %4033 = vmatprep.subr.mxu0 0.0
        %4034 = vmatpush1.msra.mxu0 0.0
        %4035 = vmatprep.subr.mxu0 0.0
        %4036 = vmatpush1.msra.mxu0 0.0
        %4037 = vmatprep.subr.mxu0 0.0
        %4038 = vmatpush1.msra.mxu0 0.0
        %4039 = vmatprep.subr.mxu0 0.0
        %4040 = vmatpush1.msra.mxu0 0.0
        %4041 = vmatprep.subr.mxu0 0.0
        %4042 = vmatpush1.msra.mxu0 0.0
        %4043 = vmatprep.subr.mxu0 0.0
        %4044 = vmatpush1.msra.mxu0 0.0
        %4045 = vmatprep.subr.mxu0 0.0
        %4046 = vmatpush1.msra.mxu0 0.0
        %4047 = vmatprep.subr.mxu0 0.0
        %4048 = vmatpush1.msra.mxu0 0.0
        %4049 = vmatprep.subr.mxu0 0.0
        %4050 = vmatpush1.msra.mxu0 0.0
        %4051 = vmatprep.subr.mxu0 0.0
        %4052 = vmatpush1.msra.mxu0 0.0
        %4053 = vmatprep.subr.mxu0 0.0
        %4054 = vmatpush1.msra.mxu0 0.0
        %4055 = vmatprep.mubr.f32.mxu0 0.0
        %4056 = vmatmul.mubr.f32.gmra.mrb[0].mxu0 %v3944
        %v4057 = vpop.f32.mrb[0].mxu0
        %v4058 = vadd.f32 0.0, %v4057
        %v4059 = vpop.f32.mrb[0].mxu0
        %4060 = vmatprep.mubr.f32.mxu0 0.0
        %4061 = vmatmul.mubr.f32.gmra.mrb[0].mxu0 %v3947
        %v4062 = vpop.f32.mrb[0].mxu0
        %v4063 = vadd.f32 0.0, %v4062
        %v4064 = vpop.f32.mrb[0].mxu0
        %4065 = vmatprep.mubr.f32.mxu0 0.0
        %4066 = vmatmul.mubr.f32.gmra.mrb[0].mxu0 %v3950
        %v4067 = vpop.f32.mrb[0].mxu0
        %v4068 = vadd.f32 0.0, %v4067
        %v4069 = vpop.f32.mrb[0].mxu0
        %4070 = vmatprep.mubr.f32.mxu0 0.0
        %4071 = vmatmul.mubr.f32.gmra.mrb[0].mxu0 %v3953
        %v4072 = vpop.f32.mrb[0].mxu0
        %v4073 = vadd.f32 0.0, %v4072
        %v4074 = vpop.f32.mrb[0].mxu0
        %4075 = vmatprep.mubr.f32.mxu0 0.0
        %4076 = vmatmul.mubr.f32.gmra.mrb[0].mxu0 %v3956
        %v4077 = vpop.f32.mrb[0].mxu0
        %v4078 = vadd.f32 0.0, %v4077
        %v4079 = vpop.f32.mrb[0].mxu0
        %4080 = vmatprep.mubr.f32.mxu0 0.0
        %4081 = vmatmul.mubr.f32.gmra.mrb[0].mxu0 %v3959
        %v4082 = vpop.f32.mrb[0].mxu0
        %v4083 = vadd.f32 0.0, %v4082
        %v4084 = vpop.f32.mrb[0].mxu0
        %4085 = vmatprep.mubr.f32.mxu0 0.0
        %4086 = vmatmul.mubr.f32.gmra.mrb[0].mxu0 %v3962
        %v4087 = vpop.f32.mrb[0].mxu0
        %v4088 = vadd.f32 0.0, %v4087
        %v4089 = vpop.f32.mrb[0].mxu0
        %4090 = vmatprep.mubr.f32.mxu0 0.0
        %4091 = vmatmul.mubr.f32.gmra.mrb[0].mxu0 %v3965
        %v4092 = vpop.f32.mrb[0].mxu0
        %v4093 = vadd.f32 0.0, %v4092
        %v4094 = vpop.f32.mrb[0].mxu0
        %4095 = vmatprep.mubr.f32.mxu0 0.0
        %4096 = vmatmul.mubr.f32.gmra.mrb[0].mxu0 %v3968
        %v4097 = vpop.f32.mrb[0].mxu0
        %v4098 = vadd.f32 0.0, %v4097
        %v4099 = vpop.f32.mrb[0].mxu0
        %4100 = vmatprep.mubr.f32.mxu0 0.0
        %4101 = vmatmul.mubr.f32.gmra.mrb[0].mxu0 %v3971
        %v4102 = vpop.f32.mrb[0].mxu0
        %v4103 = vadd.f32 0.0, %v4102
        %v4104 = vpop.f32.mrb[0].mxu0
        %4105 = vmatprep.mubr.f32.mxu0 0.0
        %4106 = vmatmul.mubr.f32.gmra.mrb[0].mxu0 %v3974
        %v4107 = vpop.f32.mrb[0].mxu0
        %v4108 = vadd.f32 0.0, %v4107
        %v4109 = vpop.f32.mrb[0].mxu0
        %4110 = vmatprep.mubr.f32.mxu0 0.0
        %4111 = vmatmul.mubr.f32.gmra.mrb[0].mxu0 %v3977
        %v4112 = vpop.f32.mrb[0].mxu0
        %v4113 = vadd.f32 0.0, %v4112
        %v4114 = vpop.f32.mrb[0].mxu0
        %4115 = vmatprep.mubr.f32.mxu0 0.0
        %4116 = vmatmul.mubr.f32.gmra.mrb[0].mxu0 %v3980
        %v4117 = vpop.f32.mrb[0].mxu0
        %v4118 = vadd.f32 0.0, %v4117
        %v4119 = vpop.f32.mrb[0].mxu0
        %4120 = vmatprep.mubr.f32.mxu0 0.0
        %4121 = vmatmul.mubr.f32.gmra.mrb[0].mxu0 %v3983
        %v4122 = vpop.f32.mrb[0].mxu0
        %v4123 = vadd.f32 0.0, %v4122
        %v4124 = vpop.f32.mrb[0].mxu0
        %4125 = vmatprep.mubr.f32.mxu0 0.0
        %4126 = vmatmul.mubr.f32.gmra.mrb[0].mxu0 %v3986
        %v4127 = vpop.f32.mrb[0].mxu0
        %v4128 = vadd.f32 0.0, %v4127
        %v4129 = vpop.f32.mrb[0].mxu0
        %4130 = vmatprep.mubr.f32.mxu0 0.0
        %4131 = vmatmul.mubr.f32.gmra.mrb[0].mxu0 %v3989
        %v4132 = vpop.f32.mrb[0].mxu0
        %v4133 = vadd.f32 0.0, %v4132
        %v4134 = vpop.f32.mrb[0].mxu0
        %4135 = vdwg.mxu0
        %v4136 = vadd.f32 %v3908, %v4058
        %v4137 = vadd.f32 %v3909, %v4063
        %v4138 = vadd.f32 %v3910, %v4068
        %v4139 = vadd.f32 %v3911, %v4073
        %v4140 = vadd.f32 %v3912, %v4078
        %v4141 = vadd.f32 %v3913, %v4083
        %v4142 = vadd.f32 %v3914, %v4088
        %v4143 = vadd.f32 %v3915, %v4093
        %v4144 = vadd.f32 %v3916, %v4098
        %v4145 = vadd.f32 %v3917, %v4103
        %v4146 = vadd.f32 %v3918, %v4108
        %v4147 = vadd.f32 %v3919, %v4113
        %v4148 = vadd.f32 %v3920, %v4118
        %v4149 = vadd.f32 %v3921, %v4123
        %v4150 = vadd.f32 %v3922, %v4128
        %v4151 = vadd.f32 %v3923, %v4133
        %4152 = vst.msk [vmem:[#allocation3] sm:$0xff] %vm512, %v4136
        %4153 = vst.msk [vmem:[#allocation3 + $0x8] sm:$0xff] %vm512, %v4137
        %4154 = vst.msk [vmem:[#allocation3 + $0x10] sm:$0xff] %vm512, %v4138
        %4155 = vst.msk [vmem:[#allocation3 + $0x18] sm:$0xff] %vm512, %v4139
        %4156 = vst.msk [vmem:[#allocation3 + $0x20] sm:$0xff] %vm512, %v4140
        %4157 = vst.msk [vmem:[#allocation3 + $0x28] sm:$0xff] %vm512, %v4141
        %4158 = vst.msk [vmem:[#allocation3 + $0x30] sm:$0xff] %vm512, %v4142
        %4159 = vst.msk [vmem:[#allocation3 + $0x38] sm:$0xff] %vm512, %v4143
        %4160 = vst.msk [vmem:[#allocation3 + $0x40] sm:$0xff] %vm512, %v4144
        %4161 = vst.msk [vmem:[#allocation3 + $0x48] sm:$0xff] %vm512, %v4145
        %4162 = vst.msk [vmem:[#allocation3 + $0x50] sm:$0xff] %vm512, %v4146
        %4163 = vst.msk [vmem:[#allocation3 + $0x58] sm:$0xff] %vm512, %v4147
        %4164 = vst.msk [vmem:[#allocation3 + $0x60] sm:$0xff] %vm512, %v4148
        %4165 = vst.msk [vmem:[#allocation3 + $0x68] sm:$0xff] %vm512, %v4149
        %4166 = vst.msk [vmem:[#allocation3 + $0x70] sm:$0xff] %vm512, %v4150
        %4167 = vst.msk [vmem:[#allocation3 + $0x78] sm:$0xff] %vm512, %v4151
        %v4168 = vld [vmem:[#allocation3] sm:$0xff]
        %v4169 = vld [vmem:[#allocation3 + $0x8] sm:$0xff]
        %v4170 = vld [vmem:[#allocation3 + $0x10] sm:$0xff]
        %v4171 = vld [vmem:[#allocation3 + $0x18] sm:$0xff]
        %v4172 = vld [vmem:[#allocation3 + $0x20] sm:$0xff]
        %v4173 = vld [vmem:[#allocation3 + $0x28] sm:$0xff]
        %v4174 = vld [vmem:[#allocation3 + $0x30] sm:$0xff]
        %v4175 = vld [vmem:[#allocation3 + $0x38] sm:$0xff]
        %v4176 = vld [vmem:[#allocation3 + $0x40] sm:$0xff]
        %v4177 = vld [vmem:[#allocation3 + $0x48] sm:$0xff]
        %v4178 = vld [vmem:[#allocation3 + $0x50] sm:$0xff]
        %v4179 = vld [vmem:[#allocation3 + $0x58] sm:$0xff]
        %v4180 = vld [vmem:[#allocation3 + $0x60] sm:$0xff]
        %v4181 = vld [vmem:[#allocation3 + $0x68] sm:$0xff]
        %v4182 = vld [vmem:[#allocation3 + $0x70] sm:$0xff]
        %v4183 = vld [vmem:[#allocation3 + $0x78] sm:$0xff]
        %v4184 = vld [vmem:[%s374 + $0x1] sm:$0xff]
        %v4185 = vld [vmem:[%s374 + $0x11] sm:$0xff]
        %v4186 = vld [vmem:[%s374 + $0x21] sm:$0xff]
        %v4187 = vld [vmem:[%s374 + $0x31] sm:$0xff]
        %v4188 = vld [vmem:[%s374 + $0x41] sm:$0xff]
        %v4189 = vld [vmem:[%s374 + $0x51] sm:$0xff]
        %v4190 = vld [vmem:[%s374 + $0x61] sm:$0xff]
        %v4191 = vld [vmem:[%s374 + $0x71] sm:$0xff]
        %v4192 = vld [vmem:[%s374 + $0x81] sm:$0xff]
        %v4193 = vld [vmem:[%s374 + $0x91] sm:$0xff]
        %v4194 = vld [vmem:[%s374 + $0xa1] sm:$0xff]
        %v4195 = vld [vmem:[%s374 + $0xb1] sm:$0xff]
        %v4196 = vld [vmem:[%s374 + $0xc1] sm:$0xff]
        %v4197 = vld [vmem:[%s374 + $0xd1] sm:$0xff]
        %v4198 = vld [vmem:[%s374 + $0xe1] sm:$0xff]
        %v4199 = vld [vmem:[%s374 + $0xf1] sm:$0xff]
        %s4200 = scalar_lea.vmem %s5, 80
        %v4201 = vld [vmem:[%s4200] sm:$0xff]
        %v4202 = vld [vmem:[%s4200 + $0x8] sm:$0xff]
        %v4204 = vsel %vm335, %v4184, 0
        %v4207 = vsel %vm335, %v4185, 0
        %v4210 = vsel %vm335, %v4186, 0
        %v4213 = vsel %vm335, %v4187, 0
        %v4216 = vsel %vm335, %v4188, 0
        %v4219 = vsel %vm335, %v4189, 0
        %v4222 = vsel %vm335, %v4190, 0
        %v4225 = vsel %vm335, %v4191, 0
        %v4228 = vsel %vm335, %v4192, 0
        %v4231 = vsel %vm335, %v4193, 0
        %v4234 = vsel %vm335, %v4194, 0
        %v4237 = vsel %vm335, %v4195, 0
        %v4240 = vsel %vm335, %v4196, 0
        %v4243 = vsel %vm335, %v4197, 0
        %v4246 = vsel %vm335, %v4198, 0
        %v4249 = vsel %vm335, %v4199, 0
        %4251 = vmatprep.subr.mxu0 0.0
        %4252 = vmatpush1.msra.mxu0 %v4201
        %4253 = vmatprep.subr.mxu0 0.0
        %4254 = vmatpush1.msra.mxu0 %v4202
        %4255 = vmatprep.subr.mxu0 0.0
        %4256 = vmatpush1.msra.mxu0 0.0
        %4257 = vmatprep.subr.mxu0 0.0
        %4258 = vmatpush1.msra.mxu0 0.0
        %4259 = vmatprep.subr.mxu0 0.0
        %4260 = vmatpush1.msra.mxu0 0.0
        %4261 = vmatprep.subr.mxu0 0.0
        %4262 = vmatpush1.msra.mxu0 0.0
        %4263 = vmatprep.subr.mxu0 0.0
        %4264 = vmatpush1.msra.mxu0 0.0
        %4265 = vmatprep.subr.mxu0 0.0
        %4266 = vmatpush1.msra.mxu0 0.0
        %4267 = vmatprep.subr.mxu0 0.0
        %4268 = vmatpush1.msra.mxu0 0.0
        %4269 = vmatprep.subr.mxu0 0.0
        %4270 = vmatpush1.msra.mxu0 0.0
        %4271 = vmatprep.subr.mxu0 0.0
        %4272 = vmatpush1.msra.mxu0 0.0
        %4273 = vmatprep.subr.mxu0 0.0
        %4274 = vmatpush1.msra.mxu0 0.0
        %4275 = vmatprep.subr.mxu0 0.0
        %4276 = vmatpush1.msra.mxu0 0.0
        %4277 = vmatprep.subr.mxu0 0.0
        %4278 = vmatpush1.msra.mxu0 0.0
        %4279 = vmatprep.subr.mxu0 0.0
        %4280 = vmatpush1.msra.mxu0 0.0
        %4281 = vmatprep.subr.mxu0 0.0
        %4282 = vmatpush1.msra.mxu0 0.0
        %4283 = vmatprep.subr.mxu0 0.0
        %4284 = vmatpush1.msra.mxu0 0.0
        %4285 = vmatprep.subr.mxu0 0.0
        %4286 = vmatpush1.msra.mxu0 0.0
        %4287 = vmatprep.subr.mxu0 0.0
        %4288 = vmatpush1.msra.mxu0 0.0
        %4289 = vmatprep.subr.mxu0 0.0
        %4290 = vmatpush1.msra.mxu0 0.0
        %4291 = vmatprep.subr.mxu0 0.0
        %4292 = vmatpush1.msra.mxu0 0.0
        %4293 = vmatprep.subr.mxu0 0.0
        %4294 = vmatpush1.msra.mxu0 0.0
        %4295 = vmatprep.subr.mxu0 0.0
        %4296 = vmatpush1.msra.mxu0 0.0
        %4297 = vmatprep.subr.mxu0 0.0
        %4298 = vmatpush1.msra.mxu0 0.0
        %4299 = vmatprep.subr.mxu0 0.0
        %4300 = vmatpush1.msra.mxu0 0.0
        %4301 = vmatprep.subr.mxu0 0.0
        %4302 = vmatpush1.msra.mxu0 0.0
        %4303 = vmatprep.subr.mxu0 0.0
        %4304 = vmatpush1.msra.mxu0 0.0
        %4305 = vmatprep.subr.mxu0 0.0
        %4306 = vmatpush1.msra.mxu0 0.0
        %4307 = vmatprep.subr.mxu0 0.0
        %4308 = vmatpush1.msra.mxu0 0.0
        %4309 = vmatprep.subr.mxu0 0.0
        %4310 = vmatpush1.msra.mxu0 0.0
        %4311 = vmatprep.subr.mxu0 0.0
        %4312 = vmatpush1.msra.mxu0 0.0
        %4313 = vmatprep.subr.mxu0 0.0
        %4314 = vmatpush1.msra.mxu0 0.0
        %4315 = vmatprep.mubr.f32.mxu0 0.0
        %4316 = vmatmul.mubr.f32.gmra.mrb[0].mxu0 %v4204
        %v4317 = vpop.f32.mrb[0].mxu0
        %v4318 = vadd.f32 0.0, %v4317
        %v4319 = vpop.f32.mrb[0].mxu0
        %4320 = vmatprep.mubr.f32.mxu0 0.0
        %4321 = vmatmul.mubr.f32.gmra.mrb[0].mxu0 %v4207
        %v4322 = vpop.f32.mrb[0].mxu0
        %v4323 = vadd.f32 0.0, %v4322
        %v4324 = vpop.f32.mrb[0].mxu0
        %4325 = vmatprep.mubr.f32.mxu0 0.0
        %4326 = vmatmul.mubr.f32.gmra.mrb[0].mxu0 %v4210
        %v4327 = vpop.f32.mrb[0].mxu0
        %v4328 = vadd.f32 0.0, %v4327
        %v4329 = vpop.f32.mrb[0].mxu0
        %4330 = vmatprep.mubr.f32.mxu0 0.0
        %4331 = vmatmul.mubr.f32.gmra.mrb[0].mxu0 %v4213
        %v4332 = vpop.f32.mrb[0].mxu0
        %v4333 = vadd.f32 0.0, %v4332
        %v4334 = vpop.f32.mrb[0].mxu0
        %4335 = vmatprep.mubr.f32.mxu0 0.0
        %4336 = vmatmul.mubr.f32.gmra.mrb[0].mxu0 %v4216
        %v4337 = vpop.f32.mrb[0].mxu0
        %v4338 = vadd.f32 0.0, %v4337
        %v4339 = vpop.f32.mrb[0].mxu0
        %4340 = vmatprep.mubr.f32.mxu0 0.0
        %4341 = vmatmul.mubr.f32.gmra.mrb[0].mxu0 %v4219
        %v4342 = vpop.f32.mrb[0].mxu0
        %v4343 = vadd.f32 0.0, %v4342
        %v4344 = vpop.f32.mrb[0].mxu0
        %4345 = vmatprep.mubr.f32.mxu0 0.0
        %4346 = vmatmul.mubr.f32.gmra.mrb[0].mxu0 %v4222
        %v4347 = vpop.f32.mrb[0].mxu0
        %v4348 = vadd.f32 0.0, %v4347
        %v4349 = vpop.f32.mrb[0].mxu0
        %4350 = vmatprep.mubr.f32.mxu0 0.0
        %4351 = vmatmul.mubr.f32.gmra.mrb[0].mxu0 %v4225
        %v4352 = vpop.f32.mrb[0].mxu0
        %v4353 = vadd.f32 0.0, %v4352
        %v4354 = vpop.f32.mrb[0].mxu0
        %4355 = vmatprep.mubr.f32.mxu0 0.0
        %4356 = vmatmul.mubr.f32.gmra.mrb[0].mxu0 %v4228
        %v4357 = vpop.f32.mrb[0].mxu0
        %v4358 = vadd.f32 0.0, %v4357
        %v4359 = vpop.f32.mrb[0].mxu0
        %4360 = vmatprep.mubr.f32.mxu0 0.0
        %4361 = vmatmul.mubr.f32.gmra.mrb[0].mxu0 %v4231
        %v4362 = vpop.f32.mrb[0].mxu0
        %v4363 = vadd.f32 0.0, %v4362
        %v4364 = vpop.f32.mrb[0].mxu0
        %4365 = vmatprep.mubr.f32.mxu0 0.0
        %4366 = vmatmul.mubr.f32.gmra.mrb[0].mxu0 %v4234
        %v4367 = vpop.f32.mrb[0].mxu0
        %v4368 = vadd.f32 0.0, %v4367
        %v4369 = vpop.f32.mrb[0].mxu0
        %4370 = vmatprep.mubr.f32.mxu0 0.0
        %4371 = vmatmul.mubr.f32.gmra.mrb[0].mxu0 %v4237
        %v4372 = vpop.f32.mrb[0].mxu0
        %v4373 = vadd.f32 0.0, %v4372
        %v4374 = vpop.f32.mrb[0].mxu0
        %4375 = vmatprep.mubr.f32.mxu0 0.0
        %4376 = vmatmul.mubr.f32.gmra.mrb[0].mxu0 %v4240
        %v4377 = vpop.f32.mrb[0].mxu0
        %v4378 = vadd.f32 0.0, %v4377
        %v4379 = vpop.f32.mrb[0].mxu0
        %4380 = vmatprep.mubr.f32.mxu0 0.0
        %4381 = vmatmul.mubr.f32.gmra.mrb[0].mxu0 %v4243
        %v4382 = vpop.f32.mrb[0].mxu0
        %v4383 = vadd.f32 0.0, %v4382
        %v4384 = vpop.f32.mrb[0].mxu0
        %4385 = vmatprep.mubr.f32.mxu0 0.0
        %4386 = vmatmul.mubr.f32.gmra.mrb[0].mxu0 %v4246
        %v4387 = vpop.f32.mrb[0].mxu0
        %v4388 = vadd.f32 0.0, %v4387
        %v4389 = vpop.f32.mrb[0].mxu0
        %4390 = vmatprep.mubr.f32.mxu0 0.0
        %4391 = vmatmul.mubr.f32.gmra.mrb[0].mxu0 %v4249
        %v4392 = vpop.f32.mrb[0].mxu0
        %v4393 = vadd.f32 0.0, %v4392
        %v4394 = vpop.f32.mrb[0].mxu0
        %4395 = vdwg.mxu0
        %v4396 = vadd.f32 %v4168, %v4318
        %v4397 = vadd.f32 %v4169, %v4323
        %v4398 = vadd.f32 %v4170, %v4328
        %v4399 = vadd.f32 %v4171, %v4333
        %v4400 = vadd.f32 %v4172, %v4338
        %v4401 = vadd.f32 %v4173, %v4343
        %v4402 = vadd.f32 %v4174, %v4348
        %v4403 = vadd.f32 %v4175, %v4353
        %v4404 = vadd.f32 %v4176, %v4358
        %v4405 = vadd.f32 %v4177, %v4363
        %v4406 = vadd.f32 %v4178, %v4368
        %v4407 = vadd.f32 %v4179, %v4373
        %v4408 = vadd.f32 %v4180, %v4378
        %v4409 = vadd.f32 %v4181, %v4383
        %v4410 = vadd.f32 %v4182, %v4388
        %v4411 = vadd.f32 %v4183, %v4393
        %4412 = vst.msk [vmem:[#allocation3] sm:$0xff] %vm512, %v4396
        %4413 = vst.msk [vmem:[#allocation3 + $0x8] sm:$0xff] %vm512, %v4397
        %4414 = vst.msk [vmem:[#allocation3 + $0x10] sm:$0xff] %vm512, %v4398
        %4415 = vst.msk [vmem:[#allocation3 + $0x18] sm:$0xff] %vm512, %v4399
        %4416 = vst.msk [vmem:[#allocation3 + $0x20] sm:$0xff] %vm512, %v4400
        %4417 = vst.msk [vmem:[#allocation3 + $0x28] sm:$0xff] %vm512, %v4401
        %4418 = vst.msk [vmem:[#allocation3 + $0x30] sm:$0xff] %vm512, %v4402
        %4419 = vst.msk [vmem:[#allocation3 + $0x38] sm:$0xff] %vm512, %v4403
        %4420 = vst.msk [vmem:[#allocation3 + $0x40] sm:$0xff] %vm512, %v4404
        %4421 = vst.msk [vmem:[#allocation3 + $0x48] sm:$0xff] %vm512, %v4405
        %4422 = vst.msk [vmem:[#allocation3 + $0x50] sm:$0xff] %vm512, %v4406
        %4423 = vst.msk [vmem:[#allocation3 + $0x58] sm:$0xff] %vm512, %v4407
        %4424 = vst.msk [vmem:[#allocation3 + $0x60] sm:$0xff] %vm512, %v4408
        %4425 = vst.msk [vmem:[#allocation3 + $0x68] sm:$0xff] %vm512, %v4409
        %4426 = vst.msk [vmem:[#allocation3 + $0x70] sm:$0xff] %vm512, %v4410
        %4427 = vst.msk [vmem:[#allocation3 + $0x78] sm:$0xff] %vm512, %v4411
        %v4428 = vld [vmem:[#allocation4] sm:$0xff]
        %v4429 = vld [vmem:[#allocation4 + $0x8] sm:$0xff]
        %v4430 = vld [vmem:[#allocation4 + $0x10] sm:$0xff]
        %v4431 = vld [vmem:[#allocation4 + $0x18] sm:$0xff]
        %v4432 = vld [vmem:[#allocation4 + $0x20] sm:$0xff]
        %v4433 = vld [vmem:[#allocation4 + $0x28] sm:$0xff]
        %v4434 = vld [vmem:[#allocation4 + $0x30] sm:$0xff]
        %v4435 = vld [vmem:[#allocation4 + $0x38] sm:$0xff]
        %v4436 = vld [vmem:[#allocation4 + $0x40] sm:$0xff]
        %v4437 = vld [vmem:[#allocation4 + $0x48] sm:$0xff]
        %v4438 = vld [vmem:[#allocation4 + $0x50] sm:$0xff]
        %v4439 = vld [vmem:[#allocation4 + $0x58] sm:$0xff]
        %v4440 = vld [vmem:[#allocation4 + $0x60] sm:$0xff]
        %v4441 = vld [vmem:[#allocation4 + $0x68] sm:$0xff]
        %v4442 = vld [vmem:[#allocation4 + $0x70] sm:$0xff]
        %v4443 = vld [vmem:[#allocation4 + $0x78] sm:$0xff]
        %v4444 = vld [vmem:[%s318] sm:$0xff]
        %v4445 = vld [vmem:[%s318 + $0x10] sm:$0xff]
        %v4446 = vld [vmem:[%s318 + $0x20] sm:$0xff]
        %v4447 = vld [vmem:[%s318 + $0x30] sm:$0xff]
        %v4448 = vld [vmem:[%s318 + $0x40] sm:$0xff]
        %v4449 = vld [vmem:[%s318 + $0x50] sm:$0xff]
        %v4450 = vld [vmem:[%s318 + $0x60] sm:$0xff]
        %v4451 = vld [vmem:[%s318 + $0x70] sm:$0xff]
        %v4452 = vld [vmem:[%s318 + $0x80] sm:$0xff]
        %v4453 = vld [vmem:[%s318 + $0x90] sm:$0xff]
        %v4454 = vld [vmem:[%s318 + $0xa0] sm:$0xff]
        %v4455 = vld [vmem:[%s318 + $0xb0] sm:$0xff]
        %v4456 = vld [vmem:[%s318 + $0xc0] sm:$0xff]
        %v4457 = vld [vmem:[%s318 + $0xd0] sm:$0xff]
        %v4458 = vld [vmem:[%s318 + $0xe0] sm:$0xff]
        %v4459 = vld [vmem:[%s318 + $0xf0] sm:$0xff]
        %v4460 = vld [vmem:[%s3680] sm:$0xff]
        %v4461 = vld [vmem:[%s3680 + $0x8] sm:$0xff]
        %v4463 = vsel %vm335, %v4444, 0
        %v4466 = vsel %vm335, %v4445, 0
        %v4469 = vsel %vm335, %v4446, 0
        %v4472 = vsel %vm335, %v4447, 0
        %v4475 = vsel %vm335, %v4448, 0
        %v4478 = vsel %vm335, %v4449, 0
        %v4481 = vsel %vm335, %v4450, 0
        %v4484 = vsel %vm335, %v4451, 0
        %v4487 = vsel %vm335, %v4452, 0
        %v4490 = vsel %vm335, %v4453, 0
        %v4493 = vsel %vm335, %v4454, 0
        %v4496 = vsel %vm335, %v4455, 0
        %v4499 = vsel %vm335, %v4456, 0
        %v4502 = vsel %vm335, %v4457, 0
        %v4505 = vsel %vm335, %v4458, 0
        %v4508 = vsel %vm335, %v4459, 0
        %4510 = vmatprep.subr.mxu0 0.0
        %4511 = vmatpush1.msra.mxu0 %v4460
        %4512 = vmatprep.subr.mxu0 0.0
        %4513 = vmatpush1.msra.mxu0 %v4461
        %4514 = vmatprep.subr.mxu0 0.0
        %4515 = vmatpush1.msra.mxu0 0.0
        %4516 = vmatprep.subr.mxu0 0.0
        %4517 = vmatpush1.msra.mxu0 0.0
        %4518 = vmatprep.subr.mxu0 0.0
        %4519 = vmatpush1.msra.mxu0 0.0
        %4520 = vmatprep.subr.mxu0 0.0
        %4521 = vmatpush1.msra.mxu0 0.0
        %4522 = vmatprep.subr.mxu0 0.0
        %4523 = vmatpush1.msra.mxu0 0.0
        %4524 = vmatprep.subr.mxu0 0.0
        %4525 = vmatpush1.msra.mxu0 0.0
        %4526 = vmatprep.subr.mxu0 0.0
        %4527 = vmatpush1.msra.mxu0 0.0
        %4528 = vmatprep.subr.mxu0 0.0
        %4529 = vmatpush1.msra.mxu0 0.0
        %4530 = vmatprep.subr.mxu0 0.0
        %4531 = vmatpush1.msra.mxu0 0.0
        %4532 = vmatprep.subr.mxu0 0.0
        %4533 = vmatpush1.msra.mxu0 0.0
        %4534 = vmatprep.subr.mxu0 0.0
        %4535 = vmatpush1.msra.mxu0 0.0
        %4536 = vmatprep.subr.mxu0 0.0
        %4537 = vmatpush1.msra.mxu0 0.0
        %4538 = vmatprep.subr.mxu0 0.0
        %4539 = vmatpush1.msra.mxu0 0.0
        %4540 = vmatprep.subr.mxu0 0.0
        %4541 = vmatpush1.msra.mxu0 0.0
        %4542 = vmatprep.subr.mxu0 0.0
        %4543 = vmatpush1.msra.mxu0 0.0
        %4544 = vmatprep.subr.mxu0 0.0
        %4545 = vmatpush1.msra.mxu0 0.0
        %4546 = vmatprep.subr.mxu0 0.0
        %4547 = vmatpush1.msra.mxu0 0.0
        %4548 = vmatprep.subr.mxu0 0.0
        %4549 = vmatpush1.msra.mxu0 0.0
        %4550 = vmatprep.subr.mxu0 0.0
        %4551 = vmatpush1.msra.mxu0 0.0
        %4552 = vmatprep.subr.mxu0 0.0
        %4553 = vmatpush1.msra.mxu0 0.0
        %4554 = vmatprep.subr.mxu0 0.0
        %4555 = vmatpush1.msra.mxu0 0.0
        %4556 = vmatprep.subr.mxu0 0.0
        %4557 = vmatpush1.msra.mxu0 0.0
        %4558 = vmatprep.subr.mxu0 0.0
        %4559 = vmatpush1.msra.mxu0 0.0
        %4560 = vmatprep.subr.mxu0 0.0
        %4561 = vmatpush1.msra.mxu0 0.0
        %4562 = vmatprep.subr.mxu0 0.0
        %4563 = vmatpush1.msra.mxu0 0.0
        %4564 = vmatprep.subr.mxu0 0.0
        %4565 = vmatpush1.msra.mxu0 0.0
        %4566 = vmatprep.subr.mxu0 0.0
        %4567 = vmatpush1.msra.mxu0 0.0
        %4568 = vmatprep.subr.mxu0 0.0
        %4569 = vmatpush1.msra.mxu0 0.0
        %4570 = vmatprep.subr.mxu0 0.0
        %4571 = vmatpush1.msra.mxu0 0.0
        %4572 = vmatprep.subr.mxu0 0.0
        %4573 = vmatpush1.msra.mxu0 0.0
        %4574 = vmatprep.mubr.f32.mxu0 0.0
        %4575 = vmatmul.mubr.f32.gmra.mrb[0].mxu0 %v4463
        %v4576 = vpop.f32.mrb[0].mxu0
        %v4577 = vadd.f32 0.0, %v4576
        %v4578 = vpop.f32.mrb[0].mxu0
        %4579 = vmatprep.mubr.f32.mxu0 0.0
        %4580 = vmatmul.mubr.f32.gmra.mrb[0].mxu0 %v4466
        %v4581 = vpop.f32.mrb[0].mxu0
        %v4582 = vadd.f32 0.0, %v4581
        %v4583 = vpop.f32.mrb[0].mxu0
        %4584 = vmatprep.mubr.f32.mxu0 0.0
        %4585 = vmatmul.mubr.f32.gmra.mrb[0].mxu0 %v4469
        %v4586 = vpop.f32.mrb[0].mxu0
        %v4587 = vadd.f32 0.0, %v4586
        %v4588 = vpop.f32.mrb[0].mxu0
        %4589 = vmatprep.mubr.f32.mxu0 0.0
        %4590 = vmatmul.mubr.f32.gmra.mrb[0].mxu0 %v4472
        %v4591 = vpop.f32.mrb[0].mxu0
        %v4592 = vadd.f32 0.0, %v4591
        %v4593 = vpop.f32.mrb[0].mxu0
        %4594 = vmatprep.mubr.f32.mxu0 0.0
        %4595 = vmatmul.mubr.f32.gmra.mrb[0].mxu0 %v4475
        %v4596 = vpop.f32.mrb[0].mxu0
        %v4597 = vadd.f32 0.0, %v4596
        %v4598 = vpop.f32.mrb[0].mxu0
        %4599 = vmatprep.mubr.f32.mxu0 0.0
        %4600 = vmatmul.mubr.f32.gmra.mrb[0].mxu0 %v4478
        %v4601 = vpop.f32.mrb[0].mxu0
        %v4602 = vadd.f32 0.0, %v4601
        %v4603 = vpop.f32.mrb[0].mxu0
        %4604 = vmatprep.mubr.f32.mxu0 0.0
        %4605 = vmatmul.mubr.f32.gmra.mrb[0].mxu0 %v4481
        %v4606 = vpop.f32.mrb[0].mxu0
        %v4607 = vadd.f32 0.0, %v4606
        %v4608 = vpop.f32.mrb[0].mxu0
        %4609 = vmatprep.mubr.f32.mxu0 0.0
        %4610 = vmatmul.mubr.f32.gmra.mrb[0].mxu0 %v4484
        %v4611 = vpop.f32.mrb[0].mxu0
        %v4612 = vadd.f32 0.0, %v4611
        %v4613 = vpop.f32.mrb[0].mxu0
        %4614 = vmatprep.mubr.f32.mxu0 0.0
        %4615 = vmatmul.mubr.f32.gmra.mrb[0].mxu0 %v4487
        %v4616 = vpop.f32.mrb[0].mxu0
        %v4617 = vadd.f32 0.0, %v4616
        %v4618 = vpop.f32.mrb[0].mxu0
        %4619 = vmatprep.mubr.f32.mxu0 0.0
        %4620 = vmatmul.mubr.f32.gmra.mrb[0].mxu0 %v4490
        %v4621 = vpop.f32.mrb[0].mxu0
        %v4622 = vadd.f32 0.0, %v4621
        %v4623 = vpop.f32.mrb[0].mxu0
        %4624 = vmatprep.mubr.f32.mxu0 0.0
        %4625 = vmatmul.mubr.f32.gmra.mrb[0].mxu0 %v4493
        %v4626 = vpop.f32.mrb[0].mxu0
        %v4627 = vadd.f32 0.0, %v4626
        %v4628 = vpop.f32.mrb[0].mxu0
        %4629 = vmatprep.mubr.f32.mxu0 0.0
        %4630 = vmatmul.mubr.f32.gmra.mrb[0].mxu0 %v4496
        %v4631 = vpop.f32.mrb[0].mxu0
        %v4632 = vadd.f32 0.0, %v4631
        %v4633 = vpop.f32.mrb[0].mxu0
        %4634 = vmatprep.mubr.f32.mxu0 0.0
        %4635 = vmatmul.mubr.f32.gmra.mrb[0].mxu0 %v4499
        %v4636 = vpop.f32.mrb[0].mxu0
        %v4637 = vadd.f32 0.0, %v4636
        %v4638 = vpop.f32.mrb[0].mxu0
        %4639 = vmatprep.mubr.f32.mxu0 0.0
        %4640 = vmatmul.mubr.f32.gmra.mrb[0].mxu0 %v4502
        %v4641 = vpop.f32.mrb[0].mxu0
        %v4642 = vadd.f32 0.0, %v4641
        %v4643 = vpop.f32.mrb[0].mxu0
        %4644 = vmatprep.mubr.f32.mxu0 0.0
        %4645 = vmatmul.mubr.f32.gmra.mrb[0].mxu0 %v4505
        %v4646 = vpop.f32.mrb[0].mxu0
        %v4647 = vadd.f32 0.0, %v4646
        %v4648 = vpop.f32.mrb[0].mxu0
        %4649 = vmatprep.mubr.f32.mxu0 0.0
        %4650 = vmatmul.mubr.f32.gmra.mrb[0].mxu0 %v4508
        %v4651 = vpop.f32.mrb[0].mxu0
        %v4652 = vadd.f32 0.0, %v4651
        %v4653 = vpop.f32.mrb[0].mxu0
        %4654 = vdwg.mxu0
        %v4655 = vadd.f32 %v4428, %v4577
        %v4656 = vadd.f32 %v4429, %v4582
        %v4657 = vadd.f32 %v4430, %v4587
        %v4658 = vadd.f32 %v4431, %v4592
        %v4659 = vadd.f32 %v4432, %v4597
        %v4660 = vadd.f32 %v4433, %v4602
        %v4661 = vadd.f32 %v4434, %v4607
        %v4662 = vadd.f32 %v4435, %v4612
        %v4663 = vadd.f32 %v4436, %v4617
        %v4664 = vadd.f32 %v4437, %v4622
        %v4665 = vadd.f32 %v4438, %v4627
        %v4666 = vadd.f32 %v4439, %v4632
        %v4667 = vadd.f32 %v4440, %v4637
        %v4668 = vadd.f32 %v4441, %v4642
        %v4669 = vadd.f32 %v4442, %v4647
        %v4670 = vadd.f32 %v4443, %v4652
        %4671 = vst.msk [vmem:[#allocation4] sm:$0xff] %vm512, %v4655
        %4672 = vst.msk [vmem:[#allocation4 + $0x8] sm:$0xff] %vm512, %v4656
        %4673 = vst.msk [vmem:[#allocation4 + $0x10] sm:$0xff] %vm512, %v4657
        %4674 = vst.msk [vmem:[#allocation4 + $0x18] sm:$0xff] %vm512, %v4658
        %4675 = vst.msk [vmem:[#allocation4 + $0x20] sm:$0xff] %vm512, %v4659
        %4676 = vst.msk [vmem:[#allocation4 + $0x28] sm:$0xff] %vm512, %v4660
        %4677 = vst.msk [vmem:[#allocation4 + $0x30] sm:$0xff] %vm512, %v4661
        %4678 = vst.msk [vmem:[#allocation4 + $0x38] sm:$0xff] %vm512, %v4662
        %4679 = vst.msk [vmem:[#allocation4 + $0x40] sm:$0xff] %vm512, %v4663
        %4680 = vst.msk [vmem:[#allocation4 + $0x48] sm:$0xff] %vm512, %v4664
        %4681 = vst.msk [vmem:[#allocation4 + $0x50] sm:$0xff] %vm512, %v4665
        %4682 = vst.msk [vmem:[#allocation4 + $0x58] sm:$0xff] %vm512, %v4666
        %4683 = vst.msk [vmem:[#allocation4 + $0x60] sm:$0xff] %vm512, %v4667
        %4684 = vst.msk [vmem:[#allocation4 + $0x68] sm:$0xff] %vm512, %v4668
        %4685 = vst.msk [vmem:[#allocation4 + $0x70] sm:$0xff] %vm512, %v4669
        %4686 = vst.msk [vmem:[#allocation4 + $0x78] sm:$0xff] %vm512, %v4670
        %v4687 = vld [vmem:[#allocation4] sm:$0xff]
        %v4688 = vld [vmem:[#allocation4 + $0x8] sm:$0xff]
        %v4689 = vld [vmem:[#allocation4 + $0x10] sm:$0xff]
        %v4690 = vld [vmem:[#allocation4 + $0x18] sm:$0xff]
        %v4691 = vld [vmem:[#allocation4 + $0x20] sm:$0xff]
        %v4692 = vld [vmem:[#allocation4 + $0x28] sm:$0xff]
        %v4693 = vld [vmem:[#allocation4 + $0x30] sm:$0xff]
        %v4694 = vld [vmem:[#allocation4 + $0x38] sm:$0xff]
        %v4695 = vld [vmem:[#allocation4 + $0x40] sm:$0xff]
        %v4696 = vld [vmem:[#allocation4 + $0x48] sm:$0xff]
        %v4697 = vld [vmem:[#allocation4 + $0x50] sm:$0xff]
        %v4698 = vld [vmem:[#allocation4 + $0x58] sm:$0xff]
        %v4699 = vld [vmem:[#allocation4 + $0x60] sm:$0xff]
        %v4700 = vld [vmem:[#allocation4 + $0x68] sm:$0xff]
        %v4701 = vld [vmem:[#allocation4 + $0x70] sm:$0xff]
        %v4702 = vld [vmem:[#allocation4 + $0x78] sm:$0xff]
        %v4703 = vld [vmem:[%s374 + $0x1] sm:$0xff]
        %v4704 = vld [vmem:[%s374 + $0x11] sm:$0xff]
        %v4705 = vld [vmem:[%s374 + $0x21] sm:$0xff]
        %v4706 = vld [vmem:[%s374 + $0x31] sm:$0xff]
        %v4707 = vld [vmem:[%s374 + $0x41] sm:$0xff]
        %v4708 = vld [vmem:[%s374 + $0x51] sm:$0xff]
        %v4709 = vld [vmem:[%s374 + $0x61] sm:$0xff]
        %v4710 = vld [vmem:[%s374 + $0x71] sm:$0xff]
        %v4711 = vld [vmem:[%s374 + $0x81] sm:$0xff]
        %v4712 = vld [vmem:[%s374 + $0x91] sm:$0xff]
        %v4713 = vld [vmem:[%s374 + $0xa1] sm:$0xff]
        %v4714 = vld [vmem:[%s374 + $0xb1] sm:$0xff]
        %v4715 = vld [vmem:[%s374 + $0xc1] sm:$0xff]
        %v4716 = vld [vmem:[%s374 + $0xd1] sm:$0xff]
        %v4717 = vld [vmem:[%s374 + $0xe1] sm:$0xff]
        %v4718 = vld [vmem:[%s374 + $0xf1] sm:$0xff]
        %v4719 = vld [vmem:[%s3940] sm:$0xff]
        %v4720 = vld [vmem:[%s3940 + $0x8] sm:$0xff]
        %v4722 = vsel %vm335, %v4703, 0
        %v4725 = vsel %vm335, %v4704, 0
        %v4728 = vsel %vm335, %v4705, 0
        %v4731 = vsel %vm335, %v4706, 0
        %v4734 = vsel %vm335, %v4707, 0
        %v4737 = vsel %vm335, %v4708, 0
        %v4740 = vsel %vm335, %v4709, 0
        %v4743 = vsel %vm335, %v4710, 0
        %v4746 = vsel %vm335, %v4711, 0
        %v4749 = vsel %vm335, %v4712, 0
        %v4752 = vsel %vm335, %v4713, 0
        %v4755 = vsel %vm335, %v4714, 0
        %v4758 = vsel %vm335, %v4715, 0
        %v4761 = vsel %vm335, %v4716, 0
        %v4764 = vsel %vm335, %v4717, 0
        %v4767 = vsel %vm335, %v4718, 0
        %4769 = vmatprep.subr.mxu0 0.0
        %4770 = vmatpush1.msra.mxu0 %v4719
        %4771 = vmatprep.subr.mxu0 0.0
        %4772 = vmatpush1.msra.mxu0 %v4720
        %4773 = vmatprep.subr.mxu0 0.0
        %4774 = vmatpush1.msra.mxu0 0.0
        %4775 = vmatprep.subr.mxu0 0.0
        %4776 = vmatpush1.msra.mxu0 0.0
        %4777 = vmatprep.subr.mxu0 0.0
        %4778 = vmatpush1.msra.mxu0 0.0
        %4779 = vmatprep.subr.mxu0 0.0
        %4780 = vmatpush1.msra.mxu0 0.0
        %4781 = vmatprep.subr.mxu0 0.0
        %4782 = vmatpush1.msra.mxu0 0.0
        %4783 = vmatprep.subr.mxu0 0.0
        %4784 = vmatpush1.msra.mxu0 0.0
        %4785 = vmatprep.subr.mxu0 0.0
        %4786 = vmatpush1.msra.mxu0 0.0
        %4787 = vmatprep.subr.mxu0 0.0
        %4788 = vmatpush1.msra.mxu0 0.0
        %4789 = vmatprep.subr.mxu0 0.0
        %4790 = vmatpush1.msra.mxu0 0.0
        %4791 = vmatprep.subr.mxu0 0.0
        %4792 = vmatpush1.msra.mxu0 0.0
        %4793 = vmatprep.subr.mxu0 0.0
        %4794 = vmatpush1.msra.mxu0 0.0
        %4795 = vmatprep.subr.mxu0 0.0
        %4796 = vmatpush1.msra.mxu0 0.0
        %4797 = vmatprep.subr.mxu0 0.0
        %4798 = vmatpush1.msra.mxu0 0.0
        %4799 = vmatprep.subr.mxu0 0.0
        %4800 = vmatpush1.msra.mxu0 0.0
        %4801 = vmatprep.subr.mxu0 0.0
        %4802 = vmatpush1.msra.mxu0 0.0
        %4803 = vmatprep.subr.mxu0 0.0
        %4804 = vmatpush1.msra.mxu0 0.0
        %4805 = vmatprep.subr.mxu0 0.0
        %4806 = vmatpush1.msra.mxu0 0.0
        %4807 = vmatprep.subr.mxu0 0.0
        %4808 = vmatpush1.msra.mxu0 0.0
        %4809 = vmatprep.subr.mxu0 0.0
        %4810 = vmatpush1.msra.mxu0 0.0
        %4811 = vmatprep.subr.mxu0 0.0
        %4812 = vmatpush1.msra.mxu0 0.0
        %4813 = vmatprep.subr.mxu0 0.0
        %4814 = vmatpush1.msra.mxu0 0.0
        %4815 = vmatprep.subr.mxu0 0.0
        %4816 = vmatpush1.msra.mxu0 0.0
        %4817 = vmatprep.subr.mxu0 0.0
        %4818 = vmatpush1.msra.mxu0 0.0
        %4819 = vmatprep.subr.mxu0 0.0
        %4820 = vmatpush1.msra.mxu0 0.0
        %4821 = vmatprep.subr.mxu0 0.0
        %4822 = vmatpush1.msra.mxu0 0.0
        %4823 = vmatprep.subr.mxu0 0.0
        %4824 = vmatpush1.msra.mxu0 0.0
        %4825 = vmatprep.subr.mxu0 0.0
        %4826 = vmatpush1.msra.mxu0 0.0
        %4827 = vmatprep.subr.mxu0 0.0
        %4828 = vmatpush1.msra.mxu0 0.0
        %4829 = vmatprep.subr.mxu0 0.0
        %4830 = vmatpush1.msra.mxu0 0.0
        %4831 = vmatprep.subr.mxu0 0.0
        %4832 = vmatpush1.msra.mxu0 0.0
        %4833 = vmatprep.mubr.f32.mxu0 0.0
        %4834 = vmatmul.mubr.f32.gmra.mrb[0].mxu0 %v4722
        %v4835 = vpop.f32.mrb[0].mxu0
        %v4836 = vadd.f32 0.0, %v4835
        %v4837 = vpop.f32.mrb[0].mxu0
        %4838 = vmatprep.mubr.f32.mxu0 0.0
        %4839 = vmatmul.mubr.f32.gmra.mrb[0].mxu0 %v4725
        %v4840 = vpop.f32.mrb[0].mxu0
        %v4841 = vadd.f32 0.0, %v4840
        %v4842 = vpop.f32.mrb[0].mxu0
        %4843 = vmatprep.mubr.f32.mxu0 0.0
        %4844 = vmatmul.mubr.f32.gmra.mrb[0].mxu0 %v4728
        %v4845 = vpop.f32.mrb[0].mxu0
        %v4846 = vadd.f32 0.0, %v4845
        %v4847 = vpop.f32.mrb[0].mxu0
        %4848 = vmatprep.mubr.f32.mxu0 0.0
        %4849 = vmatmul.mubr.f32.gmra.mrb[0].mxu0 %v4731
        %v4850 = vpop.f32.mrb[0].mxu0
        %v4851 = vadd.f32 0.0, %v4850
        %v4852 = vpop.f32.mrb[0].mxu0
        %4853 = vmatprep.mubr.f32.mxu0 0.0
        %4854 = vmatmul.mubr.f32.gmra.mrb[0].mxu0 %v4734
        %v4855 = vpop.f32.mrb[0].mxu0
        %v4856 = vadd.f32 0.0, %v4855
        %v4857 = vpop.f32.mrb[0].mxu0
        %4858 = vmatprep.mubr.f32.mxu0 0.0
        %4859 = vmatmul.mubr.f32.gmra.mrb[0].mxu0 %v4737
        %v4860 = vpop.f32.mrb[0].mxu0
        %v4861 = vadd.f32 0.0, %v4860
        %v4862 = vpop.f32.mrb[0].mxu0
        %4863 = vmatprep.mubr.f32.mxu0 0.0
        %4864 = vmatmul.mubr.f32.gmra.mrb[0].mxu0 %v4740
        %v4865 = vpop.f32.mrb[0].mxu0
        %v4866 = vadd.f32 0.0, %v4865
        %v4867 = vpop.f32.mrb[0].mxu0
        %4868 = vmatprep.mubr.f32.mxu0 0.0
        %4869 = vmatmul.mubr.f32.gmra.mrb[0].mxu0 %v4743
        %v4870 = vpop.f32.mrb[0].mxu0
        %v4871 = vadd.f32 0.0, %v4870
        %v4872 = vpop.f32.mrb[0].mxu0
        %4873 = vmatprep.mubr.f32.mxu0 0.0
        %4874 = vmatmul.mubr.f32.gmra.mrb[0].mxu0 %v4746
        %v4875 = vpop.f32.mrb[0].mxu0
        %v4876 = vadd.f32 0.0, %v4875
        %v4877 = vpop.f32.mrb[0].mxu0
        %4878 = vmatprep.mubr.f32.mxu0 0.0
        %4879 = vmatmul.mubr.f32.gmra.mrb[0].mxu0 %v4749
        %v4880 = vpop.f32.mrb[0].mxu0
        %v4881 = vadd.f32 0.0, %v4880
        %v4882 = vpop.f32.mrb[0].mxu0
        %4883 = vmatprep.mubr.f32.mxu0 0.0
        %4884 = vmatmul.mubr.f32.gmra.mrb[0].mxu0 %v4752
        %v4885 = vpop.f32.mrb[0].mxu0
        %v4886 = vadd.f32 0.0, %v4885
        %v4887 = vpop.f32.mrb[0].mxu0
        %4888 = vmatprep.mubr.f32.mxu0 0.0
        %4889 = vmatmul.mubr.f32.gmra.mrb[0].mxu0 %v4755
        %v4890 = vpop.f32.mrb[0].mxu0
        %v4891 = vadd.f32 0.0, %v4890
        %v4892 = vpop.f32.mrb[0].mxu0
        %4893 = vmatprep.mubr.f32.mxu0 0.0
        %4894 = vmatmul.mubr.f32.gmra.mrb[0].mxu0 %v4758
        %v4895 = vpop.f32.mrb[0].mxu0
        %v4896 = vadd.f32 0.0, %v4895
        %v4897 = vpop.f32.mrb[0].mxu0
        %4898 = vmatprep.mubr.f32.mxu0 0.0
        %4899 = vmatmul.mubr.f32.gmra.mrb[0].mxu0 %v4761
        %v4900 = vpop.f32.mrb[0].mxu0
        %v4901 = vadd.f32 0.0, %v4900
        %v4902 = vpop.f32.mrb[0].mxu0
        %4903 = vmatprep.mubr.f32.mxu0 0.0
        %4904 = vmatmul.mubr.f32.gmra.mrb[0].mxu0 %v4764
        %v4905 = vpop.f32.mrb[0].mxu0
        %v4906 = vadd.f32 0.0, %v4905
        %v4907 = vpop.f32.mrb[0].mxu0
        %4908 = vmatprep.mubr.f32.mxu0 0.0
        %4909 = vmatmul.mubr.f32.gmra.mrb[0].mxu0 %v4767
        %v4910 = vpop.f32.mrb[0].mxu0
        %v4911 = vadd.f32 0.0, %v4910
        %v4912 = vpop.f32.mrb[0].mxu0
        %4913 = vdwg.mxu0
        %v4914 = vadd.f32 %v4687, %v4836
        %v4915 = vadd.f32 %v4688, %v4841
        %v4916 = vadd.f32 %v4689, %v4846
        %v4917 = vadd.f32 %v4690, %v4851
        %v4918 = vadd.f32 %v4691, %v4856
        %v4919 = vadd.f32 %v4692, %v4861
        %v4920 = vadd.f32 %v4693, %v4866
        %v4921 = vadd.f32 %v4694, %v4871
        %v4922 = vadd.f32 %v4695, %v4876
        %v4923 = vadd.f32 %v4696, %v4881
        %v4924 = vadd.f32 %v4697, %v4886
        %v4925 = vadd.f32 %v4698, %v4891
        %v4926 = vadd.f32 %v4699, %v4896
        %v4927 = vadd.f32 %v4700, %v4901
        %v4928 = vadd.f32 %v4701, %v4906
        %v4929 = vadd.f32 %v4702, %v4911
        %4930 = vst.msk [vmem:[#allocation4] sm:$0xff] %vm512, %v4914
        %4931 = vst.msk [vmem:[#allocation4 + $0x8] sm:$0xff] %vm512, %v4915
        %4932 = vst.msk [vmem:[#allocation4 + $0x10] sm:$0xff] %vm512, %v4916
        %4933 = vst.msk [vmem:[#allocation4 + $0x18] sm:$0xff] %vm512, %v4917
        %4934 = vst.msk [vmem:[#allocation4 + $0x20] sm:$0xff] %vm512, %v4918
        %4935 = vst.msk [vmem:[#allocation4 + $0x28] sm:$0xff] %vm512, %v4919
        %4936 = vst.msk [vmem:[#allocation4 + $0x30] sm:$0xff] %vm512, %v4920
        %4937 = vst.msk [vmem:[#allocation4 + $0x38] sm:$0xff] %vm512, %v4921
        %4938 = vst.msk [vmem:[#allocation4 + $0x40] sm:$0xff] %vm512, %v4922
        %4939 = vst.msk [vmem:[#allocation4 + $0x48] sm:$0xff] %vm512, %v4923
        %4940 = vst.msk [vmem:[#allocation4 + $0x50] sm:$0xff] %vm512, %v4924
        %4941 = vst.msk [vmem:[#allocation4 + $0x58] sm:$0xff] %vm512, %v4925
        %4942 = vst.msk [vmem:[#allocation4 + $0x60] sm:$0xff] %vm512, %v4926
        %4943 = vst.msk [vmem:[#allocation4 + $0x68] sm:$0xff] %vm512, %v4927
        %4944 = vst.msk [vmem:[#allocation4 + $0x70] sm:$0xff] %vm512, %v4928
        %4945 = vst.msk [vmem:[#allocation4 + $0x78] sm:$0xff] %vm512, %v4929
        %v4946 = vld [vmem:[#allocation4] sm:$0xff]
        %v4947 = vld [vmem:[#allocation4 + $0x8] sm:$0xff]
        %v4948 = vld [vmem:[#allocation4 + $0x10] sm:$0xff]
        %v4949 = vld [vmem:[#allocation4 + $0x18] sm:$0xff]
        %v4950 = vld [vmem:[#allocation4 + $0x20] sm:$0xff]
        %v4951 = vld [vmem:[#allocation4 + $0x28] sm:$0xff]
        %v4952 = vld [vmem:[#allocation4 + $0x30] sm:$0xff]
        %v4953 = vld [vmem:[#allocation4 + $0x38] sm:$0xff]
        %v4954 = vld [vmem:[#allocation4 + $0x40] sm:$0xff]
        %v4955 = vld [vmem:[#allocation4 + $0x48] sm:$0xff]
        %v4956 = vld [vmem:[#allocation4 + $0x50] sm:$0xff]
        %v4957 = vld [vmem:[#allocation4 + $0x58] sm:$0xff]
        %v4958 = vld [vmem:[#allocation4 + $0x60] sm:$0xff]
        %v4959 = vld [vmem:[#allocation4 + $0x68] sm:$0xff]
        %v4960 = vld [vmem:[#allocation4 + $0x70] sm:$0xff]
        %v4961 = vld [vmem:[#allocation4 + $0x78] sm:$0xff]
        %v4962 = vld [vmem:[%s318 + $0x1] sm:$0xff]
        %v4963 = vld [vmem:[%s318 + $0x11] sm:$0xff]
        %v4964 = vld [vmem:[%s318 + $0x21] sm:$0xff]
        %v4965 = vld [vmem:[%s318 + $0x31] sm:$0xff]
        %v4966 = vld [vmem:[%s318 + $0x41] sm:$0xff]
        %v4967 = vld [vmem:[%s318 + $0x51] sm:$0xff]
        %v4968 = vld [vmem:[%s318 + $0x61] sm:$0xff]
        %v4969 = vld [vmem:[%s318 + $0x71] sm:$0xff]
        %v4970 = vld [vmem:[%s318 + $0x81] sm:$0xff]
        %v4971 = vld [vmem:[%s318 + $0x91] sm:$0xff]
        %v4972 = vld [vmem:[%s318 + $0xa1] sm:$0xff]
        %v4973 = vld [vmem:[%s318 + $0xb1] sm:$0xff]
        %v4974 = vld [vmem:[%s318 + $0xc1] sm:$0xff]
        %v4975 = vld [vmem:[%s318 + $0xd1] sm:$0xff]
        %v4976 = vld [vmem:[%s318 + $0xe1] sm:$0xff]
        %v4977 = vld [vmem:[%s318 + $0xf1] sm:$0xff]
        %v4978 = vld [vmem:[%s4200] sm:$0xff]
        %v4979 = vld [vmem:[%s4200 + $0x8] sm:$0xff]
        %v4981 = vsel %vm335, %v4962, 0
        %v4984 = vsel %vm335, %v4963, 0
        %v4987 = vsel %vm335, %v4964, 0
        %v4990 = vsel %vm335, %v4965, 0
        %v4993 = vsel %vm335, %v4966, 0
        %v4996 = vsel %vm335, %v4967, 0
        %v4999 = vsel %vm335, %v4968, 0
        %v5002 = vsel %vm335, %v4969, 0
        %v5005 = vsel %vm335, %v4970, 0
        %v5008 = vsel %vm335, %v4971, 0
        %v5011 = vsel %vm335, %v4972, 0
        %v5014 = vsel %vm335, %v4973, 0
        %v5017 = vsel %vm335, %v4974, 0
        %v5020 = vsel %vm335, %v4975, 0
        %v5023 = vsel %vm335, %v4976, 0
        %v5026 = vsel %vm335, %v4977, 0
        %5028 = vmatprep.subr.mxu0 0.0
        %5029 = vmatpush1.msra.mxu0 %v4978
        %5030 = vmatprep.subr.mxu0 0.0
        %5031 = vmatpush1.msra.mxu0 %v4979
        %5032 = vmatprep.subr.mxu0 0.0
        %5033 = vmatpush1.msra.mxu0 0.0
        %5034 = vmatprep.subr.mxu0 0.0
        %5035 = vmatpush1.msra.mxu0 0.0
        %5036 = vmatprep.subr.mxu0 0.0
        %5037 = vmatpush1.msra.mxu0 0.0
        %5038 = vmatprep.subr.mxu0 0.0
        %5039 = vmatpush1.msra.mxu0 0.0
        %5040 = vmatprep.subr.mxu0 0.0
        %5041 = vmatpush1.msra.mxu0 0.0
        %5042 = vmatprep.subr.mxu0 0.0
        %5043 = vmatpush1.msra.mxu0 0.0
        %5044 = vmatprep.subr.mxu0 0.0
        %5045 = vmatpush1.msra.mxu0 0.0
        %5046 = vmatprep.subr.mxu0 0.0
        %5047 = vmatpush1.msra.mxu0 0.0
        %5048 = vmatprep.subr.mxu0 0.0
        %5049 = vmatpush1.msra.mxu0 0.0
        %5050 = vmatprep.subr.mxu0 0.0
        %5051 = vmatpush1.msra.mxu0 0.0
        %5052 = vmatprep.subr.mxu0 0.0
        %5053 = vmatpush1.msra.mxu0 0.0
        %5054 = vmatprep.subr.mxu0 0.0
        %5055 = vmatpush1.msra.mxu0 0.0
        %5056 = vmatprep.subr.mxu0 0.0
        %5057 = vmatpush1.msra.mxu0 0.0
        %5058 = vmatprep.subr.mxu0 0.0
        %5059 = vmatpush1.msra.mxu0 0.0
        %5060 = vmatprep.subr.mxu0 0.0
        %5061 = vmatpush1.msra.mxu0 0.0
        %5062 = vmatprep.subr.mxu0 0.0
        %5063 = vmatpush1.msra.mxu0 0.0
        %5064 = vmatprep.subr.mxu0 0.0
        %5065 = vmatpush1.msra.mxu0 0.0
        %5066 = vmatprep.subr.mxu0 0.0
        %5067 = vmatpush1.msra.mxu0 0.0
        %5068 = vmatprep.subr.mxu0 0.0
        %5069 = vmatpush1.msra.mxu0 0.0
        %5070 = vmatprep.subr.mxu0 0.0
        %5071 = vmatpush1.msra.mxu0 0.0
        %5072 = vmatprep.subr.mxu0 0.0
        %5073 = vmatpush1.msra.mxu0 0.0
        %5074 = vmatprep.subr.mxu0 0.0
        %5075 = vmatpush1.msra.mxu0 0.0
        %5076 = vmatprep.subr.mxu0 0.0
        %5077 = vmatpush1.msra.mxu0 0.0
        %5078 = vmatprep.subr.mxu0 0.0
        %5079 = vmatpush1.msra.mxu0 0.0
        %5080 = vmatprep.subr.mxu0 0.0
        %5081 = vmatpush1.msra.mxu0 0.0
        %5082 = vmatprep.subr.mxu0 0.0
        %5083 = vmatpush1.msra.mxu0 0.0
        %5084 = vmatprep.subr.mxu0 0.0
        %5085 = vmatpush1.msra.mxu0 0.0
        %5086 = vmatprep.subr.mxu0 0.0
        %5087 = vmatpush1.msra.mxu0 0.0
        %5088 = vmatprep.subr.mxu0 0.0
        %5089 = vmatpush1.msra.mxu0 0.0
        %5090 = vmatprep.subr.mxu0 0.0
        %5091 = vmatpush1.msra.mxu0 0.0
        %5092 = vmatprep.mubr.f32.mxu0 0.0
        %5093 = vmatmul.mubr.f32.gmra.mrb[0].mxu0 %v4981
        %v5094 = vpop.f32.mrb[0].mxu0
        %v5095 = vadd.f32 0.0, %v5094
        %v5096 = vpop.f32.mrb[0].mxu0
        %5097 = vmatprep.mubr.f32.mxu0 0.0
        %5098 = vmatmul.mubr.f32.gmra.mrb[0].mxu0 %v4984
        %v5099 = vpop.f32.mrb[0].mxu0
        %v5100 = vadd.f32 0.0, %v5099
        %v5101 = vpop.f32.mrb[0].mxu0
        %5102 = vmatprep.mubr.f32.mxu0 0.0
        %5103 = vmatmul.mubr.f32.gmra.mrb[0].mxu0 %v4987
        %v5104 = vpop.f32.mrb[0].mxu0
        %v5105 = vadd.f32 0.0, %v5104
        %v5106 = vpop.f32.mrb[0].mxu0
        %5107 = vmatprep.mubr.f32.mxu0 0.0
        %5108 = vmatmul.mubr.f32.gmra.mrb[0].mxu0 %v4990
        %v5109 = vpop.f32.mrb[0].mxu0
        %v5110 = vadd.f32 0.0, %v5109
        %v5111 = vpop.f32.mrb[0].mxu0
        %5112 = vmatprep.mubr.f32.mxu0 0.0
        %5113 = vmatmul.mubr.f32.gmra.mrb[0].mxu0 %v4993
        %v5114 = vpop.f32.mrb[0].mxu0
        %v5115 = vadd.f32 0.0, %v5114
        %v5116 = vpop.f32.mrb[0].mxu0
        %5117 = vmatprep.mubr.f32.mxu0 0.0
        %5118 = vmatmul.mubr.f32.gmra.mrb[0].mxu0 %v4996
        %v5119 = vpop.f32.mrb[0].mxu0
        %v5120 = vadd.f32 0.0, %v5119
        %v5121 = vpop.f32.mrb[0].mxu0
        %5122 = vmatprep.mubr.f32.mxu0 0.0
        %5123 = vmatmul.mubr.f32.gmra.mrb[0].mxu0 %v4999
        %v5124 = vpop.f32.mrb[0].mxu0
        %v5125 = vadd.f32 0.0, %v5124
        %v5126 = vpop.f32.mrb[0].mxu0
        %5127 = vmatprep.mubr.f32.mxu0 0.0
        %5128 = vmatmul.mubr.f32.gmra.mrb[0].mxu0 %v5002
        %v5129 = vpop.f32.mrb[0].mxu0
        %v5130 = vadd.f32 0.0, %v5129
        %v5131 = vpop.f32.mrb[0].mxu0
        %5132 = vmatprep.mubr.f32.mxu0 0.0
        %5133 = vmatmul.mubr.f32.gmra.mrb[0].mxu0 %v5005
        %v5134 = vpop.f32.mrb[0].mxu0
        %v5135 = vadd.f32 0.0, %v5134
        %v5136 = vpop.f32.mrb[0].mxu0
        %5137 = vmatprep.mubr.f32.mxu0 0.0
        %5138 = vmatmul.mubr.f32.gmra.mrb[0].mxu0 %v5008
        %v5139 = vpop.f32.mrb[0].mxu0
        %v5140 = vadd.f32 0.0, %v5139
        %v5141 = vpop.f32.mrb[0].mxu0
        %5142 = vmatprep.mubr.f32.mxu0 0.0
        %5143 = vmatmul.mubr.f32.gmra.mrb[0].mxu0 %v5011
        %v5144 = vpop.f32.mrb[0].mxu0
        %v5145 = vadd.f32 0.0, %v5144
        %v5146 = vpop.f32.mrb[0].mxu0
        %5147 = vmatprep.mubr.f32.mxu0 0.0
        %5148 = vmatmul.mubr.f32.gmra.mrb[0].mxu0 %v5014
        %v5149 = vpop.f32.mrb[0].mxu0
        %v5150 = vadd.f32 0.0, %v5149
        %v5151 = vpop.f32.mrb[0].mxu0
        %5152 = vmatprep.mubr.f32.mxu0 0.0
        %5153 = vmatmul.mubr.f32.gmra.mrb[0].mxu0 %v5017
        %v5154 = vpop.f32.mrb[0].mxu0
        %v5155 = vadd.f32 0.0, %v5154
        %v5156 = vpop.f32.mrb[0].mxu0
        %5157 = vmatprep.mubr.f32.mxu0 0.0
        %5158 = vmatmul.mubr.f32.gmra.mrb[0].mxu0 %v5020
        %v5159 = vpop.f32.mrb[0].mxu0
        %v5160 = vadd.f32 0.0, %v5159
        %v5161 = vpop.f32.mrb[0].mxu0
        %5162 = vmatprep.mubr.f32.mxu0 0.0
        %5163 = vmatmul.mubr.f32.gmra.mrb[0].mxu0 %v5023
        %v5164 = vpop.f32.mrb[0].mxu0
        %v5165 = vadd.f32 0.0, %v5164
        %v5166 = vpop.f32.mrb[0].mxu0
        %5167 = vmatprep.mubr.f32.mxu0 0.0
        %5168 = vmatmul.mubr.f32.gmra.mrb[0].mxu0 %v5026
        %v5169 = vpop.f32.mrb[0].mxu0
        %v5170 = vadd.f32 0.0, %v5169
        %v5171 = vpop.f32.mrb[0].mxu0
        %5172 = vdwg.mxu0
        %v5173 = vadd.f32 %v4946, %v5095
        %v5174 = vadd.f32 %v4947, %v5100
        %v5175 = vadd.f32 %v4948, %v5105
        %v5176 = vadd.f32 %v4949, %v5110
        %v5177 = vadd.f32 %v4950, %v5115
        %v5178 = vadd.f32 %v4951, %v5120
        %v5179 = vadd.f32 %v4952, %v5125
        %v5180 = vadd.f32 %v4953, %v5130
        %v5181 = vadd.f32 %v4954, %v5135
        %v5182 = vadd.f32 %v4955, %v5140
        %v5183 = vadd.f32 %v4956, %v5145
        %v5184 = vadd.f32 %v4957, %v5150
        %v5185 = vadd.f32 %v4958, %v5155
        %v5186 = vadd.f32 %v4959, %v5160
        %v5187 = vadd.f32 %v4960, %v5165
        %v5188 = vadd.f32 %v4961, %v5170
        %5189 = vst.msk [vmem:[#allocation4] sm:$0xff] %vm512, %v5173
        %5190 = vst.msk [vmem:[#allocation4 + $0x8] sm:$0xff] %vm512, %v5174
        %5191 = vst.msk [vmem:[#allocation4 + $0x10] sm:$0xff] %vm512, %v5175
        %5192 = vst.msk [vmem:[#allocation4 + $0x18] sm:$0xff] %vm512, %v5176
        %5193 = vst.msk [vmem:[#allocation4 + $0x20] sm:$0xff] %vm512, %v5177
        %5194 = vst.msk [vmem:[#allocation4 + $0x28] sm:$0xff] %vm512, %v5178
        %5195 = vst.msk [vmem:[#allocation4 + $0x30] sm:$0xff] %vm512, %v5179
        %5196 = vst.msk [vmem:[#allocation4 + $0x38] sm:$0xff] %vm512, %v5180
        %5197 = vst.msk [vmem:[#allocation4 + $0x40] sm:$0xff] %vm512, %v5181
        %5198 = vst.msk [vmem:[#allocation4 + $0x48] sm:$0xff] %vm512, %v5182
        %5199 = vst.msk [vmem:[#allocation4 + $0x50] sm:$0xff] %vm512, %v5183
        %5200 = vst.msk [vmem:[#allocation4 + $0x58] sm:$0xff] %vm512, %v5184
        %5201 = vst.msk [vmem:[#allocation4 + $0x60] sm:$0xff] %vm512, %v5185
        %5202 = vst.msk [vmem:[#allocation4 + $0x68] sm:$0xff] %vm512, %v5186
        %5203 = vst.msk [vmem:[#allocation4 + $0x70] sm:$0xff] %vm512, %v5187
        %5204 = vst.msk [vmem:[#allocation4 + $0x78] sm:$0xff] %vm512, %v5188
        %v5205 = vld [vmem:[#allocation3] sm:$0xff]
        %v5206 = vld [vmem:[#allocation3 + $0x8] sm:$0xff]
        %v5207 = vld [vmem:[#allocation3 + $0x10] sm:$0xff]
        %v5208 = vld [vmem:[#allocation3 + $0x18] sm:$0xff]
        %v5209 = vld [vmem:[#allocation3 + $0x20] sm:$0xff]
        %v5210 = vld [vmem:[#allocation3 + $0x28] sm:$0xff]
        %v5211 = vld [vmem:[#allocation3 + $0x30] sm:$0xff]
        %v5212 = vld [vmem:[#allocation3 + $0x38] sm:$0xff]
        %v5213 = vld [vmem:[#allocation3 + $0x40] sm:$0xff]
        %v5214 = vld [vmem:[#allocation3 + $0x48] sm:$0xff]
        %v5215 = vld [vmem:[#allocation3 + $0x50] sm:$0xff]
        %v5216 = vld [vmem:[#allocation3 + $0x58] sm:$0xff]
        %v5217 = vld [vmem:[#allocation3 + $0x60] sm:$0xff]
        %v5218 = vld [vmem:[#allocation3 + $0x68] sm:$0xff]
        %v5219 = vld [vmem:[#allocation3 + $0x70] sm:$0xff]
        %v5220 = vld [vmem:[#allocation3 + $0x78] sm:$0xff]
        %s5221 = scalar_lea.vmem %s311, 32
        %v5222 = vld [vmem:[%s5221] sm:$0xff]
        %v5223 = vld [vmem:[%s5221 + $0x10] sm:$0xff]
        %v5224 = vld [vmem:[%s5221 + $0x20] sm:$0xff]
        %v5225 = vld [vmem:[%s5221 + $0x30] sm:$0xff]
        %v5226 = vld [vmem:[%s5221 + $0x40] sm:$0xff]
        %v5227 = vld [vmem:[%s5221 + $0x50] sm:$0xff]
        %v5228 = vld [vmem:[%s5221 + $0x60] sm:$0xff]
        %v5229 = vld [vmem:[%s5221 + $0x70] sm:$0xff]
        %v5230 = vld [vmem:[%s5221 + $0x80] sm:$0xff]
        %v5231 = vld [vmem:[%s5221 + $0x90] sm:$0xff]
        %v5232 = vld [vmem:[%s5221 + $0xa0] sm:$0xff]
        %v5233 = vld [vmem:[%s5221 + $0xb0] sm:$0xff]
        %v5234 = vld [vmem:[%s5221 + $0xc0] sm:$0xff]
        %v5235 = vld [vmem:[%s5221 + $0xd0] sm:$0xff]
        %v5236 = vld [vmem:[%s5221 + $0xe0] sm:$0xff]
        %v5237 = vld [vmem:[%s5221 + $0xf0] sm:$0xff]
        %s5238 = scalar_lea.vmem %s5, 96
        %v5239 = vld [vmem:[%s5238] sm:$0xff]
        %v5240 = vld [vmem:[%s5238 + $0x8] sm:$0xff]
        %v5242 = vsel %vm335, %v5222, 0
        %v5245 = vsel %vm335, %v5223, 0
        %v5248 = vsel %vm335, %v5224, 0
        %v5251 = vsel %vm335, %v5225, 0
        %v5254 = vsel %vm335, %v5226, 0
        %v5257 = vsel %vm335, %v5227, 0
        %v5260 = vsel %vm335, %v5228, 0
        %v5263 = vsel %vm335, %v5229, 0
        %v5266 = vsel %vm335, %v5230, 0
        %v5269 = vsel %vm335, %v5231, 0
        %v5272 = vsel %vm335, %v5232, 0
        %v5275 = vsel %vm335, %v5233, 0
        %v5278 = vsel %vm335, %v5234, 0
        %v5281 = vsel %vm335, %v5235, 0
        %v5284 = vsel %vm335, %v5236, 0
        %v5287 = vsel %vm335, %v5237, 0
        %5289 = vmatprep.subr.mxu0 0.0
        %5290 = vmatpush1.msra.mxu0 %v5239
        %5291 = vmatprep.subr.mxu0 0.0
        %5292 = vmatpush1.msra.mxu0 %v5240
        %5293 = vmatprep.subr.mxu0 0.0
        %5294 = vmatpush1.msra.mxu0 0.0
        %5295 = vmatprep.subr.mxu0 0.0
        %5296 = vmatpush1.msra.mxu0 0.0
        %5297 = vmatprep.subr.mxu0 0.0
        %5298 = vmatpush1.msra.mxu0 0.0
        %5299 = vmatprep.subr.mxu0 0.0
        %5300 = vmatpush1.msra.mxu0 0.0
        %5301 = vmatprep.subr.mxu0 0.0
        %5302 = vmatpush1.msra.mxu0 0.0
        %5303 = vmatprep.subr.mxu0 0.0
        %5304 = vmatpush1.msra.mxu0 0.0
        %5305 = vmatprep.subr.mxu0 0.0
        %5306 = vmatpush1.msra.mxu0 0.0
        %5307 = vmatprep.subr.mxu0 0.0
        %5308 = vmatpush1.msra.mxu0 0.0
        %5309 = vmatprep.subr.mxu0 0.0
        %5310 = vmatpush1.msra.mxu0 0.0
        %5311 = vmatprep.subr.mxu0 0.0
        %5312 = vmatpush1.msra.mxu0 0.0
        %5313 = vmatprep.subr.mxu0 0.0
        %5314 = vmatpush1.msra.mxu0 0.0
        %5315 = vmatprep.subr.mxu0 0.0
        %5316 = vmatpush1.msra.mxu0 0.0
        %5317 = vmatprep.subr.mxu0 0.0
        %5318 = vmatpush1.msra.mxu0 0.0
        %5319 = vmatprep.subr.mxu0 0.0
        %5320 = vmatpush1.msra.mxu0 0.0
        %5321 = vmatprep.subr.mxu0 0.0
        %5322 = vmatpush1.msra.mxu0 0.0
        %5323 = vmatprep.subr.mxu0 0.0
        %5324 = vmatpush1.msra.mxu0 0.0
        %5325 = vmatprep.subr.mxu0 0.0
        %5326 = vmatpush1.msra.mxu0 0.0
        %5327 = vmatprep.subr.mxu0 0.0
        %5328 = vmatpush1.msra.mxu0 0.0
        %5329 = vmatprep.subr.mxu0 0.0
        %5330 = vmatpush1.msra.mxu0 0.0
        %5331 = vmatprep.subr.mxu0 0.0
        %5332 = vmatpush1.msra.mxu0 0.0
        %5333 = vmatprep.subr.mxu0 0.0
        %5334 = vmatpush1.msra.mxu0 0.0
        %5335 = vmatprep.subr.mxu0 0.0
        %5336 = vmatpush1.msra.mxu0 0.0
        %5337 = vmatprep.subr.mxu0 0.0
        %5338 = vmatpush1.msra.mxu0 0.0
        %5339 = vmatprep.subr.mxu0 0.0
        %5340 = vmatpush1.msra.mxu0 0.0
        %5341 = vmatprep.subr.mxu0 0.0
        %5342 = vmatpush1.msra.mxu0 0.0
        %5343 = vmatprep.subr.mxu0 0.0
        %5344 = vmatpush1.msra.mxu0 0.0
        %5345 = vmatprep.subr.mxu0 0.0
        %5346 = vmatpush1.msra.mxu0 0.0
        %5347 = vmatprep.subr.mxu0 0.0
        %5348 = vmatpush1.msra.mxu0 0.0
        %5349 = vmatprep.subr.mxu0 0.0
        %5350 = vmatpush1.msra.mxu0 0.0
        %5351 = vmatprep.subr.mxu0 0.0
        %5352 = vmatpush1.msra.mxu0 0.0
        %5353 = vmatprep.mubr.f32.mxu0 0.0
        %5354 = vmatmul.mubr.f32.gmra.mrb[0].mxu0 %v5242
        %v5355 = vpop.f32.mrb[0].mxu0
        %v5356 = vadd.f32 0.0, %v5355
        %v5357 = vpop.f32.mrb[0].mxu0
        %5358 = vmatprep.mubr.f32.mxu0 0.0
        %5359 = vmatmul.mubr.f32.gmra.mrb[0].mxu0 %v5245
        %v5360 = vpop.f32.mrb[0].mxu0
        %v5361 = vadd.f32 0.0, %v5360
        %v5362 = vpop.f32.mrb[0].mxu0
        %5363 = vmatprep.mubr.f32.mxu0 0.0
        %5364 = vmatmul.mubr.f32.gmra.mrb[0].mxu0 %v5248
        %v5365 = vpop.f32.mrb[0].mxu0
        %v5366 = vadd.f32 0.0, %v5365
        %v5367 = vpop.f32.mrb[0].mxu0
        %5368 = vmatprep.mubr.f32.mxu0 0.0
        %5369 = vmatmul.mubr.f32.gmra.mrb[0].mxu0 %v5251
        %v5370 = vpop.f32.mrb[0].mxu0
        %v5371 = vadd.f32 0.0, %v5370
        %v5372 = vpop.f32.mrb[0].mxu0
        %5373 = vmatprep.mubr.f32.mxu0 0.0
        %5374 = vmatmul.mubr.f32.gmra.mrb[0].mxu0 %v5254
        %v5375 = vpop.f32.mrb[0].mxu0
        %v5376 = vadd.f32 0.0, %v5375
        %v5377 = vpop.f32.mrb[0].mxu0
        %5378 = vmatprep.mubr.f32.mxu0 0.0
        %5379 = vmatmul.mubr.f32.gmra.mrb[0].mxu0 %v5257
        %v5380 = vpop.f32.mrb[0].mxu0
        %v5381 = vadd.f32 0.0, %v5380
        %v5382 = vpop.f32.mrb[0].mxu0
        %5383 = vmatprep.mubr.f32.mxu0 0.0
        %5384 = vmatmul.mubr.f32.gmra.mrb[0].mxu0 %v5260
        %v5385 = vpop.f32.mrb[0].mxu0
        %v5386 = vadd.f32 0.0, %v5385
        %v5387 = vpop.f32.mrb[0].mxu0
        %5388 = vmatprep.mubr.f32.mxu0 0.0
        %5389 = vmatmul.mubr.f32.gmra.mrb[0].mxu0 %v5263
        %v5390 = vpop.f32.mrb[0].mxu0
        %v5391 = vadd.f32 0.0, %v5390
        %v5392 = vpop.f32.mrb[0].mxu0
        %5393 = vmatprep.mubr.f32.mxu0 0.0
        %5394 = vmatmul.mubr.f32.gmra.mrb[0].mxu0 %v5266
        %v5395 = vpop.f32.mrb[0].mxu0
        %v5396 = vadd.f32 0.0, %v5395
        %v5397 = vpop.f32.mrb[0].mxu0
        %5398 = vmatprep.mubr.f32.mxu0 0.0
        %5399 = vmatmul.mubr.f32.gmra.mrb[0].mxu0 %v5269
        %v5400 = vpop.f32.mrb[0].mxu0
        %v5401 = vadd.f32 0.0, %v5400
        %v5402 = vpop.f32.mrb[0].mxu0
        %5403 = vmatprep.mubr.f32.mxu0 0.0
        %5404 = vmatmul.mubr.f32.gmra.mrb[0].mxu0 %v5272
        %v5405 = vpop.f32.mrb[0].mxu0
        %v5406 = vadd.f32 0.0, %v5405
        %v5407 = vpop.f32.mrb[0].mxu0
        %5408 = vmatprep.mubr.f32.mxu0 0.0
        %5409 = vmatmul.mubr.f32.gmra.mrb[0].mxu0 %v5275
        %v5410 = vpop.f32.mrb[0].mxu0
        %v5411 = vadd.f32 0.0, %v5410
        %v5412 = vpop.f32.mrb[0].mxu0
        %5413 = vmatprep.mubr.f32.mxu0 0.0
        %5414 = vmatmul.mubr.f32.gmra.mrb[0].mxu0 %v5278
        %v5415 = vpop.f32.mrb[0].mxu0
        %v5416 = vadd.f32 0.0, %v5415
        %v5417 = vpop.f32.mrb[0].mxu0
        %5418 = vmatprep.mubr.f32.mxu0 0.0
        %5419 = vmatmul.mubr.f32.gmra.mrb[0].mxu0 %v5281
        %v5420 = vpop.f32.mrb[0].mxu0
        %v5421 = vadd.f32 0.0, %v5420
        %v5422 = vpop.f32.mrb[0].mxu0
        %5423 = vmatprep.mubr.f32.mxu0 0.0
        %5424 = vmatmul.mubr.f32.gmra.mrb[0].mxu0 %v5284
        %v5425 = vpop.f32.mrb[0].mxu0
        %v5426 = vadd.f32 0.0, %v5425
        %v5427 = vpop.f32.mrb[0].mxu0
        %5428 = vmatprep.mubr.f32.mxu0 0.0
        %5429 = vmatmul.mubr.f32.gmra.mrb[0].mxu0 %v5287
        %v5430 = vpop.f32.mrb[0].mxu0
        %v5431 = vadd.f32 0.0, %v5430
        %v5432 = vpop.f32.mrb[0].mxu0
        %5433 = vdwg.mxu0
        %v5434 = vadd.f32 %v5205, %v5356
        %v5435 = vadd.f32 %v5206, %v5361
        %v5436 = vadd.f32 %v5207, %v5366
        %v5437 = vadd.f32 %v5208, %v5371
        %v5438 = vadd.f32 %v5209, %v5376
        %v5439 = vadd.f32 %v5210, %v5381
        %v5440 = vadd.f32 %v5211, %v5386
        %v5441 = vadd.f32 %v5212, %v5391
        %v5442 = vadd.f32 %v5213, %v5396
        %v5443 = vadd.f32 %v5214, %v5401
        %v5444 = vadd.f32 %v5215, %v5406
        %v5445 = vadd.f32 %v5216, %v5411
        %v5446 = vadd.f32 %v5217, %v5416
        %v5447 = vadd.f32 %v5218, %v5421
        %v5448 = vadd.f32 %v5219, %v5426
        %v5449 = vadd.f32 %v5220, %v5431
        %5450 = vst.msk [vmem:[#allocation3] sm:$0xff] %vm512, %v5434
        %5451 = vst.msk [vmem:[#allocation3 + $0x8] sm:$0xff] %vm512, %v5435
        %5452 = vst.msk [vmem:[#allocation3 + $0x10] sm:$0xff] %vm512, %v5436
        %5453 = vst.msk [vmem:[#allocation3 + $0x18] sm:$0xff] %vm512, %v5437
        %5454 = vst.msk [vmem:[#allocation3 + $0x20] sm:$0xff] %vm512, %v5438
        %5455 = vst.msk [vmem:[#allocation3 + $0x28] sm:$0xff] %vm512, %v5439
        %5456 = vst.msk [vmem:[#allocation3 + $0x30] sm:$0xff] %vm512, %v5440
        %5457 = vst.msk [vmem:[#allocation3 + $0x38] sm:$0xff] %vm512, %v5441
        %5458 = vst.msk [vmem:[#allocation3 + $0x40] sm:$0xff] %vm512, %v5442
        %5459 = vst.msk [vmem:[#allocation3 + $0x48] sm:$0xff] %vm512, %v5443
        %5460 = vst.msk [vmem:[#allocation3 + $0x50] sm:$0xff] %vm512, %v5444
        %5461 = vst.msk [vmem:[#allocation3 + $0x58] sm:$0xff] %vm512, %v5445
        %5462 = vst.msk [vmem:[#allocation3 + $0x60] sm:$0xff] %vm512, %v5446
        %5463 = vst.msk [vmem:[#allocation3 + $0x68] sm:$0xff] %vm512, %v5447
        %5464 = vst.msk [vmem:[#allocation3 + $0x70] sm:$0xff] %vm512, %v5448
        %5465 = vst.msk [vmem:[#allocation3 + $0x78] sm:$0xff] %vm512, %v5449
        %v5466 = vld [vmem:[#allocation3] sm:$0xff]
        %v5467 = vld [vmem:[#allocation3 + $0x8] sm:$0xff]
        %v5468 = vld [vmem:[#allocation3 + $0x10] sm:$0xff]
        %v5469 = vld [vmem:[#allocation3 + $0x18] sm:$0xff]
        %v5470 = vld [vmem:[#allocation3 + $0x20] sm:$0xff]
        %v5471 = vld [vmem:[#allocation3 + $0x28] sm:$0xff]
        %v5472 = vld [vmem:[#allocation3 + $0x30] sm:$0xff]
        %v5473 = vld [vmem:[#allocation3 + $0x38] sm:$0xff]
        %v5474 = vld [vmem:[#allocation3 + $0x40] sm:$0xff]
        %v5475 = vld [vmem:[#allocation3 + $0x48] sm:$0xff]
        %v5476 = vld [vmem:[#allocation3 + $0x50] sm:$0xff]
        %v5477 = vld [vmem:[#allocation3 + $0x58] sm:$0xff]
        %v5478 = vld [vmem:[#allocation3 + $0x60] sm:$0xff]
        %v5479 = vld [vmem:[#allocation3 + $0x68] sm:$0xff]
        %v5480 = vld [vmem:[#allocation3 + $0x70] sm:$0xff]
        %v5481 = vld [vmem:[#allocation3 + $0x78] sm:$0xff]
        %s5482 = scalar_lea.vmem %s316, 32
        %v5483 = vld [vmem:[%s5482] sm:$0xff]
        %v5484 = vld [vmem:[%s5482 + $0x10] sm:$0xff]
        %v5485 = vld [vmem:[%s5482 + $0x20] sm:$0xff]
        %v5486 = vld [vmem:[%s5482 + $0x30] sm:$0xff]
        %v5487 = vld [vmem:[%s5482 + $0x40] sm:$0xff]
        %v5488 = vld [vmem:[%s5482 + $0x50] sm:$0xff]
        %v5489 = vld [vmem:[%s5482 + $0x60] sm:$0xff]
        %v5490 = vld [vmem:[%s5482 + $0x70] sm:$0xff]
        %v5491 = vld [vmem:[%s5482 + $0x80] sm:$0xff]
        %v5492 = vld [vmem:[%s5482 + $0x90] sm:$0xff]
        %v5493 = vld [vmem:[%s5482 + $0xa0] sm:$0xff]
        %v5494 = vld [vmem:[%s5482 + $0xb0] sm:$0xff]
        %v5495 = vld [vmem:[%s5482 + $0xc0] sm:$0xff]
        %v5496 = vld [vmem:[%s5482 + $0xd0] sm:$0xff]
        %v5497 = vld [vmem:[%s5482 + $0xe0] sm:$0xff]
        %v5498 = vld [vmem:[%s5482 + $0xf0] sm:$0xff]
        %s5499 = scalar_lea.vmem %s5, 112
        %v5500 = vld [vmem:[%s5499] sm:$0xff]
        %v5501 = vld [vmem:[%s5499 + $0x8] sm:$0xff]
        %v5503 = vsel %vm335, %v5483, 0
        %v5506 = vsel %vm335, %v5484, 0
        %v5509 = vsel %vm335, %v5485, 0
        %v5512 = vsel %vm335, %v5486, 0
        %v5515 = vsel %vm335, %v5487, 0
        %v5518 = vsel %vm335, %v5488, 0
        %v5521 = vsel %vm335, %v5489, 0
        %v5524 = vsel %vm335, %v5490, 0
        %v5527 = vsel %vm335, %v5491, 0
        %v5530 = vsel %vm335, %v5492, 0
        %v5533 = vsel %vm335, %v5493, 0
        %v5536 = vsel %vm335, %v5494, 0
        %v5539 = vsel %vm335, %v5495, 0
        %v5542 = vsel %vm335, %v5496, 0
        %v5545 = vsel %vm335, %v5497, 0
        %v5548 = vsel %vm335, %v5498, 0
        %5550 = vmatprep.subr.mxu0 0.0
        %5551 = vmatpush1.msra.mxu0 %v5500
        %5552 = vmatprep.subr.mxu0 0.0
        %5553 = vmatpush1.msra.mxu0 %v5501
        %5554 = vmatprep.subr.mxu0 0.0
        %5555 = vmatpush1.msra.mxu0 0.0
        %5556 = vmatprep.subr.mxu0 0.0
        %5557 = vmatpush1.msra.mxu0 0.0
        %5558 = vmatprep.subr.mxu0 0.0
        %5559 = vmatpush1.msra.mxu0 0.0
        %5560 = vmatprep.subr.mxu0 0.0
        %5561 = vmatpush1.msra.mxu0 0.0
        %5562 = vmatprep.subr.mxu0 0.0
        %5563 = vmatpush1.msra.mxu0 0.0
        %5564 = vmatprep.subr.mxu0 0.0
        %5565 = vmatpush1.msra.mxu0 0.0
        %5566 = vmatprep.subr.mxu0 0.0
        %5567 = vmatpush1.msra.mxu0 0.0
        %5568 = vmatprep.subr.mxu0 0.0
        %5569 = vmatpush1.msra.mxu0 0.0
        %5570 = vmatprep.subr.mxu0 0.0
        %5571 = vmatpush1.msra.mxu0 0.0
        %5572 = vmatprep.subr.mxu0 0.0
        %5573 = vmatpush1.msra.mxu0 0.0
        %5574 = vmatprep.subr.mxu0 0.0
        %5575 = vmatpush1.msra.mxu0 0.0
        %5576 = vmatprep.subr.mxu0 0.0
        %5577 = vmatpush1.msra.mxu0 0.0
        %5578 = vmatprep.subr.mxu0 0.0
        %5579 = vmatpush1.msra.mxu0 0.0
        %5580 = vmatprep.subr.mxu0 0.0
        %5581 = vmatpush1.msra.mxu0 0.0
        %5582 = vmatprep.subr.mxu0 0.0
        %5583 = vmatpush1.msra.mxu0 0.0
        %5584 = vmatprep.subr.mxu0 0.0
        %5585 = vmatpush1.msra.mxu0 0.0
        %5586 = vmatprep.subr.mxu0 0.0
        %5587 = vmatpush1.msra.mxu0 0.0
        %5588 = vmatprep.subr.mxu0 0.0
        %5589 = vmatpush1.msra.mxu0 0.0
        %5590 = vmatprep.subr.mxu0 0.0
        %5591 = vmatpush1.msra.mxu0 0.0
        %5592 = vmatprep.subr.mxu0 0.0
        %5593 = vmatpush1.msra.mxu0 0.0
        %5594 = vmatprep.subr.mxu0 0.0
        %5595 = vmatpush1.msra.mxu0 0.0
        %5596 = vmatprep.subr.mxu0 0.0
        %5597 = vmatpush1.msra.mxu0 0.0
        %5598 = vmatprep.subr.mxu0 0.0
        %5599 = vmatpush1.msra.mxu0 0.0
        %5600 = vmatprep.subr.mxu0 0.0
        %5601 = vmatpush1.msra.mxu0 0.0
        %5602 = vmatprep.subr.mxu0 0.0
        %5603 = vmatpush1.msra.mxu0 0.0
        %5604 = vmatprep.subr.mxu0 0.0
        %5605 = vmatpush1.msra.mxu0 0.0
        %5606 = vmatprep.subr.mxu0 0.0
        %5607 = vmatpush1.msra.mxu0 0.0
        %5608 = vmatprep.subr.mxu0 0.0
        %5609 = vmatpush1.msra.mxu0 0.0
        %5610 = vmatprep.subr.mxu0 0.0
        %5611 = vmatpush1.msra.mxu0 0.0
        %5612 = vmatprep.subr.mxu0 0.0
        %5613 = vmatpush1.msra.mxu0 0.0
        %5614 = vmatprep.mubr.f32.mxu0 0.0
        %5615 = vmatmul.mubr.f32.gmra.mrb[0].mxu0 %v5503
        %v5616 = vpop.f32.mrb[0].mxu0
        %v5617 = vadd.f32 0.0, %v5616
        %v5618 = vpop.f32.mrb[0].mxu0
        %5619 = vmatprep.mubr.f32.mxu0 0.0
        %5620 = vmatmul.mubr.f32.gmra.mrb[0].mxu0 %v5506
        %v5621 = vpop.f32.mrb[0].mxu0
        %v5622 = vadd.f32 0.0, %v5621
        %v5623 = vpop.f32.mrb[0].mxu0
        %5624 = vmatprep.mubr.f32.mxu0 0.0
        %5625 = vmatmul.mubr.f32.gmra.mrb[0].mxu0 %v5509
        %v5626 = vpop.f32.mrb[0].mxu0
        %v5627 = vadd.f32 0.0, %v5626
        %v5628 = vpop.f32.mrb[0].mxu0
        %5629 = vmatprep.mubr.f32.mxu0 0.0
        %5630 = vmatmul.mubr.f32.gmra.mrb[0].mxu0 %v5512
        %v5631 = vpop.f32.mrb[0].mxu0
        %v5632 = vadd.f32 0.0, %v5631
        %v5633 = vpop.f32.mrb[0].mxu0
        %5634 = vmatprep.mubr.f32.mxu0 0.0
        %5635 = vmatmul.mubr.f32.gmra.mrb[0].mxu0 %v5515
        %v5636 = vpop.f32.mrb[0].mxu0
        %v5637 = vadd.f32 0.0, %v5636
        %v5638 = vpop.f32.mrb[0].mxu0
        %5639 = vmatprep.mubr.f32.mxu0 0.0
        %5640 = vmatmul.mubr.f32.gmra.mrb[0].mxu0 %v5518
        %v5641 = vpop.f32.mrb[0].mxu0
        %v5642 = vadd.f32 0.0, %v5641
        %v5643 = vpop.f32.mrb[0].mxu0
        %5644 = vmatprep.mubr.f32.mxu0 0.0
        %5645 = vmatmul.mubr.f32.gmra.mrb[0].mxu0 %v5521
        %v5646 = vpop.f32.mrb[0].mxu0
        %v5647 = vadd.f32 0.0, %v5646
        %v5648 = vpop.f32.mrb[0].mxu0
        %5649 = vmatprep.mubr.f32.mxu0 0.0
        %5650 = vmatmul.mubr.f32.gmra.mrb[0].mxu0 %v5524
        %v5651 = vpop.f32.mrb[0].mxu0
        %v5652 = vadd.f32 0.0, %v5651
        %v5653 = vpop.f32.mrb[0].mxu0
        %5654 = vmatprep.mubr.f32.mxu0 0.0
        %5655 = vmatmul.mubr.f32.gmra.mrb[0].mxu0 %v5527
        %v5656 = vpop.f32.mrb[0].mxu0
        %v5657 = vadd.f32 0.0, %v5656
        %v5658 = vpop.f32.mrb[0].mxu0
        %5659 = vmatprep.mubr.f32.mxu0 0.0
        %5660 = vmatmul.mubr.f32.gmra.mrb[0].mxu0 %v5530
        %v5661 = vpop.f32.mrb[0].mxu0
        %v5662 = vadd.f32 0.0, %v5661
        %v5663 = vpop.f32.mrb[0].mxu0
        %5664 = vmatprep.mubr.f32.mxu0 0.0
        %5665 = vmatmul.mubr.f32.gmra.mrb[0].mxu0 %v5533
        %v5666 = vpop.f32.mrb[0].mxu0
        %v5667 = vadd.f32 0.0, %v5666
        %v5668 = vpop.f32.mrb[0].mxu0
        %5669 = vmatprep.mubr.f32.mxu0 0.0
        %5670 = vmatmul.mubr.f32.gmra.mrb[0].mxu0 %v5536
        %v5671 = vpop.f32.mrb[0].mxu0
        %v5672 = vadd.f32 0.0, %v5671
        %v5673 = vpop.f32.mrb[0].mxu0
        %5674 = vmatprep.mubr.f32.mxu0 0.0
        %5675 = vmatmul.mubr.f32.gmra.mrb[0].mxu0 %v5539
        %v5676 = vpop.f32.mrb[0].mxu0
        %v5677 = vadd.f32 0.0, %v5676
        %v5678 = vpop.f32.mrb[0].mxu0
        %5679 = vmatprep.mubr.f32.mxu0 0.0
        %5680 = vmatmul.mubr.f32.gmra.mrb[0].mxu0 %v5542
        %v5681 = vpop.f32.mrb[0].mxu0
        %v5682 = vadd.f32 0.0, %v5681
        %v5683 = vpop.f32.mrb[0].mxu0
        %5684 = vmatprep.mubr.f32.mxu0 0.0
        %5685 = vmatmul.mubr.f32.gmra.mrb[0].mxu0 %v5545
        %v5686 = vpop.f32.mrb[0].mxu0
        %v5687 = vadd.f32 0.0, %v5686
        %v5688 = vpop.f32.mrb[0].mxu0
        %5689 = vmatprep.mubr.f32.mxu0 0.0
        %5690 = vmatmul.mubr.f32.gmra.mrb[0].mxu0 %v5548
        %v5691 = vpop.f32.mrb[0].mxu0
        %v5692 = vadd.f32 0.0, %v5691
        %v5693 = vpop.f32.mrb[0].mxu0
        %5694 = vdwg.mxu0
        %v5695 = vadd.f32 %v5466, %v5617
        %v5696 = vadd.f32 %v5467, %v5622
        %v5697 = vadd.f32 %v5468, %v5627
        %v5698 = vadd.f32 %v5469, %v5632
        %v5699 = vadd.f32 %v5470, %v5637
        %v5700 = vadd.f32 %v5471, %v5642
        %v5701 = vadd.f32 %v5472, %v5647
        %v5702 = vadd.f32 %v5473, %v5652
        %v5703 = vadd.f32 %v5474, %v5657
        %v5704 = vadd.f32 %v5475, %v5662
        %v5705 = vadd.f32 %v5476, %v5667
        %v5706 = vadd.f32 %v5477, %v5672
        %v5707 = vadd.f32 %v5478, %v5677
        %v5708 = vadd.f32 %v5479, %v5682
        %v5709 = vadd.f32 %v5480, %v5687
        %v5710 = vadd.f32 %v5481, %v5692
        %5711 = vst.msk [vmem:[#allocation3] sm:$0xff] %vm512, %v5695
        %5712 = vst.msk [vmem:[#allocation3 + $0x8] sm:$0xff] %vm512, %v5696
        %5713 = vst.msk [vmem:[#allocation3 + $0x10] sm:$0xff] %vm512, %v5697
        %5714 = vst.msk [vmem:[#allocation3 + $0x18] sm:$0xff] %vm512, %v5698
        %5715 = vst.msk [vmem:[#allocation3 + $0x20] sm:$0xff] %vm512, %v5699
        %5716 = vst.msk [vmem:[#allocation3 + $0x28] sm:$0xff] %vm512, %v5700
        %5717 = vst.msk [vmem:[#allocation3 + $0x30] sm:$0xff] %vm512, %v5701
        %5718 = vst.msk [vmem:[#allocation3 + $0x38] sm:$0xff] %vm512, %v5702
        %5719 = vst.msk [vmem:[#allocation3 + $0x40] sm:$0xff] %vm512, %v5703
        %5720 = vst.msk [vmem:[#allocation3 + $0x48] sm:$0xff] %vm512, %v5704
        %5721 = vst.msk [vmem:[#allocation3 + $0x50] sm:$0xff] %vm512, %v5705
        %5722 = vst.msk [vmem:[#allocation3 + $0x58] sm:$0xff] %vm512, %v5706
        %5723 = vst.msk [vmem:[#allocation3 + $0x60] sm:$0xff] %vm512, %v5707
        %5724 = vst.msk [vmem:[#allocation3 + $0x68] sm:$0xff] %vm512, %v5708
        %5725 = vst.msk [vmem:[#allocation3 + $0x70] sm:$0xff] %vm512, %v5709
        %5726 = vst.msk [vmem:[#allocation3 + $0x78] sm:$0xff] %vm512, %v5710
        %v5727 = vld [vmem:[#allocation3] sm:$0xff]
        %v5728 = vld [vmem:[#allocation3 + $0x8] sm:$0xff]
        %v5729 = vld [vmem:[#allocation3 + $0x10] sm:$0xff]
        %v5730 = vld [vmem:[#allocation3 + $0x18] sm:$0xff]
        %v5731 = vld [vmem:[#allocation3 + $0x20] sm:$0xff]
        %v5732 = vld [vmem:[#allocation3 + $0x28] sm:$0xff]
        %v5733 = vld [vmem:[#allocation3 + $0x30] sm:$0xff]
        %v5734 = vld [vmem:[#allocation3 + $0x38] sm:$0xff]
        %v5735 = vld [vmem:[#allocation3 + $0x40] sm:$0xff]
        %v5736 = vld [vmem:[#allocation3 + $0x48] sm:$0xff]
        %v5737 = vld [vmem:[#allocation3 + $0x50] sm:$0xff]
        %v5738 = vld [vmem:[#allocation3 + $0x58] sm:$0xff]
        %v5739 = vld [vmem:[#allocation3 + $0x60] sm:$0xff]
        %v5740 = vld [vmem:[#allocation3 + $0x68] sm:$0xff]
        %v5741 = vld [vmem:[#allocation3 + $0x70] sm:$0xff]
        %v5742 = vld [vmem:[#allocation3 + $0x78] sm:$0xff]
        %v5743 = vld [vmem:[%s5221 + $0x1] sm:$0xff]
        %v5744 = vld [vmem:[%s5221 + $0x11] sm:$0xff]
        %v5745 = vld [vmem:[%s5221 + $0x21] sm:$0xff]
        %v5746 = vld [vmem:[%s5221 + $0x31] sm:$0xff]
        %v5747 = vld [vmem:[%s5221 + $0x41] sm:$0xff]
        %v5748 = vld [vmem:[%s5221 + $0x51] sm:$0xff]
        %v5749 = vld [vmem:[%s5221 + $0x61] sm:$0xff]
        %v5750 = vld [vmem:[%s5221 + $0x71] sm:$0xff]
        %v5751 = vld [vmem:[%s5221 + $0x81] sm:$0xff]
        %v5752 = vld [vmem:[%s5221 + $0x91] sm:$0xff]
        %v5753 = vld [vmem:[%s5221 + $0xa1] sm:$0xff]
        %v5754 = vld [vmem:[%s5221 + $0xb1] sm:$0xff]
        %v5755 = vld [vmem:[%s5221 + $0xc1] sm:$0xff]
        %v5756 = vld [vmem:[%s5221 + $0xd1] sm:$0xff]
        %v5757 = vld [vmem:[%s5221 + $0xe1] sm:$0xff]
        %v5758 = vld [vmem:[%s5221 + $0xf1] sm:$0xff]
        %s5759 = scalar_lea.vmem %s5, 128
        %v5760 = vld [vmem:[%s5759] sm:$0xff]
        %v5761 = vld [vmem:[%s5759 + $0x8] sm:$0xff]
        %v5763 = vsel %vm335, %v5743, 0
        %v5766 = vsel %vm335, %v5744, 0
        %v5769 = vsel %vm335, %v5745, 0
        %v5772 = vsel %vm335, %v5746, 0
        %v5775 = vsel %vm335, %v5747, 0
        %v5778 = vsel %vm335, %v5748, 0
        %v5781 = vsel %vm335, %v5749, 0
        %v5784 = vsel %vm335, %v5750, 0
        %v5787 = vsel %vm335, %v5751, 0
        %v5790 = vsel %vm335, %v5752, 0
        %v5793 = vsel %vm335, %v5753, 0
        %v5796 = vsel %vm335, %v5754, 0
        %v5799 = vsel %vm335, %v5755, 0
        %v5802 = vsel %vm335, %v5756, 0
        %v5805 = vsel %vm335, %v5757, 0
        %v5808 = vsel %vm335, %v5758, 0
        %5810 = vmatprep.subr.mxu0 0.0
        %5811 = vmatpush1.msra.mxu0 %v5760
        %5812 = vmatprep.subr.mxu0 0.0
        %5813 = vmatpush1.msra.mxu0 %v5761
        %5814 = vmatprep.subr.mxu0 0.0
        %5815 = vmatpush1.msra.mxu0 0.0
        %5816 = vmatprep.subr.mxu0 0.0
        %5817 = vmatpush1.msra.mxu0 0.0
        %5818 = vmatprep.subr.mxu0 0.0
        %5819 = vmatpush1.msra.mxu0 0.0
        %5820 = vmatprep.subr.mxu0 0.0
        %5821 = vmatpush1.msra.mxu0 0.0
        %5822 = vmatprep.subr.mxu0 0.0
        %5823 = vmatpush1.msra.mxu0 0.0
        %5824 = vmatprep.subr.mxu0 0.0
        %5825 = vmatpush1.msra.mxu0 0.0
        %5826 = vmatprep.subr.mxu0 0.0
        %5827 = vmatpush1.msra.mxu0 0.0
        %5828 = vmatprep.subr.mxu0 0.0
        %5829 = vmatpush1.msra.mxu0 0.0
        %5830 = vmatprep.subr.mxu0 0.0
        %5831 = vmatpush1.msra.mxu0 0.0
        %5832 = vmatprep.subr.mxu0 0.0
        %5833 = vmatpush1.msra.mxu0 0.0
        %5834 = vmatprep.subr.mxu0 0.0
        %5835 = vmatpush1.msra.mxu0 0.0
        %5836 = vmatprep.subr.mxu0 0.0
        %5837 = vmatpush1.msra.mxu0 0.0
        %5838 = vmatprep.subr.mxu0 0.0
        %5839 = vmatpush1.msra.mxu0 0.0
        %5840 = vmatprep.subr.mxu0 0.0
        %5841 = vmatpush1.msra.mxu0 0.0
        %5842 = vmatprep.subr.mxu0 0.0
        %5843 = vmatpush1.msra.mxu0 0.0
        %5844 = vmatprep.subr.mxu0 0.0
        %5845 = vmatpush1.msra.mxu0 0.0
        %5846 = vmatprep.subr.mxu0 0.0
        %5847 = vmatpush1.msra.mxu0 0.0
        %5848 = vmatprep.subr.mxu0 0.0
        %5849 = vmatpush1.msra.mxu0 0.0
        %5850 = vmatprep.subr.mxu0 0.0
        %5851 = vmatpush1.msra.mxu0 0.0
        %5852 = vmatprep.subr.mxu0 0.0
        %5853 = vmatpush1.msra.mxu0 0.0
        %5854 = vmatprep.subr.mxu0 0.0
        %5855 = vmatpush1.msra.mxu0 0.0
        %5856 = vmatprep.subr.mxu0 0.0
        %5857 = vmatpush1.msra.mxu0 0.0
        %5858 = vmatprep.subr.mxu0 0.0
        %5859 = vmatpush1.msra.mxu0 0.0
        %5860 = vmatprep.subr.mxu0 0.0
        %5861 = vmatpush1.msra.mxu0 0.0
        %5862 = vmatprep.subr.mxu0 0.0
        %5863 = vmatpush1.msra.mxu0 0.0
        %5864 = vmatprep.subr.mxu0 0.0
        %5865 = vmatpush1.msra.mxu0 0.0
        %5866 = vmatprep.subr.mxu0 0.0
        %5867 = vmatpush1.msra.mxu0 0.0
        %5868 = vmatprep.subr.mxu0 0.0
        %5869 = vmatpush1.msra.mxu0 0.0
        %5870 = vmatprep.subr.mxu0 0.0
        %5871 = vmatpush1.msra.mxu0 0.0
        %5872 = vmatprep.subr.mxu0 0.0
        %5873 = vmatpush1.msra.mxu0 0.0
        %5874 = vmatprep.mubr.f32.mxu0 0.0
        %5875 = vmatmul.mubr.f32.gmra.mrb[0].mxu0 %v5763
        %v5876 = vpop.f32.mrb[0].mxu0
        %v5877 = vadd.f32 0.0, %v5876
        %v5878 = vpop.f32.mrb[0].mxu0
        %5879 = vmatprep.mubr.f32.mxu0 0.0
        %5880 = vmatmul.mubr.f32.gmra.mrb[0].mxu0 %v5766
        %v5881 = vpop.f32.mrb[0].mxu0
        %v5882 = vadd.f32 0.0, %v5881
        %v5883 = vpop.f32.mrb[0].mxu0
        %5884 = vmatprep.mubr.f32.mxu0 0.0
        %5885 = vmatmul.mubr.f32.gmra.mrb[0].mxu0 %v5769
        %v5886 = vpop.f32.mrb[0].mxu0
        %v5887 = vadd.f32 0.0, %v5886
        %v5888 = vpop.f32.mrb[0].mxu0
        %5889 = vmatprep.mubr.f32.mxu0 0.0
        %5890 = vmatmul.mubr.f32.gmra.mrb[0].mxu0 %v5772
        %v5891 = vpop.f32.mrb[0].mxu0
        %v5892 = vadd.f32 0.0, %v5891
        %v5893 = vpop.f32.mrb[0].mxu0
        %5894 = vmatprep.mubr.f32.mxu0 0.0
        %5895 = vmatmul.mubr.f32.gmra.mrb[0].mxu0 %v5775
        %v5896 = vpop.f32.mrb[0].mxu0
        %v5897 = vadd.f32 0.0, %v5896
        %v5898 = vpop.f32.mrb[0].mxu0
        %5899 = vmatprep.mubr.f32.mxu0 0.0
        %5900 = vmatmul.mubr.f32.gmra.mrb[0].mxu0 %v5778
        %v5901 = vpop.f32.mrb[0].mxu0
        %v5902 = vadd.f32 0.0, %v5901
        %v5903 = vpop.f32.mrb[0].mxu0
        %5904 = vmatprep.mubr.f32.mxu0 0.0
        %5905 = vmatmul.mubr.f32.gmra.mrb[0].mxu0 %v5781
        %v5906 = vpop.f32.mrb[0].mxu0
        %v5907 = vadd.f32 0.0, %v5906
        %v5908 = vpop.f32.mrb[0].mxu0
        %5909 = vmatprep.mubr.f32.mxu0 0.0
        %5910 = vmatmul.mubr.f32.gmra.mrb[0].mxu0 %v5784
        %v5911 = vpop.f32.mrb[0].mxu0
        %v5912 = vadd.f32 0.0, %v5911
        %v5913 = vpop.f32.mrb[0].mxu0
        %5914 = vmatprep.mubr.f32.mxu0 0.0
        %5915 = vmatmul.mubr.f32.gmra.mrb[0].mxu0 %v5787
        %v5916 = vpop.f32.mrb[0].mxu0
        %v5917 = vadd.f32 0.0, %v5916
        %v5918 = vpop.f32.mrb[0].mxu0
        %5919 = vmatprep.mubr.f32.mxu0 0.0
        %5920 = vmatmul.mubr.f32.gmra.mrb[0].mxu0 %v5790
        %v5921 = vpop.f32.mrb[0].mxu0
        %v5922 = vadd.f32 0.0, %v5921
        %v5923 = vpop.f32.mrb[0].mxu0
        %5924 = vmatprep.mubr.f32.mxu0 0.0
        %5925 = vmatmul.mubr.f32.gmra.mrb[0].mxu0 %v5793
        %v5926 = vpop.f32.mrb[0].mxu0
        %v5927 = vadd.f32 0.0, %v5926
        %v5928 = vpop.f32.mrb[0].mxu0
        %5929 = vmatprep.mubr.f32.mxu0 0.0
        %5930 = vmatmul.mubr.f32.gmra.mrb[0].mxu0 %v5796
        %v5931 = vpop.f32.mrb[0].mxu0
        %v5932 = vadd.f32 0.0, %v5931
        %v5933 = vpop.f32.mrb[0].mxu0
        %5934 = vmatprep.mubr.f32.mxu0 0.0
        %5935 = vmatmul.mubr.f32.gmra.mrb[0].mxu0 %v5799
        %v5936 = vpop.f32.mrb[0].mxu0
        %v5937 = vadd.f32 0.0, %v5936
        %v5938 = vpop.f32.mrb[0].mxu0
        %5939 = vmatprep.mubr.f32.mxu0 0.0
        %5940 = vmatmul.mubr.f32.gmra.mrb[0].mxu0 %v5802
        %v5941 = vpop.f32.mrb[0].mxu0
        %v5942 = vadd.f32 0.0, %v5941
        %v5943 = vpop.f32.mrb[0].mxu0
        %5944 = vmatprep.mubr.f32.mxu0 0.0
        %5945 = vmatmul.mubr.f32.gmra.mrb[0].mxu0 %v5805
        %v5946 = vpop.f32.mrb[0].mxu0
        %v5947 = vadd.f32 0.0, %v5946
        %v5948 = vpop.f32.mrb[0].mxu0
        %5949 = vmatprep.mubr.f32.mxu0 0.0
        %5950 = vmatmul.mubr.f32.gmra.mrb[0].mxu0 %v5808
        %v5951 = vpop.f32.mrb[0].mxu0
        %v5952 = vadd.f32 0.0, %v5951
        %v5953 = vpop.f32.mrb[0].mxu0
        %5954 = vdwg.mxu0
        %v5955 = vadd.f32 %v5727, %v5877
        %v5956 = vadd.f32 %v5728, %v5882
        %v5957 = vadd.f32 %v5729, %v5887
        %v5958 = vadd.f32 %v5730, %v5892
        %v5959 = vadd.f32 %v5731, %v5897
        %v5960 = vadd.f32 %v5732, %v5902
        %v5961 = vadd.f32 %v5733, %v5907
        %v5962 = vadd.f32 %v5734, %v5912
        %v5963 = vadd.f32 %v5735, %v5917
        %v5964 = vadd.f32 %v5736, %v5922
        %v5965 = vadd.f32 %v5737, %v5927
        %v5966 = vadd.f32 %v5738, %v5932
        %v5967 = vadd.f32 %v5739, %v5937
        %v5968 = vadd.f32 %v5740, %v5942
        %v5969 = vadd.f32 %v5741, %v5947
        %v5970 = vadd.f32 %v5742, %v5952
        %5971 = vst.msk [vmem:[#allocation3] sm:$0xff] %vm512, %v5955
        %5972 = vst.msk [vmem:[#allocation3 + $0x8] sm:$0xff] %vm512, %v5956
        %5973 = vst.msk [vmem:[#allocation3 + $0x10] sm:$0xff] %vm512, %v5957
        %5974 = vst.msk [vmem:[#allocation3 + $0x18] sm:$0xff] %vm512, %v5958
        %5975 = vst.msk [vmem:[#allocation3 + $0x20] sm:$0xff] %vm512, %v5959
        %5976 = vst.msk [vmem:[#allocation3 + $0x28] sm:$0xff] %vm512, %v5960
        %5977 = vst.msk [vmem:[#allocation3 + $0x30] sm:$0xff] %vm512, %v5961
        %5978 = vst.msk [vmem:[#allocation3 + $0x38] sm:$0xff] %vm512, %v5962
        %5979 = vst.msk [vmem:[#allocation3 + $0x40] sm:$0xff] %vm512, %v5963
        %5980 = vst.msk [vmem:[#allocation3 + $0x48] sm:$0xff] %vm512, %v5964
        %5981 = vst.msk [vmem:[#allocation3 + $0x50] sm:$0xff] %vm512, %v5965
        %5982 = vst.msk [vmem:[#allocation3 + $0x58] sm:$0xff] %vm512, %v5966
        %5983 = vst.msk [vmem:[#allocation3 + $0x60] sm:$0xff] %vm512, %v5967
        %5984 = vst.msk [vmem:[#allocation3 + $0x68] sm:$0xff] %vm512, %v5968
        %5985 = vst.msk [vmem:[#allocation3 + $0x70] sm:$0xff] %vm512, %v5969
        %5986 = vst.msk [vmem:[#allocation3 + $0x78] sm:$0xff] %vm512, %v5970
        %v5987 = vld [vmem:[#allocation4] sm:$0xff]
        %v5988 = vld [vmem:[#allocation4 + $0x8] sm:$0xff]
        %v5989 = vld [vmem:[#allocation4 + $0x10] sm:$0xff]
        %v5990 = vld [vmem:[#allocation4 + $0x18] sm:$0xff]
        %v5991 = vld [vmem:[#allocation4 + $0x20] sm:$0xff]
        %v5992 = vld [vmem:[#allocation4 + $0x28] sm:$0xff]
        %v5993 = vld [vmem:[#allocation4 + $0x30] sm:$0xff]
        %v5994 = vld [vmem:[#allocation4 + $0x38] sm:$0xff]
        %v5995 = vld [vmem:[#allocation4 + $0x40] sm:$0xff]
        %v5996 = vld [vmem:[#allocation4 + $0x48] sm:$0xff]
        %v5997 = vld [vmem:[#allocation4 + $0x50] sm:$0xff]
        %v5998 = vld [vmem:[#allocation4 + $0x58] sm:$0xff]
        %v5999 = vld [vmem:[#allocation4 + $0x60] sm:$0xff]
        %v6000 = vld [vmem:[#allocation4 + $0x68] sm:$0xff]
        %v6001 = vld [vmem:[#allocation4 + $0x70] sm:$0xff]
        %v6002 = vld [vmem:[#allocation4 + $0x78] sm:$0xff]
        %v6003 = vld [vmem:[%s5482] sm:$0xff]
        %v6004 = vld [vmem:[%s5482 + $0x10] sm:$0xff]
        %v6005 = vld [vmem:[%s5482 + $0x20] sm:$0xff]
        %v6006 = vld [vmem:[%s5482 + $0x30] sm:$0xff]
        %v6007 = vld [vmem:[%s5482 + $0x40] sm:$0xff]
        %v6008 = vld [vmem:[%s5482 + $0x50] sm:$0xff]
        %v6009 = vld [vmem:[%s5482 + $0x60] sm:$0xff]
        %v6010 = vld [vmem:[%s5482 + $0x70] sm:$0xff]
        %v6011 = vld [vmem:[%s5482 + $0x80] sm:$0xff]
        %v6012 = vld [vmem:[%s5482 + $0x90] sm:$0xff]
        %v6013 = vld [vmem:[%s5482 + $0xa0] sm:$0xff]
        %v6014 = vld [vmem:[%s5482 + $0xb0] sm:$0xff]
        %v6015 = vld [vmem:[%s5482 + $0xc0] sm:$0xff]
        %v6016 = vld [vmem:[%s5482 + $0xd0] sm:$0xff]
        %v6017 = vld [vmem:[%s5482 + $0xe0] sm:$0xff]
        %v6018 = vld [vmem:[%s5482 + $0xf0] sm:$0xff]
        %v6019 = vld [vmem:[%s5238] sm:$0xff]
        %v6020 = vld [vmem:[%s5238 + $0x8] sm:$0xff]
        %v6022 = vsel %vm335, %v6003, 0
        %v6025 = vsel %vm335, %v6004, 0
        %v6028 = vsel %vm335, %v6005, 0
        %v6031 = vsel %vm335, %v6006, 0
        %v6034 = vsel %vm335, %v6007, 0
        %v6037 = vsel %vm335, %v6008, 0
        %v6040 = vsel %vm335, %v6009, 0
        %v6043 = vsel %vm335, %v6010, 0
        %v6046 = vsel %vm335, %v6011, 0
        %v6049 = vsel %vm335, %v6012, 0
        %v6052 = vsel %vm335, %v6013, 0
        %v6055 = vsel %vm335, %v6014, 0
        %v6058 = vsel %vm335, %v6015, 0
        %v6061 = vsel %vm335, %v6016, 0
        %v6064 = vsel %vm335, %v6017, 0
        %v6067 = vsel %vm335, %v6018, 0
        %6069 = vmatprep.subr.mxu0 0.0
        %6070 = vmatpush1.msra.mxu0 %v6019
        %6071 = vmatprep.subr.mxu0 0.0
        %6072 = vmatpush1.msra.mxu0 %v6020
        %6073 = vmatprep.subr.mxu0 0.0
        %6074 = vmatpush1.msra.mxu0 0.0
        %6075 = vmatprep.subr.mxu0 0.0
        %6076 = vmatpush1.msra.mxu0 0.0
        %6077 = vmatprep.subr.mxu0 0.0
        %6078 = vmatpush1.msra.mxu0 0.0
        %6079 = vmatprep.subr.mxu0 0.0
        %6080 = vmatpush1.msra.mxu0 0.0
        %6081 = vmatprep.subr.mxu0 0.0
        %6082 = vmatpush1.msra.mxu0 0.0
        %6083 = vmatprep.subr.mxu0 0.0
        %6084 = vmatpush1.msra.mxu0 0.0
        %6085 = vmatprep.subr.mxu0 0.0
        %6086 = vmatpush1.msra.mxu0 0.0
        %6087 = vmatprep.subr.mxu0 0.0
        %6088 = vmatpush1.msra.mxu0 0.0
        %6089 = vmatprep.subr.mxu0 0.0
        %6090 = vmatpush1.msra.mxu0 0.0
        %6091 = vmatprep.subr.mxu0 0.0
        %6092 = vmatpush1.msra.mxu0 0.0
        %6093 = vmatprep.subr.mxu0 0.0
        %6094 = vmatpush1.msra.mxu0 0.0
        %6095 = vmatprep.subr.mxu0 0.0
        %6096 = vmatpush1.msra.mxu0 0.0
        %6097 = vmatprep.subr.mxu0 0.0
        %6098 = vmatpush1.msra.mxu0 0.0
        %6099 = vmatprep.subr.mxu0 0.0
        %6100 = vmatpush1.msra.mxu0 0.0
        %6101 = vmatprep.subr.mxu0 0.0
        %6102 = vmatpush1.msra.mxu0 0.0
        %6103 = vmatprep.subr.mxu0 0.0
        %6104 = vmatpush1.msra.mxu0 0.0
        %6105 = vmatprep.subr.mxu0 0.0
        %6106 = vmatpush1.msra.mxu0 0.0
        %6107 = vmatprep.subr.mxu0 0.0
        %6108 = vmatpush1.msra.mxu0 0.0
        %6109 = vmatprep.subr.mxu0 0.0
        %6110 = vmatpush1.msra.mxu0 0.0
        %6111 = vmatprep.subr.mxu0 0.0
        %6112 = vmatpush1.msra.mxu0 0.0
        %6113 = vmatprep.subr.mxu0 0.0
        %6114 = vmatpush1.msra.mxu0 0.0
        %6115 = vmatprep.subr.mxu0 0.0
        %6116 = vmatpush1.msra.mxu0 0.0
        %6117 = vmatprep.subr.mxu0 0.0
        %6118 = vmatpush1.msra.mxu0 0.0
        %6119 = vmatprep.subr.mxu0 0.0
        %6120 = vmatpush1.msra.mxu0 0.0
        %6121 = vmatprep.subr.mxu0 0.0
        %6122 = vmatpush1.msra.mxu0 0.0
        %6123 = vmatprep.subr.mxu0 0.0
        %6124 = vmatpush1.msra.mxu0 0.0
        %6125 = vmatprep.subr.mxu0 0.0
        %6126 = vmatpush1.msra.mxu0 0.0
        %6127 = vmatprep.subr.mxu0 0.0
        %6128 = vmatpush1.msra.mxu0 0.0
        %6129 = vmatprep.subr.mxu0 0.0
        %6130 = vmatpush1.msra.mxu0 0.0
        %6131 = vmatprep.subr.mxu0 0.0
        %6132 = vmatpush1.msra.mxu0 0.0
        %6133 = vmatprep.mubr.f32.mxu0 0.0
        %6134 = vmatmul.mubr.f32.gmra.mrb[0].mxu0 %v6022
        %v6135 = vpop.f32.mrb[0].mxu0
        %v6136 = vadd.f32 0.0, %v6135
        %v6137 = vpop.f32.mrb[0].mxu0
        %6138 = vmatprep.mubr.f32.mxu0 0.0
        %6139 = vmatmul.mubr.f32.gmra.mrb[0].mxu0 %v6025
        %v6140 = vpop.f32.mrb[0].mxu0
        %v6141 = vadd.f32 0.0, %v6140
        %v6142 = vpop.f32.mrb[0].mxu0
        %6143 = vmatprep.mubr.f32.mxu0 0.0
        %6144 = vmatmul.mubr.f32.gmra.mrb[0].mxu0 %v6028
        %v6145 = vpop.f32.mrb[0].mxu0
        %v6146 = vadd.f32 0.0, %v6145
        %v6147 = vpop.f32.mrb[0].mxu0
        %6148 = vmatprep.mubr.f32.mxu0 0.0
        %6149 = vmatmul.mubr.f32.gmra.mrb[0].mxu0 %v6031
        %v6150 = vpop.f32.mrb[0].mxu0
        %v6151 = vadd.f32 0.0, %v6150
        %v6152 = vpop.f32.mrb[0].mxu0
        %6153 = vmatprep.mubr.f32.mxu0 0.0
        %6154 = vmatmul.mubr.f32.gmra.mrb[0].mxu0 %v6034
        %v6155 = vpop.f32.mrb[0].mxu0
        %v6156 = vadd.f32 0.0, %v6155
        %v6157 = vpop.f32.mrb[0].mxu0
        %6158 = vmatprep.mubr.f32.mxu0 0.0
        %6159 = vmatmul.mubr.f32.gmra.mrb[0].mxu0 %v6037
        %v6160 = vpop.f32.mrb[0].mxu0
        %v6161 = vadd.f32 0.0, %v6160
        %v6162 = vpop.f32.mrb[0].mxu0
        %6163 = vmatprep.mubr.f32.mxu0 0.0
        %6164 = vmatmul.mubr.f32.gmra.mrb[0].mxu0 %v6040
        %v6165 = vpop.f32.mrb[0].mxu0
        %v6166 = vadd.f32 0.0, %v6165
        %v6167 = vpop.f32.mrb[0].mxu0
        %6168 = vmatprep.mubr.f32.mxu0 0.0
        %6169 = vmatmul.mubr.f32.gmra.mrb[0].mxu0 %v6043
        %v6170 = vpop.f32.mrb[0].mxu0
        %v6171 = vadd.f32 0.0, %v6170
        %v6172 = vpop.f32.mrb[0].mxu0
        %6173 = vmatprep.mubr.f32.mxu0 0.0
        %6174 = vmatmul.mubr.f32.gmra.mrb[0].mxu0 %v6046
        %v6175 = vpop.f32.mrb[0].mxu0
        %v6176 = vadd.f32 0.0, %v6175
        %v6177 = vpop.f32.mrb[0].mxu0
        %6178 = vmatprep.mubr.f32.mxu0 0.0
        %6179 = vmatmul.mubr.f32.gmra.mrb[0].mxu0 %v6049
        %v6180 = vpop.f32.mrb[0].mxu0
        %v6181 = vadd.f32 0.0, %v6180
        %v6182 = vpop.f32.mrb[0].mxu0
        %6183 = vmatprep.mubr.f32.mxu0 0.0
        %6184 = vmatmul.mubr.f32.gmra.mrb[0].mxu0 %v6052
        %v6185 = vpop.f32.mrb[0].mxu0
        %v6186 = vadd.f32 0.0, %v6185
        %v6187 = vpop.f32.mrb[0].mxu0
        %6188 = vmatprep.mubr.f32.mxu0 0.0
        %6189 = vmatmul.mubr.f32.gmra.mrb[0].mxu0 %v6055
        %v6190 = vpop.f32.mrb[0].mxu0
        %v6191 = vadd.f32 0.0, %v6190
        %v6192 = vpop.f32.mrb[0].mxu0
        %6193 = vmatprep.mubr.f32.mxu0 0.0
        %6194 = vmatmul.mubr.f32.gmra.mrb[0].mxu0 %v6058
        %v6195 = vpop.f32.mrb[0].mxu0
        %v6196 = vadd.f32 0.0, %v6195
        %v6197 = vpop.f32.mrb[0].mxu0
        %6198 = vmatprep.mubr.f32.mxu0 0.0
        %6199 = vmatmul.mubr.f32.gmra.mrb[0].mxu0 %v6061
        %v6200 = vpop.f32.mrb[0].mxu0
        %v6201 = vadd.f32 0.0, %v6200
        %v6202 = vpop.f32.mrb[0].mxu0
        %6203 = vmatprep.mubr.f32.mxu0 0.0
        %6204 = vmatmul.mubr.f32.gmra.mrb[0].mxu0 %v6064
        %v6205 = vpop.f32.mrb[0].mxu0
        %v6206 = vadd.f32 0.0, %v6205
        %v6207 = vpop.f32.mrb[0].mxu0
        %6208 = vmatprep.mubr.f32.mxu0 0.0
        %6209 = vmatmul.mubr.f32.gmra.mrb[0].mxu0 %v6067
        %v6210 = vpop.f32.mrb[0].mxu0
        %v6211 = vadd.f32 0.0, %v6210
        %v6212 = vpop.f32.mrb[0].mxu0
        %6213 = vdwg.mxu0
        %v6214 = vadd.f32 %v5987, %v6136
        %v6215 = vadd.f32 %v5988, %v6141
        %v6216 = vadd.f32 %v5989, %v6146
        %v6217 = vadd.f32 %v5990, %v6151
        %v6218 = vadd.f32 %v5991, %v6156
        %v6219 = vadd.f32 %v5992, %v6161
        %v6220 = vadd.f32 %v5993, %v6166
        %v6221 = vadd.f32 %v5994, %v6171
        %v6222 = vadd.f32 %v5995, %v6176
        %v6223 = vadd.f32 %v5996, %v6181
        %v6224 = vadd.f32 %v5997, %v6186
        %v6225 = vadd.f32 %v5998, %v6191
        %v6226 = vadd.f32 %v5999, %v6196
        %v6227 = vadd.f32 %v6000, %v6201
        %v6228 = vadd.f32 %v6001, %v6206
        %v6229 = vadd.f32 %v6002, %v6211
        %6230 = vst.msk [vmem:[#allocation4] sm:$0xff] %vm512, %v6214
        %6231 = vst.msk [vmem:[#allocation4 + $0x8] sm:$0xff] %vm512, %v6215
        %6232 = vst.msk [vmem:[#allocation4 + $0x10] sm:$0xff] %vm512, %v6216
        %6233 = vst.msk [vmem:[#allocation4 + $0x18] sm:$0xff] %vm512, %v6217
        %6234 = vst.msk [vmem:[#allocation4 + $0x20] sm:$0xff] %vm512, %v6218
        %6235 = vst.msk [vmem:[#allocation4 + $0x28] sm:$0xff] %vm512, %v6219
        %6236 = vst.msk [vmem:[#allocation4 + $0x30] sm:$0xff] %vm512, %v6220
        %6237 = vst.msk [vmem:[#allocation4 + $0x38] sm:$0xff] %vm512, %v6221
        %6238 = vst.msk [vmem:[#allocation4 + $0x40] sm:$0xff] %vm512, %v6222
        %6239 = vst.msk [vmem:[#allocation4 + $0x48] sm:$0xff] %vm512, %v6223
        %6240 = vst.msk [vmem:[#allocation4 + $0x50] sm:$0xff] %vm512, %v6224
        %6241 = vst.msk [vmem:[#allocation4 + $0x58] sm:$0xff] %vm512, %v6225
        %6242 = vst.msk [vmem:[#allocation4 + $0x60] sm:$0xff] %vm512, %v6226
        %6243 = vst.msk [vmem:[#allocation4 + $0x68] sm:$0xff] %vm512, %v6227
        %6244 = vst.msk [vmem:[#allocation4 + $0x70] sm:$0xff] %vm512, %v6228
        %6245 = vst.msk [vmem:[#allocation4 + $0x78] sm:$0xff] %vm512, %v6229
        %v6246 = vld [vmem:[#allocation4] sm:$0xff]
        %v6247 = vld [vmem:[#allocation4 + $0x8] sm:$0xff]
        %v6248 = vld [vmem:[#allocation4 + $0x10] sm:$0xff]
        %v6249 = vld [vmem:[#allocation4 + $0x18] sm:$0xff]
        %v6250 = vld [vmem:[#allocation4 + $0x20] sm:$0xff]
        %v6251 = vld [vmem:[#allocation4 + $0x28] sm:$0xff]
        %v6252 = vld [vmem:[#allocation4 + $0x30] sm:$0xff]
        %v6253 = vld [vmem:[#allocation4 + $0x38] sm:$0xff]
        %v6254 = vld [vmem:[#allocation4 + $0x40] sm:$0xff]
        %v6255 = vld [vmem:[#allocation4 + $0x48] sm:$0xff]
        %v6256 = vld [vmem:[#allocation4 + $0x50] sm:$0xff]
        %v6257 = vld [vmem:[#allocation4 + $0x58] sm:$0xff]
        %v6258 = vld [vmem:[#allocation4 + $0x60] sm:$0xff]
        %v6259 = vld [vmem:[#allocation4 + $0x68] sm:$0xff]
        %v6260 = vld [vmem:[#allocation4 + $0x70] sm:$0xff]
        %v6261 = vld [vmem:[#allocation4 + $0x78] sm:$0xff]
        %v6262 = vld [vmem:[%s5221 + $0x1] sm:$0xff]
        %v6263 = vld [vmem:[%s5221 + $0x11] sm:$0xff]
        %v6264 = vld [vmem:[%s5221 + $0x21] sm:$0xff]
        %v6265 = vld [vmem:[%s5221 + $0x31] sm:$0xff]
        %v6266 = vld [vmem:[%s5221 + $0x41] sm:$0xff]
        %v6267 = vld [vmem:[%s5221 + $0x51] sm:$0xff]
        %v6268 = vld [vmem:[%s5221 + $0x61] sm:$0xff]
        %v6269 = vld [vmem:[%s5221 + $0x71] sm:$0xff]
        %v6270 = vld [vmem:[%s5221 + $0x81] sm:$0xff]
        %v6271 = vld [vmem:[%s5221 + $0x91] sm:$0xff]
        %v6272 = vld [vmem:[%s5221 + $0xa1] sm:$0xff]
        %v6273 = vld [vmem:[%s5221 + $0xb1] sm:$0xff]
        %v6274 = vld [vmem:[%s5221 + $0xc1] sm:$0xff]
        %v6275 = vld [vmem:[%s5221 + $0xd1] sm:$0xff]
        %v6276 = vld [vmem:[%s5221 + $0xe1] sm:$0xff]
        %v6277 = vld [vmem:[%s5221 + $0xf1] sm:$0xff]
        %v6278 = vld [vmem:[%s5499] sm:$0xff]
        %v6279 = vld [vmem:[%s5499 + $0x8] sm:$0xff]
        %v6281 = vsel %vm335, %v6262, 0
        %v6284 = vsel %vm335, %v6263, 0
        %v6287 = vsel %vm335, %v6264, 0
        %v6290 = vsel %vm335, %v6265, 0
        %v6293 = vsel %vm335, %v6266, 0
        %v6296 = vsel %vm335, %v6267, 0
        %v6299 = vsel %vm335, %v6268, 0
        %v6302 = vsel %vm335, %v6269, 0
        %v6305 = vsel %vm335, %v6270, 0
        %v6308 = vsel %vm335, %v6271, 0
        %v6311 = vsel %vm335, %v6272, 0
        %v6314 = vsel %vm335, %v6273, 0
        %v6317 = vsel %vm335, %v6274, 0
        %v6320 = vsel %vm335, %v6275, 0
        %v6323 = vsel %vm335, %v6276, 0
        %v6326 = vsel %vm335, %v6277, 0
        %6328 = vmatprep.subr.mxu0 0.0
        %6329 = vmatpush1.msra.mxu0 %v6278
        %6330 = vmatprep.subr.mxu0 0.0
        %6331 = vmatpush1.msra.mxu0 %v6279
        %6332 = vmatprep.subr.mxu0 0.0
        %6333 = vmatpush1.msra.mxu0 0.0
        %6334 = vmatprep.subr.mxu0 0.0
        %6335 = vmatpush1.msra.mxu0 0.0
        %6336 = vmatprep.subr.mxu0 0.0
        %6337 = vmatpush1.msra.mxu0 0.0
        %6338 = vmatprep.subr.mxu0 0.0
        %6339 = vmatpush1.msra.mxu0 0.0
        %6340 = vmatprep.subr.mxu0 0.0
        %6341 = vmatpush1.msra.mxu0 0.0
        %6342 = vmatprep.subr.mxu0 0.0
        %6343 = vmatpush1.msra.mxu0 0.0
        %6344 = vmatprep.subr.mxu0 0.0
        %6345 = vmatpush1.msra.mxu0 0.0
        %6346 = vmatprep.subr.mxu0 0.0
        %6347 = vmatpush1.msra.mxu0 0.0
        %6348 = vmatprep.subr.mxu0 0.0
        %6349 = vmatpush1.msra.mxu0 0.0
        %6350 = vmatprep.subr.mxu0 0.0
        %6351 = vmatpush1.msra.mxu0 0.0
        %6352 = vmatprep.subr.mxu0 0.0
        %6353 = vmatpush1.msra.mxu0 0.0
        %6354 = vmatprep.subr.mxu0 0.0
        %6355 = vmatpush1.msra.mxu0 0.0
        %6356 = vmatprep.subr.mxu0 0.0
        %6357 = vmatpush1.msra.mxu0 0.0
        %6358 = vmatprep.subr.mxu0 0.0
        %6359 = vmatpush1.msra.mxu0 0.0
        %6360 = vmatprep.subr.mxu0 0.0
        %6361 = vmatpush1.msra.mxu0 0.0
        %6362 = vmatprep.subr.mxu0 0.0
        %6363 = vmatpush1.msra.mxu0 0.0
        %6364 = vmatprep.subr.mxu0 0.0
        %6365 = vmatpush1.msra.mxu0 0.0
        %6366 = vmatprep.subr.mxu0 0.0
        %6367 = vmatpush1.msra.mxu0 0.0
        %6368 = vmatprep.subr.mxu0 0.0
        %6369 = vmatpush1.msra.mxu0 0.0
        %6370 = vmatprep.subr.mxu0 0.0
        %6371 = vmatpush1.msra.mxu0 0.0
        %6372 = vmatprep.subr.mxu0 0.0
        %6373 = vmatpush1.msra.mxu0 0.0
        %6374 = vmatprep.subr.mxu0 0.0
        %6375 = vmatpush1.msra.mxu0 0.0
        %6376 = vmatprep.subr.mxu0 0.0
        %6377 = vmatpush1.msra.mxu0 0.0
        %6378 = vmatprep.subr.mxu0 0.0
        %6379 = vmatpush1.msra.mxu0 0.0
        %6380 = vmatprep.subr.mxu0 0.0
        %6381 = vmatpush1.msra.mxu0 0.0
        %6382 = vmatprep.subr.mxu0 0.0
        %6383 = vmatpush1.msra.mxu0 0.0
        %6384 = vmatprep.subr.mxu0 0.0
        %6385 = vmatpush1.msra.mxu0 0.0
        %6386 = vmatprep.subr.mxu0 0.0
        %6387 = vmatpush1.msra.mxu0 0.0
        %6388 = vmatprep.subr.mxu0 0.0
        %6389 = vmatpush1.msra.mxu0 0.0
        %6390 = vmatprep.subr.mxu0 0.0
        %6391 = vmatpush1.msra.mxu0 0.0
        %6392 = vmatprep.mubr.f32.mxu0 0.0
        %6393 = vmatmul.mubr.f32.gmra.mrb[0].mxu0 %v6281
        %v6394 = vpop.f32.mrb[0].mxu0
        %v6395 = vadd.f32 0.0, %v6394
        %v6396 = vpop.f32.mrb[0].mxu0
        %6397 = vmatprep.mubr.f32.mxu0 0.0
        %6398 = vmatmul.mubr.f32.gmra.mrb[0].mxu0 %v6284
        %v6399 = vpop.f32.mrb[0].mxu0
        %v6400 = vadd.f32 0.0, %v6399
        %v6401 = vpop.f32.mrb[0].mxu0
        %6402 = vmatprep.mubr.f32.mxu0 0.0
        %6403 = vmatmul.mubr.f32.gmra.mrb[0].mxu0 %v6287
        %v6404 = vpop.f32.mrb[0].mxu0
        %v6405 = vadd.f32 0.0, %v6404
        %v6406 = vpop.f32.mrb[0].mxu0
        %6407 = vmatprep.mubr.f32.mxu0 0.0
        %6408 = vmatmul.mubr.f32.gmra.mrb[0].mxu0 %v6290
        %v6409 = vpop.f32.mrb[0].mxu0
        %v6410 = vadd.f32 0.0, %v6409
        %v6411 = vpop.f32.mrb[0].mxu0
        %6412 = vmatprep.mubr.f32.mxu0 0.0
        %6413 = vmatmul.mubr.f32.gmra.mrb[0].mxu0 %v6293
        %v6414 = vpop.f32.mrb[0].mxu0
        %v6415 = vadd.f32 0.0, %v6414
        %v6416 = vpop.f32.mrb[0].mxu0
        %6417 = vmatprep.mubr.f32.mxu0 0.0
        %6418 = vmatmul.mubr.f32.gmra.mrb[0].mxu0 %v6296
        %v6419 = vpop.f32.mrb[0].mxu0
        %v6420 = vadd.f32 0.0, %v6419
        %v6421 = vpop.f32.mrb[0].mxu0
        %6422 = vmatprep.mubr.f32.mxu0 0.0
        %6423 = vmatmul.mubr.f32.gmra.mrb[0].mxu0 %v6299
        %v6424 = vpop.f32.mrb[0].mxu0
        %v6425 = vadd.f32 0.0, %v6424
        %v6426 = vpop.f32.mrb[0].mxu0
        %6427 = vmatprep.mubr.f32.mxu0 0.0
        %6428 = vmatmul.mubr.f32.gmra.mrb[0].mxu0 %v6302
        %v6429 = vpop.f32.mrb[0].mxu0
        %v6430 = vadd.f32 0.0, %v6429
        %v6431 = vpop.f32.mrb[0].mxu0
        %6432 = vmatprep.mubr.f32.mxu0 0.0
        %6433 = vmatmul.mubr.f32.gmra.mrb[0].mxu0 %v6305
        %v6434 = vpop.f32.mrb[0].mxu0
        %v6435 = vadd.f32 0.0, %v6434
        %v6436 = vpop.f32.mrb[0].mxu0
        %6437 = vmatprep.mubr.f32.mxu0 0.0
        %6438 = vmatmul.mubr.f32.gmra.mrb[0].mxu0 %v6308
        %v6439 = vpop.f32.mrb[0].mxu0
        %v6440 = vadd.f32 0.0, %v6439
        %v6441 = vpop.f32.mrb[0].mxu0
        %6442 = vmatprep.mubr.f32.mxu0 0.0
        %6443 = vmatmul.mubr.f32.gmra.mrb[0].mxu0 %v6311
        %v6444 = vpop.f32.mrb[0].mxu0
        %v6445 = vadd.f32 0.0, %v6444
        %v6446 = vpop.f32.mrb[0].mxu0
        %6447 = vmatprep.mubr.f32.mxu0 0.0
        %6448 = vmatmul.mubr.f32.gmra.mrb[0].mxu0 %v6314
        %v6449 = vpop.f32.mrb[0].mxu0
        %v6450 = vadd.f32 0.0, %v6449
        %v6451 = vpop.f32.mrb[0].mxu0
        %6452 = vmatprep.mubr.f32.mxu0 0.0
        %6453 = vmatmul.mubr.f32.gmra.mrb[0].mxu0 %v6317
        %v6454 = vpop.f32.mrb[0].mxu0
        %v6455 = vadd.f32 0.0, %v6454
        %v6456 = vpop.f32.mrb[0].mxu0
        %6457 = vmatprep.mubr.f32.mxu0 0.0
        %6458 = vmatmul.mubr.f32.gmra.mrb[0].mxu0 %v6320
        %v6459 = vpop.f32.mrb[0].mxu0
        %v6460 = vadd.f32 0.0, %v6459
        %v6461 = vpop.f32.mrb[0].mxu0
        %6462 = vmatprep.mubr.f32.mxu0 0.0
        %6463 = vmatmul.mubr.f32.gmra.mrb[0].mxu0 %v6323
        %v6464 = vpop.f32.mrb[0].mxu0
        %v6465 = vadd.f32 0.0, %v6464
        %v6466 = vpop.f32.mrb[0].mxu0
        %6467 = vmatprep.mubr.f32.mxu0 0.0
        %6468 = vmatmul.mubr.f32.gmra.mrb[0].mxu0 %v6326
        %v6469 = vpop.f32.mrb[0].mxu0
        %v6470 = vadd.f32 0.0, %v6469
        %v6471 = vpop.f32.mrb[0].mxu0
        %6472 = vdwg.mxu0
        %v6473 = vadd.f32 %v6246, %v6395
        %v6474 = vadd.f32 %v6247, %v6400
        %v6475 = vadd.f32 %v6248, %v6405
        %v6476 = vadd.f32 %v6249, %v6410
        %v6477 = vadd.f32 %v6250, %v6415
        %v6478 = vadd.f32 %v6251, %v6420
        %v6479 = vadd.f32 %v6252, %v6425
        %v6480 = vadd.f32 %v6253, %v6430
        %v6481 = vadd.f32 %v6254, %v6435
        %v6482 = vadd.f32 %v6255, %v6440
        %v6483 = vadd.f32 %v6256, %v6445
        %v6484 = vadd.f32 %v6257, %v6450
        %v6485 = vadd.f32 %v6258, %v6455
        %v6486 = vadd.f32 %v6259, %v6460
        %v6487 = vadd.f32 %v6260, %v6465
        %v6488 = vadd.f32 %v6261, %v6470
        %6489 = vst.msk [vmem:[#allocation4] sm:$0xff] %vm512, %v6473
        %6490 = vst.msk [vmem:[#allocation4 + $0x8] sm:$0xff] %vm512, %v6474
        %6491 = vst.msk [vmem:[#allocation4 + $0x10] sm:$0xff] %vm512, %v6475
        %6492 = vst.msk [vmem:[#allocation4 + $0x18] sm:$0xff] %vm512, %v6476
        %6493 = vst.msk [vmem:[#allocation4 + $0x20] sm:$0xff] %vm512, %v6477
        %6494 = vst.msk [vmem:[#allocation4 + $0x28] sm:$0xff] %vm512, %v6478
        %6495 = vst.msk [vmem:[#allocation4 + $0x30] sm:$0xff] %vm512, %v6479
        %6496 = vst.msk [vmem:[#allocation4 + $0x38] sm:$0xff] %vm512, %v6480
        %6497 = vst.msk [vmem:[#allocation4 + $0x40] sm:$0xff] %vm512, %v6481
        %6498 = vst.msk [vmem:[#allocation4 + $0x48] sm:$0xff] %vm512, %v6482
        %6499 = vst.msk [vmem:[#allocation4 + $0x50] sm:$0xff] %vm512, %v6483
        %6500 = vst.msk [vmem:[#allocation4 + $0x58] sm:$0xff] %vm512, %v6484
        %6501 = vst.msk [vmem:[#allocation4 + $0x60] sm:$0xff] %vm512, %v6485
        %6502 = vst.msk [vmem:[#allocation4 + $0x68] sm:$0xff] %vm512, %v6486
        %6503 = vst.msk [vmem:[#allocation4 + $0x70] sm:$0xff] %vm512, %v6487
        %6504 = vst.msk [vmem:[#allocation4 + $0x78] sm:$0xff] %vm512, %v6488
        %v6505 = vld [vmem:[#allocation4] sm:$0xff]
        %v6506 = vld [vmem:[#allocation4 + $0x8] sm:$0xff]
        %v6507 = vld [vmem:[#allocation4 + $0x10] sm:$0xff]
        %v6508 = vld [vmem:[#allocation4 + $0x18] sm:$0xff]
        %v6509 = vld [vmem:[#allocation4 + $0x20] sm:$0xff]
        %v6510 = vld [vmem:[#allocation4 + $0x28] sm:$0xff]
        %v6511 = vld [vmem:[#allocation4 + $0x30] sm:$0xff]
        %v6512 = vld [vmem:[#allocation4 + $0x38] sm:$0xff]
        %v6513 = vld [vmem:[#allocation4 + $0x40] sm:$0xff]
        %v6514 = vld [vmem:[#allocation4 + $0x48] sm:$0xff]
        %v6515 = vld [vmem:[#allocation4 + $0x50] sm:$0xff]
        %v6516 = vld [vmem:[#allocation4 + $0x58] sm:$0xff]
        %v6517 = vld [vmem:[#allocation4 + $0x60] sm:$0xff]
        %v6518 = vld [vmem:[#allocation4 + $0x68] sm:$0xff]
        %v6519 = vld [vmem:[#allocation4 + $0x70] sm:$0xff]
        %v6520 = vld [vmem:[#allocation4 + $0x78] sm:$0xff]
        %v6521 = vld [vmem:[%s5482 + $0x1] sm:$0xff]
        %v6522 = vld [vmem:[%s5482 + $0x11] sm:$0xff]
        %v6523 = vld [vmem:[%s5482 + $0x21] sm:$0xff]
        %v6524 = vld [vmem:[%s5482 + $0x31] sm:$0xff]
        %v6525 = vld [vmem:[%s5482 + $0x41] sm:$0xff]
        %v6526 = vld [vmem:[%s5482 + $0x51] sm:$0xff]
        %v6527 = vld [vmem:[%s5482 + $0x61] sm:$0xff]
        %v6528 = vld [vmem:[%s5482 + $0x71] sm:$0xff]
        %v6529 = vld [vmem:[%s5482 + $0x81] sm:$0xff]
        %v6530 = vld [vmem:[%s5482 + $0x91] sm:$0xff]
        %v6531 = vld [vmem:[%s5482 + $0xa1] sm:$0xff]
        %v6532 = vld [vmem:[%s5482 + $0xb1] sm:$0xff]
        %v6533 = vld [vmem:[%s5482 + $0xc1] sm:$0xff]
        %v6534 = vld [vmem:[%s5482 + $0xd1] sm:$0xff]
        %v6535 = vld [vmem:[%s5482 + $0xe1] sm:$0xff]
        %v6536 = vld [vmem:[%s5482 + $0xf1] sm:$0xff]
        %v6537 = vld [vmem:[%s5759] sm:$0xff]
        %v6538 = vld [vmem:[%s5759 + $0x8] sm:$0xff]
        %v6540 = vsel %vm335, %v6521, 0
        %v6543 = vsel %vm335, %v6522, 0
        %v6546 = vsel %vm335, %v6523, 0
        %v6549 = vsel %vm335, %v6524, 0
        %v6552 = vsel %vm335, %v6525, 0
        %v6555 = vsel %vm335, %v6526, 0
        %v6558 = vsel %vm335, %v6527, 0
        %v6561 = vsel %vm335, %v6528, 0
        %v6564 = vsel %vm335, %v6529, 0
        %v6567 = vsel %vm335, %v6530, 0
        %v6570 = vsel %vm335, %v6531, 0
        %v6573 = vsel %vm335, %v6532, 0
        %v6576 = vsel %vm335, %v6533, 0
        %v6579 = vsel %vm335, %v6534, 0
        %v6582 = vsel %vm335, %v6535, 0
        %v6585 = vsel %vm335, %v6536, 0
        %6587 = vmatprep.subr.mxu0 0.0
        %6588 = vmatpush1.msra.mxu0 %v6537
        %6589 = vmatprep.subr.mxu0 0.0
        %6590 = vmatpush1.msra.mxu0 %v6538
        %6591 = vmatprep.subr.mxu0 0.0
        %6592 = vmatpush1.msra.mxu0 0.0
        %6593 = vmatprep.subr.mxu0 0.0
        %6594 = vmatpush1.msra.mxu0 0.0
        %6595 = vmatprep.subr.mxu0 0.0
        %6596 = vmatpush1.msra.mxu0 0.0
        %6597 = vmatprep.subr.mxu0 0.0
        %6598 = vmatpush1.msra.mxu0 0.0
        %6599 = vmatprep.subr.mxu0 0.0
        %6600 = vmatpush1.msra.mxu0 0.0
        %6601 = vmatprep.subr.mxu0 0.0
        %6602 = vmatpush1.msra.mxu0 0.0
        %6603 = vmatprep.subr.mxu0 0.0
        %6604 = vmatpush1.msra.mxu0 0.0
        %6605 = vmatprep.subr.mxu0 0.0
        %6606 = vmatpush1.msra.mxu0 0.0
        %6607 = vmatprep.subr.mxu0 0.0
        %6608 = vmatpush1.msra.mxu0 0.0
        %6609 = vmatprep.subr.mxu0 0.0
        %6610 = vmatpush1.msra.mxu0 0.0
        %6611 = vmatprep.subr.mxu0 0.0
        %6612 = vmatpush1.msra.mxu0 0.0
        %6613 = vmatprep.subr.mxu0 0.0
        %6614 = vmatpush1.msra.mxu0 0.0
        %6615 = vmatprep.subr.mxu0 0.0
        %6616 = vmatpush1.msra.mxu0 0.0
        %6617 = vmatprep.subr.mxu0 0.0
        %6618 = vmatpush1.msra.mxu0 0.0
        %6619 = vmatprep.subr.mxu0 0.0
        %6620 = vmatpush1.msra.mxu0 0.0
        %6621 = vmatprep.subr.mxu0 0.0
        %6622 = vmatpush1.msra.mxu0 0.0
        %6623 = vmatprep.subr.mxu0 0.0
        %6624 = vmatpush1.msra.mxu0 0.0
        %6625 = vmatprep.subr.mxu0 0.0
        %6626 = vmatpush1.msra.mxu0 0.0
        %6627 = vmatprep.subr.mxu0 0.0
        %6628 = vmatpush1.msra.mxu0 0.0
        %6629 = vmatprep.subr.mxu0 0.0
        %6630 = vmatpush1.msra.mxu0 0.0
        %6631 = vmatprep.subr.mxu0 0.0
        %6632 = vmatpush1.msra.mxu0 0.0
        %6633 = vmatprep.subr.mxu0 0.0
        %6634 = vmatpush1.msra.mxu0 0.0
        %6635 = vmatprep.subr.mxu0 0.0
        %6636 = vmatpush1.msra.mxu0 0.0
        %6637 = vmatprep.subr.mxu0 0.0
        %6638 = vmatpush1.msra.mxu0 0.0
        %6639 = vmatprep.subr.mxu0 0.0
        %6640 = vmatpush1.msra.mxu0 0.0
        %6641 = vmatprep.subr.mxu0 0.0
        %6642 = vmatpush1.msra.mxu0 0.0
        %6643 = vmatprep.subr.mxu0 0.0
        %6644 = vmatpush1.msra.mxu0 0.0
        %6645 = vmatprep.subr.mxu0 0.0
        %6646 = vmatpush1.msra.mxu0 0.0
        %6647 = vmatprep.subr.mxu0 0.0
        %6648 = vmatpush1.msra.mxu0 0.0
        %6649 = vmatprep.subr.mxu0 0.0
        %6650 = vmatpush1.msra.mxu0 0.0
        %6651 = vmatprep.mubr.f32.mxu0 0.0
        %6652 = vmatmul.mubr.f32.gmra.mrb[0].mxu0 %v6540
        %v6653 = vpop.f32.mrb[0].mxu0
        %v6654 = vadd.f32 0.0, %v6653
        %v6655 = vpop.f32.mrb[0].mxu0
        %6656 = vmatprep.mubr.f32.mxu0 0.0
        %6657 = vmatmul.mubr.f32.gmra.mrb[0].mxu0 %v6543
        %v6658 = vpop.f32.mrb[0].mxu0
        %v6659 = vadd.f32 0.0, %v6658
        %v6660 = vpop.f32.mrb[0].mxu0
        %6661 = vmatprep.mubr.f32.mxu0 0.0
        %6662 = vmatmul.mubr.f32.gmra.mrb[0].mxu0 %v6546
        %v6663 = vpop.f32.mrb[0].mxu0
        %v6664 = vadd.f32 0.0, %v6663
        %v6665 = vpop.f32.mrb[0].mxu0
        %6666 = vmatprep.mubr.f32.mxu0 0.0
        %6667 = vmatmul.mubr.f32.gmra.mrb[0].mxu0 %v6549
        %v6668 = vpop.f32.mrb[0].mxu0
        %v6669 = vadd.f32 0.0, %v6668
        %v6670 = vpop.f32.mrb[0].mxu0
        %6671 = vmatprep.mubr.f32.mxu0 0.0
        %6672 = vmatmul.mubr.f32.gmra.mrb[0].mxu0 %v6552
        %v6673 = vpop.f32.mrb[0].mxu0
        %v6674 = vadd.f32 0.0, %v6673
        %v6675 = vpop.f32.mrb[0].mxu0
        %6676 = vmatprep.mubr.f32.mxu0 0.0
        %6677 = vmatmul.mubr.f32.gmra.mrb[0].mxu0 %v6555
        %v6678 = vpop.f32.mrb[0].mxu0
        %v6679 = vadd.f32 0.0, %v6678
        %v6680 = vpop.f32.mrb[0].mxu0
        %6681 = vmatprep.mubr.f32.mxu0 0.0
        %6682 = vmatmul.mubr.f32.gmra.mrb[0].mxu0 %v6558
        %v6683 = vpop.f32.mrb[0].mxu0
        %v6684 = vadd.f32 0.0, %v6683
        %v6685 = vpop.f32.mrb[0].mxu0
        %6686 = vmatprep.mubr.f32.mxu0 0.0
        %6687 = vmatmul.mubr.f32.gmra.mrb[0].mxu0 %v6561
        %v6688 = vpop.f32.mrb[0].mxu0
        %v6689 = vadd.f32 0.0, %v6688
        %v6690 = vpop.f32.mrb[0].mxu0
        %6691 = vmatprep.mubr.f32.mxu0 0.0
        %6692 = vmatmul.mubr.f32.gmra.mrb[0].mxu0 %v6564
        %v6693 = vpop.f32.mrb[0].mxu0
        %v6694 = vadd.f32 0.0, %v6693
        %v6695 = vpop.f32.mrb[0].mxu0
        %6696 = vmatprep.mubr.f32.mxu0 0.0
        %6697 = vmatmul.mubr.f32.gmra.mrb[0].mxu0 %v6567
        %v6698 = vpop.f32.mrb[0].mxu0
        %v6699 = vadd.f32 0.0, %v6698
        %v6700 = vpop.f32.mrb[0].mxu0
        %6701 = vmatprep.mubr.f32.mxu0 0.0
        %6702 = vmatmul.mubr.f32.gmra.mrb[0].mxu0 %v6570
        %v6703 = vpop.f32.mrb[0].mxu0
        %v6704 = vadd.f32 0.0, %v6703
        %v6705 = vpop.f32.mrb[0].mxu0
        %6706 = vmatprep.mubr.f32.mxu0 0.0
        %6707 = vmatmul.mubr.f32.gmra.mrb[0].mxu0 %v6573
        %v6708 = vpop.f32.mrb[0].mxu0
        %v6709 = vadd.f32 0.0, %v6708
        %v6710 = vpop.f32.mrb[0].mxu0
        %6711 = vmatprep.mubr.f32.mxu0 0.0
        %6712 = vmatmul.mubr.f32.gmra.mrb[0].mxu0 %v6576
        %v6713 = vpop.f32.mrb[0].mxu0
        %v6714 = vadd.f32 0.0, %v6713
        %v6715 = vpop.f32.mrb[0].mxu0
        %6716 = vmatprep.mubr.f32.mxu0 0.0
        %6717 = vmatmul.mubr.f32.gmra.mrb[0].mxu0 %v6579
        %v6718 = vpop.f32.mrb[0].mxu0
        %v6719 = vadd.f32 0.0, %v6718
        %v6720 = vpop.f32.mrb[0].mxu0
        %6721 = vmatprep.mubr.f32.mxu0 0.0
        %6722 = vmatmul.mubr.f32.gmra.mrb[0].mxu0 %v6582
        %v6723 = vpop.f32.mrb[0].mxu0
        %v6724 = vadd.f32 0.0, %v6723
        %v6725 = vpop.f32.mrb[0].mxu0
        %6726 = vmatprep.mubr.f32.mxu0 0.0
        %6727 = vmatmul.mubr.f32.gmra.mrb[0].mxu0 %v6585
        %v6728 = vpop.f32.mrb[0].mxu0
        %v6729 = vadd.f32 0.0, %v6728
        %v6730 = vpop.f32.mrb[0].mxu0
        %6731 = vdwg.mxu0
        %v6732 = vadd.f32 %v6505, %v6654
        %v6733 = vadd.f32 %v6506, %v6659
        %v6734 = vadd.f32 %v6507, %v6664
        %v6735 = vadd.f32 %v6508, %v6669
        %v6736 = vadd.f32 %v6509, %v6674
        %v6737 = vadd.f32 %v6510, %v6679
        %v6738 = vadd.f32 %v6511, %v6684
        %v6739 = vadd.f32 %v6512, %v6689
        %v6740 = vadd.f32 %v6513, %v6694
        %v6741 = vadd.f32 %v6514, %v6699
        %v6742 = vadd.f32 %v6515, %v6704
        %v6743 = vadd.f32 %v6516, %v6709
        %v6744 = vadd.f32 %v6517, %v6714
        %v6745 = vadd.f32 %v6518, %v6719
        %v6746 = vadd.f32 %v6519, %v6724
        %v6747 = vadd.f32 %v6520, %v6729
        %6748 = vst.msk [vmem:[#allocation4] sm:$0xff] %vm512, %v6732
        %6749 = vst.msk [vmem:[#allocation4 + $0x8] sm:$0xff] %vm512, %v6733
        %6750 = vst.msk [vmem:[#allocation4 + $0x10] sm:$0xff] %vm512, %v6734
        %6751 = vst.msk [vmem:[#allocation4 + $0x18] sm:$0xff] %vm512, %v6735
        %6752 = vst.msk [vmem:[#allocation4 + $0x20] sm:$0xff] %vm512, %v6736
        %6753 = vst.msk [vmem:[#allocation4 + $0x28] sm:$0xff] %vm512, %v6737
        %6754 = vst.msk [vmem:[#allocation4 + $0x30] sm:$0xff] %vm512, %v6738
        %6755 = vst.msk [vmem:[#allocation4 + $0x38] sm:$0xff] %vm512, %v6739
        %6756 = vst.msk [vmem:[#allocation4 + $0x40] sm:$0xff] %vm512, %v6740
        %6757 = vst.msk [vmem:[#allocation4 + $0x48] sm:$0xff] %vm512, %v6741
        %6758 = vst.msk [vmem:[#allocation4 + $0x50] sm:$0xff] %vm512, %v6742
        %6759 = vst.msk [vmem:[#allocation4 + $0x58] sm:$0xff] %vm512, %v6743
        %6760 = vst.msk [vmem:[#allocation4 + $0x60] sm:$0xff] %vm512, %v6744
        %6761 = vst.msk [vmem:[#allocation4 + $0x68] sm:$0xff] %vm512, %v6745
        %6762 = vst.msk [vmem:[#allocation4 + $0x70] sm:$0xff] %vm512, %v6746
        %6763 = vst.msk [vmem:[#allocation4 + $0x78] sm:$0xff] %vm512, %v6747
        %v6764 = vld [vmem:[#allocation3] sm:$0xff]
        %v6765 = vld [vmem:[#allocation3 + $0x8] sm:$0xff]
        %v6766 = vld [vmem:[#allocation3 + $0x10] sm:$0xff]
        %v6767 = vld [vmem:[#allocation3 + $0x18] sm:$0xff]
        %v6768 = vld [vmem:[#allocation3 + $0x20] sm:$0xff]
        %v6769 = vld [vmem:[#allocation3 + $0x28] sm:$0xff]
        %v6770 = vld [vmem:[#allocation3 + $0x30] sm:$0xff]
        %v6771 = vld [vmem:[#allocation3 + $0x38] sm:$0xff]
        %v6772 = vld [vmem:[#allocation3 + $0x40] sm:$0xff]
        %v6773 = vld [vmem:[#allocation3 + $0x48] sm:$0xff]
        %v6774 = vld [vmem:[#allocation3 + $0x50] sm:$0xff]
        %v6775 = vld [vmem:[#allocation3 + $0x58] sm:$0xff]
        %v6776 = vld [vmem:[#allocation3 + $0x60] sm:$0xff]
        %v6777 = vld [vmem:[#allocation3 + $0x68] sm:$0xff]
        %v6778 = vld [vmem:[#allocation3 + $0x70] sm:$0xff]
        %v6779 = vld [vmem:[#allocation3 + $0x78] sm:$0xff]
        %v6780 = vlaneseq
        %v6781 = vshrl.u32 %v6780, 7
        %v6782 = vsub.s32 4, %v6781
        %v6783 = vrot.slane %v317, %v6782
        %v6784 = vmul.f32 %v6764, %v6783
        %v6785 = vmul.f32 %v6765, %v6783
        %v6786 = vmul.f32 %v6766, %v6783
        %v6787 = vmul.f32 %v6767, %v6783
        %v6788 = vmul.f32 %v6768, %v6783
        %v6789 = vmul.f32 %v6769, %v6783
        %v6790 = vmul.f32 %v6770, %v6783
        %v6791 = vmul.f32 %v6771, %v6783
        %v6792 = vmul.f32 %v6772, %v6783
        %v6793 = vmul.f32 %v6773, %v6783
        %v6794 = vmul.f32 %v6774, %v6783
        %v6795 = vmul.f32 %v6775, %v6783
        %v6796 = vmul.f32 %v6776, %v6783
        %v6797 = vmul.f32 %v6777, %v6783
        %v6798 = vmul.f32 %v6778, %v6783
        %v6799 = vmul.f32 %v6779, %v6783
        %v6800 = vlaneseq
        %v6801 = vshrl.u32 %v6800, 7
        %v6802 = vsub.s32 5, %v6801
        %v6803 = vrot.slane %v317, %v6802
        %v6804 = vadd.f32 %v6784, %v6803
        %v6805 = vadd.f32 %v6785, %v6803
        %v6806 = vadd.f32 %v6786, %v6803
        %v6807 = vadd.f32 %v6787, %v6803
        %v6808 = vadd.f32 %v6788, %v6803
        %v6809 = vadd.f32 %v6789, %v6803
        %v6810 = vadd.f32 %v6790, %v6803
        %v6811 = vadd.f32 %v6791, %v6803
        %v6812 = vadd.f32 %v6792, %v6803
        %v6813 = vadd.f32 %v6793, %v6803
        %v6814 = vadd.f32 %v6794, %v6803
        %v6815 = vadd.f32 %v6795, %v6803
        %v6816 = vadd.f32 %v6796, %v6803
        %v6817 = vadd.f32 %v6797, %v6803
        %v6818 = vadd.f32 %v6798, %v6803
        %v6819 = vadd.f32 %v6799, %v6803
        %v6820 = vmax.f32 %v6804, 0.0
        %v6821 = vmax.f32 %v6805, 0.0
        %v6822 = vmax.f32 %v6806, 0.0
        %v6823 = vmax.f32 %v6807, 0.0
        %v6824 = vmax.f32 %v6808, 0.0
        %v6825 = vmax.f32 %v6809, 0.0
        %v6826 = vmax.f32 %v6810, 0.0
        %v6827 = vmax.f32 %v6811, 0.0
        %v6828 = vmax.f32 %v6812, 0.0
        %v6829 = vmax.f32 %v6813, 0.0
        %v6830 = vmax.f32 %v6814, 0.0
        %v6831 = vmax.f32 %v6815, 0.0
        %v6832 = vmax.f32 %v6816, 0.0
        %v6833 = vmax.f32 %v6817, 0.0
        %v6834 = vmax.f32 %v6818, 0.0
        %v6835 = vmax.f32 %v6819, 0.0
        %v6836 = vld [vmem:[#allocation4] sm:$0xff]
        %v6837 = vld [vmem:[#allocation4 + $0x8] sm:$0xff]
        %v6838 = vld [vmem:[#allocation4 + $0x10] sm:$0xff]
        %v6839 = vld [vmem:[#allocation4 + $0x18] sm:$0xff]
        %v6840 = vld [vmem:[#allocation4 + $0x20] sm:$0xff]
        %v6841 = vld [vmem:[#allocation4 + $0x28] sm:$0xff]
        %v6842 = vld [vmem:[#allocation4 + $0x30] sm:$0xff]
        %v6843 = vld [vmem:[#allocation4 + $0x38] sm:$0xff]
        %v6844 = vld [vmem:[#allocation4 + $0x40] sm:$0xff]
        %v6845 = vld [vmem:[#allocation4 + $0x48] sm:$0xff]
        %v6846 = vld [vmem:[#allocation4 + $0x50] sm:$0xff]
        %v6847 = vld [vmem:[#allocation4 + $0x58] sm:$0xff]
        %v6848 = vld [vmem:[#allocation4 + $0x60] sm:$0xff]
        %v6849 = vld [vmem:[#allocation4 + $0x68] sm:$0xff]
        %v6850 = vld [vmem:[#allocation4 + $0x70] sm:$0xff]
        %v6851 = vld [vmem:[#allocation4 + $0x78] sm:$0xff]
        %v6852 = vmul.f32 %v6836, %v6783
        %v6853 = vmul.f32 %v6837, %v6783
        %v6854 = vmul.f32 %v6838, %v6783
        %v6855 = vmul.f32 %v6839, %v6783
        %v6856 = vmul.f32 %v6840, %v6783
        %v6857 = vmul.f32 %v6841, %v6783
        %v6858 = vmul.f32 %v6842, %v6783
        %v6859 = vmul.f32 %v6843, %v6783
        %v6860 = vmul.f32 %v6844, %v6783
        %v6861 = vmul.f32 %v6845, %v6783
        %v6862 = vmul.f32 %v6846, %v6783
        %v6863 = vmul.f32 %v6847, %v6783
        %v6864 = vmul.f32 %v6848, %v6783
        %v6865 = vmul.f32 %v6849, %v6783
        %v6866 = vmul.f32 %v6850, %v6783
        %v6867 = vmul.f32 %v6851, %v6783
        %v6868 = vadd.f32 %v6852, %v6803
        %v6869 = vadd.f32 %v6853, %v6803
        %v6870 = vadd.f32 %v6854, %v6803
        %v6871 = vadd.f32 %v6855, %v6803
        %v6872 = vadd.f32 %v6856, %v6803
        %v6873 = vadd.f32 %v6857, %v6803
        %v6874 = vadd.f32 %v6858, %v6803
        %v6875 = vadd.f32 %v6859, %v6803
        %v6876 = vadd.f32 %v6860, %v6803
        %v6877 = vadd.f32 %v6861, %v6803
        %v6878 = vadd.f32 %v6862, %v6803
        %v6879 = vadd.f32 %v6863, %v6803
        %v6880 = vadd.f32 %v6864, %v6803
        %v6881 = vadd.f32 %v6865, %v6803
        %v6882 = vadd.f32 %v6866, %v6803
        %v6883 = vadd.f32 %v6867, %v6803
        %v6884 = vmax.f32 %v6868, 0.0
        %v6885 = vmax.f32 %v6869, 0.0
        %v6886 = vmax.f32 %v6870, 0.0
        %v6887 = vmax.f32 %v6871, 0.0
        %v6888 = vmax.f32 %v6872, 0.0
        %v6889 = vmax.f32 %v6873, 0.0
        %v6890 = vmax.f32 %v6874, 0.0
        %v6891 = vmax.f32 %v6875, 0.0
        %v6892 = vmax.f32 %v6876, 0.0
        %v6893 = vmax.f32 %v6877, 0.0
        %v6894 = vmax.f32 %v6878, 0.0
        %v6895 = vmax.f32 %v6879, 0.0
        %v6896 = vmax.f32 %v6880, 0.0
        %v6897 = vmax.f32 %v6881, 0.0
        %v6898 = vmax.f32 %v6882, 0.0
        %v6899 = vmax.f32 %v6883, 0.0
        %v6900 = vmax.f32 %v6820, %v6884
        %v6901 = vmax.f32 %v6821, %v6885
        %v6902 = vmax.f32 %v6822, %v6886
        %v6903 = vmax.f32 %v6823, %v6887
        %v6904 = vmax.f32 %v6824, %v6888
        %v6905 = vmax.f32 %v6825, %v6889
        %v6906 = vmax.f32 %v6826, %v6890
        %v6907 = vmax.f32 %v6827, %v6891
        %v6908 = vmax.f32 %v6828, %v6892
        %v6909 = vmax.f32 %v6829, %v6893
        %v6910 = vmax.f32 %v6830, %v6894
        %v6911 = vmax.f32 %v6831, %v6895
        %v6912 = vmax.f32 %v6832, %v6896
        %v6913 = vmax.f32 %v6833, %v6897
        %v6914 = vmax.f32 %v6834, %v6898
        %v6915 = vmax.f32 %v6835, %v6899
        %v6916 = vsel %vm512, %v6900, -inf
        %v6917 = vsel %vm512, %v6901, -inf
        %v6918 = vmax.f32 %v6916, %v6917
        %v6919 = vsel %vm512, %v6902, -inf
        %v6920 = vsel %vm512, %v6903, -inf
        %v6921 = vmax.f32 %v6919, %v6920
        %v6922 = vsel %vm512, %v6904, -inf
        %v6923 = vsel %vm512, %v6905, -inf
        %v6924 = vmax.f32 %v6922, %v6923
        %v6925 = vsel %vm512, %v6906, -inf
        %v6926 = vsel %vm512, %v6907, -inf
        %v6927 = vmax.f32 %v6925, %v6926
        %v6928 = vsel %vm512, %v6908, -inf
        %v6929 = vsel %vm512, %v6909, -inf
        %v6930 = vmax.f32 %v6928, %v6929
        %v6931 = vsel %vm512, %v6910, -inf
        %v6932 = vsel %vm512, %v6911, -inf
        %v6933 = vmax.f32 %v6931, %v6932
        %v6934 = vsel %vm512, %v6912, -inf
        %v6935 = vsel %vm512, %v6913, -inf
        %v6936 = vmax.f32 %v6934, %v6935
        %v6937 = vsel %vm512, %v6914, -inf
        %v6938 = vsel %vm512, %v6915, -inf
        %v6939 = vmax.f32 %v6937, %v6938
        %v6940 = vlaneseq
        %v6941 = vshrl.u32 %v6940, 7
        %v6942 = vsub.s32 6, %v6941
        %v6943 = vrot.slane %v317, %v6942
        %v6944 = vmul.f32 %v6918, %v6943
        %v6945 = vmul.f32 %v6921, %v6943
        %v6946 = vmul.f32 %v6924, %v6943
        %v6947 = vmul.f32 %v6927, %v6943
        %v6948 = vmul.f32 %v6930, %v6943
        %v6949 = vmul.f32 %v6933, %v6943
        %v6950 = vmul.f32 %v6936, %v6943
        %v6951 = vmul.f32 %v6939, %v6943
        %v6952 = vlaneseq
        %v6953 = vshrl.u32 %v6952, 7
        %v6954 = vsub.s32 7, %v6953
        %v6955 = vrot.slane %v317, %v6954
        %v6956 = vadd.f32 %v6944, %v6955
        %v6957 = vadd.f32 %v6945, %v6955
        %v6958 = vadd.f32 %v6946, %v6955
        %v6959 = vadd.f32 %v6947, %v6955
        %v6960 = vadd.f32 %v6948, %v6955
        %v6961 = vadd.f32 %v6949, %v6955
        %v6962 = vadd.f32 %v6950, %v6955
        %v6963 = vadd.f32 %v6951, %v6955
        %v6964 = vadd.f32 %v6956, %v2052
        %v6965 = vadd.f32 %v6957, %v2053
        %v6966 = vadd.f32 %v6958, %v2054
        %v6967 = vadd.f32 %v6959, %v2055
        %v6968 = vadd.f32 %v6960, %v2056
        %v6969 = vadd.f32 %v6961, %v2057
        %v6970 = vadd.f32 %v6962, %v2058
        %v6971 = vadd.f32 %v6963, %v2059
        %v6972 = vmax.f32 %v6964, 0.0
        %v6973 = vmax.f32 %v6965, 0.0
        %v6974 = vmax.f32 %v6966, 0.0
        %v6975 = vmax.f32 %v6967, 0.0
        %v6976 = vmax.f32 %v6968, 0.0
        %v6977 = vmax.f32 %v6969, 0.0
        %v6978 = vmax.f32 %v6970, 0.0
        %v6979 = vmax.f32 %v6971, 0.0
        %6980 = vst.msk [vmem:[%s301] sm:$0xff] %vm512, %v6972
        %6981 = vst.msk [vmem:[%s301 + $0x8] sm:$0xff] %vm512, %v6973
        %6982 = vst.msk [vmem:[%s301 + $0x10] sm:$0xff] %vm512, %v6974
        %6983 = vst.msk [vmem:[%s301 + $0x18] sm:$0xff] %vm512, %v6975
        %6984 = vst.msk [vmem:[%s301 + $0x20] sm:$0xff] %vm512, %v6976
        %6985 = vst.msk [vmem:[%s301 + $0x28] sm:$0xff] %vm512, %v6977
        %6986 = vst.msk [vmem:[%s301 + $0x30] sm:$0xff] %vm512, %v6978
        %6987 = vst.msk [vmem:[%s301 + $0x38] sm:$0xff] %vm512, %v6979
        %s6988 = sand.u32 %s191, 1
        %s6989 = scalar_lea.sflag [#allocation6], %s6988
        %s6990 = sand.u32 %s191, 1
        %s6991 = smul.addr %s6990, 64
        %s6992 = scalar_lea.vmem [#allocation5], %s6991
        // Predicated region
        $region49: #{tpu_custom_call.1} parent=47 // pred_check
          %p6993 = pneg %p201
        $region50: #{tpu_custom_call.1} parent=47 // pred_check_branch
          %6995 = sbr.rel (%p6993) target = $region52
        $region51: #{tpu_custom_call.1} parent=47 // pred_region
          %s6997 = ssub.s32 1024, 1024
          %6998 = vsyncadd %s6989, %s6997
          %s6999 = smul.addr %s21, 8
          %s7000 = smul.addr %s6999, 128
          %s7001 = scalar_lea.hbm %s7, %s7000
          %s7002 = sshll.u32 %s6992, 4
          %s7003 = int_to_ptr.vmem [resolvable:$true] %s7002
          %7008 = dma.vmem_to_hbm [thread:$0]  %s7003, 1024, %s7001, %s6989, 128, 128, 8
        $region52: #{tpu_custom_call.1} parent=47 // pred_fallthru
          _
      $region48: #{tpu_custom_call.1} parent=5 // pred_fallthru
        _
      %p7009 = scmp.le.s32.totalorder 2, %s16
      // Predicated region
      $region53: #{tpu_custom_call.1} parent=5 // pred_check
        %p7010 = pneg %p7009
      $region54: #{tpu_custom_call.1} parent=5 // pred_check_branch
        %7012 = sbr.rel (%p7010) target = $region56
      $region55: #{tpu_custom_call.1} parent=5 // pred_region
        %s7013 = ssub.s32 %s16, 2
        // Predicated region
        $region57: #{tpu_custom_call.1} parent=55 // pred_check
          %p7014 = pneg %p207
        $region58: #{tpu_custom_call.1} parent=55 // pred_check_branch
          %7016 = sbr.rel (%p7014) target = $region60
        $region59: #{tpu_custom_call.1} parent=55 // pred_region
          %s7017 = sand.u32 %s192, 1
          %s7018 = scalar_lea.sflag [#allocation6], %s7017
          %s7019 = sand.u32 %s192, 1
          %s7020 = smul.addr %s7019, 64
          %s7021 = scalar_lea.vmem [#allocation5], %s7020
          %7022 = dma.done %s7018, 1024
        $region60: #{tpu_custom_call.1} parent=55 // pred_fallthru
          _
      $region56: #{tpu_custom_call.1} parent=5 // pred_fallthru
        _
    $region6: #{tpu_custom_call.1} parent=1 // loop_footer
      %s20 = sadd.s32 1, %s16
    $region7: #{tpu_custom_call.1} parent=1 // loop_footer_branch
      %15 = sbr.rel target = $region3
    $region8: #{tpu_custom_call.1} parent=1 // loop_exit
      _
    %7023 = vsyncpa [#allocation6], 1
    %s7024 = scalar_lea.sflag [#allocation6], 1
    %7025 = vsyncpa %s7024, 1

</llo_original>
